<compile_context>
chip_gen: v5e
topology: v5e:2x2
jax: 0.10.0
libtpu: 0.0.40
codegen_flags: <defaults>
</compile_context>

<pallas_src>
import functools

import jax
import jax.numpy as jnp
from jax.experimental import pallas as pl
from jax.experimental.pallas import tpu as pltpu

LANE = 128


def _round_up(v, m=LANE):
    return ((v + m - 1) // m) * m


def _pick_tile(n, prefs):
    for t in prefs:
        if n % t == 0:
            return t
    return n


# --------------------------- SAGE conv (tiled) ------------------------------

def _sage_conv_kernel(adj_ref, xk_ref, xi_ref, invdeg_ref, wl_ref, wr_ref,
                      b_ref, o_ref, acc_ref, *, apply_relu):
    # grid = (row tiles i, contraction tiles k); k is the reduction axis.
    k = pl.program_id(1)

    @pl.when(k == 0)
    def _init():
        acc_ref[...] = jnp.zeros_like(acc_ref)

    # neighbor-sum accumulation on the MXU
    acc_ref[...] += jnp.dot(adj_ref[...], xk_ref[...],
                            preferred_element_type=jnp.float32)

    @pl.when(k == pl.num_programs(1) - 1)
    def _finalize():
        agg = acc_ref[...] * invdeg_ref[...]          # mean aggregation
        out = (jnp.dot(agg, wl_ref[...], preferred_element_type=jnp.float32)
               + jnp.dot(xi_ref[...], wr_ref[...],
                         preferred_element_type=jnp.float32)
               + b_ref[...])
        if apply_relu:
            out = jnp.maximum(out, 0.0)
        o_ref[...] = out                              # lane-dense (128-wide)


def sage_conv(adj, inv_deg, x_pad, wl_t_pad, wr_t_pad, b_pad, apply_relu):
    """out = ((A @ X) * inv_deg) @ Wl^T + b + X @ Wr^T   (feature dims padded)."""
    n = adj.shape[0]
    fp = x_pad.shape[1]
    dp = wl_t_pad.shape[1]
    tm = _pick_tile(n, (256, 128))
    tk = _pick_tile(n, (512, 256, 128))
    grid = (n // tm, n // tk)
    kern = functools.partial(_sage_conv_kernel, apply_relu=apply_relu)
    return pl.pallas_call(
        kern,
        out_shape=jax.ShapeDtypeStruct((n, dp), jnp.float32),
        grid_spec=pltpu.PrefetchScalarGridSpec(
            num_scalar_prefetch=0,
            grid=grid,
            in_specs=[
                pl.BlockSpec((tm, tk), lambda i, k: (i, k)),    # adjacency tile
                pl.BlockSpec((tk, fp), lambda i, k: (k, 0)),    # X rows (contraction)
                pl.BlockSpec((tm, fp), lambda i, k: (i, 0)),    # X rows (self term)
                pl.BlockSpec((tm, 1), lambda i, k: (i, 0)),     # 1 / degree
                pl.BlockSpec((fp, dp), lambda i, k: (0, 0)),    # Wl^T (padded)
                pl.BlockSpec((fp, dp), lambda i, k: (0, 0)),    # Wr^T (padded)
                pl.BlockSpec((1, dp), lambda i, k: (0, 0)),     # bias
            ],
            out_specs=pl.BlockSpec((tm, dp), lambda i, k: (i, 0)),
            scratch_shapes=[pltpu.VMEM((tm, fp), jnp.float32)],
        ),
        compiler_params=pltpu.CompilerParams(
            dimension_semantics=("parallel", "arbitrary"),
            vmem_limit_bytes=32 * 1024 * 1024,
        ),
    )(adj, x_pad, x_pad, inv_deg, wl_t_pad, wr_t_pad, b_pad.reshape(1, dp))


# --------------------- k-NN scores via MXU norm trick -----------------------

def _knn_score_kernel(pos_ref, sqn_ref, ps_ref, pd_ref, ss_ref, sd_ref):
    # pos: (H, N, D), sqn: (H, N), ps/pd: (H, B, D)
    # score[h,b,n] = 2 <pos[h,n], q[h,b]> - ||pos[h,n]||^2  == ||q||^2 - dist^2
    # (monotone in -distance, so top_k ordering is preserved; sqrt not needed)
    pos = pos_ref[...]
    sqn = sqn_ref[...]
    dots_s = jnp.einsum('hbd,hnd->hbn', ps_ref[...], pos,
                        preferred_element_type=jnp.float32)
    dots_d = jnp.einsum('hbd,hnd->hbn', pd_ref[...], pos,
                        preferred_element_type=jnp.float32)
    ss_ref[...] = 2.0 * dots_s - sqn[:, None, :]
    sd_ref[...] = 2.0 * dots_d - sqn[:, None, :]


def knn_scores(pos_h, sqn_h, ps_h, pd_h):
    h, n, _ = pos_h.shape
    b = ps_h.shape[1]
    vmem = pl.BlockSpec(memory_space=pltpu.MemorySpace.VMEM)
    return pl.pallas_call(
        _knn_score_kernel,
        out_shape=(jax.ShapeDtypeStruct((h, b, n), jnp.float32),
                   jax.ShapeDtypeStruct((h, b, n), jnp.float32)),
        in_specs=[vmem] * 4,
        out_specs=(vmem, vmem),
    )(pos_h, sqn_h, ps_h, pd_h)


# ----------------------------- predictor core -------------------------------

def _predictor_kernel(lw_ref, ps_ref, pd_ref, ps0_ref, pd0_ref, gs_ref, gd_ref,
                      adjs_ref, adjd_ref, o_ref, *, num_sentinals, sentinal_dist):
    lw = lw_ref[0, 0]                                   # label_nn weight (SMEM)
    ps = ps_ref[...]                                    # (BH, D)
    pd = pd_ref[...]
    gs = gs_ref[...]
    gd = gd_ref[...]
    ps0 = ps0_ref[...]                                  # (BH, S, D)
    pd0 = pd0_ref[...]

    sdiff = ps[:, None, :] - ps0                        # (BH, S, D)
    ddiff = pd[:, None, :] - pd0

    s_contrib = jnp.sum(sdiff * gs[:, None, :], axis=-1)   # (BH, S)
    d_contrib = jnp.sum(ddiff * gd[:, None, :], axis=-1)

    s_logits = lw * adjs_ref[...] + s_contrib
    d_logits = lw * adjd_ref[...] + d_contrib

    s_dist = jnp.sqrt(jnp.sum(sdiff * sdiff, axis=-1))      # (BH, S)
    d_dist = jnp.sqrt(jnp.sum(ddiff * ddiff, axis=-1))

    # softmin over [s_dist | d_dist | sentinal_dist * num_sentinals] without
    # concatenation: shared max + partial sums (exactly F.softmin on the cat).
    neg_s = -s_dist
    neg_d = -d_dist
    m = jnp.maximum(jnp.max(neg_s, axis=1, keepdims=True),
                    jnp.max(neg_d, axis=1, keepdims=True))
    neg_sent = jnp.float32(-sentinal_dist)
    if num_sentinals > 0:
        m = jnp.maximum(m, neg_sent)
    e_s = jnp.exp(neg_s - m)
    e_d = jnp.exp(neg_d - m)
    denom = (jnp.sum(e_s, axis=1, keepdims=True)
             + jnp.sum(e_d, axis=1, keepdims=True))
    if num_sentinals > 0:
        denom = denom + jnp.float32(num_sentinals) * jnp.exp(neg_sent - m)
    inv = pl.reciprocal(denom, approx=True)                 # EUP

    weighed = (jnp.sum(e_s * s_logits, axis=1, keepdims=True)
               + jnp.sum(e_d * d_logits, axis=1, keepdims=True)) * inv
    o_ref[...] = weighed                                    # (BH, 1)


def predictor_core(label_w, pos_src, pos_dst, pos_src0, pos_dst0,
                   grads_src, grads_dst, adj_src0, adj_dst0,
                   *, num_sentinals, sentinal_dist):
    b, h, s, d = pos_src0.shape
    bh = b * h
    kern = functools.partial(_predictor_kernel, num_sentinals=num_sentinals,
                             sentinal_dist=sentinal_dist)
    vmem = pl.BlockSpec(memory_space=pltpu.MemorySpace.VMEM)
    smem = pl.BlockSpec(memory_space=pltpu.MemorySpace.SMEM)
    weighed = pl.pallas_call(
        kern,
        out_shape=jax.ShapeDtypeStruct((bh, 1), jnp.float32),
        in_specs=[smem] + [vmem] * 8,
        out_specs=vmem,
    )(label_w,
      pos_src.reshape(bh, d), pos_dst.reshape(bh, d),
      pos_src0.reshape(bh, s, d), pos_dst0.reshape(bh, s, d),
      grads_src.reshape(bh, d), grads_dst.reshape(bh, d),
      adj_src0.reshape(bh, s), adj_dst0.reshape(bh, s))
    return weighed.reshape(b, h)


# ---------------------- MADEdgePredictor forward (eval) ---------------------

def mad_edge_predictor_forward(pos, grads, edges, adj_dense, label_w, *,
                               k_nearest, num_sentinals, sentinal_dist):
    n, num_heads, _ = pos.shape
    src = edges[0]
    dst = edges[1]
    pos_src = pos[src]                                   # (B, H, D)
    pos_dst = pos[dst]

    # per-head nearest-neighbour scores, (H, B, N) with N lane-dense
    pos_h = jnp.transpose(pos, (1, 0, 2))                # (H, N, D)
    sqn_h = jnp.sum(pos_h * pos_h, axis=-1)              # (H, N)
    ps_h = jnp.transpose(pos_src, (1, 0, 2))             # (H, B, D)
    pd_h = jnp.transpose(pos_dst, (1, 0, 2))
    score_s, score_d = knn_scores(pos_h, sqn_h, ps_h, pd_h)

    def knn(score_hbn):
        _, idx = jax.lax.top_k(score_hbn, k_nearest + 1)  # nearest first
        return jnp.transpose(idx[..., 1:], (1, 0, 2))     # drop query -> (B,H,K)

    src0 = knn(score_s)
    dst0 = knn(score_d)

    heads = jnp.arange(num_heads)
    pos_src0 = pos[src0, heads[None, :, None]]           # (B, H, K, D)
    pos_dst0 = pos[dst0, heads[None, :, None]]

    grads_src = grads[dst]                               # src<->dst swap as in reference
    grads_dst = grads[src]

    # gather raw 0/1 adjacency, then apply *2-1 on the (B,H,K) values only
    adj_src0 = adj_dense[src0, dst[:, None, None]] * 2.0 - 1.0
    adj_dst0 = adj_dense[src[:, None, None], dst0] * 2.0 - 1.0

    weighed = predictor_core(label_w, pos_src, pos_dst, pos_src0, pos_dst0,
                             grads_src, grads_dst, adj_src0, adj_dst0,
                             num_sentinals=num_sentinals,
                             sentinal_dist=sentinal_dist)  # (B, H)
    return jax.nn.sigmoid(jnp.mean(weighed, axis=1))       # (B,)


# ------------------------------ full forward --------------------------------

def mad_sage2_forward(params, adj_dense, edges, *, num_heads, mad_size,
                      k_nearest, num_sentinals, sentinal_dist):
    n = adj_dense.shape[0]

    # --- SAGE network (2 layers, eval mode so dropout is identity) ---
    deg = jnp.sum(adj_dense, axis=1, keepdims=True)
    inv_deg = 1.0 / jnp.maximum(deg, 1.0)                # no (N,N) adj_norm array

    e = params["sage_embedding"].shape[1]
    hid = params["w1_l"].shape[0]
    out_dim = params["w2_l"].shape[0]
    e_p, h_p, o_p = _round_up(e), _round_up(hid), _round_up(out_dim)

    # zero-pad features / weights to 128 lanes (exact; padding stays zero)
    x0 = jnp.pad(params["sage_embedding"], ((0, 0), (0, e_p - e)))
    w1l = jnp.pad(params["w1_l"].T, ((0, e_p - e), (0, h_p - hid)))
    w1r = jnp.pad(params["w1_r"].T, ((0, e_p - e), (0, h_p - hid)))
    b1 = jnp.pad(params["b1_l"], (0, h_p - hid))
    w2l = jnp.pad(params["w2_l"].T, ((0, h_p - hid), (0, o_p - out_dim)))
    w2r = jnp.pad(params["w2_r"].T, ((0, h_p - hid), (0, o_p - out_dim)))
    b2 = jnp.pad(params["b2_l"], (0, o_p - out_dim))

    h1 = sage_conv(adj_dense, inv_deg, x0, w1l, w1r, b1, True)
    h2 = sage_conv(adj_dense, inv_deg, h1, w2l, w2r, b2, False)
    grads = h2[:, :out_dim].reshape(n, num_heads, mad_size)
    pos = params["mad_embedding"]

    return mad_edge_predictor_forward(
        pos, grads, edges, adj_dense, params["label_w"],
        k_nearest=k_nearest, num_sentinals=num_sentinals,
        sentinal_dist=sentinal_dist)


# --------------------------- deterministic params ---------------------------

def init_params(key, n, num_heads, mad_size, embed, hidden):
    out_dim = num_heads * mad_size
    ks = jax.random.split(key, 6)

    def xavier(k, shape, fan_in, fan_out):
        bound = (6.0 / (fan_in + fan_out)) ** 0.5
        return jax.random.uniform(k, shape, jnp.float32, -bound, bound)

    return dict(
        mad_embedding=xavier(ks[0], (n, num_heads, mad_size), num_heads * mad_size, n),
        sage_embedding=xavier(ks[1], (n, embed), n, embed),
        w1_l=xavier(ks[2], (hidden, embed), embed, hidden),
        b1_l=jnp.zeros((hidden,), jnp.float32),
        w1_r=xavier(ks[3], (hidden, embed), embed, hidden),
        w2_l=xavier(ks[4], (out_dim, hidden), hidden, out_dim),
        b2_l=jnp.zeros((out_dim,), jnp.float32),
        w2_r=xavier(ks[5], (out_dim, hidden), hidden, out_dim),
        label_w=jnp.ones((1, 1), jnp.float32),           # label_nn.weight == 1
    )


if __name__ == "__main__":
    N, H, MAD = 64, 4, 8          # num_nodes, num_heads, mad_size (embedding_dim)
    EMBED, HIDDEN = 32, 32        # SAGE embed / hidden dims
    B = 8                         # batch of edges
    K, NUM_SENT, SENT_DIST = 16, 16, 1.0

    key = jax.random.PRNGKey(0)
    kp, ka, ke = jax.random.split(key, 3)
    params = init_params(kp, N, H, MAD, EMBED, HIDDEN)

    # symmetric 0/1 adjacency with guaranteed nonzero degree (random + ring)
    rand = jax.random.bernoulli(ka, 0.15, (N, N))
    adj = jnp.logical_or(rand, rand.T)
    ring = (jnp.eye(N, k=1, dtype=bool) | jnp.eye(N, k=-1, dtype=bool)
            | jnp.eye(N, k=N - 1, dtype=bool) | jnp.eye(N, k=-(N - 1), dtype=bool))
    adj = jnp.logical_or(adj, ring).astype(jnp.float32)

    edges = jax.random.randint(ke, (2, B), 0, N, dtype=jnp.int32)

    forward = jax.jit(functools.partial(
        mad_sage2_forward, num_heads=H, mad_size=MAD, k_nearest=K,
        num_sentinals=NUM_SENT, sentinal_dist=SENT_DIST))

    out = forward(params, adj, edges)
    out = jax.block_until_ready(out)
    assert out.shape == (B,) and bool(jnp.all(jnp.isfinite(out)))
    assert bool(jnp.all((out >= 0.0) & (out <= 1.0)))
    print("KERNEL_OK")
</pallas_src>

<mosaic_0001>
module attributes {stable_mosaic.version = 11 : i64} {
  func.func @_sage_conv_kernel(%arg0: i32, %arg1: i32, %arg2: memref<64x64xf32, #tpu.memory_space<vmem>>, %arg3: memref<64x128xf32, #tpu.memory_space<vmem>>, %arg4: memref<64x128xf32, #tpu.memory_space<vmem>>, %arg5: memref<64x1xf32, #tpu.memory_space<vmem>>, %arg6: memref<128x128xf32, #tpu.memory_space<vmem>>, %arg7: memref<128x128xf32, #tpu.memory_space<vmem>>, %arg8: memref<1x128xf32, #tpu.memory_space<vmem>>, %arg9: memref<64x128xf32, #tpu.memory_space<vmem>>, %arg10: memref<64x128xf32, #tpu.memory_space<vmem>>) attributes {dimension_semantics = [#tpu.dimension_semantics<parallel>, #tpu.dimension_semantics<arbitrary>], iteration_bounds = array<i64: 1, 1>, scalar_prefetch = 0 : i64, scratch_operands = 1 : i64, tpu.core_type = #tpu.core_type<tc>, window_params = [{transform_indices = @transform_0, window_bounds = array<i64: 64, 64>}, {transform_indices = @transform_1, window_bounds = array<i64: 64, 128>}, {transform_indices = @transform_2, window_bounds = array<i64: 64, 128>}, {transform_indices = @transform_3, window_bounds = array<i64: 64, 1>}, {pipeline_mode = #tpu.pipeline_mode<synchronous>, transform_indices = @transform_4, window_bounds = array<i64: 128, 128>}, {pipeline_mode = #tpu.pipeline_mode<synchronous>, transform_indices = @transform_5, window_bounds = array<i64: 128, 128>}, {pipeline_mode = #tpu.pipeline_mode<synchronous>, transform_indices = @transform_6, window_bounds = array<i64: 1, 128>}, {transform_indices = @transform_7, window_bounds = array<i64: 64, 128>}]} {
    %c0_i32 = arith.constant 0 : i32
    %0 = arith.cmpi eq, %arg1, %c0_i32 : i32
    %1 = arith.extui %0 : i1 to i32
    %c0_i32_0 = arith.constant 0 : i32
    %2 = arith.cmpi ne, %1, %c0_i32_0 : i32
    scf.if %2 {
      %cst_10 = arith.constant 0.000000e+00 : f32
      %12 = vector.broadcast %cst_10 : f32 to vector<64x128xf32>
      %c0_11 = arith.constant 0 : index
      %c0_12 = arith.constant 0 : index
      %13 = vector.load %arg10[%c0_11, %c0_12] : memref<64x128xf32, #tpu.memory_space<vmem>>, vector<64x128xf32>
      tpu.vector_store %arg10[%c0_11, %c0_12], %12 {strides = array<i32>} : memref<64x128xf32, #tpu.memory_space<vmem>>, vector<64x128xf32>,
    } else {
    }
    %c0 = arith.constant 0 : index
    %c0_1 = arith.constant 0 : index
    %3 = vector.load %arg10[%c0, %c0_1] : memref<64x128xf32, #tpu.memory_space<vmem>>, vector<64x128xf32>
    %c0_2 = arith.constant 0 : index
    %c0_3 = arith.constant 0 : index
    %4 = vector.load %arg2[%c0_2, %c0_3] : memref<64x64xf32, #tpu.memory_space<vmem>>, vector<64x64xf32>
    %c0_4 = arith.constant 0 : index
    %c0_5 = arith.constant 0 : index
    %5 = vector.load %arg3[%c0_4, %c0_5] : memref<64x128xf32, #tpu.memory_space<vmem>>, vector<64x128xf32>
    %cst = arith.constant dense<0.000000e+00> : vector<64x128xf32>
    %6 = tpu.matmul %4, %5, %cst {dimension_numbers = #tpu.dot_dimension_numbers<[1], [0], [0], [1], [0, 0, 1, 1], [], []>} : vector<64x64xf32>, vector<64x128xf32>, vector<64x128xf32> -> vector<64x128xf32>
    %7 = arith.addf %3, %6 : vector<64x128xf32>
    %c0_6 = arith.constant 0 : index
    %c0_7 = arith.constant 0 : index
    %8 = vector.load %arg10[%c0_6, %c0_7] : memref<64x128xf32, #tpu.memory_space<vmem>>, vector<64x128xf32>
    tpu.vector_store %arg10[%c0_6, %c0_7], %7 {strides = array<i32>} : memref<64x128xf32, #tpu.memory_space<vmem>>, vector<64x128xf32>,
    %c0_i32_8 = arith.constant 0 : i32
    %9 = arith.cmpi eq, %arg1, %c0_i32_8 : i32
    %10 = arith.extui %9 : i1 to i32
    %c0_i32_9 = arith.constant 0 : i32
    %11 = arith.cmpi ne, %10, %c0_i32_9 : i32
    scf.if %11 {
      %c0_10 = arith.constant 0 : index
      %c0_11 = arith.constant 0 : index
      %12 = vector.load %arg10[%c0_10, %c0_11] : memref<64x128xf32, #tpu.memory_space<vmem>>, vector<64x128xf32>
      %c0_12 = arith.constant 0 : index
      %c0_13 = arith.constant 0 : index
      %13 = vector.load %arg5[%c0_12, %c0_13] : memref<64x1xf32, #tpu.memory_space<vmem>>, vector<64x1xf32>
      %14 = vector.broadcast %13 : vector<64x1xf32> to vector<64x128xf32>
      %15 = arith.mulf %12, %14 : vector<64x128xf32>
      %c0_14 = arith.constant 0 : index
      %c0_15 = arith.constant 0 : index
      %16 = vector.load %arg6[%c0_14, %c0_15] : memref<128x128xf32, #tpu.memory_space<vmem>>, vector<128x128xf32>
      %cst_16 = arith.constant dense<0.000000e+00> : vector<64x128xf32>
      %17 = tpu.matmul %15, %16, %cst_16 {dimension_numbers = #tpu.dot_dimension_numbers<[1], [0], [0], [1], [0, 0, 1, 1], [], []>} : vector<64x128xf32>, vector<128x128xf32>, vector<64x128xf32> -> vector<64x128xf32>
      %c0_17 = arith.constant 0 : index
      %c0_18 = arith.constant 0 : index
      %18 = vector.load %arg4[%c0_17, %c0_18] : memref<64x128xf32, #tpu.memory_space<vmem>>, vector<64x128xf32>
      %c0_19 = arith.constant 0 : index
      %c0_20 = arith.constant 0 : index
      %19 = vector.load %arg7[%c0_19, %c0_20] : memref<128x128xf32, #tpu.memory_space<vmem>>, vector<128x128xf32>
      %cst_21 = arith.constant dense<0.000000e+00> : vector<64x128xf32>
      %20 = tpu.matmul %18, %19, %cst_21 {dimension_numbers = #tpu.dot_dimension_numbers<[1], [0], [0], [1], [0, 0, 1, 1], [], []>} : vector<64x128xf32>, vector<128x128xf32>, vector<64x128xf32> -> vector<64x128xf32>
      %21 = arith.addf %17, %20 : vector<64x128xf32>
      %c0_22 = arith.constant 0 : index
      %c0_23 = arith.constant 0 : index
      %22 = vector.load %arg8[%c0_22, %c0_23] : memref<1x128xf32, #tpu.memory_space<vmem>>, vector<1x128xf32>
      %23 = vector.broadcast %22 : vector<1x128xf32> to vector<64x128xf32>
      %24 = arith.addf %21, %23 : vector<64x128xf32>
      %cst_24 = arith.constant 0.000000e+00 : f32
      %25 = vector.broadcast %cst_24 : f32 to vector<64x128xf32>
      %26 = arith.maximumf %24, %25 : vector<64x128xf32>
      %c0_25 = arith.constant 0 : index
      %c0_26 = arith.constant 0 : index
      %27 = vector.load %arg9[%c0_25, %c0_26] : memref<64x128xf32, #tpu.memory_space<vmem>>, vector<64x128xf32>
      tpu.vector_store %arg9[%c0_25, %c0_26], %26 {strides = array<i32>} : memref<64x128xf32, #tpu.memory_space<vmem>>, vector<64x128xf32>,
    } else {
    }
    return
  }
  func.func @transform_0(%arg0: i32, %arg1: i32) -> (i32, i32) {
    %c0_i32 = arith.constant 0 : i32
    return %arg0, %arg1 : i32, i32
  }
  func.func @transform_1(%arg0: i32, %arg1: i32) -> (i32, i32) {
    %c0_i32 = arith.constant 0 : i32
    %c0_i32_0 = arith.constant 0 : i32
    return %arg1, %c0_i32 : i32, i32
  }
  func.func @transform_2(%arg0: i32, %arg1: i32) -> (i32, i32) {
    %c0_i32 = arith.constant 0 : i32
    %c0_i32_0 = arith.constant 0 : i32
    return %arg0, %c0_i32 : i32, i32
  }
  func.func @transform_3(%arg0: i32, %arg1: i32) -> (i32, i32) {
    %c0_i32 = arith.constant 0 : i32
    %c0_i32_0 = arith.constant 0 : i32
    return %arg0, %c0_i32 : i32, i32
  }
  func.func @transform_4(%arg0: i32, %arg1: i32) -> (i32, i32) {
    %c0_i32 = arith.constant 0 : i32
    %c0_i32_0 = arith.constant 0 : i32
    %c0_i32_1 = arith.constant 0 : i32
    return %c0_i32, %c0_i32_0 : i32, i32
  }
  func.func @transform_5(%arg0: i32, %arg1: i32) -> (i32, i32) {
    %c0_i32 = arith.constant 0 : i32
    %c0_i32_0 = arith.constant 0 : i32
    %c0_i32_1 = arith.constant 0 : i32
    return %c0_i32, %c0_i32_0 : i32, i32
  }
  func.func @transform_6(%arg0: i32, %arg1: i32) -> (i32, i32) {
    %c0_i32 = arith.constant 0 : i32
    %c0_i32_0 = arith.constant 0 : i32
    %c0_i32_1 = arith.constant 0 : i32
    return %c0_i32, %c0_i32_0 : i32, i32
  }
  func.func @transform_7(%arg0: i32, %arg1: i32) -> (i32, i32) {
    %c0_i32 = arith.constant 0 : i32
    %c0_i32_0 = arith.constant 0 : i32
    return %arg0, %c0_i32 : i32, i32
  }
}

module attributes {stable_mosaic.version = 11 : i64} {
  func.func @_sage_conv_kernel(%arg0: i32, %arg1: i32, %arg2: memref<64x64xf32, #tpu.memory_space<vmem>>, %arg3: memref<64x128xf32, #tpu.memory_space<vmem>>, %arg4: memref<64x128xf32, #tpu.memory_space<vmem>>, %arg5: memref<64x1xf32, #tpu.memory_space<vmem>>, %arg6: memref<128x128xf32, #tpu.memory_space<vmem>>, %arg7: memref<128x128xf32, #tpu.memory_space<vmem>>, %arg8: memref<1x128xf32, #tpu.memory_space<vmem>>, %arg9: memref<64x128xf32, #tpu.memory_space<vmem>>, %arg10: memref<64x128xf32, #tpu.memory_space<vmem>>) attributes {dimension_semantics = [#tpu.dimension_semantics<parallel>, #tpu.dimension_semantics<arbitrary>], iteration_bounds = array<i64: 1, 1>, scalar_prefetch = 0 : i64, scratch_operands = 1 : i64, tpu.core_type = #tpu.core_type<tc>, window_params = [{transform_indices = @transform_0, window_bounds = array<i64: 64, 64>}, {transform_indices = @transform_1, window_bounds = array<i64: 64, 128>}, {transform_indices = @transform_2, window_bounds = array<i64: 64, 128>}, {transform_indices = @transform_3, window_bounds = array<i64: 64, 1>}, {pipeline_mode = #tpu.pipeline_mode<synchronous>, transform_indices = @transform_4, window_bounds = array<i64: 128, 128>}, {pipeline_mode = #tpu.pipeline_mode<synchronous>, transform_indices = @transform_5, window_bounds = array<i64: 128, 128>}, {pipeline_mode = #tpu.pipeline_mode<synchronous>, transform_indices = @transform_6, window_bounds = array<i64: 1, 128>}, {transform_indices = @transform_7, window_bounds = array<i64: 64, 128>}]} {
    %c0_i32 = arith.constant 0 : i32
    %0 = arith.cmpi eq, %arg1, %c0_i32 : i32
    %1 = arith.extui %0 : i1 to i32
    %c0_i32_0 = arith.constant 0 : i32
    %2 = arith.cmpi ne, %1, %c0_i32_0 : i32
    scf.if %2 {
      %cst_10 = arith.constant 0.000000e+00 : f32
      %12 = vector.broadcast %cst_10 : f32 to vector<64x128xf32>
      %c0_11 = arith.constant 0 : index
      %c0_12 = arith.constant 0 : index
      %13 = vector.load %arg10[%c0_11, %c0_12] : memref<64x128xf32, #tpu.memory_space<vmem>>, vector<64x128xf32>
      tpu.vector_store %arg10[%c0_11, %c0_12], %12 {strides = array<i32>} : memref<64x128xf32, #tpu.memory_space<vmem>>, vector<64x128xf32>,
    } else {
    }
    %c0 = arith.constant 0 : index
    %c0_1 = arith.constant 0 : index
    %3 = vector.load %arg10[%c0, %c0_1] : memref<64x128xf32, #tpu.memory_space<vmem>>, vector<64x128xf32>
    %c0_2 = arith.constant 0 : index
    %c0_3 = arith.constant 0 : index
    %4 = vector.load %arg2[%c0_2, %c0_3] : memref<64x64xf32, #tpu.memory_space<vmem>>, vector<64x64xf32>
    %c0_4 = arith.constant 0 : index
    %c0_5 = arith.constant 0 : index
    %5 = vector.load %arg3[%c0_4, %c0_5] : memref<64x128xf32, #tpu.memory_space<vmem>>, vector<64x128xf32>
    %cst = arith.constant dense<0.000000e+00> : vector<64x128xf32>
    %6 = tpu.matmul %4, %5, %cst {dimension_numbers = #tpu.dot_dimension_numbers<[1], [0], [0], [1], [0, 0, 1, 1], [], []>} : vector<64x64xf32>, vector<64x128xf32>, vector<64x128xf32> -> vector<64x128xf32>
    %7 = arith.addf %3, %6 : vector<64x128xf32>
    %c0_6 = arith.constant 0 : index
    %c0_7 = arith.constant 0 : index
    %8 = vector.load %arg10[%c0_6, %c0_7] : memref<64x128xf32, #tpu.memory_space<vmem>>, vector<64x128xf32>
    tpu.vector_store %arg10[%c0_6, %c0_7], %7 {strides = array<i32>} : memref<64x128xf32, #tpu.memory_space<vmem>>, vector<64x128xf32>,
    %c0_i32_8 = arith.constant 0 : i32
    %9 = arith.cmpi eq, %arg1, %c0_i32_8 : i32
    %10 = arith.extui %9 : i1 to i32
    %c0_i32_9 = arith.constant 0 : i32
    %11 = arith.cmpi ne, %10, %c0_i32_9 : i32
    scf.if %11 {
      %c0_10 = arith.constant 0 : index
      %c0_11 = arith.constant 0 : index
      %12 = vector.load %arg10[%c0_10, %c0_11] : memref<64x128xf32, #tpu.memory_space<vmem>>, vector<64x128xf32>
      %c0_12 = arith.constant 0 : index
      %c0_13 = arith.constant 0 : index
      %13 = vector.load %arg5[%c0_12, %c0_13] : memref<64x1xf32, #tpu.memory_space<vmem>>, vector<64x1xf32>
      %14 = vector.broadcast %13 : vector<64x1xf32> to vector<64x128xf32>
      %15 = arith.mulf %12, %14 : vector<64x128xf32>
      %c0_14 = arith.constant 0 : index
      %c0_15 = arith.constant 0 : index
      %16 = vector.load %arg6[%c0_14, %c0_15] : memref<128x128xf32, #tpu.memory_space<vmem>>, vector<128x128xf32>
      %cst_16 = arith.constant dense<0.000000e+00> : vector<64x128xf32>
      %17 = tpu.matmul %15, %16, %cst_16 {dimension_numbers = #tpu.dot_dimension_numbers<[1], [0], [0], [1], [0, 0, 1, 1], [], []>} : vector<64x128xf32>, vector<128x128xf32>, vector<64x128xf32> -> vector<64x128xf32>
      %c0_17 = arith.constant 0 : index
      %c0_18 = arith.constant 0 : index
      %18 = vector.load %arg4[%c0_17, %c0_18] : memref<64x128xf32, #tpu.memory_space<vmem>>, vector<64x128xf32>
      %c0_19 = arith.constant 0 : index
      %c0_20 = arith.constant 0 : index
      %19 = vector.load %arg7[%c0_19, %c0_20] : memref<128x128xf32, #tpu.memory_space<vmem>>, vector<128x128xf32>
      %cst_21 = arith.constant dense<0.000000e+00> : vector<64x128xf32>
      %20 = tpu.matmul %18, %19, %cst_21 {dimension_numbers = #tpu.dot_dimension_numbers<[1], [0], [0], [1], [0, 0, 1, 1], [], []>} : vector<64x128xf32>, vector<128x128xf32>, vector<64x128xf32> -> vector<64x128xf32>
      %21 = arith.addf %17, %20 : vector<64x128xf32>
      %c0_22 = arith.constant 0 : index
      %c0_23 = arith.constant 0 : index
      %22 = vector.load %arg8[%c0_22, %c0_23] : memref<1x128xf32, #tpu.memory_space<vmem>>, vector<1x128xf32>
      %23 = vector.broadcast %22 : vector<1x128xf32> to vector<64x128xf32>
      %24 = arith.addf %21, %23 : vector<64x128xf32>
      %c0_24 = arith.constant 0 : index
      %c0_25 = arith.constant 0 : index
      %25 = vector.load %arg9[%c0_24, %c0_25] : memref<64x128xf32, #tpu.memory_space<vmem>>, vector<64x128xf32>
      tpu.vector_store %arg9[%c0_24, %c0_25], %24 {strides = array<i32>} : memref<64x128xf32, #tpu.memory_space<vmem>>, vector<64x128xf32>,
    } else {
    }
    return
  }
  func.func @transform_0(%arg0: i32, %arg1: i32) -> (i32, i32) {
    %c0_i32 = arith.constant 0 : i32
    return %arg0, %arg1 : i32, i32
  }
  func.func @transform_1(%arg0: i32, %arg1: i32) -> (i32, i32) {
    %c0_i32 = arith.constant 0 : i32
    %c0_i32_0 = arith.constant 0 : i32
    return %arg1, %c0_i32 : i32, i32
  }
  func.func @transform_2(%arg0: i32, %arg1: i32) -> (i32, i32) {
    %c0_i32 = arith.constant 0 : i32
    %c0_i32_0 = arith.constant 0 : i32
    return %arg0, %c0_i32 : i32, i32
  }
  func.func @transform_3(%arg0: i32, %arg1: i32) -> (i32, i32) {
    %c0_i32 = arith.constant 0 : i32
    %c0_i32_0 = arith.constant 0 : i32
    return %arg0, %c0_i32 : i32, i32
  }
  func.func @transform_4(%arg0: i32, %arg1: i32) -> (i32, i32) {
    %c0_i32 = arith.constant 0 : i32
    %c0_i32_0 = arith.constant 0 : i32
    %c0_i32_1 = arith.constant 0 : i32
    return %c0_i32, %c0_i32_0 : i32, i32
  }
  func.func @transform_5(%arg0: i32, %arg1: i32) -> (i32, i32) {
    %c0_i32 = arith.constant 0 : i32
    %c0_i32_0 = arith.constant 0 : i32
    %c0_i32_1 = arith.constant 0 : i32
    return %c0_i32, %c0_i32_0 : i32, i32
  }
  func.func @transform_6(%arg0: i32, %arg1: i32) -> (i32, i32) {
    %c0_i32 = arith.constant 0 : i32
    %c0_i32_0 = arith.constant 0 : i32
    %c0_i32_1 = arith.constant 0 : i32
    return %c0_i32, %c0_i32_0 : i32, i32
  }
  func.func @transform_7(%arg0: i32, %arg1: i32) -> (i32, i32) {
    %c0_i32 = arith.constant 0 : i32
    %c0_i32_0 = arith.constant 0 : i32
    return %arg0, %c0_i32 : i32, i32
  }
}

module attributes {stable_mosaic.version = 11 : i64} {
  func.func @_knn_score_kernel(%arg0: memref<4x64x8xf32, #tpu.memory_space<vmem>>, %arg1: memref<4x64xf32, #tpu.memory_space<vmem>>, %arg2: memref<4x8x8xf32, #tpu.memory_space<vmem>>, %arg3: memref<4x8x8xf32, #tpu.memory_space<vmem>>, %arg4: memref<4x8x64xf32, #tpu.memory_space<vmem>>, %arg5: memref<4x8x64xf32, #tpu.memory_space<vmem>>) attributes {dimension_semantics = [], scalar_prefetch = 0 : i64, scratch_operands = 0 : i64, tpu.core_type = #tpu.core_type<tc>} {
    %c0 = arith.constant 0 : index
    %c0_0 = arith.constant 0 : index
    %c0_1 = arith.constant 0 : index
    %0 = vector.load %arg0[%c0, %c0_0, %c0_1] : memref<4x64x8xf32, #tpu.memory_space<vmem>>, vector<4x64x8xf32>
    %c0_2 = arith.constant 0 : index
    %c0_3 = arith.constant 0 : index
    %1 = vector.load %arg1[%c0_2, %c0_3] : memref<4x64xf32, #tpu.memory_space<vmem>>, vector<4x64xf32>
    %c0_4 = arith.constant 0 : index
    %c0_5 = arith.constant 0 : index
    %c0_6 = arith.constant 0 : index
    %2 = vector.load %arg2[%c0_4, %c0_5, %c0_6] : memref<4x8x8xf32, #tpu.memory_space<vmem>>, vector<4x8x8xf32>
    "tpu.trace_start"() <{level = 10 : i32, message = "hbd,hnd->hbn"}> : () -> ()
    %cst = arith.constant dense<0.000000e+00> : vector<4x8x64xf32>
    %3 = tpu.matmul %2, %0, %cst {dimension_numbers = #tpu.dot_dimension_numbers<[2], [2], [1], [1], [0, 0, 0, 1, 1, 1], [0], [0]>} : vector<4x8x8xf32>, vector<4x64x8xf32>, vector<4x8x64xf32> -> vector<4x8x64xf32>
    "tpu.trace_stop"() : () -> ()
    %c0_7 = arith.constant 0 : index
    %c0_8 = arith.constant 0 : index
    %c0_9 = arith.constant 0 : index
    %4 = vector.load %arg3[%c0_7, %c0_8, %c0_9] : memref<4x8x8xf32, #tpu.memory_space<vmem>>, vector<4x8x8xf32>
    "tpu.trace_start"() <{level = 10 : i32, message = "hbd,hnd->hbn"}> : () -> ()
    %cst_10 = arith.constant dense<0.000000e+00> : vector<4x8x64xf32>
    %5 = tpu.matmul %4, %0, %cst_10 {dimension_numbers = #tpu.dot_dimension_numbers<[2], [2], [1], [1], [0, 0, 0, 1, 1, 1], [0], [0]>} : vector<4x8x8xf32>, vector<4x64x8xf32>, vector<4x8x64xf32> -> vector<4x8x64xf32>
    "tpu.trace_stop"() : () -> ()
    %cst_11 = arith.constant 2.000000e+00 : f32
    %6 = vector.broadcast %cst_11 : f32 to vector<4x8x64xf32>
    %7 = arith.mulf %6, %3 : vector<4x8x64xf32>
    %8 = vector.shape_cast %1 : vector<4x64xf32> to vector<4x1x64xf32>
    %9 = vector.broadcast %8 : vector<4x1x64xf32> to vector<4x8x64xf32>
    %10 = arith.subf %7, %9 : vector<4x8x64xf32>
    %c0_12 = arith.constant 0 : index
    %c0_13 = arith.constant 0 : index
    %c0_14 = arith.constant 0 : index
    %11 = vector.load %arg4[%c0_12, %c0_13, %c0_14] : memref<4x8x64xf32, #tpu.memory_space<vmem>>, vector<4x8x64xf32>
    tpu.vector_store %arg4[%c0_12, %c0_13, %c0_14], %10 {strides = array<i32>} : memref<4x8x64xf32, #tpu.memory_space<vmem>>, vector<4x8x64xf32>,
    %cst_15 = arith.constant 2.000000e+00 : f32
    %12 = vector.broadcast %cst_15 : f32 to vector<4x8x64xf32>
    %13 = arith.mulf %12, %5 : vector<4x8x64xf32>
    %14 = vector.shape_cast %1 : vector<4x64xf32> to vector<4x1x64xf32>
    %15 = vector.broadcast %14 : vector<4x1x64xf32> to vector<4x8x64xf32>
    %16 = arith.subf %13, %15 : vector<4x8x64xf32>
    %c0_16 = arith.constant 0 : index
    %c0_17 = arith.constant 0 : index
    %c0_18 = arith.constant 0 : index
    %17 = vector.load %arg5[%c0_16, %c0_17, %c0_18] : memref<4x8x64xf32, #tpu.memory_space<vmem>>, vector<4x8x64xf32>
    tpu.vector_store %arg5[%c0_16, %c0_17, %c0_18], %16 {strides = array<i32>} : memref<4x8x64xf32, #tpu.memory_space<vmem>>, vector<4x8x64xf32>,
    return
  }
}

module attributes {stable_mosaic.version = 11 : i64} {
  func.func @_predictor_kernel(%arg0: memref<1x1xf32, #tpu.memory_space<smem>>, %arg1: memref<32x8xf32, #tpu.memory_space<vmem>>, %arg2: memref<32x8xf32, #tpu.memory_space<vmem>>, %arg3: memref<32x16x8xf32, #tpu.memory_space<vmem>>, %arg4: memref<32x16x8xf32, #tpu.memory_space<vmem>>, %arg5: memref<32x8xf32, #tpu.memory_space<vmem>>, %arg6: memref<32x8xf32, #tpu.memory_space<vmem>>, %arg7: memref<32x16xf32, #tpu.memory_space<vmem>>, %arg8: memref<32x16xf32, #tpu.memory_space<vmem>>, %arg9: memref<32x1xf32, #tpu.memory_space<vmem>>) attributes {dimension_semantics = [], scalar_prefetch = 0 : i64, scratch_operands = 0 : i64, tpu.core_type = #tpu.core_type<tc>} {
    %c0 = arith.constant 0 : index
    %c0_0 = arith.constant 0 : index
    %0 = memref.load %arg0[%c0, %c0_0] : memref<1x1xf32, #tpu.memory_space<smem>>
    %c0_1 = arith.constant 0 : index
    %c0_2 = arith.constant 0 : index
    %1 = vector.load %arg1[%c0_1, %c0_2] : memref<32x8xf32, #tpu.memory_space<vmem>>, vector<32x8xf32>
    %c0_3 = arith.constant 0 : index
    %c0_4 = arith.constant 0 : index
    %2 = vector.load %arg2[%c0_3, %c0_4] : memref<32x8xf32, #tpu.memory_space<vmem>>, vector<32x8xf32>
    %c0_5 = arith.constant 0 : index
    %c0_6 = arith.constant 0 : index
    %3 = vector.load %arg5[%c0_5, %c0_6] : memref<32x8xf32, #tpu.memory_space<vmem>>, vector<32x8xf32>
    %c0_7 = arith.constant 0 : index
    %c0_8 = arith.constant 0 : index
    %4 = vector.load %arg6[%c0_7, %c0_8] : memref<32x8xf32, #tpu.memory_space<vmem>>, vector<32x8xf32>
    %c0_9 = arith.constant 0 : index
    %c0_10 = arith.constant 0 : index
    %c0_11 = arith.constant 0 : index
    %5 = vector.load %arg3[%c0_9, %c0_10, %c0_11] : memref<32x16x8xf32, #tpu.memory_space<vmem>>, vector<32x16x8xf32>
    %c0_12 = arith.constant 0 : index
    %c0_13 = arith.constant 0 : index
    %c0_14 = arith.constant 0 : index
    %6 = vector.load %arg4[%c0_12, %c0_13, %c0_14] : memref<32x16x8xf32, #tpu.memory_space<vmem>>, vector<32x16x8xf32>
    %7 = vector.shape_cast %1 : vector<32x8xf32> to vector<32x1x8xf32>
    %8 = vector.broadcast %7 : vector<32x1x8xf32> to vector<32x16x8xf32>
    %9 = arith.subf %8, %5 : vector<32x16x8xf32>
    %10 = vector.shape_cast %2 : vector<32x8xf32> to vector<32x1x8xf32>
    %11 = vector.broadcast %10 : vector<32x1x8xf32> to vector<32x16x8xf32>
    %12 = arith.subf %11, %6 : vector<32x16x8xf32>
    %13 = vector.shape_cast %3 : vector<32x8xf32> to vector<32x1x8xf32>
    %14 = vector.broadcast %13 : vector<32x1x8xf32> to vector<32x16x8xf32>
    %15 = arith.mulf %9, %14 : vector<32x16x8xf32>
    %cst = arith.constant dense<0.000000e+00> : vector<32x16xf32>
    %16 = vector.multi_reduction <add>, %15, %cst [2] : vector<32x16x8xf32> to vector<32x16xf32>
    %17 = vector.shape_cast %4 : vector<32x8xf32> to vector<32x1x8xf32>
    %18 = vector.broadcast %17 : vector<32x1x8xf32> to vector<32x16x8xf32>
    %19 = arith.mulf %12, %18 : vector<32x16x8xf32>
    %cst_15 = arith.constant dense<0.000000e+00> : vector<32x16xf32>
    %20 = vector.multi_reduction <add>, %19, %cst_15 [2] : vector<32x16x8xf32> to vector<32x16xf32>
    %c0_16 = arith.constant 0 : index
    %c0_17 = arith.constant 0 : index
    %21 = vector.load %arg7[%c0_16, %c0_17] : memref<32x16xf32, #tpu.memory_space<vmem>>, vector<32x16xf32>
    %22 = vector.broadcast %0 : f32 to vector<32x16xf32>
    %23 = arith.mulf %22, %21 : vector<32x16xf32>
    %24 = arith.addf %23, %16 : vector<32x16xf32>
    %c0_18 = arith.constant 0 : index
    %c0_19 = arith.constant 0 : index
    %25 = vector.load %arg8[%c0_18, %c0_19] : memref<32x16xf32, #tpu.memory_space<vmem>>, vector<32x16xf32>
    %26 = vector.broadcast %0 : f32 to vector<32x16xf32>
    %27 = arith.mulf %26, %25 : vector<32x16xf32>
    %28 = arith.addf %27, %20 : vector<32x16xf32>
    %29 = arith.mulf %9, %9 : vector<32x16x8xf32>
    %cst_20 = arith.constant dense<0.000000e+00> : vector<32x16xf32>
    %30 = vector.multi_reduction <add>, %29, %cst_20 [2] : vector<32x16x8xf32> to vector<32x16xf32>
    %31 = math.sqrt %30 : vector<32x16xf32>
    %32 = arith.mulf %12, %12 : vector<32x16x8xf32>
    %cst_21 = arith.constant dense<0.000000e+00> : vector<32x16xf32>
    %33 = vector.multi_reduction <add>, %32, %cst_21 [2] : vector<32x16x8xf32> to vector<32x16xf32>
    %34 = math.sqrt %33 : vector<32x16xf32>
    %cst_22 = arith.constant 0.000000e+00 : f32
    %35 = vector.broadcast %cst_22 : f32 to vector<32x16xf32>
    %36 = arith.subf %35, %31 : vector<32x16xf32>
    %cst_23 = arith.constant 0.000000e+00 : f32
    %37 = vector.broadcast %cst_23 : f32 to vector<32x16xf32>
    %38 = arith.subf %37, %34 : vector<32x16xf32>
    %cst_24 = arith.constant dense<0xFF800000> : vector<32xf32>
    %39 = vector.multi_reduction <maximumf>, %36, %cst_24 [1] : vector<32x16xf32> to vector<32xf32>
    %40 = vector.shape_cast %39 : vector<32xf32> to vector<32x1xf32>
    %cst_25 = arith.constant dense<0xFF800000> : vector<32xf32>
    %41 = vector.multi_reduction <maximumf>, %38, %cst_25 [1] : vector<32x16xf32> to vector<32xf32>
    %42 = vector.shape_cast %41 : vector<32xf32> to vector<32x1xf32>
    %43 = arith.maximumf %40, %42 : vector<32x1xf32>
    %cst_26 = arith.constant -1.000000e+00 : f32
    %44 = vector.broadcast %cst_26 : f32 to vector<32x1xf32>
    %45 = arith.maximumf %43, %44 : vector<32x1xf32>
    %46 = vector.broadcast %45 : vector<32x1xf32> to vector<32x16xf32>
    %47 = arith.subf %36, %46 : vector<32x16xf32>
    %48 = math.exp %47 : vector<32x16xf32>
    %49 = vector.broadcast %45 : vector<32x1xf32> to vector<32x16xf32>
    %50 = arith.subf %38, %49 : vector<32x16xf32>
    %51 = math.exp %50 : vector<32x16xf32>
    %cst_27 = arith.constant dense<0.000000e+00> : vector<32xf32>
    %52 = vector.multi_reduction <add>, %48, %cst_27 [1] : vector<32x16xf32> to vector<32xf32>
    %53 = vector.shape_cast %52 : vector<32xf32> to vector<32x1xf32>
    %cst_28 = arith.constant dense<0.000000e+00> : vector<32xf32>
    %54 = vector.multi_reduction <add>, %51, %cst_28 [1] : vector<32x16xf32> to vector<32xf32>
    %55 = vector.shape_cast %54 : vector<32xf32> to vector<32x1xf32>
    %56 = arith.addf %53, %55 : vector<32x1xf32>
    %cst_29 = arith.constant -1.000000e+00 : f32
    %57 = vector.broadcast %cst_29 : f32 to vector<32x1xf32>
    %58 = arith.subf %57, %45 : vector<32x1xf32>
    %59 = math.exp %58 : vector<32x1xf32>
    %cst_30 = arith.constant 1.600000e+01 : f32
    %60 = vector.broadcast %cst_30 : f32 to vector<32x1xf32>
    %61 = arith.mulf %60, %59 : vector<32x1xf32>
    %62 = arith.addf %56, %61 : vector<32x1xf32>
    %63 = tpu.reciprocal %62 {approx = true} : vector<32x1xf32> -> vector<32x1xf32>
    %64 = arith.mulf %48, %24 : vector<32x16xf32>
    %cst_31 = arith.constant dense<0.000000e+00> : vector<32xf32>
    %65 = vector.multi_reduction <add>, %64, %cst_31 [1] : vector<32x16xf32> to vector<32xf32>
    %66 = vector.shape_cast %65 : vector<32xf32> to vector<32x1xf32>
    %67 = arith.mulf %51, %28 : vector<32x16xf32>
    %cst_32 = arith.constant dense<0.000000e+00> : vector<32xf32>
    %68 = vector.multi_reduction <add>, %67, %cst_32 [1] : vector<32x16xf32> to vector<32xf32>
    %69 = vector.shape_cast %68 : vector<32xf32> to vector<32x1xf32>
    %70 = arith.addf %66, %69 : vector<32x1xf32>
    %71 = arith.mulf %70, %63 : vector<32x1xf32>
    %c0_33 = arith.constant 0 : index
    %c0_34 = arith.constant 0 : index
    %72 = vector.load %arg9[%c0_33, %c0_34] : memref<32x1xf32, #tpu.memory_space<vmem>>, vector<32x1xf32>
    tpu.vector_store %arg9[%c0_33, %c0_34], %71 {strides = array<i32>} : memref<32x1xf32, #tpu.memory_space<vmem>>, vector<32x1xf32>,
    return
  }
}

</mosaic_0001>

<llo_original>
// kernel: mad_sage2_forward.5
$region0: #{mad_sage2_forward.5}
  #allocation0 [shape = 'u32[]', space=smem, size = 0x4, offset = 0x4, fixed_abs, tag = 'smem constant byte address 0x4 - core index']
  #allocation1 [shape = 'u32[72,128]{1,0:T(1,128)}', space=vmem, size = 0x9000, scoped, tag = 'internal scratch']
  #allocation2 [shape = 'f32[64,128]{1,0:T(8,128)}', space=vmem, size = 0x8000, scoped, tag = 'scratch operand']
  %s0 = inlined_call_operand.vmem [shape: f32[64,64], index: 0, kind: input, shape index: {}]
  %s1 = inlined_call_operand.vmem [shape: f32[64,128], index: 1, kind: input, shape index: {}, may-alias: {1,2}]
  %s2 = inlined_call_operand.vmem [shape: f32[64,128], index: 2, kind: input, shape index: {}, may-alias: {1,2}]
  %s3 = inlined_call_operand.vmem [shape: f32[64,1], index: 3, kind: input, shape index: {}]
  %s4 = inlined_call_operand.vmem [shape: f32[128,128], index: 4, kind: input, shape index: {}]
  %s5 = inlined_call_operand.vmem [shape: f32[128,128], index: 5, kind: input, shape index: {}]
  %s6 = inlined_call_operand.vmem [shape: f32[1,128], index: 6, kind: input, shape index: {}]
  %s7 = inlined_call_operand.vmem [shape: f32[64,128], index: 7, kind: output, shape index: {}]
  %s8 = sld [smem:[#allocation0]]
  $region46: #{mad_sage2_forward.5} parent=0
    _
  %s10 = ssub.s32 1, %s8
  %s11 = scalar_select 0, %s10, %s8
  // Predicated region
  $region2: #{mad_sage2_forward.5} parent=0 // pred_check
    _
  $region3: #{mad_sage2_forward.5} parent=0 // pred_check_branch
    %13 = sbr.rel (0) target = $region5
  $region4: #{mad_sage2_forward.5} parent=0 // pred_region
    _
  $region5: #{mad_sage2_forward.5} parent=0 // pred_fallthru
    _
  // Predicated region
  $region6: #{mad_sage2_forward.5} parent=0 // pred_check
    _
  $region7: #{mad_sage2_forward.5} parent=0 // pred_check_branch
    %15 = sbr.rel (0) target = $region9
  $region8: #{mad_sage2_forward.5} parent=0 // pred_region
    _
  $region9: #{mad_sage2_forward.5} parent=0 // pred_fallthru
    _
  // Predicated region
  $region10: #{mad_sage2_forward.5} parent=0 // pred_check
    _
  $region11: #{mad_sage2_forward.5} parent=0 // pred_check_branch
    %17 = sbr.rel (0) target = $region13
  $region12: #{mad_sage2_forward.5} parent=0 // pred_region
    _
  $region13: #{mad_sage2_forward.5} parent=0 // pred_fallthru
    _
  // Predicated region
  $region14: #{mad_sage2_forward.5} parent=0 // pred_check
    _
  $region15: #{mad_sage2_forward.5} parent=0 // pred_check_branch
    %19 = sbr.rel (0) target = $region17
  $region16: #{mad_sage2_forward.5} parent=0 // pred_region
    _
  $region17: #{mad_sage2_forward.5} parent=0 // pred_fallthru
    _
  // Predicated region
  $region18: #{mad_sage2_forward.5} parent=0 // pred_check
    _
  $region19: #{mad_sage2_forward.5} parent=0 // pred_check_branch
    %21 = sbr.rel (0) target = $region21
  $region20: #{mad_sage2_forward.5} parent=0 // pred_region
    _
  $region21: #{mad_sage2_forward.5} parent=0 // pred_fallthru
    _
  // Predicated region
  $region22: #{mad_sage2_forward.5} parent=0 // pred_check
    _
  $region23: #{mad_sage2_forward.5} parent=0 // pred_check_branch
    %23 = sbr.rel (0) target = $region25
  $region24: #{mad_sage2_forward.5} parent=0 // pred_region
    _
  $region25: #{mad_sage2_forward.5} parent=0 // pred_fallthru
    _
  // Predicated region
  $region26: #{mad_sage2_forward.5} parent=0 // pred_check
    _
  $region27: #{mad_sage2_forward.5} parent=0 // pred_check_branch
    %25 = sbr.rel (0) target = $region29
  $region28: #{mad_sage2_forward.5} parent=0 // pred_region
    _
  $region29: #{mad_sage2_forward.5} parent=0 // pred_fallthru
    _
  %p26 = scmp.eq.s32.totalorder 0, 0
  // Predicated region
  $region30: #{mad_sage2_forward.5} parent=0 // pred_check
    %p27 = pneg %p26
  $region31: #{mad_sage2_forward.5} parent=0 // pred_check_branch
    %29 = sbr.rel (%p27) target = $region33
  $region32: #{mad_sage2_forward.5} parent=0 // pred_region
    %30 = vst [vmem:[#allocation2] sm:$0xff] 0.0
    %31 = vst [vmem:[#allocation2 + $0x8] sm:$0xff] 0.0
    %32 = vst [vmem:[#allocation2 + $0x10] sm:$0xff] 0.0
    %33 = vst [vmem:[#allocation2 + $0x18] sm:$0xff] 0.0
    %34 = vst [vmem:[#allocation2 + $0x20] sm:$0xff] 0.0
    %35 = vst [vmem:[#allocation2 + $0x28] sm:$0xff] 0.0
    %36 = vst [vmem:[#allocation2 + $0x30] sm:$0xff] 0.0
    %37 = vst [vmem:[#allocation2 + $0x38] sm:$0xff] 0.0
  $region33: #{mad_sage2_forward.5} parent=0 // pred_fallthru
    _
  %v38 = vld [vmem:[#allocation2] sm:$0xff]
  %v39 = vld [vmem:[#allocation2 + $0x8] sm:$0xff]
  %v40 = vld [vmem:[#allocation2 + $0x10] sm:$0xff]
  %v41 = vld [vmem:[#allocation2 + $0x18] sm:$0xff]
  %v42 = vld [vmem:[#allocation2 + $0x20] sm:$0xff]
  %v43 = vld [vmem:[#allocation2 + $0x28] sm:$0xff]
  %v44 = vld [vmem:[#allocation2 + $0x30] sm:$0xff]
  %v45 = vld [vmem:[#allocation2 + $0x38] sm:$0xff]
  %v46 = vld [vmem:[%s0] sm:$0xff]
  %v47 = vld [vmem:[%s0 + $0x8] sm:$0xff]
  %v48 = vld [vmem:[%s0 + $0x10] sm:$0xff]
  %v49 = vld [vmem:[%s0 + $0x18] sm:$0xff]
  %v50 = vld [vmem:[%s0 + $0x20] sm:$0xff]
  %v51 = vld [vmem:[%s0 + $0x28] sm:$0xff]
  %v52 = vld [vmem:[%s0 + $0x30] sm:$0xff]
  %v53 = vld [vmem:[%s0 + $0x38] sm:$0xff]
  %v54 = vld [vmem:[%s1] sm:$0xff]
  %v55 = vld [vmem:[%s1 + $0x8] sm:$0xff]
  %v56 = vld [vmem:[%s1 + $0x10] sm:$0xff]
  %v57 = vld [vmem:[%s1 + $0x18] sm:$0xff]
  %v58 = vld [vmem:[%s1 + $0x20] sm:$0xff]
  %v59 = vld [vmem:[%s1 + $0x28] sm:$0xff]
  %v60 = vld [vmem:[%s1 + $0x30] sm:$0xff]
  %v61 = vld [vmem:[%s1 + $0x38] sm:$0xff]
  %vm62 = vcmask 523264
  %v64 = vsel %vm62, %v46, 0
  %v67 = vsel %vm62, %v47, 0
  %v70 = vsel %vm62, %v48, 0
  %v73 = vsel %vm62, %v49, 0
  %v76 = vsel %vm62, %v50, 0
  %v79 = vsel %vm62, %v51, 0
  %v82 = vsel %vm62, %v52, 0
  %v85 = vsel %vm62, %v53, 0
  %87 = vmatpush.msra.mxu0 0.0
  %88 = vmatpush.msra.mxu0 0.0
  %89 = vmatpush.msra.mxu0 0.0
  %90 = vmatpush.msra.mxu0 0.0
  %91 = vmatpush.msra.mxu0 0.0
  %92 = vmatpush.msra.mxu0 0.0
  %93 = vmatpush.msra.mxu0 0.0
  %94 = vmatpush.msra.mxu0 0.0
  %95 = vmatpush.msra.mxu0 %v61
  %96 = vmatpush.msra.mxu0 %v60
  %97 = vmatpush.msra.mxu0 %v59
  %98 = vmatpush.msra.mxu0 %v58
  %99 = vmatpush.msra.mxu0 %v57
  %100 = vmatpush.msra.mxu0 %v56
  %101 = vmatpush.msra.mxu0 %v55
  %102 = vmatpush.msra.mxu0 %v54
  %103 = vmatmul.f32.gmra.mxu0 %v64
  %v104 = vpop.f32.mrf.mxu0
  %v105 = vadd.f32 0.0, %v104
  %106 = vmatmul.f32.gmra.mxu0 %v67
  %v107 = vpop.f32.mrf.mxu0
  %v108 = vadd.f32 0.0, %v107
  %109 = vmatmul.f32.gmra.mxu0 %v70
  %v110 = vpop.f32.mrf.mxu0
  %v111 = vadd.f32 0.0, %v110
  %112 = vmatmul.f32.gmra.mxu0 %v73
  %v113 = vpop.f32.mrf.mxu0
  %v114 = vadd.f32 0.0, %v113
  %115 = vmatmul.f32.gmra.mxu0 %v76
  %v116 = vpop.f32.mrf.mxu0
  %v117 = vadd.f32 0.0, %v116
  %118 = vmatmul.f32.gmra.mxu0 %v79
  %v119 = vpop.f32.mrf.mxu0
  %v120 = vadd.f32 0.0, %v119
  %121 = vmatmul.f32.gmra.mxu0 %v82
  %v122 = vpop.f32.mrf.mxu0
  %v123 = vadd.f32 0.0, %v122
  %124 = vmatmul.f32.gmra.mxu0 %v85
  %v125 = vpop.f32.mrf.mxu0
  %v126 = vadd.f32 0.0, %v125
  %127 = vdwg.mxu0
  %v128 = vadd.f32 %v38, %v105
  %v129 = vadd.f32 %v39, %v108
  %v130 = vadd.f32 %v40, %v111
  %v131 = vadd.f32 %v41, %v114
  %v132 = vadd.f32 %v42, %v117
  %v133 = vadd.f32 %v43, %v120
  %v134 = vadd.f32 %v44, %v123
  %v135 = vadd.f32 %v45, %v126
  %136 = vst [vmem:[#allocation2] sm:$0xff] %v128
  %137 = vst [vmem:[#allocation2 + $0x8] sm:$0xff] %v129
  %138 = vst [vmem:[#allocation2 + $0x10] sm:$0xff] %v130
  %139 = vst [vmem:[#allocation2 + $0x18] sm:$0xff] %v131
  %140 = vst [vmem:[#allocation2 + $0x20] sm:$0xff] %v132
  %141 = vst [vmem:[#allocation2 + $0x28] sm:$0xff] %v133
  %142 = vst [vmem:[#allocation2 + $0x30] sm:$0xff] %v134
  %143 = vst [vmem:[#allocation2 + $0x38] sm:$0xff] %v135
  // Predicated region
  $region34: #{mad_sage2_forward.5} parent=0 // pred_check
    %p144 = pneg %p26
  $region35: #{mad_sage2_forward.5} parent=0 // pred_check_branch
    %146 = sbr.rel (%p144) target = $region37
  $region36: #{mad_sage2_forward.5} parent=0 // pred_region
    %v147 = vld [vmem:[#allocation2] sm:$0xff]
    %v148 = vld [vmem:[#allocation2 + $0x8] sm:$0xff]
    %v149 = vld [vmem:[#allocation2 + $0x10] sm:$0xff]
    %v150 = vld [vmem:[#allocation2 + $0x18] sm:$0xff]
    %v151 = vld [vmem:[#allocation2 + $0x20] sm:$0xff]
    %v152 = vld [vmem:[#allocation2 + $0x28] sm:$0xff]
    %v153 = vld [vmem:[#allocation2 + $0x30] sm:$0xff]
    %v154 = vld [vmem:[#allocation2 + $0x38] sm:$0xff]
    %v155 = vld [vmem:[%s3] sm:$0xff]
    %v156 = vld [vmem:[%s3 + $0x8] sm:$0xff]
    %v157 = vld [vmem:[%s3 + $0x10] sm:$0xff]
    %v158 = vld [vmem:[%s3 + $0x18] sm:$0xff]
    %v159 = vld [vmem:[%s3 + $0x20] sm:$0xff]
    %v160 = vld [vmem:[%s3 + $0x28] sm:$0xff]
    %v161 = vld [vmem:[%s3 + $0x30] sm:$0xff]
    %v162 = vld [vmem:[%s3 + $0x38] sm:$0xff]
    %164 = vset.pattern.permute.xlu0 0
    %165 = vperm.xlu0 %164, %v155
    %v166 = vpop.permute.xlu0 %165
    %169 = vset.pattern.permute.xlu0 0
    %170 = vperm.xlu0 %169, %v156
    %v171 = vpop.permute.xlu0 %170
    %174 = vset.pattern.permute.xlu0 0
    %175 = vperm.xlu0 %174, %v157
    %v176 = vpop.permute.xlu0 %175
    %179 = vset.pattern.permute.xlu0 0
    %180 = vperm.xlu0 %179, %v158
    %v181 = vpop.permute.xlu0 %180
    %184 = vset.pattern.permute.xlu0 0
    %185 = vperm.xlu0 %184, %v159
    %v186 = vpop.permute.xlu0 %185
    %189 = vset.pattern.permute.xlu0 0
    %190 = vperm.xlu0 %189, %v160
    %v191 = vpop.permute.xlu0 %190
    %194 = vset.pattern.permute.xlu0 0
    %195 = vperm.xlu0 %194, %v161
    %v196 = vpop.permute.xlu0 %195
    %199 = vset.pattern.permute.xlu0 0
    %200 = vperm.xlu0 %199, %v162
    %v201 = vpop.permute.xlu0 %200
    %v203 = vmul.f32 %v147, %v166
    %v204 = vmul.f32 %v148, %v171
    %v205 = vmul.f32 %v149, %v176
    %v206 = vmul.f32 %v150, %v181
    %v207 = vmul.f32 %v151, %v186
    %v208 = vmul.f32 %v152, %v191
    %v209 = vmul.f32 %v153, %v196
    %v210 = vmul.f32 %v154, %v201
    %v211 = vld [vmem:[%s4] sm:$0xff]
    %v212 = vld [vmem:[%s4 + $0x8] sm:$0xff]
    %v213 = vld [vmem:[%s4 + $0x10] sm:$0xff]
    %v214 = vld [vmem:[%s4 + $0x18] sm:$0xff]
    %v215 = vld [vmem:[%s4 + $0x20] sm:$0xff]
    %v216 = vld [vmem:[%s4 + $0x28] sm:$0xff]
    %v217 = vld [vmem:[%s4 + $0x30] sm:$0xff]
    %v218 = vld [vmem:[%s4 + $0x38] sm:$0xff]
    %v219 = vld [vmem:[%s4 + $0x40] sm:$0xff]
    %v220 = vld [vmem:[%s4 + $0x48] sm:$0xff]
    %v221 = vld [vmem:[%s4 + $0x50] sm:$0xff]
    %v222 = vld [vmem:[%s4 + $0x58] sm:$0xff]
    %v223 = vld [vmem:[%s4 + $0x60] sm:$0xff]
    %v224 = vld [vmem:[%s4 + $0x68] sm:$0xff]
    %v225 = vld [vmem:[%s4 + $0x70] sm:$0xff]
    %v226 = vld [vmem:[%s4 + $0x78] sm:$0xff]
    %v227 = vld [vmem:[%s2] sm:$0xff]
    %v228 = vld [vmem:[%s2 + $0x8] sm:$0xff]
    %v229 = vld [vmem:[%s2 + $0x10] sm:$0xff]
    %v230 = vld [vmem:[%s2 + $0x18] sm:$0xff]
    %v231 = vld [vmem:[%s2 + $0x20] sm:$0xff]
    %v232 = vld [vmem:[%s2 + $0x28] sm:$0xff]
    %v233 = vld [vmem:[%s2 + $0x30] sm:$0xff]
    %v234 = vld [vmem:[%s2 + $0x38] sm:$0xff]
    %v235 = vld [vmem:[%s5] sm:$0xff]
    %v236 = vld [vmem:[%s5 + $0x8] sm:$0xff]
    %v237 = vld [vmem:[%s5 + $0x10] sm:$0xff]
    %v238 = vld [vmem:[%s5 + $0x18] sm:$0xff]
    %v239 = vld [vmem:[%s5 + $0x20] sm:$0xff]
    %v240 = vld [vmem:[%s5 + $0x28] sm:$0xff]
    %v241 = vld [vmem:[%s5 + $0x30] sm:$0xff]
    %v242 = vld [vmem:[%s5 + $0x38] sm:$0xff]
    %v243 = vld [vmem:[%s5 + $0x40] sm:$0xff]
    %v244 = vld [vmem:[%s5 + $0x48] sm:$0xff]
    %v245 = vld [vmem:[%s5 + $0x50] sm:$0xff]
    %v246 = vld [vmem:[%s5 + $0x58] sm:$0xff]
    %v247 = vld [vmem:[%s5 + $0x60] sm:$0xff]
    %v248 = vld [vmem:[%s5 + $0x68] sm:$0xff]
    %v249 = vld [vmem:[%s5 + $0x70] sm:$0xff]
    %v250 = vld [vmem:[%s5 + $0x78] sm:$0xff]
    %251 = vmatpush.msra.mxu0 %v250
    %252 = vmatpush.msra.mxu0 %v249
    %253 = vmatpush.msra.mxu0 %v248
    %254 = vmatpush.msra.mxu0 %v247
    %255 = vmatpush.msra.mxu0 %v246
    %256 = vmatpush.msra.mxu0 %v245
    %257 = vmatpush.msra.mxu0 %v244
    %258 = vmatpush.msra.mxu0 %v243
    %259 = vmatpush.msra.mxu0 %v242
    %260 = vmatpush.msra.mxu0 %v241
    %261 = vmatpush.msra.mxu0 %v240
    %262 = vmatpush.msra.mxu0 %v239
    %263 = vmatpush.msra.mxu0 %v238
    %264 = vmatpush.msra.mxu0 %v237
    %265 = vmatpush.msra.mxu0 %v236
    %266 = vmatpush.msra.mxu0 %v235
    %267 = vmatmul.f32.gmra.mxu0 %v227
    %v268 = vpop.f32.mrf.mxu0
    %v269 = vadd.f32 0.0, %v268
    %270 = vmatmul.f32.gmra.mxu0 %v228
    %v271 = vpop.f32.mrf.mxu0
    %v272 = vadd.f32 0.0, %v271
    %273 = vmatmul.f32.gmra.mxu0 %v229
    %v274 = vpop.f32.mrf.mxu0
    %v275 = vadd.f32 0.0, %v274
    %276 = vmatmul.f32.gmra.mxu0 %v230
    %v277 = vpop.f32.mrf.mxu0
    %v278 = vadd.f32 0.0, %v277
    %279 = vmatmul.f32.gmra.mxu0 %v231
    %v280 = vpop.f32.mrf.mxu0
    %v281 = vadd.f32 0.0, %v280
    %282 = vmatmul.f32.gmra.mxu0 %v232
    %v283 = vpop.f32.mrf.mxu0
    %v284 = vadd.f32 0.0, %v283
    %285 = vmatmul.f32.gmra.mxu0 %v233
    %v286 = vpop.f32.mrf.mxu0
    %v287 = vadd.f32 0.0, %v286
    %288 = vmatmul.f32.gmra.mxu0 %v234
    %v289 = vpop.f32.mrf.mxu0
    %v290 = vadd.f32 0.0, %v289
    %291 = vdwg.mxu0
    %292 = vmatpush.msra.mxu0 %v226
    %293 = vmatpush.msra.mxu0 %v225
    %294 = vmatpush.msra.mxu0 %v224
    %295 = vmatpush.msra.mxu0 %v223
    %296 = vmatpush.msra.mxu0 %v222
    %297 = vmatpush.msra.mxu0 %v221
    %298 = vmatpush.msra.mxu0 %v220
    %299 = vmatpush.msra.mxu0 %v219
    %300 = vmatpush.msra.mxu0 %v218
    %301 = vmatpush.msra.mxu0 %v217
    %302 = vmatpush.msra.mxu0 %v216
    %303 = vmatpush.msra.mxu0 %v215
    %304 = vmatpush.msra.mxu0 %v214
    %305 = vmatpush.msra.mxu0 %v213
    %306 = vmatpush.msra.mxu0 %v212
    %307 = vmatpush.msra.mxu0 %v211
    %308 = vmatmul.f32.gmra.mxu0 %v203
    %v309 = vpop.f32.mrf.mxu0
    %v310 = vadd.f32 %v269, %v309
    %311 = vmatmul.f32.gmra.mxu0 %v204
    %v312 = vpop.f32.mrf.mxu0
    %v313 = vadd.f32 %v272, %v312
    %314 = vmatmul.f32.gmra.mxu0 %v205
    %v315 = vpop.f32.mrf.mxu0
    %v316 = vadd.f32 %v275, %v315
    %317 = vmatmul.f32.gmra.mxu0 %v206
    %v318 = vpop.f32.mrf.mxu0
    %v319 = vadd.f32 %v278, %v318
    %320 = vmatmul.f32.gmra.mxu0 %v207
    %v321 = vpop.f32.mrf.mxu0
    %v322 = vadd.f32 %v281, %v321
    %323 = vmatmul.f32.gmra.mxu0 %v208
    %v324 = vpop.f32.mrf.mxu0
    %v325 = vadd.f32 %v284, %v324
    %326 = vmatmul.f32.gmra.mxu0 %v209
    %v327 = vpop.f32.mrf.mxu0
    %v328 = vadd.f32 %v287, %v327
    %329 = vmatmul.f32.gmra.mxu0 %v210
    %v330 = vpop.f32.mrf.mxu0
    %v331 = vadd.f32 %v290, %v330
    %332 = vdwg.mxu0
    %v333 = vld [vmem:[%s6] sm:$0x1]
    %v335 = vperm.slane %v333, 0
    %v337 = vadd.f32 %v310, %v335
    %v338 = vadd.f32 %v313, %v335
    %v339 = vadd.f32 %v316, %v335
    %v340 = vadd.f32 %v319, %v335
    %v341 = vadd.f32 %v322, %v335
    %v342 = vadd.f32 %v325, %v335
    %v343 = vadd.f32 %v328, %v335
    %v344 = vadd.f32 %v331, %v335
    %345 = vst [vmem:[%s7] sm:$0xff] %v337
    %346 = vst [vmem:[%s7 + $0x8] sm:$0xff] %v338
    %347 = vst [vmem:[%s7 + $0x10] sm:$0xff] %v339
    %348 = vst [vmem:[%s7 + $0x18] sm:$0xff] %v340
    %349 = vst [vmem:[%s7 + $0x20] sm:$0xff] %v341
    %350 = vst [vmem:[%s7 + $0x28] sm:$0xff] %v342
    %351 = vst [vmem:[%s7 + $0x30] sm:$0xff] %v343
    %352 = vst [vmem:[%s7 + $0x38] sm:$0xff] %v344
  $region37: #{mad_sage2_forward.5} parent=0 // pred_fallthru
    _
  // Predicated region
  $region38: #{mad_sage2_forward.5} parent=0 // pred_check
    _
  $region39: #{mad_sage2_forward.5} parent=0 // pred_check_branch
    %354 = sbr.rel (0) target = $region41
  $region40: #{mad_sage2_forward.5} parent=0 // pred_region
    _
  $region41: #{mad_sage2_forward.5} parent=0 // pred_fallthru
    _
  // Predicated region
  $region42: #{mad_sage2_forward.5} parent=0 // pred_check
    _
  $region43: #{mad_sage2_forward.5} parent=0 // pred_check_branch
    %356 = sbr.rel (0) target = $region45
  $region44: #{mad_sage2_forward.5} parent=0 // pred_region
    _
  $region45: #{mad_sage2_forward.5} parent=0 // pred_fallthru
    _

// kernel: mad_sage2_forward.4
$region0: #{mad_sage2_forward.4}
  #allocation0 [shape = 'u32[]', space=smem, size = 0x4, offset = 0x4, fixed_abs, tag = 'smem constant byte address 0x4 - core index']
  #allocation1 [shape = 'u32[72,128]{1,0:T(1,128)}', space=vmem, size = 0x9000, scoped, tag = 'internal scratch']
  #allocation2 [shape = 'f32[64,128]{1,0:T(8,128)}', space=vmem, size = 0x8000, scoped, tag = 'scratch operand']
  %s0 = inlined_call_operand.vmem [shape: f32[64,64], index: 0, kind: input, shape index: {}]
  %s1 = inlined_call_operand.vmem [shape: f32[64,128], index: 1, kind: input, shape index: {}, may-alias: {1,2}]
  %s2 = inlined_call_operand.vmem [shape: f32[64,128], index: 2, kind: input, shape index: {}, may-alias: {1,2}]
  %s3 = inlined_call_operand.vmem [shape: f32[64,1], index: 3, kind: input, shape index: {}]
  %s4 = inlined_call_operand.vmem [shape: f32[128,128], index: 4, kind: input, shape index: {}]
  %s5 = inlined_call_operand.vmem [shape: f32[128,128], index: 5, kind: input, shape index: {}]
  %s6 = inlined_call_operand.vmem [shape: f32[1,128], index: 6, kind: input, shape index: {}]
  %s7 = inlined_call_operand.vmem [shape: f32[64,128], index: 7, kind: output, shape index: {}]
  %s8 = sld [smem:[#allocation0]]
  $region46: #{mad_sage2_forward.4} parent=0
    _
  %s10 = ssub.s32 1, %s8
  %s11 = scalar_select 0, %s10, %s8
  // Predicated region
  $region2: #{mad_sage2_forward.4} parent=0 // pred_check
    _
  $region3: #{mad_sage2_forward.4} parent=0 // pred_check_branch
    %13 = sbr.rel (0) target = $region5
  $region4: #{mad_sage2_forward.4} parent=0 // pred_region
    _
  $region5: #{mad_sage2_forward.4} parent=0 // pred_fallthru
    _
  // Predicated region
  $region6: #{mad_sage2_forward.4} parent=0 // pred_check
    _
  $region7: #{mad_sage2_forward.4} parent=0 // pred_check_branch
    %15 = sbr.rel (0) target = $region9
  $region8: #{mad_sage2_forward.4} parent=0 // pred_region
    _
  $region9: #{mad_sage2_forward.4} parent=0 // pred_fallthru
    _
  // Predicated region
  $region10: #{mad_sage2_forward.4} parent=0 // pred_check
    _
  $region11: #{mad_sage2_forward.4} parent=0 // pred_check_branch
    %17 = sbr.rel (0) target = $region13
  $region12: #{mad_sage2_forward.4} parent=0 // pred_region
    _
  $region13: #{mad_sage2_forward.4} parent=0 // pred_fallthru
    _
  // Predicated region
  $region14: #{mad_sage2_forward.4} parent=0 // pred_check
    _
  $region15: #{mad_sage2_forward.4} parent=0 // pred_check_branch
    %19 = sbr.rel (0) target = $region17
  $region16: #{mad_sage2_forward.4} parent=0 // pred_region
    _
  $region17: #{mad_sage2_forward.4} parent=0 // pred_fallthru
    _
  // Predicated region
  $region18: #{mad_sage2_forward.4} parent=0 // pred_check
    _
  $region19: #{mad_sage2_forward.4} parent=0 // pred_check_branch
    %21 = sbr.rel (0) target = $region21
  $region20: #{mad_sage2_forward.4} parent=0 // pred_region
    _
  $region21: #{mad_sage2_forward.4} parent=0 // pred_fallthru
    _
  // Predicated region
  $region22: #{mad_sage2_forward.4} parent=0 // pred_check
    _
  $region23: #{mad_sage2_forward.4} parent=0 // pred_check_branch
    %23 = sbr.rel (0) target = $region25
  $region24: #{mad_sage2_forward.4} parent=0 // pred_region
    _
  $region25: #{mad_sage2_forward.4} parent=0 // pred_fallthru
    _
  // Predicated region
  $region26: #{mad_sage2_forward.4} parent=0 // pred_check
    _
  $region27: #{mad_sage2_forward.4} parent=0 // pred_check_branch
    %25 = sbr.rel (0) target = $region29
  $region28: #{mad_sage2_forward.4} parent=0 // pred_region
    _
  $region29: #{mad_sage2_forward.4} parent=0 // pred_fallthru
    _
  %p26 = scmp.eq.s32.totalorder 0, 0
  // Predicated region
  $region30: #{mad_sage2_forward.4} parent=0 // pred_check
    %p27 = pneg %p26
  $region31: #{mad_sage2_forward.4} parent=0 // pred_check_branch
    %29 = sbr.rel (%p27) target = $region33
  $region32: #{mad_sage2_forward.4} parent=0 // pred_region
    %30 = vst [vmem:[#allocation2] sm:$0xff] 0.0
    %31 = vst [vmem:[#allocation2 + $0x8] sm:$0xff] 0.0
    %32 = vst [vmem:[#allocation2 + $0x10] sm:$0xff] 0.0
    %33 = vst [vmem:[#allocation2 + $0x18] sm:$0xff] 0.0
    %34 = vst [vmem:[#allocation2 + $0x20] sm:$0xff] 0.0
    %35 = vst [vmem:[#allocation2 + $0x28] sm:$0xff] 0.0
    %36 = vst [vmem:[#allocation2 + $0x30] sm:$0xff] 0.0
    %37 = vst [vmem:[#allocation2 + $0x38] sm:$0xff] 0.0
  $region33: #{mad_sage2_forward.4} parent=0 // pred_fallthru
    _
  %v38 = vld [vmem:[#allocation2] sm:$0xff]
  %v39 = vld [vmem:[#allocation2 + $0x8] sm:$0xff]
  %v40 = vld [vmem:[#allocation2 + $0x10] sm:$0xff]
  %v41 = vld [vmem:[#allocation2 + $0x18] sm:$0xff]
  %v42 = vld [vmem:[#allocation2 + $0x20] sm:$0xff]
  %v43 = vld [vmem:[#allocation2 + $0x28] sm:$0xff]
  %v44 = vld [vmem:[#allocation2 + $0x30] sm:$0xff]
  %v45 = vld [vmem:[#allocation2 + $0x38] sm:$0xff]
  %v46 = vld [vmem:[%s0] sm:$0xff]
  %v47 = vld [vmem:[%s0 + $0x8] sm:$0xff]
  %v48 = vld [vmem:[%s0 + $0x10] sm:$0xff]
  %v49 = vld [vmem:[%s0 + $0x18] sm:$0xff]
  %v50 = vld [vmem:[%s0 + $0x20] sm:$0xff]
  %v51 = vld [vmem:[%s0 + $0x28] sm:$0xff]
  %v52 = vld [vmem:[%s0 + $0x30] sm:$0xff]
  %v53 = vld [vmem:[%s0 + $0x38] sm:$0xff]
  %v54 = vld [vmem:[%s1] sm:$0xff]
  %v55 = vld [vmem:[%s1 + $0x8] sm:$0xff]
  %v56 = vld [vmem:[%s1 + $0x10] sm:$0xff]
  %v57 = vld [vmem:[%s1 + $0x18] sm:$0xff]
  %v58 = vld [vmem:[%s1 + $0x20] sm:$0xff]
  %v59 = vld [vmem:[%s1 + $0x28] sm:$0xff]
  %v60 = vld [vmem:[%s1 + $0x30] sm:$0xff]
  %v61 = vld [vmem:[%s1 + $0x38] sm:$0xff]
  %vm62 = vcmask 523264
  %v64 = vsel %vm62, %v46, 0
  %v67 = vsel %vm62, %v47, 0
  %v70 = vsel %vm62, %v48, 0
  %v73 = vsel %vm62, %v49, 0
  %v76 = vsel %vm62, %v50, 0
  %v79 = vsel %vm62, %v51, 0
  %v82 = vsel %vm62, %v52, 0
  %v85 = vsel %vm62, %v53, 0
  %87 = vmatpush.msra.mxu0 0.0
  %88 = vmatpush.msra.mxu0 0.0
  %89 = vmatpush.msra.mxu0 0.0
  %90 = vmatpush.msra.mxu0 0.0
  %91 = vmatpush.msra.mxu0 0.0
  %92 = vmatpush.msra.mxu0 0.0
  %93 = vmatpush.msra.mxu0 0.0
  %94 = vmatpush.msra.mxu0 0.0
  %95 = vmatpush.msra.mxu0 %v61
  %96 = vmatpush.msra.mxu0 %v60
  %97 = vmatpush.msra.mxu0 %v59
  %98 = vmatpush.msra.mxu0 %v58
  %99 = vmatpush.msra.mxu0 %v57
  %100 = vmatpush.msra.mxu0 %v56
  %101 = vmatpush.msra.mxu0 %v55
  %102 = vmatpush.msra.mxu0 %v54
  %103 = vmatmul.f32.gmra.mxu0 %v64
  %v104 = vpop.f32.mrf.mxu0
  %v105 = vadd.f32 0.0, %v104
  %106 = vmatmul.f32.gmra.mxu0 %v67
  %v107 = vpop.f32.mrf.mxu0
  %v108 = vadd.f32 0.0, %v107
  %109 = vmatmul.f32.gmra.mxu0 %v70
  %v110 = vpop.f32.mrf.mxu0
  %v111 = vadd.f32 0.0, %v110
  %112 = vmatmul.f32.gmra.mxu0 %v73
  %v113 = vpop.f32.mrf.mxu0
  %v114 = vadd.f32 0.0, %v113
  %115 = vmatmul.f32.gmra.mxu0 %v76
  %v116 = vpop.f32.mrf.mxu0
  %v117 = vadd.f32 0.0, %v116
  %118 = vmatmul.f32.gmra.mxu0 %v79
  %v119 = vpop.f32.mrf.mxu0
  %v120 = vadd.f32 0.0, %v119
  %121 = vmatmul.f32.gmra.mxu0 %v82
  %v122 = vpop.f32.mrf.mxu0
  %v123 = vadd.f32 0.0, %v122
  %124 = vmatmul.f32.gmra.mxu0 %v85
  %v125 = vpop.f32.mrf.mxu0
  %v126 = vadd.f32 0.0, %v125
  %127 = vdwg.mxu0
  %v128 = vadd.f32 %v38, %v105
  %v129 = vadd.f32 %v39, %v108
  %v130 = vadd.f32 %v40, %v111
  %v131 = vadd.f32 %v41, %v114
  %v132 = vadd.f32 %v42, %v117
  %v133 = vadd.f32 %v43, %v120
  %v134 = vadd.f32 %v44, %v123
  %v135 = vadd.f32 %v45, %v126
  %136 = vst [vmem:[#allocation2] sm:$0xff] %v128
  %137 = vst [vmem:[#allocation2 + $0x8] sm:$0xff] %v129
  %138 = vst [vmem:[#allocation2 + $0x10] sm:$0xff] %v130
  %139 = vst [vmem:[#allocation2 + $0x18] sm:$0xff] %v131
  %140 = vst [vmem:[#allocation2 + $0x20] sm:$0xff] %v132
  %141 = vst [vmem:[#allocation2 + $0x28] sm:$0xff] %v133
  %142 = vst [vmem:[#allocation2 + $0x30] sm:$0xff] %v134
  %143 = vst [vmem:[#allocation2 + $0x38] sm:$0xff] %v135
  // Predicated region
  $region34: #{mad_sage2_forward.4} parent=0 // pred_check
    %p144 = pneg %p26
  $region35: #{mad_sage2_forward.4} parent=0 // pred_check_branch
    %146 = sbr.rel (%p144) target = $region37
  $region36: #{mad_sage2_forward.4} parent=0 // pred_region
    %v147 = vld [vmem:[#allocation2] sm:$0xff]
    %v148 = vld [vmem:[#allocation2 + $0x8] sm:$0xff]
    %v149 = vld [vmem:[#allocation2 + $0x10] sm:$0xff]
    %v150 = vld [vmem:[#allocation2 + $0x18] sm:$0xff]
    %v151 = vld [vmem:[#allocation2 + $0x20] sm:$0xff]
    %v152 = vld [vmem:[#allocation2 + $0x28] sm:$0xff]
    %v153 = vld [vmem:[#allocation2 + $0x30] sm:$0xff]
    %v154 = vld [vmem:[#allocation2 + $0x38] sm:$0xff]
    %v155 = vld [vmem:[%s3] sm:$0xff]
    %v156 = vld [vmem:[%s3 + $0x8] sm:$0xff]
    %v157 = vld [vmem:[%s3 + $0x10] sm:$0xff]
    %v158 = vld [vmem:[%s3 + $0x18] sm:$0xff]
    %v159 = vld [vmem:[%s3 + $0x20] sm:$0xff]
    %v160 = vld [vmem:[%s3 + $0x28] sm:$0xff]
    %v161 = vld [vmem:[%s3 + $0x30] sm:$0xff]
    %v162 = vld [vmem:[%s3 + $0x38] sm:$0xff]
    %164 = vset.pattern.permute.xlu0 0
    %165 = vperm.xlu0 %164, %v155
    %v166 = vpop.permute.xlu0 %165
    %169 = vset.pattern.permute.xlu0 0
    %170 = vperm.xlu0 %169, %v156
    %v171 = vpop.permute.xlu0 %170
    %174 = vset.pattern.permute.xlu0 0
    %175 = vperm.xlu0 %174, %v157
    %v176 = vpop.permute.xlu0 %175
    %179 = vset.pattern.permute.xlu0 0
    %180 = vperm.xlu0 %179, %v158
    %v181 = vpop.permute.xlu0 %180
    %184 = vset.pattern.permute.xlu0 0
    %185 = vperm.xlu0 %184, %v159
    %v186 = vpop.permute.xlu0 %185
    %189 = vset.pattern.permute.xlu0 0
    %190 = vperm.xlu0 %189, %v160
    %v191 = vpop.permute.xlu0 %190
    %194 = vset.pattern.permute.xlu0 0
    %195 = vperm.xlu0 %194, %v161
    %v196 = vpop.permute.xlu0 %195
    %199 = vset.pattern.permute.xlu0 0
    %200 = vperm.xlu0 %199, %v162
    %v201 = vpop.permute.xlu0 %200
    %v203 = vmul.f32 %v147, %v166
    %v204 = vmul.f32 %v148, %v171
    %v205 = vmul.f32 %v149, %v176
    %v206 = vmul.f32 %v150, %v181
    %v207 = vmul.f32 %v151, %v186
    %v208 = vmul.f32 %v152, %v191
    %v209 = vmul.f32 %v153, %v196
    %v210 = vmul.f32 %v154, %v201
    %v211 = vld [vmem:[%s4] sm:$0xff]
    %v212 = vld [vmem:[%s4 + $0x8] sm:$0xff]
    %v213 = vld [vmem:[%s4 + $0x10] sm:$0xff]
    %v214 = vld [vmem:[%s4 + $0x18] sm:$0xff]
    %v215 = vld [vmem:[%s4 + $0x20] sm:$0xff]
    %v216 = vld [vmem:[%s4 + $0x28] sm:$0xff]
    %v217 = vld [vmem:[%s4 + $0x30] sm:$0xff]
    %v218 = vld [vmem:[%s4 + $0x38] sm:$0xff]
    %v219 = vld [vmem:[%s4 + $0x40] sm:$0xff]
    %v220 = vld [vmem:[%s4 + $0x48] sm:$0xff]
    %v221 = vld [vmem:[%s4 + $0x50] sm:$0xff]
    %v222 = vld [vmem:[%s4 + $0x58] sm:$0xff]
    %v223 = vld [vmem:[%s4 + $0x60] sm:$0xff]
    %v224 = vld [vmem:[%s4 + $0x68] sm:$0xff]
    %v225 = vld [vmem:[%s4 + $0x70] sm:$0xff]
    %v226 = vld [vmem:[%s4 + $0x78] sm:$0xff]
    %v227 = vld [vmem:[%s2] sm:$0xff]
    %v228 = vld [vmem:[%s2 + $0x8] sm:$0xff]
    %v229 = vld [vmem:[%s2 + $0x10] sm:$0xff]
    %v230 = vld [vmem:[%s2 + $0x18] sm:$0xff]
    %v231 = vld [vmem:[%s2 + $0x20] sm:$0xff]
    %v232 = vld [vmem:[%s2 + $0x28] sm:$0xff]
    %v233 = vld [vmem:[%s2 + $0x30] sm:$0xff]
    %v234 = vld [vmem:[%s2 + $0x38] sm:$0xff]
    %v235 = vld [vmem:[%s5] sm:$0xff]
    %v236 = vld [vmem:[%s5 + $0x8] sm:$0xff]
    %v237 = vld [vmem:[%s5 + $0x10] sm:$0xff]
    %v238 = vld [vmem:[%s5 + $0x18] sm:$0xff]
    %v239 = vld [vmem:[%s5 + $0x20] sm:$0xff]
    %v240 = vld [vmem:[%s5 + $0x28] sm:$0xff]
    %v241 = vld [vmem:[%s5 + $0x30] sm:$0xff]
    %v242 = vld [vmem:[%s5 + $0x38] sm:$0xff]
    %v243 = vld [vmem:[%s5 + $0x40] sm:$0xff]
    %v244 = vld [vmem:[%s5 + $0x48] sm:$0xff]
    %v245 = vld [vmem:[%s5 + $0x50] sm:$0xff]
    %v246 = vld [vmem:[%s5 + $0x58] sm:$0xff]
    %v247 = vld [vmem:[%s5 + $0x60] sm:$0xff]
    %v248 = vld [vmem:[%s5 + $0x68] sm:$0xff]
    %v249 = vld [vmem:[%s5 + $0x70] sm:$0xff]
    %v250 = vld [vmem:[%s5 + $0x78] sm:$0xff]
    %251 = vmatpush.msra.mxu0 %v250
    %252 = vmatpush.msra.mxu0 %v249
    %253 = vmatpush.msra.mxu0 %v248
    %254 = vmatpush.msra.mxu0 %v247
    %255 = vmatpush.msra.mxu0 %v246
    %256 = vmatpush.msra.mxu0 %v245
    %257 = vmatpush.msra.mxu0 %v244
    %258 = vmatpush.msra.mxu0 %v243
    %259 = vmatpush.msra.mxu0 %v242
    %260 = vmatpush.msra.mxu0 %v241
    %261 = vmatpush.msra.mxu0 %v240
    %262 = vmatpush.msra.mxu0 %v239
    %263 = vmatpush.msra.mxu0 %v238
    %264 = vmatpush.msra.mxu0 %v237
    %265 = vmatpush.msra.mxu0 %v236
    %266 = vmatpush.msra.mxu0 %v235
    %267 = vmatmul.f32.gmra.mxu0 %v227
    %v268 = vpop.f32.mrf.mxu0
    %v269 = vadd.f32 0.0, %v268
    %270 = vmatmul.f32.gmra.mxu0 %v228
    %v271 = vpop.f32.mrf.mxu0
    %v272 = vadd.f32 0.0, %v271
    %273 = vmatmul.f32.gmra.mxu0 %v229
    %v274 = vpop.f32.mrf.mxu0
    %v275 = vadd.f32 0.0, %v274
    %276 = vmatmul.f32.gmra.mxu0 %v230
    %v277 = vpop.f32.mrf.mxu0
    %v278 = vadd.f32 0.0, %v277
    %279 = vmatmul.f32.gmra.mxu0 %v231
    %v280 = vpop.f32.mrf.mxu0
    %v281 = vadd.f32 0.0, %v280
    %282 = vmatmul.f32.gmra.mxu0 %v232
    %v283 = vpop.f32.mrf.mxu0
    %v284 = vadd.f32 0.0, %v283
    %285 = vmatmul.f32.gmra.mxu0 %v233
    %v286 = vpop.f32.mrf.mxu0
    %v287 = vadd.f32 0.0, %v286
    %288 = vmatmul.f32.gmra.mxu0 %v234
    %v289 = vpop.f32.mrf.mxu0
    %v290 = vadd.f32 0.0, %v289
    %291 = vdwg.mxu0
    %292 = vmatpush.msra.mxu0 %v226
    %293 = vmatpush.msra.mxu0 %v225
    %294 = vmatpush.msra.mxu0 %v224
    %295 = vmatpush.msra.mxu0 %v223
    %296 = vmatpush.msra.mxu0 %v222
    %297 = vmatpush.msra.mxu0 %v221
    %298 = vmatpush.msra.mxu0 %v220
    %299 = vmatpush.msra.mxu0 %v219
    %300 = vmatpush.msra.mxu0 %v218
    %301 = vmatpush.msra.mxu0 %v217
    %302 = vmatpush.msra.mxu0 %v216
    %303 = vmatpush.msra.mxu0 %v215
    %304 = vmatpush.msra.mxu0 %v214
    %305 = vmatpush.msra.mxu0 %v213
    %306 = vmatpush.msra.mxu0 %v212
    %307 = vmatpush.msra.mxu0 %v211
    %308 = vmatmul.f32.gmra.mxu0 %v203
    %v309 = vpop.f32.mrf.mxu0
    %v310 = vadd.f32 %v269, %v309
    %311 = vmatmul.f32.gmra.mxu0 %v204
    %v312 = vpop.f32.mrf.mxu0
    %v313 = vadd.f32 %v272, %v312
    %314 = vmatmul.f32.gmra.mxu0 %v205
    %v315 = vpop.f32.mrf.mxu0
    %v316 = vadd.f32 %v275, %v315
    %317 = vmatmul.f32.gmra.mxu0 %v206
    %v318 = vpop.f32.mrf.mxu0
    %v319 = vadd.f32 %v278, %v318
    %320 = vmatmul.f32.gmra.mxu0 %v207
    %v321 = vpop.f32.mrf.mxu0
    %v322 = vadd.f32 %v281, %v321
    %323 = vmatmul.f32.gmra.mxu0 %v208
    %v324 = vpop.f32.mrf.mxu0
    %v325 = vadd.f32 %v284, %v324
    %326 = vmatmul.f32.gmra.mxu0 %v209
    %v327 = vpop.f32.mrf.mxu0
    %v328 = vadd.f32 %v287, %v327
    %329 = vmatmul.f32.gmra.mxu0 %v210
    %v330 = vpop.f32.mrf.mxu0
    %v331 = vadd.f32 %v290, %v330
    %332 = vdwg.mxu0
    %v333 = vld [vmem:[%s6] sm:$0x1]
    %v335 = vperm.slane %v333, 0
    %v337 = vadd.f32 %v310, %v335
    %v338 = vadd.f32 %v313, %v335
    %v339 = vadd.f32 %v316, %v335
    %v340 = vadd.f32 %v319, %v335
    %v341 = vadd.f32 %v322, %v335
    %v342 = vadd.f32 %v325, %v335
    %v343 = vadd.f32 %v328, %v335
    %v344 = vadd.f32 %v331, %v335
    %v345 = vmax.f32 %v337, 0.0
    %v346 = vmax.f32 %v338, 0.0
    %v347 = vmax.f32 %v339, 0.0
    %v348 = vmax.f32 %v340, 0.0
    %v349 = vmax.f32 %v341, 0.0
    %v350 = vmax.f32 %v342, 0.0
    %v351 = vmax.f32 %v343, 0.0
    %v352 = vmax.f32 %v344, 0.0
    %353 = vst [vmem:[%s7] sm:$0xff] %v345
    %354 = vst [vmem:[%s7 + $0x8] sm:$0xff] %v346
    %355 = vst [vmem:[%s7 + $0x10] sm:$0xff] %v347
    %356 = vst [vmem:[%s7 + $0x18] sm:$0xff] %v348
    %357 = vst [vmem:[%s7 + $0x20] sm:$0xff] %v349
    %358 = vst [vmem:[%s7 + $0x28] sm:$0xff] %v350
    %359 = vst [vmem:[%s7 + $0x30] sm:$0xff] %v351
    %360 = vst [vmem:[%s7 + $0x38] sm:$0xff] %v352
  $region37: #{mad_sage2_forward.4} parent=0 // pred_fallthru
    _
  // Predicated region
  $region38: #{mad_sage2_forward.4} parent=0 // pred_check
    _
  $region39: #{mad_sage2_forward.4} parent=0 // pred_check_branch
    %362 = sbr.rel (0) target = $region41
  $region40: #{mad_sage2_forward.4} parent=0 // pred_region
    _
  $region41: #{mad_sage2_forward.4} parent=0 // pred_fallthru
    _
  // Predicated region
  $region42: #{mad_sage2_forward.4} parent=0 // pred_check
    _
  $region43: #{mad_sage2_forward.4} parent=0 // pred_check_branch
    %364 = sbr.rel (0) target = $region45
  $region44: #{mad_sage2_forward.4} parent=0 // pred_region
    _
  $region45: #{mad_sage2_forward.4} parent=0 // pred_fallthru
    _

// kernel: mad_sage2_forward.6
$region0: #{mad_sage2_forward.6}
  #allocation0 [shape = 'u32[]', space=smem, size = 0x4, offset = 0x4, fixed_abs, tag = 'smem constant byte address 0x4 - core index']
  #allocation1 [shape = 'u32[72,128]{1,0:T(1,128)}', space=vmem, size = 0x9000, scoped, tag = 'internal scratch']
  %s0 = inlined_call_operand.vmem [shape: f32[4,64,8], index: 0, kind: input, shape index: {}]
  %s1 = inlined_call_operand.vmem [shape: f32[4,64], index: 1, kind: input, shape index: {}]
  %s2 = inlined_call_operand.vmem [shape: f32[4,8,8], index: 2, kind: input, shape index: {}]
  %s3 = inlined_call_operand.vmem [shape: f32[4,8,8], index: 3, kind: input, shape index: {}]
  %s4 = inlined_call_operand.vmem [shape: f32[4,8,64], index: 4, kind: output, shape index: {0}]
  %s5 = inlined_call_operand.vmem [shape: f32[4,8,64], index: 5, kind: output, shape index: {1}]
  %6 = xla_tuple %s4, %s5
  %s7 = sld [smem:[#allocation0]]
  $region34: #{mad_sage2_forward.6} parent=0
    _
  %s9 = ssub.s32 1, %s7
  %s10 = scalar_select 0, %s9, %s7
  // Predicated region
  $region2: #{mad_sage2_forward.6} parent=0 // pred_check
    _
  $region3: #{mad_sage2_forward.6} parent=0 // pred_check_branch
    %12 = sbr.rel (0) target = $region5
  $region4: #{mad_sage2_forward.6} parent=0 // pred_region
    _
  $region5: #{mad_sage2_forward.6} parent=0 // pred_fallthru
    _
  // Predicated region
  $region6: #{mad_sage2_forward.6} parent=0 // pred_check
    _
  $region7: #{mad_sage2_forward.6} parent=0 // pred_check_branch
    %14 = sbr.rel (0) target = $region9
  $region8: #{mad_sage2_forward.6} parent=0 // pred_region
    _
  $region9: #{mad_sage2_forward.6} parent=0 // pred_fallthru
    _
  // Predicated region
  $region10: #{mad_sage2_forward.6} parent=0 // pred_check
    _
  $region11: #{mad_sage2_forward.6} parent=0 // pred_check_branch
    %16 = sbr.rel (0) target = $region13
  $region12: #{mad_sage2_forward.6} parent=0 // pred_region
    _
  $region13: #{mad_sage2_forward.6} parent=0 // pred_fallthru
    _
  // Predicated region
  $region14: #{mad_sage2_forward.6} parent=0 // pred_check
    _
  $region15: #{mad_sage2_forward.6} parent=0 // pred_check_branch
    %18 = sbr.rel (0) target = $region17
  $region16: #{mad_sage2_forward.6} parent=0 // pred_region
    _
  $region17: #{mad_sage2_forward.6} parent=0 // pred_fallthru
    _
  %v19 = vld [vmem:[%s0] sm:$0xff]
  %v20 = vld [vmem:[%s0 + $0x8] sm:$0xff]
  %v21 = vld [vmem:[%s0 + $0x10] sm:$0xff]
  %v22 = vld [vmem:[%s0 + $0x18] sm:$0xff]
  %v23 = vld [vmem:[%s0 + $0x20] sm:$0xff]
  %v24 = vld [vmem:[%s0 + $0x28] sm:$0xff]
  %v25 = vld [vmem:[%s0 + $0x30] sm:$0xff]
  %v26 = vld [vmem:[%s0 + $0x38] sm:$0xff]
  %v27 = vld [vmem:[%s0 + $0x40] sm:$0xff]
  %v28 = vld [vmem:[%s0 + $0x48] sm:$0xff]
  %v29 = vld [vmem:[%s0 + $0x50] sm:$0xff]
  %v30 = vld [vmem:[%s0 + $0x58] sm:$0xff]
  %v31 = vld [vmem:[%s0 + $0x60] sm:$0xff]
  %v32 = vld [vmem:[%s0 + $0x68] sm:$0xff]
  %v33 = vld [vmem:[%s0 + $0x70] sm:$0xff]
  %v34 = vld [vmem:[%s0 + $0x78] sm:$0xff]
  %v35 = vld [vmem:[%s0 + $0x80] sm:$0xff]
  %v36 = vld [vmem:[%s0 + $0x88] sm:$0xff]
  %v37 = vld [vmem:[%s0 + $0x90] sm:$0xff]
  %v38 = vld [vmem:[%s0 + $0x98] sm:$0xff]
  %v39 = vld [vmem:[%s0 + $0xa0] sm:$0xff]
  %v40 = vld [vmem:[%s0 + $0xa8] sm:$0xff]
  %v41 = vld [vmem:[%s0 + $0xb0] sm:$0xff]
  %v42 = vld [vmem:[%s0 + $0xb8] sm:$0xff]
  %v43 = vld [vmem:[%s0 + $0xc0] sm:$0xff]
  %v44 = vld [vmem:[%s0 + $0xc8] sm:$0xff]
  %v45 = vld [vmem:[%s0 + $0xd0] sm:$0xff]
  %v46 = vld [vmem:[%s0 + $0xd8] sm:$0xff]
  %v47 = vld [vmem:[%s0 + $0xe0] sm:$0xff]
  %v48 = vld [vmem:[%s0 + $0xe8] sm:$0xff]
  %v49 = vld [vmem:[%s0 + $0xf0] sm:$0xff]
  %v50 = vld [vmem:[%s0 + $0xf8] sm:$0xff]
  %v51 = vld [vmem:[%s1] sm:$0xf]
  %v52 = vld [vmem:[%s2] sm:$0xff]
  %v53 = vld [vmem:[%s2 + $0x8] sm:$0xff]
  %v54 = vld [vmem:[%s2 + $0x10] sm:$0xff]
  %v55 = vld [vmem:[%s2 + $0x18] sm:$0xff]
  %vm56 = vcmask 64512
  %v58 = vsel %vm56, %v52, 0
  %v61 = vsel %vm56, %v19, 0
  %v64 = vsel %vm56, %v20, 0
  %v67 = vsel %vm56, %v21, 0
  %v70 = vsel %vm56, %v22, 0
  %v73 = vsel %vm56, %v23, 0
  %v76 = vsel %vm56, %v24, 0
  %v79 = vsel %vm56, %v25, 0
  %v82 = vsel %vm56, %v26, 0
  %84 = vmatpush.xpose.msra.mxu0 0.0
  %85 = vmatpush.xpose.msra.mxu0 0.0
  %86 = vmatpush.xpose.msra.mxu0 0.0
  %87 = vmatpush.xpose.msra.mxu0 0.0
  %88 = vmatpush.xpose.msra.mxu0 0.0
  %89 = vmatpush.xpose.msra.mxu0 0.0
  %90 = vmatpush.xpose.msra.mxu0 0.0
  %91 = vmatpush.xpose.msra.mxu0 0.0
  %92 = vmatpush.xpose.msra.mxu0 %v82
  %93 = vmatpush.xpose.msra.mxu0 %v79
  %94 = vmatpush.xpose.msra.mxu0 %v76
  %95 = vmatpush.xpose.msra.mxu0 %v73
  %96 = vmatpush.xpose.msra.mxu0 %v70
  %97 = vmatpush.xpose.msra.mxu0 %v67
  %98 = vmatpush.xpose.msra.mxu0 %v64
  %99 = vmatpush.xpose.msra.mxu0 %v61
  %100 = vmatmul.f32.gmra.mxu0 %v58
  %v101 = vpop.f32.mrf.mxu0
  %v102 = vadd.f32 0.0, %v101
  %103 = vdwg.mxu0
  %v105 = vsel %vm56, %v53, 0
  %v108 = vsel %vm56, %v27, 0
  %v111 = vsel %vm56, %v28, 0
  %v114 = vsel %vm56, %v29, 0
  %v117 = vsel %vm56, %v30, 0
  %v120 = vsel %vm56, %v31, 0
  %v123 = vsel %vm56, %v32, 0
  %v126 = vsel %vm56, %v33, 0
  %v129 = vsel %vm56, %v34, 0
  %131 = vmatpush.xpose.msra.mxu0 0.0
  %132 = vmatpush.xpose.msra.mxu0 0.0
  %133 = vmatpush.xpose.msra.mxu0 0.0
  %134 = vmatpush.xpose.msra.mxu0 0.0
  %135 = vmatpush.xpose.msra.mxu0 0.0
  %136 = vmatpush.xpose.msra.mxu0 0.0
  %137 = vmatpush.xpose.msra.mxu0 0.0
  %138 = vmatpush.xpose.msra.mxu0 0.0
  %139 = vmatpush.xpose.msra.mxu0 %v129
  %140 = vmatpush.xpose.msra.mxu0 %v126
  %141 = vmatpush.xpose.msra.mxu0 %v123
  %142 = vmatpush.xpose.msra.mxu0 %v120
  %143 = vmatpush.xpose.msra.mxu0 %v117
  %144 = vmatpush.xpose.msra.mxu0 %v114
  %145 = vmatpush.xpose.msra.mxu0 %v111
  %146 = vmatpush.xpose.msra.mxu0 %v108
  %147 = vmatmul.f32.gmra.mxu0 %v105
  %v148 = vpop.f32.mrf.mxu0
  %v149 = vadd.f32 0.0, %v148
  %150 = vdwg.mxu0
  %v152 = vsel %vm56, %v54, 0
  %v155 = vsel %vm56, %v35, 0
  %v158 = vsel %vm56, %v36, 0
  %v161 = vsel %vm56, %v37, 0
  %v164 = vsel %vm56, %v38, 0
  %v167 = vsel %vm56, %v39, 0
  %v170 = vsel %vm56, %v40, 0
  %v173 = vsel %vm56, %v41, 0
  %v176 = vsel %vm56, %v42, 0
  %178 = vmatpush.xpose.msra.mxu0 0.0
  %179 = vmatpush.xpose.msra.mxu0 0.0
  %180 = vmatpush.xpose.msra.mxu0 0.0
  %181 = vmatpush.xpose.msra.mxu0 0.0
  %182 = vmatpush.xpose.msra.mxu0 0.0
  %183 = vmatpush.xpose.msra.mxu0 0.0
  %184 = vmatpush.xpose.msra.mxu0 0.0
  %185 = vmatpush.xpose.msra.mxu0 0.0
  %186 = vmatpush.xpose.msra.mxu0 %v176
  %187 = vmatpush.xpose.msra.mxu0 %v173
  %188 = vmatpush.xpose.msra.mxu0 %v170
  %189 = vmatpush.xpose.msra.mxu0 %v167
  %190 = vmatpush.xpose.msra.mxu0 %v164
  %191 = vmatpush.xpose.msra.mxu0 %v161
  %192 = vmatpush.xpose.msra.mxu0 %v158
  %193 = vmatpush.xpose.msra.mxu0 %v155
  %194 = vmatmul.f32.gmra.mxu0 %v152
  %v195 = vpop.f32.mrf.mxu0
  %v196 = vadd.f32 0.0, %v195
  %197 = vdwg.mxu0
  %v199 = vsel %vm56, %v55, 0
  %v202 = vsel %vm56, %v43, 0
  %v205 = vsel %vm56, %v44, 0
  %v208 = vsel %vm56, %v45, 0
  %v211 = vsel %vm56, %v46, 0
  %v214 = vsel %vm56, %v47, 0
  %v217 = vsel %vm56, %v48, 0
  %v220 = vsel %vm56, %v49, 0
  %v223 = vsel %vm56, %v50, 0
  %225 = vmatpush.xpose.msra.mxu0 0.0
  %226 = vmatpush.xpose.msra.mxu0 0.0
  %227 = vmatpush.xpose.msra.mxu0 0.0
  %228 = vmatpush.xpose.msra.mxu0 0.0
  %229 = vmatpush.xpose.msra.mxu0 0.0
  %230 = vmatpush.xpose.msra.mxu0 0.0
  %231 = vmatpush.xpose.msra.mxu0 0.0
  %232 = vmatpush.xpose.msra.mxu0 0.0
  %233 = vmatpush.xpose.msra.mxu0 %v223
  %234 = vmatpush.xpose.msra.mxu0 %v220
  %235 = vmatpush.xpose.msra.mxu0 %v217
  %236 = vmatpush.xpose.msra.mxu0 %v214
  %237 = vmatpush.xpose.msra.mxu0 %v211
  %238 = vmatpush.xpose.msra.mxu0 %v208
  %239 = vmatpush.xpose.msra.mxu0 %v205
  %240 = vmatpush.xpose.msra.mxu0 %v202
  %241 = vmatmul.f32.gmra.mxu0 %v199
  %v242 = vpop.f32.mrf.mxu0
  %v243 = vadd.f32 0.0, %v242
  %244 = vdwg.mxu0
  %v245 = vld [vmem:[%s3] sm:$0xff]
  %v246 = vld [vmem:[%s3 + $0x8] sm:$0xff]
  %v247 = vld [vmem:[%s3 + $0x10] sm:$0xff]
  %v248 = vld [vmem:[%s3 + $0x18] sm:$0xff]
  %v250 = vsel %vm56, %v245, 0
  %252 = vmatpush.xpose.msra.mxu0 0.0
  %253 = vmatpush.xpose.msra.mxu0 0.0
  %254 = vmatpush.xpose.msra.mxu0 0.0
  %255 = vmatpush.xpose.msra.mxu0 0.0
  %256 = vmatpush.xpose.msra.mxu0 0.0
  %257 = vmatpush.xpose.msra.mxu0 0.0
  %258 = vmatpush.xpose.msra.mxu0 0.0
  %259 = vmatpush.xpose.msra.mxu0 0.0
  %260 = vmatpush.xpose.msra.mxu0 %v82
  %261 = vmatpush.xpose.msra.mxu0 %v79
  %262 = vmatpush.xpose.msra.mxu0 %v76
  %263 = vmatpush.xpose.msra.mxu0 %v73
  %264 = vmatpush.xpose.msra.mxu0 %v70
  %265 = vmatpush.xpose.msra.mxu0 %v67
  %266 = vmatpush.xpose.msra.mxu0 %v64
  %267 = vmatpush.xpose.msra.mxu0 %v61
  %268 = vmatmul.f32.gmra.mxu0 %v250
  %v269 = vpop.f32.mrf.mxu0
  %v270 = vadd.f32 0.0, %v269
  %271 = vdwg.mxu0
  %v273 = vsel %vm56, %v246, 0
  %275 = vmatpush.xpose.msra.mxu0 0.0
  %276 = vmatpush.xpose.msra.mxu0 0.0
  %277 = vmatpush.xpose.msra.mxu0 0.0
  %278 = vmatpush.xpose.msra.mxu0 0.0
  %279 = vmatpush.xpose.msra.mxu0 0.0
  %280 = vmatpush.xpose.msra.mxu0 0.0
  %281 = vmatpush.xpose.msra.mxu0 0.0
  %282 = vmatpush.xpose.msra.mxu0 0.0
  %283 = vmatpush.xpose.msra.mxu0 %v129
  %284 = vmatpush.xpose.msra.mxu0 %v126
  %285 = vmatpush.xpose.msra.mxu0 %v123
  %286 = vmatpush.xpose.msra.mxu0 %v120
  %287 = vmatpush.xpose.msra.mxu0 %v117
  %288 = vmatpush.xpose.msra.mxu0 %v114
  %289 = vmatpush.xpose.msra.mxu0 %v111
  %290 = vmatpush.xpose.msra.mxu0 %v108
  %291 = vmatmul.f32.gmra.mxu0 %v273
  %v292 = vpop.f32.mrf.mxu0
  %v293 = vadd.f32 0.0, %v292
  %294 = vdwg.mxu0
  %v296 = vsel %vm56, %v247, 0
  %298 = vmatpush.xpose.msra.mxu0 0.0
  %299 = vmatpush.xpose.msra.mxu0 0.0
  %300 = vmatpush.xpose.msra.mxu0 0.0
  %301 = vmatpush.xpose.msra.mxu0 0.0
  %302 = vmatpush.xpose.msra.mxu0 0.0
  %303 = vmatpush.xpose.msra.mxu0 0.0
  %304 = vmatpush.xpose.msra.mxu0 0.0
  %305 = vmatpush.xpose.msra.mxu0 0.0
  %306 = vmatpush.xpose.msra.mxu0 %v176
  %307 = vmatpush.xpose.msra.mxu0 %v173
  %308 = vmatpush.xpose.msra.mxu0 %v170
  %309 = vmatpush.xpose.msra.mxu0 %v167
  %310 = vmatpush.xpose.msra.mxu0 %v164
  %311 = vmatpush.xpose.msra.mxu0 %v161
  %312 = vmatpush.xpose.msra.mxu0 %v158
  %313 = vmatpush.xpose.msra.mxu0 %v155
  %314 = vmatmul.f32.gmra.mxu0 %v296
  %v315 = vpop.f32.mrf.mxu0
  %v316 = vadd.f32 0.0, %v315
  %317 = vdwg.mxu0
  %v319 = vsel %vm56, %v248, 0
  %321 = vmatpush.xpose.msra.mxu0 0.0
  %322 = vmatpush.xpose.msra.mxu0 0.0
  %323 = vmatpush.xpose.msra.mxu0 0.0
  %324 = vmatpush.xpose.msra.mxu0 0.0
  %325 = vmatpush.xpose.msra.mxu0 0.0
  %326 = vmatpush.xpose.msra.mxu0 0.0
  %327 = vmatpush.xpose.msra.mxu0 0.0
  %328 = vmatpush.xpose.msra.mxu0 0.0
  %329 = vmatpush.xpose.msra.mxu0 %v223
  %330 = vmatpush.xpose.msra.mxu0 %v220
  %331 = vmatpush.xpose.msra.mxu0 %v217
  %332 = vmatpush.xpose.msra.mxu0 %v214
  %333 = vmatpush.xpose.msra.mxu0 %v211
  %334 = vmatpush.xpose.msra.mxu0 %v208
  %335 = vmatpush.xpose.msra.mxu0 %v205
  %336 = vmatpush.xpose.msra.mxu0 %v202
  %337 = vmatmul.f32.gmra.mxu0 %v319
  %v338 = vpop.f32.mrf.mxu0
  %v339 = vadd.f32 0.0, %v338
  %340 = vdwg.mxu0
  %v341 = vmul.f32 %v102, 2.0
  %v342 = vmul.f32 %v149, 2.0
  %v343 = vmul.f32 %v196, 2.0
  %v344 = vmul.f32 %v243, 2.0
  %v346 = vrot.slane %v51, 1
  %v347 = vrot.slane %v51, 2
  %v348 = vrot.slane %v51, 3
  %v349 = vperm.slane %v51, 0
  %v350 = vperm.slane %v346, 0
  %v351 = vperm.slane %v347, 0
  %v352 = vperm.slane %v348, 0
  %v357 = vsub.f32 %v341, %v349
  %v358 = vsub.f32 %v342, %v350
  %v359 = vsub.f32 %v343, %v351
  %v360 = vsub.f32 %v344, %v352
  %vm361 = vcmask 523264
  %362 = vst.msk [vmem:[%s4] sm:$0xff] %vm361, %v357
  %363 = vst.msk [vmem:[%s4 + $0x8] sm:$0xff] %vm361, %v358
  %364 = vst.msk [vmem:[%s4 + $0x10] sm:$0xff] %vm361, %v359
  %365 = vst.msk [vmem:[%s4 + $0x18] sm:$0xff] %vm361, %v360
  %v366 = vmul.f32 %v270, 2.0
  %v367 = vmul.f32 %v293, 2.0
  %v368 = vmul.f32 %v316, 2.0
  %v369 = vmul.f32 %v339, 2.0
  %v370 = vsub.f32 %v366, %v349
  %v371 = vsub.f32 %v367, %v350
  %v372 = vsub.f32 %v368, %v351
  %v373 = vsub.f32 %v369, %v352
  %374 = vst.msk [vmem:[%s5] sm:$0xff] %vm361, %v370
  %375 = vst.msk [vmem:[%s5 + $0x8] sm:$0xff] %vm361, %v371
  %376 = vst.msk [vmem:[%s5 + $0x10] sm:$0xff] %vm361, %v372
  %377 = vst.msk [vmem:[%s5 + $0x18] sm:$0xff] %vm361, %v373
  // Predicated region
  $region18: #{mad_sage2_forward.6} parent=0 // pred_check
    _
  $region19: #{mad_sage2_forward.6} parent=0 // pred_check_branch
    %379 = sbr.rel (0) target = $region21
  $region20: #{mad_sage2_forward.6} parent=0 // pred_region
    _
  $region21: #{mad_sage2_forward.6} parent=0 // pred_fallthru
    _
  // Predicated region
  $region22: #{mad_sage2_forward.6} parent=0 // pred_check
    _
  $region23: #{mad_sage2_forward.6} parent=0 // pred_check_branch
    %381 = sbr.rel (0) target = $region25
  $region24: #{mad_sage2_forward.6} parent=0 // pred_region
    _
  $region25: #{mad_sage2_forward.6} parent=0 // pred_fallthru
    _
  // Predicated region
  $region26: #{mad_sage2_forward.6} parent=0 // pred_check
    _
  $region27: #{mad_sage2_forward.6} parent=0 // pred_check_branch
    %383 = sbr.rel (0) target = $region29
  $region28: #{mad_sage2_forward.6} parent=0 // pred_region
    _
  $region29: #{mad_sage2_forward.6} parent=0 // pred_fallthru
    _
  // Predicated region
  $region30: #{mad_sage2_forward.6} parent=0 // pred_check
    _
  $region31: #{mad_sage2_forward.6} parent=0 // pred_check_branch
    %385 = sbr.rel (0) target = $region33
  $region32: #{mad_sage2_forward.6} parent=0 // pred_region
    _
  $region33: #{mad_sage2_forward.6} parent=0 // pred_fallthru
    _

// kernel: mad_sage2_forward.7
$region0: #{mad_sage2_forward.7}
  #allocation0 [shape = 'u32[]', space=smem, size = 0x4, offset = 0x4, fixed_abs, tag = 'smem constant byte address 0x4 - core index']
  #allocation1 [shape = 'u32[72,128]{1,0:T(1,128)}', space=vmem, size = 0x9000, scoped, tag = 'internal scratch']
  #allocation2 [shape = 'f32[1,1]{1,0:T(1,128)S(6)}', space=smem, size = 0x200, scoped, tag = 'scoped memory for mad_sage2_forward.7']
  %s0 = inlined_call_operand.<no memory space> [shape: f32[1,1], index: 0, kind: input, shape index: {}]
  %s1 = inlined_call_operand.vmem [shape: f32[32,8], index: 1, kind: input, shape index: {}]
  %s2 = inlined_call_operand.vmem [shape: f32[32,8], index: 2, kind: input, shape index: {}]
  %s3 = inlined_call_operand.vmem [shape: f32[32,16,8], index: 3, kind: input, shape index: {}]
  %s4 = inlined_call_operand.vmem [shape: f32[32,16,8], index: 4, kind: input, shape index: {}]
  %s5 = inlined_call_operand.vmem [shape: f32[32,8], index: 5, kind: input, shape index: {}]
  %s6 = inlined_call_operand.vmem [shape: f32[32,8], index: 6, kind: input, shape index: {}]
  %s7 = inlined_call_operand.vmem [shape: f32[32,16], index: 7, kind: input, shape index: {}]
  %s8 = inlined_call_operand.vmem [shape: f32[32,16], index: 8, kind: input, shape index: {}]
  %s9 = inlined_call_operand.vmem [shape: f32[32,1], index: 9, kind: output, shape index: {}]
  %s10 = sld [smem:[#allocation0]]
  $region46: #{mad_sage2_forward.7} parent=0
    _
  %s12 = ssub.s32 1, %s10
  %s13 = scalar_select 0, %s12, %s10
  %14 = sst [smem:[#allocation2]] %s0
  // Predicated region
  $region2: #{mad_sage2_forward.7} parent=0 // pred_check
    _
  $region3: #{mad_sage2_forward.7} parent=0 // pred_check_branch
    %16 = sbr.rel (0) target = $region5
  $region4: #{mad_sage2_forward.7} parent=0 // pred_region
    _
  $region5: #{mad_sage2_forward.7} parent=0 // pred_fallthru
    _
  // Predicated region
  $region6: #{mad_sage2_forward.7} parent=0 // pred_check
    _
  $region7: #{mad_sage2_forward.7} parent=0 // pred_check_branch
    %18 = sbr.rel (0) target = $region9
  $region8: #{mad_sage2_forward.7} parent=0 // pred_region
    _
  $region9: #{mad_sage2_forward.7} parent=0 // pred_fallthru
    _
  // Predicated region
  $region10: #{mad_sage2_forward.7} parent=0 // pred_check
    _
  $region11: #{mad_sage2_forward.7} parent=0 // pred_check_branch
    %20 = sbr.rel (0) target = $region13
  $region12: #{mad_sage2_forward.7} parent=0 // pred_region
    _
  $region13: #{mad_sage2_forward.7} parent=0 // pred_fallthru
    _
  // Predicated region
  $region14: #{mad_sage2_forward.7} parent=0 // pred_check
    _
  $region15: #{mad_sage2_forward.7} parent=0 // pred_check_branch
    %22 = sbr.rel (0) target = $region17
  $region16: #{mad_sage2_forward.7} parent=0 // pred_region
    _
  $region17: #{mad_sage2_forward.7} parent=0 // pred_fallthru
    _
  // Predicated region
  $region18: #{mad_sage2_forward.7} parent=0 // pred_check
    _
  $region19: #{mad_sage2_forward.7} parent=0 // pred_check_branch
    %24 = sbr.rel (0) target = $region21
  $region20: #{mad_sage2_forward.7} parent=0 // pred_region
    _
  $region21: #{mad_sage2_forward.7} parent=0 // pred_fallthru
    _
  // Predicated region
  $region22: #{mad_sage2_forward.7} parent=0 // pred_check
    _
  $region23: #{mad_sage2_forward.7} parent=0 // pred_check_branch
    %26 = sbr.rel (0) target = $region25
  $region24: #{mad_sage2_forward.7} parent=0 // pred_region
    _
  $region25: #{mad_sage2_forward.7} parent=0 // pred_fallthru
    _
  // Predicated region
  $region26: #{mad_sage2_forward.7} parent=0 // pred_check
    _
  $region27: #{mad_sage2_forward.7} parent=0 // pred_check_branch
    %28 = sbr.rel (0) target = $region29
  $region28: #{mad_sage2_forward.7} parent=0 // pred_region
    _
  $region29: #{mad_sage2_forward.7} parent=0 // pred_fallthru
    _
  // Predicated region
  $region30: #{mad_sage2_forward.7} parent=0 // pred_check
    _
  $region31: #{mad_sage2_forward.7} parent=0 // pred_check_branch
    %30 = sbr.rel (0) target = $region33
  $region32: #{mad_sage2_forward.7} parent=0 // pred_region
    _
  $region33: #{mad_sage2_forward.7} parent=0 // pred_fallthru
    _
  // Predicated region
  $region34: #{mad_sage2_forward.7} parent=0 // pred_check
    _
  $region35: #{mad_sage2_forward.7} parent=0 // pred_check_branch
    %32 = sbr.rel (0) target = $region37
  $region36: #{mad_sage2_forward.7} parent=0 // pred_region
    _
  $region37: #{mad_sage2_forward.7} parent=0 // pred_fallthru
    _
  %s33 = sld [smem:[#allocation2]]
  %v34 = vld [vmem:[%s1] sm:$0xff]
  %v35 = vld [vmem:[%s1 + $0x8] sm:$0xff]
  %v36 = vld [vmem:[%s1 + $0x10] sm:$0xff]
  %v37 = vld [vmem:[%s1 + $0x18] sm:$0xff]
  %v38 = vld [vmem:[%s2] sm:$0xff]
  %v39 = vld [vmem:[%s2 + $0x8] sm:$0xff]
  %v40 = vld [vmem:[%s2 + $0x10] sm:$0xff]
  %v41 = vld [vmem:[%s2 + $0x18] sm:$0xff]
  %v42 = vld [vmem:[%s5] sm:$0xff]
  %v43 = vld [vmem:[%s5 + $0x8] sm:$0xff]
  %v44 = vld [vmem:[%s5 + $0x10] sm:$0xff]
  %v45 = vld [vmem:[%s5 + $0x18] sm:$0xff]
  %v46 = vld [vmem:[%s6] sm:$0xff]
  %v47 = vld [vmem:[%s6 + $0x8] sm:$0xff]
  %v48 = vld [vmem:[%s6 + $0x10] sm:$0xff]
  %v49 = vld [vmem:[%s6 + $0x18] sm:$0xff]
  %v50 = vld [vmem:[%s3] sm:$0xff]
  %v51 = vld [vmem:[%s3 + $0x8] sm:$0xff]
  %v52 = vld [vmem:[%s3 + $0x10] sm:$0xff]
  %v53 = vld [vmem:[%s3 + $0x18] sm:$0xff]
  %v54 = vld [vmem:[%s3 + $0x20] sm:$0xff]
  %v55 = vld [vmem:[%s3 + $0x28] sm:$0xff]
  %v56 = vld [vmem:[%s3 + $0x30] sm:$0xff]
  %v57 = vld [vmem:[%s3 + $0x38] sm:$0xff]
  %v58 = vld [vmem:[%s3 + $0x40] sm:$0xff]
  %v59 = vld [vmem:[%s3 + $0x48] sm:$0xff]
  %v60 = vld [vmem:[%s3 + $0x50] sm:$0xff]
  %v61 = vld [vmem:[%s3 + $0x58] sm:$0xff]
  %v62 = vld [vmem:[%s3 + $0x60] sm:$0xff]
  %v63 = vld [vmem:[%s3 + $0x68] sm:$0xff]
  %v64 = vld [vmem:[%s3 + $0x70] sm:$0xff]
  %v65 = vld [vmem:[%s3 + $0x78] sm:$0xff]
  %v66 = vld [vmem:[%s3 + $0x80] sm:$0xff]
  %v67 = vld [vmem:[%s3 + $0x88] sm:$0xff]
  %v68 = vld [vmem:[%s3 + $0x90] sm:$0xff]
  %v69 = vld [vmem:[%s3 + $0x98] sm:$0xff]
  %v70 = vld [vmem:[%s3 + $0xa0] sm:$0xff]
  %v71 = vld [vmem:[%s3 + $0xa8] sm:$0xff]
  %v72 = vld [vmem:[%s3 + $0xb0] sm:$0xff]
  %v73 = vld [vmem:[%s3 + $0xb8] sm:$0xff]
  %v74 = vld [vmem:[%s3 + $0xc0] sm:$0xff]
  %v75 = vld [vmem:[%s3 + $0xc8] sm:$0xff]
  %v76 = vld [vmem:[%s3 + $0xd0] sm:$0xff]
  %v77 = vld [vmem:[%s3 + $0xd8] sm:$0xff]
  %v78 = vld [vmem:[%s3 + $0xe0] sm:$0xff]
  %v79 = vld [vmem:[%s3 + $0xe8] sm:$0xff]
  %v80 = vld [vmem:[%s3 + $0xf0] sm:$0xff]
  %v81 = vld [vmem:[%s3 + $0xf8] sm:$0xff]
  %v82 = vld [vmem:[%s3 + $0x100] sm:$0xff]
  %v83 = vld [vmem:[%s3 + $0x108] sm:$0xff]
  %v84 = vld [vmem:[%s3 + $0x110] sm:$0xff]
  %v85 = vld [vmem:[%s3 + $0x118] sm:$0xff]
  %v86 = vld [vmem:[%s3 + $0x120] sm:$0xff]
  %v87 = vld [vmem:[%s3 + $0x128] sm:$0xff]
  %v88 = vld [vmem:[%s3 + $0x130] sm:$0xff]
  %v89 = vld [vmem:[%s3 + $0x138] sm:$0xff]
  %v90 = vld [vmem:[%s3 + $0x140] sm:$0xff]
  %v91 = vld [vmem:[%s3 + $0x148] sm:$0xff]
  %v92 = vld [vmem:[%s3 + $0x150] sm:$0xff]
  %v93 = vld [vmem:[%s3 + $0x158] sm:$0xff]
  %v94 = vld [vmem:[%s3 + $0x160] sm:$0xff]
  %v95 = vld [vmem:[%s3 + $0x168] sm:$0xff]
  %v96 = vld [vmem:[%s3 + $0x170] sm:$0xff]
  %v97 = vld [vmem:[%s3 + $0x178] sm:$0xff]
  %v98 = vld [vmem:[%s3 + $0x180] sm:$0xff]
  %v99 = vld [vmem:[%s3 + $0x188] sm:$0xff]
  %v100 = vld [vmem:[%s3 + $0x190] sm:$0xff]
  %v101 = vld [vmem:[%s3 + $0x198] sm:$0xff]
  %v102 = vld [vmem:[%s3 + $0x1a0] sm:$0xff]
  %v103 = vld [vmem:[%s3 + $0x1a8] sm:$0xff]
  %v104 = vld [vmem:[%s3 + $0x1b0] sm:$0xff]
  %v105 = vld [vmem:[%s3 + $0x1b8] sm:$0xff]
  %v106 = vld [vmem:[%s3 + $0x1c0] sm:$0xff]
  %v107 = vld [vmem:[%s3 + $0x1c8] sm:$0xff]
  %v108 = vld [vmem:[%s3 + $0x1d0] sm:$0xff]
  %v109 = vld [vmem:[%s3 + $0x1d8] sm:$0xff]
  %v110 = vld [vmem:[%s3 + $0x1e0] sm:$0xff]
  %v111 = vld [vmem:[%s3 + $0x1e8] sm:$0xff]
  %v112 = vld [vmem:[%s3 + $0x1f0] sm:$0xff]
  %v113 = vld [vmem:[%s3 + $0x1f8] sm:$0xff]
  %v114 = vld [vmem:[%s4] sm:$0xff]
  %v115 = vld [vmem:[%s4 + $0x8] sm:$0xff]
  %v116 = vld [vmem:[%s4 + $0x10] sm:$0xff]
  %v117 = vld [vmem:[%s4 + $0x18] sm:$0xff]
  %v118 = vld [vmem:[%s4 + $0x20] sm:$0xff]
  %v119 = vld [vmem:[%s4 + $0x28] sm:$0xff]
  %v120 = vld [vmem:[%s4 + $0x30] sm:$0xff]
  %v121 = vld [vmem:[%s4 + $0x38] sm:$0xff]
  %v122 = vld [vmem:[%s4 + $0x40] sm:$0xff]
  %v123 = vld [vmem:[%s4 + $0x48] sm:$0xff]
  %v124 = vld [vmem:[%s4 + $0x50] sm:$0xff]
  %v125 = vld [vmem:[%s4 + $0x58] sm:$0xff]
  %v126 = vld [vmem:[%s4 + $0x60] sm:$0xff]
  %v127 = vld [vmem:[%s4 + $0x68] sm:$0xff]
  %v128 = vld [vmem:[%s4 + $0x70] sm:$0xff]
  %v129 = vld [vmem:[%s4 + $0x78] sm:$0xff]
  %v130 = vld [vmem:[%s4 + $0x80] sm:$0xff]
  %v131 = vld [vmem:[%s4 + $0x88] sm:$0xff]
  %v132 = vld [vmem:[%s4 + $0x90] sm:$0xff]
  %v133 = vld [vmem:[%s4 + $0x98] sm:$0xff]
  %v134 = vld [vmem:[%s4 + $0xa0] sm:$0xff]
  %v135 = vld [vmem:[%s4 + $0xa8] sm:$0xff]
  %v136 = vld [vmem:[%s4 + $0xb0] sm:$0xff]
  %v137 = vld [vmem:[%s4 + $0xb8] sm:$0xff]
  %v138 = vld [vmem:[%s4 + $0xc0] sm:$0xff]
  %v139 = vld [vmem:[%s4 + $0xc8] sm:$0xff]
  %v140 = vld [vmem:[%s4 + $0xd0] sm:$0xff]
  %v141 = vld [vmem:[%s4 + $0xd8] sm:$0xff]
  %v142 = vld [vmem:[%s4 + $0xe0] sm:$0xff]
  %v143 = vld [vmem:[%s4 + $0xe8] sm:$0xff]
  %v144 = vld [vmem:[%s4 + $0xf0] sm:$0xff]
  %v145 = vld [vmem:[%s4 + $0xf8] sm:$0xff]
  %v146 = vld [vmem:[%s4 + $0x100] sm:$0xff]
  %v147 = vld [vmem:[%s4 + $0x108] sm:$0xff]
  %v148 = vld [vmem:[%s4 + $0x110] sm:$0xff]
  %v149 = vld [vmem:[%s4 + $0x118] sm:$0xff]
  %v150 = vld [vmem:[%s4 + $0x120] sm:$0xff]
  %v151 = vld [vmem:[%s4 + $0x128] sm:$0xff]
  %v152 = vld [vmem:[%s4 + $0x130] sm:$0xff]
  %v153 = vld [vmem:[%s4 + $0x138] sm:$0xff]
  %v154 = vld [vmem:[%s4 + $0x140] sm:$0xff]
  %v155 = vld [vmem:[%s4 + $0x148] sm:$0xff]
  %v156 = vld [vmem:[%s4 + $0x150] sm:$0xff]
  %v157 = vld [vmem:[%s4 + $0x158] sm:$0xff]
  %v158 = vld [vmem:[%s4 + $0x160] sm:$0xff]
  %v159 = vld [vmem:[%s4 + $0x168] sm:$0xff]
  %v160 = vld [vmem:[%s4 + $0x170] sm:$0xff]
  %v161 = vld [vmem:[%s4 + $0x178] sm:$0xff]
  %v162 = vld [vmem:[%s4 + $0x180] sm:$0xff]
  %v163 = vld [vmem:[%s4 + $0x188] sm:$0xff]
  %v164 = vld [vmem:[%s4 + $0x190] sm:$0xff]
  %v165 = vld [vmem:[%s4 + $0x198] sm:$0xff]
  %v166 = vld [vmem:[%s4 + $0x1a0] sm:$0xff]
  %v167 = vld [vmem:[%s4 + $0x1a8] sm:$0xff]
  %v168 = vld [vmem:[%s4 + $0x1b0] sm:$0xff]
  %v169 = vld [vmem:[%s4 + $0x1b8] sm:$0xff]
  %v170 = vld [vmem:[%s4 + $0x1c0] sm:$0xff]
  %v171 = vld [vmem:[%s4 + $0x1c8] sm:$0xff]
  %v172 = vld [vmem:[%s4 + $0x1d0] sm:$0xff]
  %v173 = vld [vmem:[%s4 + $0x1d8] sm:$0xff]
  %v174 = vld [vmem:[%s4 + $0x1e0] sm:$0xff]
  %v175 = vld [vmem:[%s4 + $0x1e8] sm:$0xff]
  %v176 = vld [vmem:[%s4 + $0x1f0] sm:$0xff]
  %v177 = vld [vmem:[%s4 + $0x1f8] sm:$0xff]
  %v182 = vrot.slane %v34, 1
  %v183 = vrot.slane %v34, 2
  %v184 = vrot.slane %v34, 3
  %v185 = vrot.slane %v34, 4
  %v186 = vrot.slane %v34, 5
  %v187 = vrot.slane %v34, 6
  %v188 = vrot.slane %v34, 7
  %v189 = vrot.slane %v35, 1
  %v190 = vrot.slane %v35, 2
  %v191 = vrot.slane %v35, 3
  %v192 = vrot.slane %v35, 4
  %v193 = vrot.slane %v35, 5
  %v194 = vrot.slane %v35, 6
  %v195 = vrot.slane %v35, 7
  %v196 = vrot.slane %v36, 1
  %v197 = vrot.slane %v36, 2
  %v198 = vrot.slane %v36, 3
  %v199 = vrot.slane %v36, 4
  %v200 = vrot.slane %v36, 5
  %v201 = vrot.slane %v36, 6
  %v202 = vrot.slane %v36, 7
  %v203 = vrot.slane %v37, 1
  %v204 = vrot.slane %v37, 2
  %v205 = vrot.slane %v37, 3
  %v206 = vrot.slane %v37, 4
  %v207 = vrot.slane %v37, 5
  %v208 = vrot.slane %v37, 6
  %v209 = vrot.slane %v37, 7
  %v210 = vperm.slane %v34, 0
  %v211 = vperm.slane %v182, 0
  %v212 = vperm.slane %v183, 0
  %v213 = vperm.slane %v184, 0
  %v214 = vperm.slane %v185, 0
  %v215 = vperm.slane %v186, 0
  %v216 = vperm.slane %v187, 0
  %v217 = vperm.slane %v188, 0
  %v218 = vperm.slane %v35, 0
  %v219 = vperm.slane %v189, 0
  %v220 = vperm.slane %v190, 0
  %v221 = vperm.slane %v191, 0
  %v222 = vperm.slane %v192, 0
  %v223 = vperm.slane %v193, 0
  %v224 = vperm.slane %v194, 0
  %v225 = vperm.slane %v195, 0
  %v226 = vperm.slane %v36, 0
  %v227 = vperm.slane %v196, 0
  %v228 = vperm.slane %v197, 0
  %v229 = vperm.slane %v198, 0
  %v230 = vperm.slane %v199, 0
  %v231 = vperm.slane %v200, 0
  %v232 = vperm.slane %v201, 0
  %v233 = vperm.slane %v202, 0
  %v234 = vperm.slane %v37, 0
  %v235 = vperm.slane %v203, 0
  %v236 = vperm.slane %v204, 0
  %v237 = vperm.slane %v205, 0
  %v238 = vperm.slane %v206, 0
  %v239 = vperm.slane %v207, 0
  %v240 = vperm.slane %v208, 0
  %v241 = vperm.slane %v209, 0
  %v274 = vsub.f32 %v210, %v50
  %v275 = vsub.f32 %v210, %v51
  %v276 = vsub.f32 %v211, %v52
  %v277 = vsub.f32 %v211, %v53
  %v278 = vsub.f32 %v212, %v54
  %v279 = vsub.f32 %v212, %v55
  %v280 = vsub.f32 %v213, %v56
  %v281 = vsub.f32 %v213, %v57
  %v282 = vsub.f32 %v214, %v58
  %v283 = vsub.f32 %v214, %v59
  %v284 = vsub.f32 %v215, %v60
  %v285 = vsub.f32 %v215, %v61
  %v286 = vsub.f32 %v216, %v62
  %v287 = vsub.f32 %v216, %v63
  %v288 = vsub.f32 %v217, %v64
  %v289 = vsub.f32 %v217, %v65
  %v290 = vsub.f32 %v218, %v66
  %v291 = vsub.f32 %v218, %v67
  %v292 = vsub.f32 %v219, %v68
  %v293 = vsub.f32 %v219, %v69
  %v294 = vsub.f32 %v220, %v70
  %v295 = vsub.f32 %v220, %v71
  %v296 = vsub.f32 %v221, %v72
  %v297 = vsub.f32 %v221, %v73
  %v298 = vsub.f32 %v222, %v74
  %v299 = vsub.f32 %v222, %v75
  %v300 = vsub.f32 %v223, %v76
  %v301 = vsub.f32 %v223, %v77
  %v302 = vsub.f32 %v224, %v78
  %v303 = vsub.f32 %v224, %v79
  %v304 = vsub.f32 %v225, %v80
  %v305 = vsub.f32 %v225, %v81
  %v306 = vsub.f32 %v226, %v82
  %v307 = vsub.f32 %v226, %v83
  %v308 = vsub.f32 %v227, %v84
  %v309 = vsub.f32 %v227, %v85
  %v310 = vsub.f32 %v228, %v86
  %v311 = vsub.f32 %v228, %v87
  %v312 = vsub.f32 %v229, %v88
  %v313 = vsub.f32 %v229, %v89
  %v314 = vsub.f32 %v230, %v90
  %v315 = vsub.f32 %v230, %v91
  %v316 = vsub.f32 %v231, %v92
  %v317 = vsub.f32 %v231, %v93
  %v318 = vsub.f32 %v232, %v94
  %v319 = vsub.f32 %v232, %v95
  %v320 = vsub.f32 %v233, %v96
  %v321 = vsub.f32 %v233, %v97
  %v322 = vsub.f32 %v234, %v98
  %v323 = vsub.f32 %v234, %v99
  %v324 = vsub.f32 %v235, %v100
  %v325 = vsub.f32 %v235, %v101
  %v326 = vsub.f32 %v236, %v102
  %v327 = vsub.f32 %v236, %v103
  %v328 = vsub.f32 %v237, %v104
  %v329 = vsub.f32 %v237, %v105
  %v330 = vsub.f32 %v238, %v106
  %v331 = vsub.f32 %v238, %v107
  %v332 = vsub.f32 %v239, %v108
  %v333 = vsub.f32 %v239, %v109
  %v334 = vsub.f32 %v240, %v110
  %v335 = vsub.f32 %v240, %v111
  %v336 = vsub.f32 %v241, %v112
  %v337 = vsub.f32 %v241, %v113
  %v342 = vrot.slane %v38, 1
  %v343 = vrot.slane %v38, 2
  %v344 = vrot.slane %v38, 3
  %v345 = vrot.slane %v38, 4
  %v346 = vrot.slane %v38, 5
  %v347 = vrot.slane %v38, 6
  %v348 = vrot.slane %v38, 7
  %v349 = vrot.slane %v39, 1
  %v350 = vrot.slane %v39, 2
  %v351 = vrot.slane %v39, 3
  %v352 = vrot.slane %v39, 4
  %v353 = vrot.slane %v39, 5
  %v354 = vrot.slane %v39, 6
  %v355 = vrot.slane %v39, 7
  %v356 = vrot.slane %v40, 1
  %v357 = vrot.slane %v40, 2
  %v358 = vrot.slane %v40, 3
  %v359 = vrot.slane %v40, 4
  %v360 = vrot.slane %v40, 5
  %v361 = vrot.slane %v40, 6
  %v362 = vrot.slane %v40, 7
  %v363 = vrot.slane %v41, 1
  %v364 = vrot.slane %v41, 2
  %v365 = vrot.slane %v41, 3
  %v366 = vrot.slane %v41, 4
  %v367 = vrot.slane %v41, 5
  %v368 = vrot.slane %v41, 6
  %v369 = vrot.slane %v41, 7
  %v370 = vperm.slane %v38, 0
  %v371 = vperm.slane %v342, 0
  %v372 = vperm.slane %v343, 0
  %v373 = vperm.slane %v344, 0
  %v374 = vperm.slane %v345, 0
  %v375 = vperm.slane %v346, 0
  %v376 = vperm.slane %v347, 0
  %v377 = vperm.slane %v348, 0
  %v378 = vperm.slane %v39, 0
  %v379 = vperm.slane %v349, 0
  %v380 = vperm.slane %v350, 0
  %v381 = vperm.slane %v351, 0
  %v382 = vperm.slane %v352, 0
  %v383 = vperm.slane %v353, 0
  %v384 = vperm.slane %v354, 0
  %v385 = vperm.slane %v355, 0
  %v386 = vperm.slane %v40, 0
  %v387 = vperm.slane %v356, 0
  %v388 = vperm.slane %v357, 0
  %v389 = vperm.slane %v358, 0
  %v390 = vperm.slane %v359, 0
  %v391 = vperm.slane %v360, 0
  %v392 = vperm.slane %v361, 0
  %v393 = vperm.slane %v362, 0
  %v394 = vperm.slane %v41, 0
  %v395 = vperm.slane %v363, 0
  %v396 = vperm.slane %v364, 0
  %v397 = vperm.slane %v365, 0
  %v398 = vperm.slane %v366, 0
  %v399 = vperm.slane %v367, 0
  %v400 = vperm.slane %v368, 0
  %v401 = vperm.slane %v369, 0
  %v434 = vsub.f32 %v370, %v114
  %v435 = vsub.f32 %v370, %v115
  %v436 = vsub.f32 %v371, %v116
  %v437 = vsub.f32 %v371, %v117
  %v438 = vsub.f32 %v372, %v118
  %v439 = vsub.f32 %v372, %v119
  %v440 = vsub.f32 %v373, %v120
  %v441 = vsub.f32 %v373, %v121
  %v442 = vsub.f32 %v374, %v122
  %v443 = vsub.f32 %v374, %v123
  %v444 = vsub.f32 %v375, %v124
  %v445 = vsub.f32 %v375, %v125
  %v446 = vsub.f32 %v376, %v126
  %v447 = vsub.f32 %v376, %v127
  %v448 = vsub.f32 %v377, %v128
  %v449 = vsub.f32 %v377, %v129
  %v450 = vsub.f32 %v378, %v130
  %v451 = vsub.f32 %v378, %v131
  %v452 = vsub.f32 %v379, %v132
  %v453 = vsub.f32 %v379, %v133
  %v454 = vsub.f32 %v380, %v134
  %v455 = vsub.f32 %v380, %v135
  %v456 = vsub.f32 %v381, %v136
  %v457 = vsub.f32 %v381, %v137
  %v458 = vsub.f32 %v382, %v138
  %v459 = vsub.f32 %v382, %v139
  %v460 = vsub.f32 %v383, %v140
  %v461 = vsub.f32 %v383, %v141
  %v462 = vsub.f32 %v384, %v142
  %v463 = vsub.f32 %v384, %v143
  %v464 = vsub.f32 %v385, %v144
  %v465 = vsub.f32 %v385, %v145
  %v466 = vsub.f32 %v386, %v146
  %v467 = vsub.f32 %v386, %v147
  %v468 = vsub.f32 %v387, %v148
  %v469 = vsub.f32 %v387, %v149
  %v470 = vsub.f32 %v388, %v150
  %v471 = vsub.f32 %v388, %v151
  %v472 = vsub.f32 %v389, %v152
  %v473 = vsub.f32 %v389, %v153
  %v474 = vsub.f32 %v390, %v154
  %v475 = vsub.f32 %v390, %v155
  %v476 = vsub.f32 %v391, %v156
  %v477 = vsub.f32 %v391, %v157
  %v478 = vsub.f32 %v392, %v158
  %v479 = vsub.f32 %v392, %v159
  %v480 = vsub.f32 %v393, %v160
  %v481 = vsub.f32 %v393, %v161
  %v482 = vsub.f32 %v394, %v162
  %v483 = vsub.f32 %v394, %v163
  %v484 = vsub.f32 %v395, %v164
  %v485 = vsub.f32 %v395, %v165
  %v486 = vsub.f32 %v396, %v166
  %v487 = vsub.f32 %v396, %v167
  %v488 = vsub.f32 %v397, %v168
  %v489 = vsub.f32 %v397, %v169
  %v490 = vsub.f32 %v398, %v170
  %v491 = vsub.f32 %v398, %v171
  %v492 = vsub.f32 %v399, %v172
  %v493 = vsub.f32 %v399, %v173
  %v494 = vsub.f32 %v400, %v174
  %v495 = vsub.f32 %v400, %v175
  %v496 = vsub.f32 %v401, %v176
  %v497 = vsub.f32 %v401, %v177
  %v502 = vrot.slane %v42, 1
  %v503 = vrot.slane %v42, 2
  %v504 = vrot.slane %v42, 3
  %v505 = vrot.slane %v42, 4
  %v506 = vrot.slane %v42, 5
  %v507 = vrot.slane %v42, 6
  %v508 = vrot.slane %v42, 7
  %v509 = vrot.slane %v43, 1
  %v510 = vrot.slane %v43, 2
  %v511 = vrot.slane %v43, 3
  %v512 = vrot.slane %v43, 4
  %v513 = vrot.slane %v43, 5
  %v514 = vrot.slane %v43, 6
  %v515 = vrot.slane %v43, 7
  %v516 = vrot.slane %v44, 1
  %v517 = vrot.slane %v44, 2
  %v518 = vrot.slane %v44, 3
  %v519 = vrot.slane %v44, 4
  %v520 = vrot.slane %v44, 5
  %v521 = vrot.slane %v44, 6
  %v522 = vrot.slane %v44, 7
  %v523 = vrot.slane %v45, 1
  %v524 = vrot.slane %v45, 2
  %v525 = vrot.slane %v45, 3
  %v526 = vrot.slane %v45, 4
  %v527 = vrot.slane %v45, 5
  %v528 = vrot.slane %v45, 6
  %v529 = vrot.slane %v45, 7
  %v530 = vperm.slane %v42, 0
  %v531 = vperm.slane %v502, 0
  %v532 = vperm.slane %v503, 0
  %v533 = vperm.slane %v504, 0
  %v534 = vperm.slane %v505, 0
  %v535 = vperm.slane %v506, 0
  %v536 = vperm.slane %v507, 0
  %v537 = vperm.slane %v508, 0
  %v538 = vperm.slane %v43, 0
  %v539 = vperm.slane %v509, 0
  %v540 = vperm.slane %v510, 0
  %v541 = vperm.slane %v511, 0
  %v542 = vperm.slane %v512, 0
  %v543 = vperm.slane %v513, 0
  %v544 = vperm.slane %v514, 0
  %v545 = vperm.slane %v515, 0
  %v546 = vperm.slane %v44, 0
  %v547 = vperm.slane %v516, 0
  %v548 = vperm.slane %v517, 0
  %v549 = vperm.slane %v518, 0
  %v550 = vperm.slane %v519, 0
  %v551 = vperm.slane %v520, 0
  %v552 = vperm.slane %v521, 0
  %v553 = vperm.slane %v522, 0
  %v554 = vperm.slane %v45, 0
  %v555 = vperm.slane %v523, 0
  %v556 = vperm.slane %v524, 0
  %v557 = vperm.slane %v525, 0
  %v558 = vperm.slane %v526, 0
  %v559 = vperm.slane %v527, 0
  %v560 = vperm.slane %v528, 0
  %v561 = vperm.slane %v529, 0
  %v594 = vmul.f32 %v274, %v530
  %v595 = vmul.f32 %v275, %v530
  %v596 = vmul.f32 %v276, %v531
  %v597 = vmul.f32 %v277, %v531
  %v598 = vmul.f32 %v278, %v532
  %v599 = vmul.f32 %v279, %v532
  %v600 = vmul.f32 %v280, %v533
  %v601 = vmul.f32 %v281, %v533
  %v602 = vmul.f32 %v282, %v534
  %v603 = vmul.f32 %v283, %v534
  %v604 = vmul.f32 %v284, %v535
  %v605 = vmul.f32 %v285, %v535
  %v606 = vmul.f32 %v286, %v536
  %v607 = vmul.f32 %v287, %v536
  %v608 = vmul.f32 %v288, %v537
  %v609 = vmul.f32 %v289, %v537
  %v610 = vmul.f32 %v290, %v538
  %v611 = vmul.f32 %v291, %v538
  %v612 = vmul.f32 %v292, %v539
  %v613 = vmul.f32 %v293, %v539
  %v614 = vmul.f32 %v294, %v540
  %v615 = vmul.f32 %v295, %v540
  %v616 = vmul.f32 %v296, %v541
  %v617 = vmul.f32 %v297, %v541
  %v618 = vmul.f32 %v298, %v542
  %v619 = vmul.f32 %v299, %v542
  %v620 = vmul.f32 %v300, %v543
  %v621 = vmul.f32 %v301, %v543
  %v622 = vmul.f32 %v302, %v544
  %v623 = vmul.f32 %v303, %v544
  %v624 = vmul.f32 %v304, %v545
  %v625 = vmul.f32 %v305, %v545
  %v626 = vmul.f32 %v306, %v546
  %v627 = vmul.f32 %v307, %v546
  %v628 = vmul.f32 %v308, %v547
  %v629 = vmul.f32 %v309, %v547
  %v630 = vmul.f32 %v310, %v548
  %v631 = vmul.f32 %v311, %v548
  %v632 = vmul.f32 %v312, %v549
  %v633 = vmul.f32 %v313, %v549
  %v634 = vmul.f32 %v314, %v550
  %v635 = vmul.f32 %v315, %v550
  %v636 = vmul.f32 %v316, %v551
  %v637 = vmul.f32 %v317, %v551
  %v638 = vmul.f32 %v318, %v552
  %v639 = vmul.f32 %v319, %v552
  %v640 = vmul.f32 %v320, %v553
  %v641 = vmul.f32 %v321, %v553
  %v642 = vmul.f32 %v322, %v554
  %v643 = vmul.f32 %v323, %v554
  %v644 = vmul.f32 %v324, %v555
  %v645 = vmul.f32 %v325, %v555
  %v646 = vmul.f32 %v326, %v556
  %v647 = vmul.f32 %v327, %v556
  %v648 = vmul.f32 %v328, %v557
  %v649 = vmul.f32 %v329, %v557
  %v650 = vmul.f32 %v330, %v558
  %v651 = vmul.f32 %v331, %v558
  %v652 = vmul.f32 %v332, %v559
  %v653 = vmul.f32 %v333, %v559
  %v654 = vmul.f32 %v334, %v560
  %v655 = vmul.f32 %v335, %v560
  %v656 = vmul.f32 %v336, %v561
  %v657 = vmul.f32 %v337, %v561
  %vm658 = vcmask 64512
  %v659 = vsel %vm658, %v594, 0.0
  %660 = vadd.xlane.f32.xlu0 %v659
  %v661 = vpop.xlane.xlu0 %660
  %v662 = vsel %vm658, %v595, 0.0
  %663 = vadd.xlane.f32.xlu0 %v662
  %v664 = vpop.xlane.xlu0 %663
  %v665 = vsel %vm658, %v596, 0.0
  %666 = vadd.xlane.f32.xlu0 %v665
  %v667 = vpop.xlane.xlu0 %666
  %v668 = vsel %vm658, %v597, 0.0
  %669 = vadd.xlane.f32.xlu0 %v668
  %v670 = vpop.xlane.xlu0 %669
  %v671 = vsel %vm658, %v598, 0.0
  %672 = vadd.xlane.f32.xlu0 %v671
  %v673 = vpop.xlane.xlu0 %672
  %v674 = vsel %vm658, %v599, 0.0
  %675 = vadd.xlane.f32.xlu0 %v674
  %v676 = vpop.xlane.xlu0 %675
  %v677 = vsel %vm658, %v600, 0.0
  %678 = vadd.xlane.f32.xlu0 %v677
  %v679 = vpop.xlane.xlu0 %678
  %v680 = vsel %vm658, %v601, 0.0
  %681 = vadd.xlane.f32.xlu0 %v680
  %v682 = vpop.xlane.xlu0 %681
  %v683 = vsel %vm658, %v602, 0.0
  %684 = vadd.xlane.f32.xlu0 %v683
  %v685 = vpop.xlane.xlu0 %684
  %v686 = vsel %vm658, %v603, 0.0
  %687 = vadd.xlane.f32.xlu0 %v686
  %v688 = vpop.xlane.xlu0 %687
  %v689 = vsel %vm658, %v604, 0.0
  %690 = vadd.xlane.f32.xlu0 %v689
  %v691 = vpop.xlane.xlu0 %690
  %v692 = vsel %vm658, %v605, 0.0
  %693 = vadd.xlane.f32.xlu0 %v692
  %v694 = vpop.xlane.xlu0 %693
  %v695 = vsel %vm658, %v606, 0.0
  %696 = vadd.xlane.f32.xlu0 %v695
  %v697 = vpop.xlane.xlu0 %696
  %v698 = vsel %vm658, %v607, 0.0
  %699 = vadd.xlane.f32.xlu0 %v698
  %v700 = vpop.xlane.xlu0 %699
  %v701 = vsel %vm658, %v608, 0.0
  %702 = vadd.xlane.f32.xlu0 %v701
  %v703 = vpop.xlane.xlu0 %702
  %v704 = vsel %vm658, %v609, 0.0
  %705 = vadd.xlane.f32.xlu0 %v704
  %v706 = vpop.xlane.xlu0 %705
  %v707 = vsel %vm658, %v610, 0.0
  %708 = vadd.xlane.f32.xlu0 %v707
  %v709 = vpop.xlane.xlu0 %708
  %v710 = vsel %vm658, %v611, 0.0
  %711 = vadd.xlane.f32.xlu0 %v710
  %v712 = vpop.xlane.xlu0 %711
  %v713 = vsel %vm658, %v612, 0.0
  %714 = vadd.xlane.f32.xlu0 %v713
  %v715 = vpop.xlane.xlu0 %714
  %v716 = vsel %vm658, %v613, 0.0
  %717 = vadd.xlane.f32.xlu0 %v716
  %v718 = vpop.xlane.xlu0 %717
  %v719 = vsel %vm658, %v614, 0.0
  %720 = vadd.xlane.f32.xlu0 %v719
  %v721 = vpop.xlane.xlu0 %720
  %v722 = vsel %vm658, %v615, 0.0
  %723 = vadd.xlane.f32.xlu0 %v722
  %v724 = vpop.xlane.xlu0 %723
  %v725 = vsel %vm658, %v616, 0.0
  %726 = vadd.xlane.f32.xlu0 %v725
  %v727 = vpop.xlane.xlu0 %726
  %v728 = vsel %vm658, %v617, 0.0
  %729 = vadd.xlane.f32.xlu0 %v728
  %v730 = vpop.xlane.xlu0 %729
  %v731 = vsel %vm658, %v618, 0.0
  %732 = vadd.xlane.f32.xlu0 %v731
  %v733 = vpop.xlane.xlu0 %732
  %v734 = vsel %vm658, %v619, 0.0
  %735 = vadd.xlane.f32.xlu0 %v734
  %v736 = vpop.xlane.xlu0 %735
  %v737 = vsel %vm658, %v620, 0.0
  %738 = vadd.xlane.f32.xlu0 %v737
  %v739 = vpop.xlane.xlu0 %738
  %v740 = vsel %vm658, %v621, 0.0
  %741 = vadd.xlane.f32.xlu0 %v740
  %v742 = vpop.xlane.xlu0 %741
  %v743 = vsel %vm658, %v622, 0.0
  %744 = vadd.xlane.f32.xlu0 %v743
  %v745 = vpop.xlane.xlu0 %744
  %v746 = vsel %vm658, %v623, 0.0
  %747 = vadd.xlane.f32.xlu0 %v746
  %v748 = vpop.xlane.xlu0 %747
  %v749 = vsel %vm658, %v624, 0.0
  %750 = vadd.xlane.f32.xlu0 %v749
  %v751 = vpop.xlane.xlu0 %750
  %v752 = vsel %vm658, %v625, 0.0
  %753 = vadd.xlane.f32.xlu0 %v752
  %v754 = vpop.xlane.xlu0 %753
  %v755 = vsel %vm658, %v626, 0.0
  %756 = vadd.xlane.f32.xlu0 %v755
  %v757 = vpop.xlane.xlu0 %756
  %v758 = vsel %vm658, %v627, 0.0
  %759 = vadd.xlane.f32.xlu0 %v758
  %v760 = vpop.xlane.xlu0 %759
  %v761 = vsel %vm658, %v628, 0.0
  %762 = vadd.xlane.f32.xlu0 %v761
  %v763 = vpop.xlane.xlu0 %762
  %v764 = vsel %vm658, %v629, 0.0
  %765 = vadd.xlane.f32.xlu0 %v764
  %v766 = vpop.xlane.xlu0 %765
  %v767 = vsel %vm658, %v630, 0.0
  %768 = vadd.xlane.f32.xlu0 %v767
  %v769 = vpop.xlane.xlu0 %768
  %v770 = vsel %vm658, %v631, 0.0
  %771 = vadd.xlane.f32.xlu0 %v770
  %v772 = vpop.xlane.xlu0 %771
  %v773 = vsel %vm658, %v632, 0.0
  %774 = vadd.xlane.f32.xlu0 %v773
  %v775 = vpop.xlane.xlu0 %774
  %v776 = vsel %vm658, %v633, 0.0
  %777 = vadd.xlane.f32.xlu0 %v776
  %v778 = vpop.xlane.xlu0 %777
  %v779 = vsel %vm658, %v634, 0.0
  %780 = vadd.xlane.f32.xlu0 %v779
  %v781 = vpop.xlane.xlu0 %780
  %v782 = vsel %vm658, %v635, 0.0
  %783 = vadd.xlane.f32.xlu0 %v782
  %v784 = vpop.xlane.xlu0 %783
  %v785 = vsel %vm658, %v636, 0.0
  %786 = vadd.xlane.f32.xlu0 %v785
  %v787 = vpop.xlane.xlu0 %786
  %v788 = vsel %vm658, %v637, 0.0
  %789 = vadd.xlane.f32.xlu0 %v788
  %v790 = vpop.xlane.xlu0 %789
  %v791 = vsel %vm658, %v638, 0.0
  %792 = vadd.xlane.f32.xlu0 %v791
  %v793 = vpop.xlane.xlu0 %792
  %v794 = vsel %vm658, %v639, 0.0
  %795 = vadd.xlane.f32.xlu0 %v794
  %v796 = vpop.xlane.xlu0 %795
  %v797 = vsel %vm658, %v640, 0.0
  %798 = vadd.xlane.f32.xlu0 %v797
  %v799 = vpop.xlane.xlu0 %798
  %v800 = vsel %vm658, %v641, 0.0
  %801 = vadd.xlane.f32.xlu0 %v800
  %v802 = vpop.xlane.xlu0 %801
  %v803 = vsel %vm658, %v642, 0.0
  %804 = vadd.xlane.f32.xlu0 %v803
  %v805 = vpop.xlane.xlu0 %804
  %v806 = vsel %vm658, %v643, 0.0
  %807 = vadd.xlane.f32.xlu0 %v806
  %v808 = vpop.xlane.xlu0 %807
  %v809 = vsel %vm658, %v644, 0.0
  %810 = vadd.xlane.f32.xlu0 %v809
  %v811 = vpop.xlane.xlu0 %810
  %v812 = vsel %vm658, %v645, 0.0
  %813 = vadd.xlane.f32.xlu0 %v812
  %v814 = vpop.xlane.xlu0 %813
  %v815 = vsel %vm658, %v646, 0.0
  %816 = vadd.xlane.f32.xlu0 %v815
  %v817 = vpop.xlane.xlu0 %816
  %v818 = vsel %vm658, %v647, 0.0
  %819 = vadd.xlane.f32.xlu0 %v818
  %v820 = vpop.xlane.xlu0 %819
  %v821 = vsel %vm658, %v648, 0.0
  %822 = vadd.xlane.f32.xlu0 %v821
  %v823 = vpop.xlane.xlu0 %822
  %v824 = vsel %vm658, %v649, 0.0
  %825 = vadd.xlane.f32.xlu0 %v824
  %v826 = vpop.xlane.xlu0 %825
  %v827 = vsel %vm658, %v650, 0.0
  %828 = vadd.xlane.f32.xlu0 %v827
  %v829 = vpop.xlane.xlu0 %828
  %v830 = vsel %vm658, %v651, 0.0
  %831 = vadd.xlane.f32.xlu0 %v830
  %v832 = vpop.xlane.xlu0 %831
  %v833 = vsel %vm658, %v652, 0.0
  %834 = vadd.xlane.f32.xlu0 %v833
  %v835 = vpop.xlane.xlu0 %834
  %v836 = vsel %vm658, %v653, 0.0
  %837 = vadd.xlane.f32.xlu0 %v836
  %v838 = vpop.xlane.xlu0 %837
  %v839 = vsel %vm658, %v654, 0.0
  %840 = vadd.xlane.f32.xlu0 %v839
  %v841 = vpop.xlane.xlu0 %840
  %v842 = vsel %vm658, %v655, 0.0
  %843 = vadd.xlane.f32.xlu0 %v842
  %v844 = vpop.xlane.xlu0 %843
  %v845 = vsel %vm658, %v656, 0.0
  %846 = vadd.xlane.f32.xlu0 %v845
  %v847 = vpop.xlane.xlu0 %846
  %v848 = vsel %vm658, %v657, 0.0
  %849 = vadd.xlane.f32.xlu0 %v848
  %v850 = vpop.xlane.xlu0 %849
  %v855 = vrot.slane %v46, 1
  %v856 = vrot.slane %v46, 2
  %v857 = vrot.slane %v46, 3
  %v858 = vrot.slane %v46, 4
  %v859 = vrot.slane %v46, 5
  %v860 = vrot.slane %v46, 6
  %v861 = vrot.slane %v46, 7
  %v862 = vrot.slane %v47, 1
  %v863 = vrot.slane %v47, 2
  %v864 = vrot.slane %v47, 3
  %v865 = vrot.slane %v47, 4
  %v866 = vrot.slane %v47, 5
  %v867 = vrot.slane %v47, 6
  %v868 = vrot.slane %v47, 7
  %v869 = vrot.slane %v48, 1
  %v870 = vrot.slane %v48, 2
  %v871 = vrot.slane %v48, 3
  %v872 = vrot.slane %v48, 4
  %v873 = vrot.slane %v48, 5
  %v874 = vrot.slane %v48, 6
  %v875 = vrot.slane %v48, 7
  %v876 = vrot.slane %v49, 1
  %v877 = vrot.slane %v49, 2
  %v878 = vrot.slane %v49, 3
  %v879 = vrot.slane %v49, 4
  %v880 = vrot.slane %v49, 5
  %v881 = vrot.slane %v49, 6
  %v882 = vrot.slane %v49, 7
  %v883 = vperm.slane %v46, 0
  %v884 = vperm.slane %v855, 0
  %v885 = vperm.slane %v856, 0
  %v886 = vperm.slane %v857, 0
  %v887 = vperm.slane %v858, 0
  %v888 = vperm.slane %v859, 0
  %v889 = vperm.slane %v860, 0
  %v890 = vperm.slane %v861, 0
  %v891 = vperm.slane %v47, 0
  %v892 = vperm.slane %v862, 0
  %v893 = vperm.slane %v863, 0
  %v894 = vperm.slane %v864, 0
  %v895 = vperm.slane %v865, 0
  %v896 = vperm.slane %v866, 0
  %v897 = vperm.slane %v867, 0
  %v898 = vperm.slane %v868, 0
  %v899 = vperm.slane %v48, 0
  %v900 = vperm.slane %v869, 0
  %v901 = vperm.slane %v870, 0
  %v902 = vperm.slane %v871, 0
  %v903 = vperm.slane %v872, 0
  %v904 = vperm.slane %v873, 0
  %v905 = vperm.slane %v874, 0
  %v906 = vperm.slane %v875, 0
  %v907 = vperm.slane %v49, 0
  %v908 = vperm.slane %v876, 0
  %v909 = vperm.slane %v877, 0
  %v910 = vperm.slane %v878, 0
  %v911 = vperm.slane %v879, 0
  %v912 = vperm.slane %v880, 0
  %v913 = vperm.slane %v881, 0
  %v914 = vperm.slane %v882, 0
  %v947 = vmul.f32 %v434, %v883
  %v948 = vmul.f32 %v435, %v883
  %v949 = vmul.f32 %v436, %v884
  %v950 = vmul.f32 %v437, %v884
  %v951 = vmul.f32 %v438, %v885
  %v952 = vmul.f32 %v439, %v885
  %v953 = vmul.f32 %v440, %v886
  %v954 = vmul.f32 %v441, %v886
  %v955 = vmul.f32 %v442, %v887
  %v956 = vmul.f32 %v443, %v887
  %v957 = vmul.f32 %v444, %v888
  %v958 = vmul.f32 %v445, %v888
  %v959 = vmul.f32 %v446, %v889
  %v960 = vmul.f32 %v447, %v889
  %v961 = vmul.f32 %v448, %v890
  %v962 = vmul.f32 %v449, %v890
  %v963 = vmul.f32 %v450, %v891
  %v964 = vmul.f32 %v451, %v891
  %v965 = vmul.f32 %v452, %v892
  %v966 = vmul.f32 %v453, %v892
  %v967 = vmul.f32 %v454, %v893
  %v968 = vmul.f32 %v455, %v893
  %v969 = vmul.f32 %v456, %v894
  %v970 = vmul.f32 %v457, %v894
  %v971 = vmul.f32 %v458, %v895
  %v972 = vmul.f32 %v459, %v895
  %v973 = vmul.f32 %v460, %v896
  %v974 = vmul.f32 %v461, %v896
  %v975 = vmul.f32 %v462, %v897
  %v976 = vmul.f32 %v463, %v897
  %v977 = vmul.f32 %v464, %v898
  %v978 = vmul.f32 %v465, %v898
  %v979 = vmul.f32 %v466, %v899
  %v980 = vmul.f32 %v467, %v899
  %v981 = vmul.f32 %v468, %v900
  %v982 = vmul.f32 %v469, %v900
  %v983 = vmul.f32 %v470, %v901
  %v984 = vmul.f32 %v471, %v901
  %v985 = vmul.f32 %v472, %v902
  %v986 = vmul.f32 %v473, %v902
  %v987 = vmul.f32 %v474, %v903
  %v988 = vmul.f32 %v475, %v903
  %v989 = vmul.f32 %v476, %v904
  %v990 = vmul.f32 %v477, %v904
  %v991 = vmul.f32 %v478, %v905
  %v992 = vmul.f32 %v479, %v905
  %v993 = vmul.f32 %v480, %v906
  %v994 = vmul.f32 %v481, %v906
  %v995 = vmul.f32 %v482, %v907
  %v996 = vmul.f32 %v483, %v907
  %v997 = vmul.f32 %v484, %v908
  %v998 = vmul.f32 %v485, %v908
  %v999 = vmul.f32 %v486, %v909
  %v1000 = vmul.f32 %v487, %v909
  %v1001 = vmul.f32 %v488, %v910
  %v1002 = vmul.f32 %v489, %v910
  %v1003 = vmul.f32 %v490, %v911
  %v1004 = vmul.f32 %v491, %v911
  %v1005 = vmul.f32 %v492, %v912
  %v1006 = vmul.f32 %v493, %v912
  %v1007 = vmul.f32 %v494, %v913
  %v1008 = vmul.f32 %v495, %v913
  %v1009 = vmul.f32 %v496, %v914
  %v1010 = vmul.f32 %v497, %v914
  %v1011 = vsel %vm658, %v947, 0.0
  %1012 = vadd.xlane.f32.xlu0 %v1011
  %v1013 = vpop.xlane.xlu0 %1012
  %v1014 = vsel %vm658, %v948, 0.0
  %1015 = vadd.xlane.f32.xlu0 %v1014
  %v1016 = vpop.xlane.xlu0 %1015
  %v1017 = vsel %vm658, %v949, 0.0
  %1018 = vadd.xlane.f32.xlu0 %v1017
  %v1019 = vpop.xlane.xlu0 %1018
  %v1020 = vsel %vm658, %v950, 0.0
  %1021 = vadd.xlane.f32.xlu0 %v1020
  %v1022 = vpop.xlane.xlu0 %1021
  %v1023 = vsel %vm658, %v951, 0.0
  %1024 = vadd.xlane.f32.xlu0 %v1023
  %v1025 = vpop.xlane.xlu0 %1024
  %v1026 = vsel %vm658, %v952, 0.0
  %1027 = vadd.xlane.f32.xlu0 %v1026
  %v1028 = vpop.xlane.xlu0 %1027
  %v1029 = vsel %vm658, %v953, 0.0
  %1030 = vadd.xlane.f32.xlu0 %v1029
  %v1031 = vpop.xlane.xlu0 %1030
  %v1032 = vsel %vm658, %v954, 0.0
  %1033 = vadd.xlane.f32.xlu0 %v1032
  %v1034 = vpop.xlane.xlu0 %1033
  %v1035 = vsel %vm658, %v955, 0.0
  %1036 = vadd.xlane.f32.xlu0 %v1035
  %v1037 = vpop.xlane.xlu0 %1036
  %v1038 = vsel %vm658, %v956, 0.0
  %1039 = vadd.xlane.f32.xlu0 %v1038
  %v1040 = vpop.xlane.xlu0 %1039
  %v1041 = vsel %vm658, %v957, 0.0
  %1042 = vadd.xlane.f32.xlu0 %v1041
  %v1043 = vpop.xlane.xlu0 %1042
  %v1044 = vsel %vm658, %v958, 0.0
  %1045 = vadd.xlane.f32.xlu0 %v1044
  %v1046 = vpop.xlane.xlu0 %1045
  %v1047 = vsel %vm658, %v959, 0.0
  %1048 = vadd.xlane.f32.xlu0 %v1047
  %v1049 = vpop.xlane.xlu0 %1048
  %v1050 = vsel %vm658, %v960, 0.0
  %1051 = vadd.xlane.f32.xlu0 %v1050
  %v1052 = vpop.xlane.xlu0 %1051
  %v1053 = vsel %vm658, %v961, 0.0
  %1054 = vadd.xlane.f32.xlu0 %v1053
  %v1055 = vpop.xlane.xlu0 %1054
  %v1056 = vsel %vm658, %v962, 0.0
  %1057 = vadd.xlane.f32.xlu0 %v1056
  %v1058 = vpop.xlane.xlu0 %1057
  %v1059 = vsel %vm658, %v963, 0.0
  %1060 = vadd.xlane.f32.xlu0 %v1059
  %v1061 = vpop.xlane.xlu0 %1060
  %v1062 = vsel %vm658, %v964, 0.0
  %1063 = vadd.xlane.f32.xlu0 %v1062
  %v1064 = vpop.xlane.xlu0 %1063
  %v1065 = vsel %vm658, %v965, 0.0
  %1066 = vadd.xlane.f32.xlu0 %v1065
  %v1067 = vpop.xlane.xlu0 %1066
  %v1068 = vsel %vm658, %v966, 0.0
  %1069 = vadd.xlane.f32.xlu0 %v1068
  %v1070 = vpop.xlane.xlu0 %1069
  %v1071 = vsel %vm658, %v967, 0.0
  %1072 = vadd.xlane.f32.xlu0 %v1071
  %v1073 = vpop.xlane.xlu0 %1072
  %v1074 = vsel %vm658, %v968, 0.0
  %1075 = vadd.xlane.f32.xlu0 %v1074
  %v1076 = vpop.xlane.xlu0 %1075
  %v1077 = vsel %vm658, %v969, 0.0
  %1078 = vadd.xlane.f32.xlu0 %v1077
  %v1079 = vpop.xlane.xlu0 %1078
  %v1080 = vsel %vm658, %v970, 0.0
  %1081 = vadd.xlane.f32.xlu0 %v1080
  %v1082 = vpop.xlane.xlu0 %1081
  %v1083 = vsel %vm658, %v971, 0.0
  %1084 = vadd.xlane.f32.xlu0 %v1083
  %v1085 = vpop.xlane.xlu0 %1084
  %v1086 = vsel %vm658, %v972, 0.0
  %1087 = vadd.xlane.f32.xlu0 %v1086
  %v1088 = vpop.xlane.xlu0 %1087
  %v1089 = vsel %vm658, %v973, 0.0
  %1090 = vadd.xlane.f32.xlu0 %v1089
  %v1091 = vpop.xlane.xlu0 %1090
  %v1092 = vsel %vm658, %v974, 0.0
  %1093 = vadd.xlane.f32.xlu0 %v1092
  %v1094 = vpop.xlane.xlu0 %1093
  %v1095 = vsel %vm658, %v975, 0.0
  %1096 = vadd.xlane.f32.xlu0 %v1095
  %v1097 = vpop.xlane.xlu0 %1096
  %v1098 = vsel %vm658, %v976, 0.0
  %1099 = vadd.xlane.f32.xlu0 %v1098
  %v1100 = vpop.xlane.xlu0 %1099
  %v1101 = vsel %vm658, %v977, 0.0
  %1102 = vadd.xlane.f32.xlu0 %v1101
  %v1103 = vpop.xlane.xlu0 %1102
  %v1104 = vsel %vm658, %v978, 0.0
  %1105 = vadd.xlane.f32.xlu0 %v1104
  %v1106 = vpop.xlane.xlu0 %1105
  %v1107 = vsel %vm658, %v979, 0.0
  %1108 = vadd.xlane.f32.xlu0 %v1107
  %v1109 = vpop.xlane.xlu0 %1108
  %v1110 = vsel %vm658, %v980, 0.0
  %1111 = vadd.xlane.f32.xlu0 %v1110
  %v1112 = vpop.xlane.xlu0 %1111
  %v1113 = vsel %vm658, %v981, 0.0
  %1114 = vadd.xlane.f32.xlu0 %v1113
  %v1115 = vpop.xlane.xlu0 %1114
  %v1116 = vsel %vm658, %v982, 0.0
  %1117 = vadd.xlane.f32.xlu0 %v1116
  %v1118 = vpop.xlane.xlu0 %1117
  %v1119 = vsel %vm658, %v983, 0.0
  %1120 = vadd.xlane.f32.xlu0 %v1119
  %v1121 = vpop.xlane.xlu0 %1120
  %v1122 = vsel %vm658, %v984, 0.0
  %1123 = vadd.xlane.f32.xlu0 %v1122
  %v1124 = vpop.xlane.xlu0 %1123
  %v1125 = vsel %vm658, %v985, 0.0
  %1126 = vadd.xlane.f32.xlu0 %v1125
  %v1127 = vpop.xlane.xlu0 %1126
  %v1128 = vsel %vm658, %v986, 0.0
  %1129 = vadd.xlane.f32.xlu0 %v1128
  %v1130 = vpop.xlane.xlu0 %1129
  %v1131 = vsel %vm658, %v987, 0.0
  %1132 = vadd.xlane.f32.xlu0 %v1131
  %v1133 = vpop.xlane.xlu0 %1132
  %v1134 = vsel %vm658, %v988, 0.0
  %1135 = vadd.xlane.f32.xlu0 %v1134
  %v1136 = vpop.xlane.xlu0 %1135
  %v1137 = vsel %vm658, %v989, 0.0
  %1138 = vadd.xlane.f32.xlu0 %v1137
  %v1139 = vpop.xlane.xlu0 %1138
  %v1140 = vsel %vm658, %v990, 0.0
  %1141 = vadd.xlane.f32.xlu0 %v1140
  %v1142 = vpop.xlane.xlu0 %1141
  %v1143 = vsel %vm658, %v991, 0.0
  %1144 = vadd.xlane.f32.xlu0 %v1143
  %v1145 = vpop.xlane.xlu0 %1144
  %v1146 = vsel %vm658, %v992, 0.0
  %1147 = vadd.xlane.f32.xlu0 %v1146
  %v1148 = vpop.xlane.xlu0 %1147
  %v1149 = vsel %vm658, %v993, 0.0
  %1150 = vadd.xlane.f32.xlu0 %v1149
  %v1151 = vpop.xlane.xlu0 %1150
  %v1152 = vsel %vm658, %v994, 0.0
  %1153 = vadd.xlane.f32.xlu0 %v1152
  %v1154 = vpop.xlane.xlu0 %1153
  %v1155 = vsel %vm658, %v995, 0.0
  %1156 = vadd.xlane.f32.xlu0 %v1155
  %v1157 = vpop.xlane.xlu0 %1156
  %v1158 = vsel %vm658, %v996, 0.0
  %1159 = vadd.xlane.f32.xlu0 %v1158
  %v1160 = vpop.xlane.xlu0 %1159
  %v1161 = vsel %vm658, %v997, 0.0
  %1162 = vadd.xlane.f32.xlu0 %v1161
  %v1163 = vpop.xlane.xlu0 %1162
  %v1164 = vsel %vm658, %v998, 0.0
  %1165 = vadd.xlane.f32.xlu0 %v1164
  %v1166 = vpop.xlane.xlu0 %1165
  %v1167 = vsel %vm658, %v999, 0.0
  %1168 = vadd.xlane.f32.xlu0 %v1167
  %v1169 = vpop.xlane.xlu0 %1168
  %v1170 = vsel %vm658, %v1000, 0.0
  %1171 = vadd.xlane.f32.xlu0 %v1170
  %v1172 = vpop.xlane.xlu0 %1171
  %v1173 = vsel %vm658, %v1001, 0.0
  %1174 = vadd.xlane.f32.xlu0 %v1173
  %v1175 = vpop.xlane.xlu0 %1174
  %v1176 = vsel %vm658, %v1002, 0.0
  %1177 = vadd.xlane.f32.xlu0 %v1176
  %v1178 = vpop.xlane.xlu0 %1177
  %v1179 = vsel %vm658, %v1003, 0.0
  %1180 = vadd.xlane.f32.xlu0 %v1179
  %v1181 = vpop.xlane.xlu0 %1180
  %v1182 = vsel %vm658, %v1004, 0.0
  %1183 = vadd.xlane.f32.xlu0 %v1182
  %v1184 = vpop.xlane.xlu0 %1183
  %v1185 = vsel %vm658, %v1005, 0.0
  %1186 = vadd.xlane.f32.xlu0 %v1185
  %v1187 = vpop.xlane.xlu0 %1186
  %v1188 = vsel %vm658, %v1006, 0.0
  %1189 = vadd.xlane.f32.xlu0 %v1188
  %v1190 = vpop.xlane.xlu0 %1189
  %v1191 = vsel %vm658, %v1007, 0.0
  %1192 = vadd.xlane.f32.xlu0 %v1191
  %v1193 = vpop.xlane.xlu0 %1192
  %v1194 = vsel %vm658, %v1008, 0.0
  %1195 = vadd.xlane.f32.xlu0 %v1194
  %v1196 = vpop.xlane.xlu0 %1195
  %v1197 = vsel %vm658, %v1009, 0.0
  %1198 = vadd.xlane.f32.xlu0 %v1197
  %v1199 = vpop.xlane.xlu0 %1198
  %v1200 = vsel %vm658, %v1010, 0.0
  %1201 = vadd.xlane.f32.xlu0 %v1200
  %v1202 = vpop.xlane.xlu0 %1201
  %v1203 = vld [vmem:[%s7] sm:$0xff]
  %v1204 = vld [vmem:[%s7 + $0x8] sm:$0xff]
  %v1205 = vld [vmem:[%s7 + $0x10] sm:$0xff]
  %v1206 = vld [vmem:[%s7 + $0x18] sm:$0xff]
  %v1207 = vstv %s33
  %v1208 = vmul.f32 %v1207, %v1203
  %v1209 = vmul.f32 %v1207, %v1204
  %v1210 = vmul.f32 %v1207, %v1205
  %v1211 = vmul.f32 %v1207, %v1206
  %v1276 = vlaneseq
  %v1277 = vand.u32 %v1276, 127
  %v1278 = vperm.slane %v661, %v1277
  %v1279 = vadd.s32 %v1277, 4294967288
  %v1280 = vperm.slane %v664, %v1279
  %vm1281 = vcmask 130112
  %v1282 = vsel %vm1281, %v1280, %v1278
  %v1283 = vperm.slane %v667, %v1277
  %v1284 = vperm.slane %v670, %v1279
  %v1285 = vsel %vm1281, %v1284, %v1283
  %v1286 = vperm.slane %v673, %v1277
  %v1287 = vperm.slane %v676, %v1279
  %v1288 = vsel %vm1281, %v1287, %v1286
  %v1289 = vperm.slane %v679, %v1277
  %v1290 = vperm.slane %v682, %v1279
  %v1291 = vsel %vm1281, %v1290, %v1289
  %v1292 = vperm.slane %v685, %v1277
  %v1293 = vperm.slane %v688, %v1279
  %v1294 = vsel %vm1281, %v1293, %v1292
  %v1295 = vperm.slane %v691, %v1277
  %v1296 = vperm.slane %v694, %v1279
  %v1297 = vsel %vm1281, %v1296, %v1295
  %v1298 = vperm.slane %v697, %v1277
  %v1299 = vperm.slane %v700, %v1279
  %v1300 = vsel %vm1281, %v1299, %v1298
  %v1301 = vperm.slane %v703, %v1277
  %v1302 = vperm.slane %v706, %v1279
  %v1303 = vsel %vm1281, %v1302, %v1301
  %v1304 = vperm.slane %v709, %v1277
  %v1305 = vperm.slane %v712, %v1279
  %v1306 = vsel %vm1281, %v1305, %v1304
  %v1307 = vperm.slane %v715, %v1277
  %v1308 = vperm.slane %v718, %v1279
  %v1309 = vsel %vm1281, %v1308, %v1307
  %v1310 = vperm.slane %v721, %v1277
  %v1311 = vperm.slane %v724, %v1279
  %v1312 = vsel %vm1281, %v1311, %v1310
  %v1313 = vperm.slane %v727, %v1277
  %v1314 = vperm.slane %v730, %v1279
  %v1315 = vsel %vm1281, %v1314, %v1313
  %v1316 = vperm.slane %v733, %v1277
  %v1317 = vperm.slane %v736, %v1279
  %v1318 = vsel %vm1281, %v1317, %v1316
  %v1319 = vperm.slane %v739, %v1277
  %v1320 = vperm.slane %v742, %v1279
  %v1321 = vsel %vm1281, %v1320, %v1319
  %v1322 = vperm.slane %v745, %v1277
  %v1323 = vperm.slane %v748, %v1279
  %v1324 = vsel %vm1281, %v1323, %v1322
  %v1325 = vperm.slane %v751, %v1277
  %v1326 = vperm.slane %v754, %v1279
  %v1327 = vsel %vm1281, %v1326, %v1325
  %v1328 = vperm.slane %v757, %v1277
  %v1329 = vperm.slane %v760, %v1279
  %v1330 = vsel %vm1281, %v1329, %v1328
  %v1331 = vperm.slane %v763, %v1277
  %v1332 = vperm.slane %v766, %v1279
  %v1333 = vsel %vm1281, %v1332, %v1331
  %v1334 = vperm.slane %v769, %v1277
  %v1335 = vperm.slane %v772, %v1279
  %v1336 = vsel %vm1281, %v1335, %v1334
  %v1337 = vperm.slane %v775, %v1277
  %v1338 = vperm.slane %v778, %v1279
  %v1339 = vsel %vm1281, %v1338, %v1337
  %v1340 = vperm.slane %v781, %v1277
  %v1341 = vperm.slane %v784, %v1279
  %v1342 = vsel %vm1281, %v1341, %v1340
  %v1343 = vperm.slane %v787, %v1277
  %v1344 = vperm.slane %v790, %v1279
  %v1345 = vsel %vm1281, %v1344, %v1343
  %v1346 = vperm.slane %v793, %v1277
  %v1347 = vperm.slane %v796, %v1279
  %v1348 = vsel %vm1281, %v1347, %v1346
  %v1349 = vperm.slane %v799, %v1277
  %v1350 = vperm.slane %v802, %v1279
  %v1351 = vsel %vm1281, %v1350, %v1349
  %v1352 = vperm.slane %v805, %v1277
  %v1353 = vperm.slane %v808, %v1279
  %v1354 = vsel %vm1281, %v1353, %v1352
  %v1355 = vperm.slane %v811, %v1277
  %v1356 = vperm.slane %v814, %v1279
  %v1357 = vsel %vm1281, %v1356, %v1355
  %v1358 = vperm.slane %v817, %v1277
  %v1359 = vperm.slane %v820, %v1279
  %v1360 = vsel %vm1281, %v1359, %v1358
  %v1361 = vperm.slane %v823, %v1277
  %v1362 = vperm.slane %v826, %v1279
  %v1363 = vsel %vm1281, %v1362, %v1361
  %v1364 = vperm.slane %v829, %v1277
  %v1365 = vperm.slane %v832, %v1279
  %v1366 = vsel %vm1281, %v1365, %v1364
  %v1367 = vperm.slane %v835, %v1277
  %v1368 = vperm.slane %v838, %v1279
  %v1369 = vsel %vm1281, %v1368, %v1367
  %v1370 = vperm.slane %v841, %v1277
  %v1371 = vperm.slane %v844, %v1279
  %v1372 = vsel %vm1281, %v1371, %v1370
  %v1373 = vperm.slane %v847, %v1277
  %v1374 = vperm.slane %v850, %v1279
  %v1375 = vsel %vm1281, %v1374, %v1373
  %vm1376 = vcmask 1041409
  %v1377 = vsel %vm1376, %v1285, %v1282
  %vm1378 = vcmask 1042434
  %v1379 = vsel %vm1378, %v1288, %v1377
  %vm1380 = vcmask 1043459
  %v1381 = vsel %vm1380, %v1291, %v1379
  %vm1382 = vcmask 1044484
  %v1383 = vsel %vm1382, %v1294, %v1381
  %vm1384 = vcmask 1045509
  %v1385 = vsel %vm1384, %v1297, %v1383
  %vm1386 = vcmask 1046534
  %v1387 = vsel %vm1386, %v1300, %v1385
  %vm1388 = vcmask 1047559
  %v1389 = vsel %vm1388, %v1303, %v1387
  %v1390 = vsel %vm1376, %v1309, %v1306
  %v1391 = vsel %vm1378, %v1312, %v1390
  %v1392 = vsel %vm1380, %v1315, %v1391
  %v1393 = vsel %vm1382, %v1318, %v1392
  %v1394 = vsel %vm1384, %v1321, %v1393
  %v1395 = vsel %vm1386, %v1324, %v1394
  %v1396 = vsel %vm1388, %v1327, %v1395
  %v1397 = vsel %vm1376, %v1333, %v1330
  %v1398 = vsel %vm1378, %v1336, %v1397
  %v1399 = vsel %vm1380, %v1339, %v1398
  %v1400 = vsel %vm1382, %v1342, %v1399
  %v1401 = vsel %vm1384, %v1345, %v1400
  %v1402 = vsel %vm1386, %v1348, %v1401
  %v1403 = vsel %vm1388, %v1351, %v1402
  %v1404 = vsel %vm1376, %v1357, %v1354
  %v1405 = vsel %vm1378, %v1360, %v1404
  %v1406 = vsel %vm1380, %v1363, %v1405
  %v1407 = vsel %vm1382, %v1366, %v1406
  %v1408 = vsel %vm1384, %v1369, %v1407
  %v1409 = vsel %vm1386, %v1372, %v1408
  %v1410 = vsel %vm1388, %v1375, %v1409
  %v1415 = vadd.f32 %v1208, %v1389
  %v1416 = vadd.f32 %v1209, %v1396
  %v1417 = vadd.f32 %v1210, %v1403
  %v1418 = vadd.f32 %v1211, %v1410
  %v1419 = vld [vmem:[%s8] sm:$0xff]
  %v1420 = vld [vmem:[%s8 + $0x8] sm:$0xff]
  %v1421 = vld [vmem:[%s8 + $0x10] sm:$0xff]
  %v1422 = vld [vmem:[%s8 + $0x18] sm:$0xff]
  %v1423 = vmul.f32 %v1207, %v1419
  %v1424 = vmul.f32 %v1207, %v1420
  %v1425 = vmul.f32 %v1207, %v1421
  %v1426 = vmul.f32 %v1207, %v1422
  %v1491 = vperm.slane %v1013, %v1277
  %v1492 = vperm.slane %v1016, %v1279
  %v1493 = vsel %vm1281, %v1492, %v1491
  %v1494 = vperm.slane %v1019, %v1277
  %v1495 = vperm.slane %v1022, %v1279
  %v1496 = vsel %vm1281, %v1495, %v1494
  %v1497 = vperm.slane %v1025, %v1277
  %v1498 = vperm.slane %v1028, %v1279
  %v1499 = vsel %vm1281, %v1498, %v1497
  %v1500 = vperm.slane %v1031, %v1277
  %v1501 = vperm.slane %v1034, %v1279
  %v1502 = vsel %vm1281, %v1501, %v1500
  %v1503 = vperm.slane %v1037, %v1277
  %v1504 = vperm.slane %v1040, %v1279
  %v1505 = vsel %vm1281, %v1504, %v1503
  %v1506 = vperm.slane %v1043, %v1277
  %v1507 = vperm.slane %v1046, %v1279
  %v1508 = vsel %vm1281, %v1507, %v1506
  %v1509 = vperm.slane %v1049, %v1277
  %v1510 = vperm.slane %v1052, %v1279
  %v1511 = vsel %vm1281, %v1510, %v1509
  %v1512 = vperm.slane %v1055, %v1277
  %v1513 = vperm.slane %v1058, %v1279
  %v1514 = vsel %vm1281, %v1513, %v1512
  %v1515 = vperm.slane %v1061, %v1277
  %v1516 = vperm.slane %v1064, %v1279
  %v1517 = vsel %vm1281, %v1516, %v1515
  %v1518 = vperm.slane %v1067, %v1277
  %v1519 = vperm.slane %v1070, %v1279
  %v1520 = vsel %vm1281, %v1519, %v1518
  %v1521 = vperm.slane %v1073, %v1277
  %v1522 = vperm.slane %v1076, %v1279
  %v1523 = vsel %vm1281, %v1522, %v1521
  %v1524 = vperm.slane %v1079, %v1277
  %v1525 = vperm.slane %v1082, %v1279
  %v1526 = vsel %vm1281, %v1525, %v1524
  %v1527 = vperm.slane %v1085, %v1277
  %v1528 = vperm.slane %v1088, %v1279
  %v1529 = vsel %vm1281, %v1528, %v1527
  %v1530 = vperm.slane %v1091, %v1277
  %v1531 = vperm.slane %v1094, %v1279
  %v1532 = vsel %vm1281, %v1531, %v1530
  %v1533 = vperm.slane %v1097, %v1277
  %v1534 = vperm.slane %v1100, %v1279
  %v1535 = vsel %vm1281, %v1534, %v1533
  %v1536 = vperm.slane %v1103, %v1277
  %v1537 = vperm.slane %v1106, %v1279
  %v1538 = vsel %vm1281, %v1537, %v1536
  %v1539 = vperm.slane %v1109, %v1277
  %v1540 = vperm.slane %v1112, %v1279
  %v1541 = vsel %vm1281, %v1540, %v1539
  %v1542 = vperm.slane %v1115, %v1277
  %v1543 = vperm.slane %v1118, %v1279
  %v1544 = vsel %vm1281, %v1543, %v1542
  %v1545 = vperm.slane %v1121, %v1277
  %v1546 = vperm.slane %v1124, %v1279
  %v1547 = vsel %vm1281, %v1546, %v1545
  %v1548 = vperm.slane %v1127, %v1277
  %v1549 = vperm.slane %v1130, %v1279
  %v1550 = vsel %vm1281, %v1549, %v1548
  %v1551 = vperm.slane %v1133, %v1277
  %v1552 = vperm.slane %v1136, %v1279
  %v1553 = vsel %vm1281, %v1552, %v1551
  %v1554 = vperm.slane %v1139, %v1277
  %v1555 = vperm.slane %v1142, %v1279
  %v1556 = vsel %vm1281, %v1555, %v1554
  %v1557 = vperm.slane %v1145, %v1277
  %v1558 = vperm.slane %v1148, %v1279
  %v1559 = vsel %vm1281, %v1558, %v1557
  %v1560 = vperm.slane %v1151, %v1277
  %v1561 = vperm.slane %v1154, %v1279
  %v1562 = vsel %vm1281, %v1561, %v1560
  %v1563 = vperm.slane %v1157, %v1277
  %v1564 = vperm.slane %v1160, %v1279
  %v1565 = vsel %vm1281, %v1564, %v1563
  %v1566 = vperm.slane %v1163, %v1277
  %v1567 = vperm.slane %v1166, %v1279
  %v1568 = vsel %vm1281, %v1567, %v1566
  %v1569 = vperm.slane %v1169, %v1277
  %v1570 = vperm.slane %v1172, %v1279
  %v1571 = vsel %vm1281, %v1570, %v1569
  %v1572 = vperm.slane %v1175, %v1277
  %v1573 = vperm.slane %v1178, %v1279
  %v1574 = vsel %vm1281, %v1573, %v1572
  %v1575 = vperm.slane %v1181, %v1277
  %v1576 = vperm.slane %v1184, %v1279
  %v1577 = vsel %vm1281, %v1576, %v1575
  %v1578 = vperm.slane %v1187, %v1277
  %v1579 = vperm.slane %v1190, %v1279
  %v1580 = vsel %vm1281, %v1579, %v1578
  %v1581 = vperm.slane %v1193, %v1277
  %v1582 = vperm.slane %v1196, %v1279
  %v1583 = vsel %vm1281, %v1582, %v1581
  %v1584 = vperm.slane %v1199, %v1277
  %v1585 = vperm.slane %v1202, %v1279
  %v1586 = vsel %vm1281, %v1585, %v1584
  %v1587 = vsel %vm1376, %v1496, %v1493
  %v1588 = vsel %vm1378, %v1499, %v1587
  %v1589 = vsel %vm1380, %v1502, %v1588
  %v1590 = vsel %vm1382, %v1505, %v1589
  %v1591 = vsel %vm1384, %v1508, %v1590
  %v1592 = vsel %vm1386, %v1511, %v1591
  %v1593 = vsel %vm1388, %v1514, %v1592
  %v1594 = vsel %vm1376, %v1520, %v1517
  %v1595 = vsel %vm1378, %v1523, %v1594
  %v1596 = vsel %vm1380, %v1526, %v1595
  %v1597 = vsel %vm1382, %v1529, %v1596
  %v1598 = vsel %vm1384, %v1532, %v1597
  %v1599 = vsel %vm1386, %v1535, %v1598
  %v1600 = vsel %vm1388, %v1538, %v1599
  %v1601 = vsel %vm1376, %v1544, %v1541
  %v1602 = vsel %vm1378, %v1547, %v1601
  %v1603 = vsel %vm1380, %v1550, %v1602
  %v1604 = vsel %vm1382, %v1553, %v1603
  %v1605 = vsel %vm1384, %v1556, %v1604
  %v1606 = vsel %vm1386, %v1559, %v1605
  %v1607 = vsel %vm1388, %v1562, %v1606
  %v1608 = vsel %vm1376, %v1568, %v1565
  %v1609 = vsel %vm1378, %v1571, %v1608
  %v1610 = vsel %vm1380, %v1574, %v1609
  %v1611 = vsel %vm1382, %v1577, %v1610
  %v1612 = vsel %vm1384, %v1580, %v1611
  %v1613 = vsel %vm1386, %v1583, %v1612
  %v1614 = vsel %vm1388, %v1586, %v1613
  %v1619 = vadd.f32 %v1423, %v1593
  %v1620 = vadd.f32 %v1424, %v1600
  %v1621 = vadd.f32 %v1425, %v1607
  %v1622 = vadd.f32 %v1426, %v1614
  %v1623 = vmul.f32 %v274, %v274
  %v1624 = vmul.f32 %v275, %v275
  %v1625 = vmul.f32 %v276, %v276
  %v1626 = vmul.f32 %v277, %v277
  %v1627 = vmul.f32 %v278, %v278
  %v1628 = vmul.f32 %v279, %v279
  %v1629 = vmul.f32 %v280, %v280
  %v1630 = vmul.f32 %v281, %v281
  %v1631 = vmul.f32 %v282, %v282
  %v1632 = vmul.f32 %v283, %v283
  %v1633 = vmul.f32 %v284, %v284
  %v1634 = vmul.f32 %v285, %v285
  %v1635 = vmul.f32 %v286, %v286
  %v1636 = vmul.f32 %v287, %v287
  %v1637 = vmul.f32 %v288, %v288
  %v1638 = vmul.f32 %v289, %v289
  %v1639 = vmul.f32 %v290, %v290
  %v1640 = vmul.f32 %v291, %v291
  %v1641 = vmul.f32 %v292, %v292
  %v1642 = vmul.f32 %v293, %v293
  %v1643 = vmul.f32 %v294, %v294
  %v1644 = vmul.f32 %v295, %v295
  %v1645 = vmul.f32 %v296, %v296
  %v1646 = vmul.f32 %v297, %v297
  %v1647 = vmul.f32 %v298, %v298
  %v1648 = vmul.f32 %v299, %v299
  %v1649 = vmul.f32 %v300, %v300
  %v1650 = vmul.f32 %v301, %v301
  %v1651 = vmul.f32 %v302, %v302
  %v1652 = vmul.f32 %v303, %v303
  %v1653 = vmul.f32 %v304, %v304
  %v1654 = vmul.f32 %v305, %v305
  %v1655 = vmul.f32 %v306, %v306
  %v1656 = vmul.f32 %v307, %v307
  %v1657 = vmul.f32 %v308, %v308
  %v1658 = vmul.f32 %v309, %v309
  %v1659 = vmul.f32 %v310, %v310
  %v1660 = vmul.f32 %v311, %v311
  %v1661 = vmul.f32 %v312, %v312
  %v1662 = vmul.f32 %v313, %v313
  %v1663 = vmul.f32 %v314, %v314
  %v1664 = vmul.f32 %v315, %v315
  %v1665 = vmul.f32 %v316, %v316
  %v1666 = vmul.f32 %v317, %v317
  %v1667 = vmul.f32 %v318, %v318
  %v1668 = vmul.f32 %v319, %v319
  %v1669 = vmul.f32 %v320, %v320
  %v1670 = vmul.f32 %v321, %v321
  %v1671 = vmul.f32 %v322, %v322
  %v1672 = vmul.f32 %v323, %v323
  %v1673 = vmul.f32 %v324, %v324
  %v1674 = vmul.f32 %v325, %v325
  %v1675 = vmul.f32 %v326, %v326
  %v1676 = vmul.f32 %v327, %v327
  %v1677 = vmul.f32 %v328, %v328
  %v1678 = vmul.f32 %v329, %v329
  %v1679 = vmul.f32 %v330, %v330
  %v1680 = vmul.f32 %v331, %v331
  %v1681 = vmul.f32 %v332, %v332
  %v1682 = vmul.f32 %v333, %v333
  %v1683 = vmul.f32 %v334, %v334
  %v1684 = vmul.f32 %v335, %v335
  %v1685 = vmul.f32 %v336, %v336
  %v1686 = vmul.f32 %v337, %v337
  %v1687 = vsel %vm658, %v1623, 0.0
  %1688 = vadd.xlane.f32.xlu0 %v1687
  %v1689 = vpop.xlane.xlu0 %1688
  %v1690 = vsel %vm658, %v1624, 0.0
  %1691 = vadd.xlane.f32.xlu0 %v1690
  %v1692 = vpop.xlane.xlu0 %1691
  %v1693 = vsel %vm658, %v1625, 0.0
  %1694 = vadd.xlane.f32.xlu0 %v1693
  %v1695 = vpop.xlane.xlu0 %1694
  %v1696 = vsel %vm658, %v1626, 0.0
  %1697 = vadd.xlane.f32.xlu0 %v1696
  %v1698 = vpop.xlane.xlu0 %1697
  %v1699 = vsel %vm658, %v1627, 0.0
  %1700 = vadd.xlane.f32.xlu0 %v1699
  %v1701 = vpop.xlane.xlu0 %1700
  %v1702 = vsel %vm658, %v1628, 0.0
  %1703 = vadd.xlane.f32.xlu0 %v1702
  %v1704 = vpop.xlane.xlu0 %1703
  %v1705 = vsel %vm658, %v1629, 0.0
  %1706 = vadd.xlane.f32.xlu0 %v1705
  %v1707 = vpop.xlane.xlu0 %1706
  %v1708 = vsel %vm658, %v1630, 0.0
  %1709 = vadd.xlane.f32.xlu0 %v1708
  %v1710 = vpop.xlane.xlu0 %1709
  %v1711 = vsel %vm658, %v1631, 0.0
  %1712 = vadd.xlane.f32.xlu0 %v1711
  %v1713 = vpop.xlane.xlu0 %1712
  %v1714 = vsel %vm658, %v1632, 0.0
  %1715 = vadd.xlane.f32.xlu0 %v1714
  %v1716 = vpop.xlane.xlu0 %1715
  %v1717 = vsel %vm658, %v1633, 0.0
  %1718 = vadd.xlane.f32.xlu0 %v1717
  %v1719 = vpop.xlane.xlu0 %1718
  %v1720 = vsel %vm658, %v1634, 0.0
  %1721 = vadd.xlane.f32.xlu0 %v1720
  %v1722 = vpop.xlane.xlu0 %1721
  %v1723 = vsel %vm658, %v1635, 0.0
  %1724 = vadd.xlane.f32.xlu0 %v1723
  %v1725 = vpop.xlane.xlu0 %1724
  %v1726 = vsel %vm658, %v1636, 0.0
  %1727 = vadd.xlane.f32.xlu0 %v1726
  %v1728 = vpop.xlane.xlu0 %1727
  %v1729 = vsel %vm658, %v1637, 0.0
  %1730 = vadd.xlane.f32.xlu0 %v1729
  %v1731 = vpop.xlane.xlu0 %1730
  %v1732 = vsel %vm658, %v1638, 0.0
  %1733 = vadd.xlane.f32.xlu0 %v1732
  %v1734 = vpop.xlane.xlu0 %1733
  %v1735 = vsel %vm658, %v1639, 0.0
  %1736 = vadd.xlane.f32.xlu0 %v1735
  %v1737 = vpop.xlane.xlu0 %1736
  %v1738 = vsel %vm658, %v1640, 0.0
  %1739 = vadd.xlane.f32.xlu0 %v1738
  %v1740 = vpop.xlane.xlu0 %1739
  %v1741 = vsel %vm658, %v1641, 0.0
  %1742 = vadd.xlane.f32.xlu0 %v1741
  %v1743 = vpop.xlane.xlu0 %1742
  %v1744 = vsel %vm658, %v1642, 0.0
  %1745 = vadd.xlane.f32.xlu0 %v1744
  %v1746 = vpop.xlane.xlu0 %1745
  %v1747 = vsel %vm658, %v1643, 0.0
  %1748 = vadd.xlane.f32.xlu0 %v1747
  %v1749 = vpop.xlane.xlu0 %1748
  %v1750 = vsel %vm658, %v1644, 0.0
  %1751 = vadd.xlane.f32.xlu0 %v1750
  %v1752 = vpop.xlane.xlu0 %1751
  %v1753 = vsel %vm658, %v1645, 0.0
  %1754 = vadd.xlane.f32.xlu0 %v1753
  %v1755 = vpop.xlane.xlu0 %1754
  %v1756 = vsel %vm658, %v1646, 0.0
  %1757 = vadd.xlane.f32.xlu0 %v1756
  %v1758 = vpop.xlane.xlu0 %1757
  %v1759 = vsel %vm658, %v1647, 0.0
  %1760 = vadd.xlane.f32.xlu0 %v1759
  %v1761 = vpop.xlane.xlu0 %1760
  %v1762 = vsel %vm658, %v1648, 0.0
  %1763 = vadd.xlane.f32.xlu0 %v1762
  %v1764 = vpop.xlane.xlu0 %1763
  %v1765 = vsel %vm658, %v1649, 0.0
  %1766 = vadd.xlane.f32.xlu0 %v1765
  %v1767 = vpop.xlane.xlu0 %1766
  %v1768 = vsel %vm658, %v1650, 0.0
  %1769 = vadd.xlane.f32.xlu0 %v1768
  %v1770 = vpop.xlane.xlu0 %1769
  %v1771 = vsel %vm658, %v1651, 0.0
  %1772 = vadd.xlane.f32.xlu0 %v1771
  %v1773 = vpop.xlane.xlu0 %1772
  %v1774 = vsel %vm658, %v1652, 0.0
  %1775 = vadd.xlane.f32.xlu0 %v1774
  %v1776 = vpop.xlane.xlu0 %1775
  %v1777 = vsel %vm658, %v1653, 0.0
  %1778 = vadd.xlane.f32.xlu0 %v1777
  %v1779 = vpop.xlane.xlu0 %1778
  %v1780 = vsel %vm658, %v1654, 0.0
  %1781 = vadd.xlane.f32.xlu0 %v1780
  %v1782 = vpop.xlane.xlu0 %1781
  %v1783 = vsel %vm658, %v1655, 0.0
  %1784 = vadd.xlane.f32.xlu0 %v1783
  %v1785 = vpop.xlane.xlu0 %1784
  %v1786 = vsel %vm658, %v1656, 0.0
  %1787 = vadd.xlane.f32.xlu0 %v1786
  %v1788 = vpop.xlane.xlu0 %1787
  %v1789 = vsel %vm658, %v1657, 0.0
  %1790 = vadd.xlane.f32.xlu0 %v1789
  %v1791 = vpop.xlane.xlu0 %1790
  %v1792 = vsel %vm658, %v1658, 0.0
  %1793 = vadd.xlane.f32.xlu0 %v1792
  %v1794 = vpop.xlane.xlu0 %1793
  %v1795 = vsel %vm658, %v1659, 0.0
  %1796 = vadd.xlane.f32.xlu0 %v1795
  %v1797 = vpop.xlane.xlu0 %1796
  %v1798 = vsel %vm658, %v1660, 0.0
  %1799 = vadd.xlane.f32.xlu0 %v1798
  %v1800 = vpop.xlane.xlu0 %1799
  %v1801 = vsel %vm658, %v1661, 0.0
  %1802 = vadd.xlane.f32.xlu0 %v1801
  %v1803 = vpop.xlane.xlu0 %1802
  %v1804 = vsel %vm658, %v1662, 0.0
  %1805 = vadd.xlane.f32.xlu0 %v1804
  %v1806 = vpop.xlane.xlu0 %1805
  %v1807 = vsel %vm658, %v1663, 0.0
  %1808 = vadd.xlane.f32.xlu0 %v1807
  %v1809 = vpop.xlane.xlu0 %1808
  %v1810 = vsel %vm658, %v1664, 0.0
  %1811 = vadd.xlane.f32.xlu0 %v1810
  %v1812 = vpop.xlane.xlu0 %1811
  %v1813 = vsel %vm658, %v1665, 0.0
  %1814 = vadd.xlane.f32.xlu0 %v1813
  %v1815 = vpop.xlane.xlu0 %1814
  %v1816 = vsel %vm658, %v1666, 0.0
  %1817 = vadd.xlane.f32.xlu0 %v1816
  %v1818 = vpop.xlane.xlu0 %1817
  %v1819 = vsel %vm658, %v1667, 0.0
  %1820 = vadd.xlane.f32.xlu0 %v1819
  %v1821 = vpop.xlane.xlu0 %1820
  %v1822 = vsel %vm658, %v1668, 0.0
  %1823 = vadd.xlane.f32.xlu0 %v1822
  %v1824 = vpop.xlane.xlu0 %1823
  %v1825 = vsel %vm658, %v1669, 0.0
  %1826 = vadd.xlane.f32.xlu0 %v1825
  %v1827 = vpop.xlane.xlu0 %1826
  %v1828 = vsel %vm658, %v1670, 0.0
  %1829 = vadd.xlane.f32.xlu0 %v1828
  %v1830 = vpop.xlane.xlu0 %1829
  %v1831 = vsel %vm658, %v1671, 0.0
  %1832 = vadd.xlane.f32.xlu0 %v1831
  %v1833 = vpop.xlane.xlu0 %1832
  %v1834 = vsel %vm658, %v1672, 0.0
  %1835 = vadd.xlane.f32.xlu0 %v1834
  %v1836 = vpop.xlane.xlu0 %1835
  %v1837 = vsel %vm658, %v1673, 0.0
  %1838 = vadd.xlane.f32.xlu0 %v1837
  %v1839 = vpop.xlane.xlu0 %1838
  %v1840 = vsel %vm658, %v1674, 0.0
  %1841 = vadd.xlane.f32.xlu0 %v1840
  %v1842 = vpop.xlane.xlu0 %1841
  %v1843 = vsel %vm658, %v1675, 0.0
  %1844 = vadd.xlane.f32.xlu0 %v1843
  %v1845 = vpop.xlane.xlu0 %1844
  %v1846 = vsel %vm658, %v1676, 0.0
  %1847 = vadd.xlane.f32.xlu0 %v1846
  %v1848 = vpop.xlane.xlu0 %1847
  %v1849 = vsel %vm658, %v1677, 0.0
  %1850 = vadd.xlane.f32.xlu0 %v1849
  %v1851 = vpop.xlane.xlu0 %1850
  %v1852 = vsel %vm658, %v1678, 0.0
  %1853 = vadd.xlane.f32.xlu0 %v1852
  %v1854 = vpop.xlane.xlu0 %1853
  %v1855 = vsel %vm658, %v1679, 0.0
  %1856 = vadd.xlane.f32.xlu0 %v1855
  %v1857 = vpop.xlane.xlu0 %1856
  %v1858 = vsel %vm658, %v1680, 0.0
  %1859 = vadd.xlane.f32.xlu0 %v1858
  %v1860 = vpop.xlane.xlu0 %1859
  %v1861 = vsel %vm658, %v1681, 0.0
  %1862 = vadd.xlane.f32.xlu0 %v1861
  %v1863 = vpop.xlane.xlu0 %1862
  %v1864 = vsel %vm658, %v1682, 0.0
  %1865 = vadd.xlane.f32.xlu0 %v1864
  %v1866 = vpop.xlane.xlu0 %1865
  %v1867 = vsel %vm658, %v1683, 0.0
  %1868 = vadd.xlane.f32.xlu0 %v1867
  %v1869 = vpop.xlane.xlu0 %1868
  %v1870 = vsel %vm658, %v1684, 0.0
  %1871 = vadd.xlane.f32.xlu0 %v1870
  %v1872 = vpop.xlane.xlu0 %1871
  %v1873 = vsel %vm658, %v1685, 0.0
  %1874 = vadd.xlane.f32.xlu0 %v1873
  %v1875 = vpop.xlane.xlu0 %1874
  %v1876 = vsel %vm658, %v1686, 0.0
  %1877 = vadd.xlane.f32.xlu0 %v1876
  %v1878 = vpop.xlane.xlu0 %1877
  %v1879 = vrsqrt.pop %v1689
  %v1880 = vmul.f32 %v1879, %v1689
  %v1881 = vmul.f32 %v1880, %v1879
  %v1882 = vmul.f32 0.5, %v1881
  %v1883 = vsub.f32 1.5, %v1882
  %v1884 = vmul.f32 %v1879, %v1883
  %v1885 = vmul.f32 %v1689, %v1884
  %vm1886 = vcmp.eq.f32.partialorder %v1689, inf
  %v1887 = vsel %vm1886, %v1689, %v1885
  %vm1888 = vcmp.eq.f32.partialorder %v1689, 0.0
  %v1889 = vand.u32 %v1689, 2147483648
  %v1890 = vsel %vm1888, %v1889, %v1887
  %v1891 = vrsqrt.pop %v1692
  %v1892 = vmul.f32 %v1891, %v1692
  %v1893 = vmul.f32 %v1892, %v1891
  %v1894 = vmul.f32 0.5, %v1893
  %v1895 = vsub.f32 1.5, %v1894
  %v1896 = vmul.f32 %v1891, %v1895
  %v1897 = vmul.f32 %v1692, %v1896
  %vm1898 = vcmp.eq.f32.partialorder %v1692, inf
  %v1899 = vsel %vm1898, %v1692, %v1897
  %vm1900 = vcmp.eq.f32.partialorder %v1692, 0.0
  %v1901 = vand.u32 %v1692, 2147483648
  %v1902 = vsel %vm1900, %v1901, %v1899
  %v1903 = vrsqrt.pop %v1695
  %v1904 = vmul.f32 %v1903, %v1695
  %v1905 = vmul.f32 %v1904, %v1903
  %v1906 = vmul.f32 0.5, %v1905
  %v1907 = vsub.f32 1.5, %v1906
  %v1908 = vmul.f32 %v1903, %v1907
  %v1909 = vmul.f32 %v1695, %v1908
  %vm1910 = vcmp.eq.f32.partialorder %v1695, inf
  %v1911 = vsel %vm1910, %v1695, %v1909
  %vm1912 = vcmp.eq.f32.partialorder %v1695, 0.0
  %v1913 = vand.u32 %v1695, 2147483648
  %v1914 = vsel %vm1912, %v1913, %v1911
  %v1915 = vrsqrt.pop %v1698
  %v1916 = vmul.f32 %v1915, %v1698
  %v1917 = vmul.f32 %v1916, %v1915
  %v1918 = vmul.f32 0.5, %v1917
  %v1919 = vsub.f32 1.5, %v1918
  %v1920 = vmul.f32 %v1915, %v1919
  %v1921 = vmul.f32 %v1698, %v1920
  %vm1922 = vcmp.eq.f32.partialorder %v1698, inf
  %v1923 = vsel %vm1922, %v1698, %v1921
  %vm1924 = vcmp.eq.f32.partialorder %v1698, 0.0
  %v1925 = vand.u32 %v1698, 2147483648
  %v1926 = vsel %vm1924, %v1925, %v1923
  %v1927 = vrsqrt.pop %v1701
  %v1928 = vmul.f32 %v1927, %v1701
  %v1929 = vmul.f32 %v1928, %v1927
  %v1930 = vmul.f32 0.5, %v1929
  %v1931 = vsub.f32 1.5, %v1930
  %v1932 = vmul.f32 %v1927, %v1931
  %v1933 = vmul.f32 %v1701, %v1932
  %vm1934 = vcmp.eq.f32.partialorder %v1701, inf
  %v1935 = vsel %vm1934, %v1701, %v1933
  %vm1936 = vcmp.eq.f32.partialorder %v1701, 0.0
  %v1937 = vand.u32 %v1701, 2147483648
  %v1938 = vsel %vm1936, %v1937, %v1935
  %v1939 = vrsqrt.pop %v1704
  %v1940 = vmul.f32 %v1939, %v1704
  %v1941 = vmul.f32 %v1940, %v1939
  %v1942 = vmul.f32 0.5, %v1941
  %v1943 = vsub.f32 1.5, %v1942
  %v1944 = vmul.f32 %v1939, %v1943
  %v1945 = vmul.f32 %v1704, %v1944
  %vm1946 = vcmp.eq.f32.partialorder %v1704, inf
  %v1947 = vsel %vm1946, %v1704, %v1945
  %vm1948 = vcmp.eq.f32.partialorder %v1704, 0.0
  %v1949 = vand.u32 %v1704, 2147483648
  %v1950 = vsel %vm1948, %v1949, %v1947
  %v1951 = vrsqrt.pop %v1707
  %v1952 = vmul.f32 %v1951, %v1707
  %v1953 = vmul.f32 %v1952, %v1951
  %v1954 = vmul.f32 0.5, %v1953
  %v1955 = vsub.f32 1.5, %v1954
  %v1956 = vmul.f32 %v1951, %v1955
  %v1957 = vmul.f32 %v1707, %v1956
  %vm1958 = vcmp.eq.f32.partialorder %v1707, inf
  %v1959 = vsel %vm1958, %v1707, %v1957
  %vm1960 = vcmp.eq.f32.partialorder %v1707, 0.0
  %v1961 = vand.u32 %v1707, 2147483648
  %v1962 = vsel %vm1960, %v1961, %v1959
  %v1963 = vrsqrt.pop %v1710
  %v1964 = vmul.f32 %v1963, %v1710
  %v1965 = vmul.f32 %v1964, %v1963
  %v1966 = vmul.f32 0.5, %v1965
  %v1967 = vsub.f32 1.5, %v1966
  %v1968 = vmul.f32 %v1963, %v1967
  %v1969 = vmul.f32 %v1710, %v1968
  %vm1970 = vcmp.eq.f32.partialorder %v1710, inf
  %v1971 = vsel %vm1970, %v1710, %v1969
  %vm1972 = vcmp.eq.f32.partialorder %v1710, 0.0
  %v1973 = vand.u32 %v1710, 2147483648
  %v1974 = vsel %vm1972, %v1973, %v1971
  %v1975 = vrsqrt.pop %v1713
  %v1976 = vmul.f32 %v1975, %v1713
  %v1977 = vmul.f32 %v1976, %v1975
  %v1978 = vmul.f32 0.5, %v1977
  %v1979 = vsub.f32 1.5, %v1978
  %v1980 = vmul.f32 %v1975, %v1979
  %v1981 = vmul.f32 %v1713, %v1980
  %vm1982 = vcmp.eq.f32.partialorder %v1713, inf
  %v1983 = vsel %vm1982, %v1713, %v1981
  %vm1984 = vcmp.eq.f32.partialorder %v1713, 0.0
  %v1985 = vand.u32 %v1713, 2147483648
  %v1986 = vsel %vm1984, %v1985, %v1983
  %v1987 = vrsqrt.pop %v1716
  %v1988 = vmul.f32 %v1987, %v1716
  %v1989 = vmul.f32 %v1988, %v1987
  %v1990 = vmul.f32 0.5, %v1989
  %v1991 = vsub.f32 1.5, %v1990
  %v1992 = vmul.f32 %v1987, %v1991
  %v1993 = vmul.f32 %v1716, %v1992
  %vm1994 = vcmp.eq.f32.partialorder %v1716, inf
  %v1995 = vsel %vm1994, %v1716, %v1993
  %vm1996 = vcmp.eq.f32.partialorder %v1716, 0.0
  %v1997 = vand.u32 %v1716, 2147483648
  %v1998 = vsel %vm1996, %v1997, %v1995
  %v1999 = vrsqrt.pop %v1719
  %v2000 = vmul.f32 %v1999, %v1719
  %v2001 = vmul.f32 %v2000, %v1999
  %v2002 = vmul.f32 0.5, %v2001
  %v2003 = vsub.f32 1.5, %v2002
  %v2004 = vmul.f32 %v1999, %v2003
  %v2005 = vmul.f32 %v1719, %v2004
  %vm2006 = vcmp.eq.f32.partialorder %v1719, inf
  %v2007 = vsel %vm2006, %v1719, %v2005
  %vm2008 = vcmp.eq.f32.partialorder %v1719, 0.0
  %v2009 = vand.u32 %v1719, 2147483648
  %v2010 = vsel %vm2008, %v2009, %v2007
  %v2011 = vrsqrt.pop %v1722
  %v2012 = vmul.f32 %v2011, %v1722
  %v2013 = vmul.f32 %v2012, %v2011
  %v2014 = vmul.f32 0.5, %v2013
  %v2015 = vsub.f32 1.5, %v2014
  %v2016 = vmul.f32 %v2011, %v2015
  %v2017 = vmul.f32 %v1722, %v2016
  %vm2018 = vcmp.eq.f32.partialorder %v1722, inf
  %v2019 = vsel %vm2018, %v1722, %v2017
  %vm2020 = vcmp.eq.f32.partialorder %v1722, 0.0
  %v2021 = vand.u32 %v1722, 2147483648
  %v2022 = vsel %vm2020, %v2021, %v2019
  %v2023 = vrsqrt.pop %v1725
  %v2024 = vmul.f32 %v2023, %v1725
  %v2025 = vmul.f32 %v2024, %v2023
  %v2026 = vmul.f32 0.5, %v2025
  %v2027 = vsub.f32 1.5, %v2026
  %v2028 = vmul.f32 %v2023, %v2027
  %v2029 = vmul.f32 %v1725, %v2028
  %vm2030 = vcmp.eq.f32.partialorder %v1725, inf
  %v2031 = vsel %vm2030, %v1725, %v2029
  %vm2032 = vcmp.eq.f32.partialorder %v1725, 0.0
  %v2033 = vand.u32 %v1725, 2147483648
  %v2034 = vsel %vm2032, %v2033, %v2031
  %v2035 = vrsqrt.pop %v1728
  %v2036 = vmul.f32 %v2035, %v1728
  %v2037 = vmul.f32 %v2036, %v2035
  %v2038 = vmul.f32 0.5, %v2037
  %v2039 = vsub.f32 1.5, %v2038
  %v2040 = vmul.f32 %v2035, %v2039
  %v2041 = vmul.f32 %v1728, %v2040
  %vm2042 = vcmp.eq.f32.partialorder %v1728, inf
  %v2043 = vsel %vm2042, %v1728, %v2041
  %vm2044 = vcmp.eq.f32.partialorder %v1728, 0.0
  %v2045 = vand.u32 %v1728, 2147483648
  %v2046 = vsel %vm2044, %v2045, %v2043
  %v2047 = vrsqrt.pop %v1731
  %v2048 = vmul.f32 %v2047, %v1731
  %v2049 = vmul.f32 %v2048, %v2047
  %v2050 = vmul.f32 0.5, %v2049
  %v2051 = vsub.f32 1.5, %v2050
  %v2052 = vmul.f32 %v2047, %v2051
  %v2053 = vmul.f32 %v1731, %v2052
  %vm2054 = vcmp.eq.f32.partialorder %v1731, inf
  %v2055 = vsel %vm2054, %v1731, %v2053
  %vm2056 = vcmp.eq.f32.partialorder %v1731, 0.0
  %v2057 = vand.u32 %v1731, 2147483648
  %v2058 = vsel %vm2056, %v2057, %v2055
  %v2059 = vrsqrt.pop %v1734
  %v2060 = vmul.f32 %v2059, %v1734
  %v2061 = vmul.f32 %v2060, %v2059
  %v2062 = vmul.f32 0.5, %v2061
  %v2063 = vsub.f32 1.5, %v2062
  %v2064 = vmul.f32 %v2059, %v2063
  %v2065 = vmul.f32 %v1734, %v2064
  %vm2066 = vcmp.eq.f32.partialorder %v1734, inf
  %v2067 = vsel %vm2066, %v1734, %v2065
  %vm2068 = vcmp.eq.f32.partialorder %v1734, 0.0
  %v2069 = vand.u32 %v1734, 2147483648
  %v2070 = vsel %vm2068, %v2069, %v2067
  %v2071 = vrsqrt.pop %v1737
  %v2072 = vmul.f32 %v2071, %v1737
  %v2073 = vmul.f32 %v2072, %v2071
  %v2074 = vmul.f32 0.5, %v2073
  %v2075 = vsub.f32 1.5, %v2074
  %v2076 = vmul.f32 %v2071, %v2075
  %v2077 = vmul.f32 %v1737, %v2076
  %vm2078 = vcmp.eq.f32.partialorder %v1737, inf
  %v2079 = vsel %vm2078, %v1737, %v2077
  %vm2080 = vcmp.eq.f32.partialorder %v1737, 0.0
  %v2081 = vand.u32 %v1737, 2147483648
  %v2082 = vsel %vm2080, %v2081, %v2079
  %v2083 = vrsqrt.pop %v1740
  %v2084 = vmul.f32 %v2083, %v1740
  %v2085 = vmul.f32 %v2084, %v2083
  %v2086 = vmul.f32 0.5, %v2085
  %v2087 = vsub.f32 1.5, %v2086
  %v2088 = vmul.f32 %v2083, %v2087
  %v2089 = vmul.f32 %v1740, %v2088
  %vm2090 = vcmp.eq.f32.partialorder %v1740, inf
  %v2091 = vsel %vm2090, %v1740, %v2089
  %vm2092 = vcmp.eq.f32.partialorder %v1740, 0.0
  %v2093 = vand.u32 %v1740, 2147483648
  %v2094 = vsel %vm2092, %v2093, %v2091
  %v2095 = vrsqrt.pop %v1743
  %v2096 = vmul.f32 %v2095, %v1743
  %v2097 = vmul.f32 %v2096, %v2095
  %v2098 = vmul.f32 0.5, %v2097
  %v2099 = vsub.f32 1.5, %v2098
  %v2100 = vmul.f32 %v2095, %v2099
  %v2101 = vmul.f32 %v1743, %v2100
  %vm2102 = vcmp.eq.f32.partialorder %v1743, inf
  %v2103 = vsel %vm2102, %v1743, %v2101
  %vm2104 = vcmp.eq.f32.partialorder %v1743, 0.0
  %v2105 = vand.u32 %v1743, 2147483648
  %v2106 = vsel %vm2104, %v2105, %v2103
  %v2107 = vrsqrt.pop %v1746
  %v2108 = vmul.f32 %v2107, %v1746
  %v2109 = vmul.f32 %v2108, %v2107
  %v2110 = vmul.f32 0.5, %v2109
  %v2111 = vsub.f32 1.5, %v2110
  %v2112 = vmul.f32 %v2107, %v2111
  %v2113 = vmul.f32 %v1746, %v2112
  %vm2114 = vcmp.eq.f32.partialorder %v1746, inf
  %v2115 = vsel %vm2114, %v1746, %v2113
  %vm2116 = vcmp.eq.f32.partialorder %v1746, 0.0
  %v2117 = vand.u32 %v1746, 2147483648
  %v2118 = vsel %vm2116, %v2117, %v2115
  %v2119 = vrsqrt.pop %v1749
  %v2120 = vmul.f32 %v2119, %v1749
  %v2121 = vmul.f32 %v2120, %v2119
  %v2122 = vmul.f32 0.5, %v2121
  %v2123 = vsub.f32 1.5, %v2122
  %v2124 = vmul.f32 %v2119, %v2123
  %v2125 = vmul.f32 %v1749, %v2124
  %vm2126 = vcmp.eq.f32.partialorder %v1749, inf
  %v2127 = vsel %vm2126, %v1749, %v2125
  %vm2128 = vcmp.eq.f32.partialorder %v1749, 0.0
  %v2129 = vand.u32 %v1749, 2147483648
  %v2130 = vsel %vm2128, %v2129, %v2127
  %v2131 = vrsqrt.pop %v1752
  %v2132 = vmul.f32 %v2131, %v1752
  %v2133 = vmul.f32 %v2132, %v2131
  %v2134 = vmul.f32 0.5, %v2133
  %v2135 = vsub.f32 1.5, %v2134
  %v2136 = vmul.f32 %v2131, %v2135
  %v2137 = vmul.f32 %v1752, %v2136
  %vm2138 = vcmp.eq.f32.partialorder %v1752, inf
  %v2139 = vsel %vm2138, %v1752, %v2137
  %vm2140 = vcmp.eq.f32.partialorder %v1752, 0.0
  %v2141 = vand.u32 %v1752, 2147483648
  %v2142 = vsel %vm2140, %v2141, %v2139
  %v2143 = vrsqrt.pop %v1755
  %v2144 = vmul.f32 %v2143, %v1755
  %v2145 = vmul.f32 %v2144, %v2143
  %v2146 = vmul.f32 0.5, %v2145
  %v2147 = vsub.f32 1.5, %v2146
  %v2148 = vmul.f32 %v2143, %v2147
  %v2149 = vmul.f32 %v1755, %v2148
  %vm2150 = vcmp.eq.f32.partialorder %v1755, inf
  %v2151 = vsel %vm2150, %v1755, %v2149
  %vm2152 = vcmp.eq.f32.partialorder %v1755, 0.0
  %v2153 = vand.u32 %v1755, 2147483648
  %v2154 = vsel %vm2152, %v2153, %v2151
  %v2155 = vrsqrt.pop %v1758
  %v2156 = vmul.f32 %v2155, %v1758
  %v2157 = vmul.f32 %v2156, %v2155
  %v2158 = vmul.f32 0.5, %v2157
  %v2159 = vsub.f32 1.5, %v2158
  %v2160 = vmul.f32 %v2155, %v2159
  %v2161 = vmul.f32 %v1758, %v2160
  %vm2162 = vcmp.eq.f32.partialorder %v1758, inf
  %v2163 = vsel %vm2162, %v1758, %v2161
  %vm2164 = vcmp.eq.f32.partialorder %v1758, 0.0
  %v2165 = vand.u32 %v1758, 2147483648
  %v2166 = vsel %vm2164, %v2165, %v2163
  %v2167 = vrsqrt.pop %v1761
  %v2168 = vmul.f32 %v2167, %v1761
  %v2169 = vmul.f32 %v2168, %v2167
  %v2170 = vmul.f32 0.5, %v2169
  %v2171 = vsub.f32 1.5, %v2170
  %v2172 = vmul.f32 %v2167, %v2171
  %v2173 = vmul.f32 %v1761, %v2172
  %vm2174 = vcmp.eq.f32.partialorder %v1761, inf
  %v2175 = vsel %vm2174, %v1761, %v2173
  %vm2176 = vcmp.eq.f32.partialorder %v1761, 0.0
  %v2177 = vand.u32 %v1761, 2147483648
  %v2178 = vsel %vm2176, %v2177, %v2175
  %v2179 = vrsqrt.pop %v1764
  %v2180 = vmul.f32 %v2179, %v1764
  %v2181 = vmul.f32 %v2180, %v2179
  %v2182 = vmul.f32 0.5, %v2181
  %v2183 = vsub.f32 1.5, %v2182
  %v2184 = vmul.f32 %v2179, %v2183
  %v2185 = vmul.f32 %v1764, %v2184
  %vm2186 = vcmp.eq.f32.partialorder %v1764, inf
  %v2187 = vsel %vm2186, %v1764, %v2185
  %vm2188 = vcmp.eq.f32.partialorder %v1764, 0.0
  %v2189 = vand.u32 %v1764, 2147483648
  %v2190 = vsel %vm2188, %v2189, %v2187
  %v2191 = vrsqrt.pop %v1767
  %v2192 = vmul.f32 %v2191, %v1767
  %v2193 = vmul.f32 %v2192, %v2191
  %v2194 = vmul.f32 0.5, %v2193
  %v2195 = vsub.f32 1.5, %v2194
  %v2196 = vmul.f32 %v2191, %v2195
  %v2197 = vmul.f32 %v1767, %v2196
  %vm2198 = vcmp.eq.f32.partialorder %v1767, inf
  %v2199 = vsel %vm2198, %v1767, %v2197
  %vm2200 = vcmp.eq.f32.partialorder %v1767, 0.0
  %v2201 = vand.u32 %v1767, 2147483648
  %v2202 = vsel %vm2200, %v2201, %v2199
  %v2203 = vrsqrt.pop %v1770
  %v2204 = vmul.f32 %v2203, %v1770
  %v2205 = vmul.f32 %v2204, %v2203
  %v2206 = vmul.f32 0.5, %v2205
  %v2207 = vsub.f32 1.5, %v2206
  %v2208 = vmul.f32 %v2203, %v2207
  %v2209 = vmul.f32 %v1770, %v2208
  %vm2210 = vcmp.eq.f32.partialorder %v1770, inf
  %v2211 = vsel %vm2210, %v1770, %v2209
  %vm2212 = vcmp.eq.f32.partialorder %v1770, 0.0
  %v2213 = vand.u32 %v1770, 2147483648
  %v2214 = vsel %vm2212, %v2213, %v2211
  %v2215 = vrsqrt.pop %v1773
  %v2216 = vmul.f32 %v2215, %v1773
  %v2217 = vmul.f32 %v2216, %v2215
  %v2218 = vmul.f32 0.5, %v2217
  %v2219 = vsub.f32 1.5, %v2218
  %v2220 = vmul.f32 %v2215, %v2219
  %v2221 = vmul.f32 %v1773, %v2220
  %vm2222 = vcmp.eq.f32.partialorder %v1773, inf
  %v2223 = vsel %vm2222, %v1773, %v2221
  %vm2224 = vcmp.eq.f32.partialorder %v1773, 0.0
  %v2225 = vand.u32 %v1773, 2147483648
  %v2226 = vsel %vm2224, %v2225, %v2223
  %v2227 = vrsqrt.pop %v1776
  %v2228 = vmul.f32 %v2227, %v1776
  %v2229 = vmul.f32 %v2228, %v2227
  %v2230 = vmul.f32 0.5, %v2229
  %v2231 = vsub.f32 1.5, %v2230
  %v2232 = vmul.f32 %v2227, %v2231
  %v2233 = vmul.f32 %v1776, %v2232
  %vm2234 = vcmp.eq.f32.partialorder %v1776, inf
  %v2235 = vsel %vm2234, %v1776, %v2233
  %vm2236 = vcmp.eq.f32.partialorder %v1776, 0.0
  %v2237 = vand.u32 %v1776, 2147483648
  %v2238 = vsel %vm2236, %v2237, %v2235
  %v2239 = vrsqrt.pop %v1779
  %v2240 = vmul.f32 %v2239, %v1779
  %v2241 = vmul.f32 %v2240, %v2239
  %v2242 = vmul.f32 0.5, %v2241
  %v2243 = vsub.f32 1.5, %v2242
  %v2244 = vmul.f32 %v2239, %v2243
  %v2245 = vmul.f32 %v1779, %v2244
  %vm2246 = vcmp.eq.f32.partialorder %v1779, inf
  %v2247 = vsel %vm2246, %v1779, %v2245
  %vm2248 = vcmp.eq.f32.partialorder %v1779, 0.0
  %v2249 = vand.u32 %v1779, 2147483648
  %v2250 = vsel %vm2248, %v2249, %v2247
  %v2251 = vrsqrt.pop %v1782
  %v2252 = vmul.f32 %v2251, %v1782
  %v2253 = vmul.f32 %v2252, %v2251
  %v2254 = vmul.f32 0.5, %v2253
  %v2255 = vsub.f32 1.5, %v2254
  %v2256 = vmul.f32 %v2251, %v2255
  %v2257 = vmul.f32 %v1782, %v2256
  %vm2258 = vcmp.eq.f32.partialorder %v1782, inf
  %v2259 = vsel %vm2258, %v1782, %v2257
  %vm2260 = vcmp.eq.f32.partialorder %v1782, 0.0
  %v2261 = vand.u32 %v1782, 2147483648
  %v2262 = vsel %vm2260, %v2261, %v2259
  %v2263 = vrsqrt.pop %v1785
  %v2264 = vmul.f32 %v2263, %v1785
  %v2265 = vmul.f32 %v2264, %v2263
  %v2266 = vmul.f32 0.5, %v2265
  %v2267 = vsub.f32 1.5, %v2266
  %v2268 = vmul.f32 %v2263, %v2267
  %v2269 = vmul.f32 %v1785, %v2268
  %vm2270 = vcmp.eq.f32.partialorder %v1785, inf
  %v2271 = vsel %vm2270, %v1785, %v2269
  %vm2272 = vcmp.eq.f32.partialorder %v1785, 0.0
  %v2273 = vand.u32 %v1785, 2147483648
  %v2274 = vsel %vm2272, %v2273, %v2271
  %v2275 = vrsqrt.pop %v1788
  %v2276 = vmul.f32 %v2275, %v1788
  %v2277 = vmul.f32 %v2276, %v2275
  %v2278 = vmul.f32 0.5, %v2277
  %v2279 = vsub.f32 1.5, %v2278
  %v2280 = vmul.f32 %v2275, %v2279
  %v2281 = vmul.f32 %v1788, %v2280
  %vm2282 = vcmp.eq.f32.partialorder %v1788, inf
  %v2283 = vsel %vm2282, %v1788, %v2281
  %vm2284 = vcmp.eq.f32.partialorder %v1788, 0.0
  %v2285 = vand.u32 %v1788, 2147483648
  %v2286 = vsel %vm2284, %v2285, %v2283
  %v2287 = vrsqrt.pop %v1791
  %v2288 = vmul.f32 %v2287, %v1791
  %v2289 = vmul.f32 %v2288, %v2287
  %v2290 = vmul.f32 0.5, %v2289
  %v2291 = vsub.f32 1.5, %v2290
  %v2292 = vmul.f32 %v2287, %v2291
  %v2293 = vmul.f32 %v1791, %v2292
  %vm2294 = vcmp.eq.f32.partialorder %v1791, inf
  %v2295 = vsel %vm2294, %v1791, %v2293
  %vm2296 = vcmp.eq.f32.partialorder %v1791, 0.0
  %v2297 = vand.u32 %v1791, 2147483648
  %v2298 = vsel %vm2296, %v2297, %v2295
  %v2299 = vrsqrt.pop %v1794
  %v2300 = vmul.f32 %v2299, %v1794
  %v2301 = vmul.f32 %v2300, %v2299
  %v2302 = vmul.f32 0.5, %v2301
  %v2303 = vsub.f32 1.5, %v2302
  %v2304 = vmul.f32 %v2299, %v2303
  %v2305 = vmul.f32 %v1794, %v2304
  %vm2306 = vcmp.eq.f32.partialorder %v1794, inf
  %v2307 = vsel %vm2306, %v1794, %v2305
  %vm2308 = vcmp.eq.f32.partialorder %v1794, 0.0
  %v2309 = vand.u32 %v1794, 2147483648
  %v2310 = vsel %vm2308, %v2309, %v2307
  %v2311 = vrsqrt.pop %v1797
  %v2312 = vmul.f32 %v2311, %v1797
  %v2313 = vmul.f32 %v2312, %v2311
  %v2314 = vmul.f32 0.5, %v2313
  %v2315 = vsub.f32 1.5, %v2314
  %v2316 = vmul.f32 %v2311, %v2315
  %v2317 = vmul.f32 %v1797, %v2316
  %vm2318 = vcmp.eq.f32.partialorder %v1797, inf
  %v2319 = vsel %vm2318, %v1797, %v2317
  %vm2320 = vcmp.eq.f32.partialorder %v1797, 0.0
  %v2321 = vand.u32 %v1797, 2147483648
  %v2322 = vsel %vm2320, %v2321, %v2319
  %v2323 = vrsqrt.pop %v1800
  %v2324 = vmul.f32 %v2323, %v1800
  %v2325 = vmul.f32 %v2324, %v2323
  %v2326 = vmul.f32 0.5, %v2325
  %v2327 = vsub.f32 1.5, %v2326
  %v2328 = vmul.f32 %v2323, %v2327
  %v2329 = vmul.f32 %v1800, %v2328
  %vm2330 = vcmp.eq.f32.partialorder %v1800, inf
  %v2331 = vsel %vm2330, %v1800, %v2329
  %vm2332 = vcmp.eq.f32.partialorder %v1800, 0.0
  %v2333 = vand.u32 %v1800, 2147483648
  %v2334 = vsel %vm2332, %v2333, %v2331
  %v2335 = vrsqrt.pop %v1803
  %v2336 = vmul.f32 %v2335, %v1803
  %v2337 = vmul.f32 %v2336, %v2335
  %v2338 = vmul.f32 0.5, %v2337
  %v2339 = vsub.f32 1.5, %v2338
  %v2340 = vmul.f32 %v2335, %v2339
  %v2341 = vmul.f32 %v1803, %v2340
  %vm2342 = vcmp.eq.f32.partialorder %v1803, inf
  %v2343 = vsel %vm2342, %v1803, %v2341
  %vm2344 = vcmp.eq.f32.partialorder %v1803, 0.0
  %v2345 = vand.u32 %v1803, 2147483648
  %v2346 = vsel %vm2344, %v2345, %v2343
  %v2347 = vrsqrt.pop %v1806
  %v2348 = vmul.f32 %v2347, %v1806
  %v2349 = vmul.f32 %v2348, %v2347
  %v2350 = vmul.f32 0.5, %v2349
  %v2351 = vsub.f32 1.5, %v2350
  %v2352 = vmul.f32 %v2347, %v2351
  %v2353 = vmul.f32 %v1806, %v2352
  %vm2354 = vcmp.eq.f32.partialorder %v1806, inf
  %v2355 = vsel %vm2354, %v1806, %v2353
  %vm2356 = vcmp.eq.f32.partialorder %v1806, 0.0
  %v2357 = vand.u32 %v1806, 2147483648
  %v2358 = vsel %vm2356, %v2357, %v2355
  %v2359 = vrsqrt.pop %v1809
  %v2360 = vmul.f32 %v2359, %v1809
  %v2361 = vmul.f32 %v2360, %v2359
  %v2362 = vmul.f32 0.5, %v2361
  %v2363 = vsub.f32 1.5, %v2362
  %v2364 = vmul.f32 %v2359, %v2363
  %v2365 = vmul.f32 %v1809, %v2364
  %vm2366 = vcmp.eq.f32.partialorder %v1809, inf
  %v2367 = vsel %vm2366, %v1809, %v2365
  %vm2368 = vcmp.eq.f32.partialorder %v1809, 0.0
  %v2369 = vand.u32 %v1809, 2147483648
  %v2370 = vsel %vm2368, %v2369, %v2367
  %v2371 = vrsqrt.pop %v1812
  %v2372 = vmul.f32 %v2371, %v1812
  %v2373 = vmul.f32 %v2372, %v2371
  %v2374 = vmul.f32 0.5, %v2373
  %v2375 = vsub.f32 1.5, %v2374
  %v2376 = vmul.f32 %v2371, %v2375
  %v2377 = vmul.f32 %v1812, %v2376
  %vm2378 = vcmp.eq.f32.partialorder %v1812, inf
  %v2379 = vsel %vm2378, %v1812, %v2377
  %vm2380 = vcmp.eq.f32.partialorder %v1812, 0.0
  %v2381 = vand.u32 %v1812, 2147483648
  %v2382 = vsel %vm2380, %v2381, %v2379
  %v2383 = vrsqrt.pop %v1815
  %v2384 = vmul.f32 %v2383, %v1815
  %v2385 = vmul.f32 %v2384, %v2383
  %v2386 = vmul.f32 0.5, %v2385
  %v2387 = vsub.f32 1.5, %v2386
  %v2388 = vmul.f32 %v2383, %v2387
  %v2389 = vmul.f32 %v1815, %v2388
  %vm2390 = vcmp.eq.f32.partialorder %v1815, inf
  %v2391 = vsel %vm2390, %v1815, %v2389
  %vm2392 = vcmp.eq.f32.partialorder %v1815, 0.0
  %v2393 = vand.u32 %v1815, 2147483648
  %v2394 = vsel %vm2392, %v2393, %v2391
  %v2395 = vrsqrt.pop %v1818
  %v2396 = vmul.f32 %v2395, %v1818
  %v2397 = vmul.f32 %v2396, %v2395
  %v2398 = vmul.f32 0.5, %v2397
  %v2399 = vsub.f32 1.5, %v2398
  %v2400 = vmul.f32 %v2395, %v2399
  %v2401 = vmul.f32 %v1818, %v2400
  %vm2402 = vcmp.eq.f32.partialorder %v1818, inf
  %v2403 = vsel %vm2402, %v1818, %v2401
  %vm2404 = vcmp.eq.f32.partialorder %v1818, 0.0
  %v2405 = vand.u32 %v1818, 2147483648
  %v2406 = vsel %vm2404, %v2405, %v2403
  %v2407 = vrsqrt.pop %v1821
  %v2408 = vmul.f32 %v2407, %v1821
  %v2409 = vmul.f32 %v2408, %v2407
  %v2410 = vmul.f32 0.5, %v2409
  %v2411 = vsub.f32 1.5, %v2410
  %v2412 = vmul.f32 %v2407, %v2411
  %v2413 = vmul.f32 %v1821, %v2412
  %vm2414 = vcmp.eq.f32.partialorder %v1821, inf
  %v2415 = vsel %vm2414, %v1821, %v2413
  %vm2416 = vcmp.eq.f32.partialorder %v1821, 0.0
  %v2417 = vand.u32 %v1821, 2147483648
  %v2418 = vsel %vm2416, %v2417, %v2415
  %v2419 = vrsqrt.pop %v1824
  %v2420 = vmul.f32 %v2419, %v1824
  %v2421 = vmul.f32 %v2420, %v2419
  %v2422 = vmul.f32 0.5, %v2421
  %v2423 = vsub.f32 1.5, %v2422
  %v2424 = vmul.f32 %v2419, %v2423
  %v2425 = vmul.f32 %v1824, %v2424
  %vm2426 = vcmp.eq.f32.partialorder %v1824, inf
  %v2427 = vsel %vm2426, %v1824, %v2425
  %vm2428 = vcmp.eq.f32.partialorder %v1824, 0.0
  %v2429 = vand.u32 %v1824, 2147483648
  %v2430 = vsel %vm2428, %v2429, %v2427
  %v2431 = vrsqrt.pop %v1827
  %v2432 = vmul.f32 %v2431, %v1827
  %v2433 = vmul.f32 %v2432, %v2431
  %v2434 = vmul.f32 0.5, %v2433
  %v2435 = vsub.f32 1.5, %v2434
  %v2436 = vmul.f32 %v2431, %v2435
  %v2437 = vmul.f32 %v1827, %v2436
  %vm2438 = vcmp.eq.f32.partialorder %v1827, inf
  %v2439 = vsel %vm2438, %v1827, %v2437
  %vm2440 = vcmp.eq.f32.partialorder %v1827, 0.0
  %v2441 = vand.u32 %v1827, 2147483648
  %v2442 = vsel %vm2440, %v2441, %v2439
  %v2443 = vrsqrt.pop %v1830
  %v2444 = vmul.f32 %v2443, %v1830
  %v2445 = vmul.f32 %v2444, %v2443
  %v2446 = vmul.f32 0.5, %v2445
  %v2447 = vsub.f32 1.5, %v2446
  %v2448 = vmul.f32 %v2443, %v2447
  %v2449 = vmul.f32 %v1830, %v2448
  %vm2450 = vcmp.eq.f32.partialorder %v1830, inf
  %v2451 = vsel %vm2450, %v1830, %v2449
  %vm2452 = vcmp.eq.f32.partialorder %v1830, 0.0
  %v2453 = vand.u32 %v1830, 2147483648
  %v2454 = vsel %vm2452, %v2453, %v2451
  %v2455 = vrsqrt.pop %v1833
  %v2456 = vmul.f32 %v2455, %v1833
  %v2457 = vmul.f32 %v2456, %v2455
  %v2458 = vmul.f32 0.5, %v2457
  %v2459 = vsub.f32 1.5, %v2458
  %v2460 = vmul.f32 %v2455, %v2459
  %v2461 = vmul.f32 %v1833, %v2460
  %vm2462 = vcmp.eq.f32.partialorder %v1833, inf
  %v2463 = vsel %vm2462, %v1833, %v2461
  %vm2464 = vcmp.eq.f32.partialorder %v1833, 0.0
  %v2465 = vand.u32 %v1833, 2147483648
  %v2466 = vsel %vm2464, %v2465, %v2463
  %v2467 = vrsqrt.pop %v1836
  %v2468 = vmul.f32 %v2467, %v1836
  %v2469 = vmul.f32 %v2468, %v2467
  %v2470 = vmul.f32 0.5, %v2469
  %v2471 = vsub.f32 1.5, %v2470
  %v2472 = vmul.f32 %v2467, %v2471
  %v2473 = vmul.f32 %v1836, %v2472
  %vm2474 = vcmp.eq.f32.partialorder %v1836, inf
  %v2475 = vsel %vm2474, %v1836, %v2473
  %vm2476 = vcmp.eq.f32.partialorder %v1836, 0.0
  %v2477 = vand.u32 %v1836, 2147483648
  %v2478 = vsel %vm2476, %v2477, %v2475
  %v2479 = vrsqrt.pop %v1839
  %v2480 = vmul.f32 %v2479, %v1839
  %v2481 = vmul.f32 %v2480, %v2479
  %v2482 = vmul.f32 0.5, %v2481
  %v2483 = vsub.f32 1.5, %v2482
  %v2484 = vmul.f32 %v2479, %v2483
  %v2485 = vmul.f32 %v1839, %v2484
  %vm2486 = vcmp.eq.f32.partialorder %v1839, inf
  %v2487 = vsel %vm2486, %v1839, %v2485
  %vm2488 = vcmp.eq.f32.partialorder %v1839, 0.0
  %v2489 = vand.u32 %v1839, 2147483648
  %v2490 = vsel %vm2488, %v2489, %v2487
  %v2491 = vrsqrt.pop %v1842
  %v2492 = vmul.f32 %v2491, %v1842
  %v2493 = vmul.f32 %v2492, %v2491
  %v2494 = vmul.f32 0.5, %v2493
  %v2495 = vsub.f32 1.5, %v2494
  %v2496 = vmul.f32 %v2491, %v2495
  %v2497 = vmul.f32 %v1842, %v2496
  %vm2498 = vcmp.eq.f32.partialorder %v1842, inf
  %v2499 = vsel %vm2498, %v1842, %v2497
  %vm2500 = vcmp.eq.f32.partialorder %v1842, 0.0
  %v2501 = vand.u32 %v1842, 2147483648
  %v2502 = vsel %vm2500, %v2501, %v2499
  %v2503 = vrsqrt.pop %v1845
  %v2504 = vmul.f32 %v2503, %v1845
  %v2505 = vmul.f32 %v2504, %v2503
  %v2506 = vmul.f32 0.5, %v2505
  %v2507 = vsub.f32 1.5, %v2506
  %v2508 = vmul.f32 %v2503, %v2507
  %v2509 = vmul.f32 %v1845, %v2508
  %vm2510 = vcmp.eq.f32.partialorder %v1845, inf
  %v2511 = vsel %vm2510, %v1845, %v2509
  %vm2512 = vcmp.eq.f32.partialorder %v1845, 0.0
  %v2513 = vand.u32 %v1845, 2147483648
  %v2514 = vsel %vm2512, %v2513, %v2511
  %v2515 = vrsqrt.pop %v1848
  %v2516 = vmul.f32 %v2515, %v1848
  %v2517 = vmul.f32 %v2516, %v2515
  %v2518 = vmul.f32 0.5, %v2517
  %v2519 = vsub.f32 1.5, %v2518
  %v2520 = vmul.f32 %v2515, %v2519
  %v2521 = vmul.f32 %v1848, %v2520
  %vm2522 = vcmp.eq.f32.partialorder %v1848, inf
  %v2523 = vsel %vm2522, %v1848, %v2521
  %vm2524 = vcmp.eq.f32.partialorder %v1848, 0.0
  %v2525 = vand.u32 %v1848, 2147483648
  %v2526 = vsel %vm2524, %v2525, %v2523
  %v2527 = vrsqrt.pop %v1851
  %v2528 = vmul.f32 %v2527, %v1851
  %v2529 = vmul.f32 %v2528, %v2527
  %v2530 = vmul.f32 0.5, %v2529
  %v2531 = vsub.f32 1.5, %v2530
  %v2532 = vmul.f32 %v2527, %v2531
  %v2533 = vmul.f32 %v1851, %v2532
  %vm2534 = vcmp.eq.f32.partialorder %v1851, inf
  %v2535 = vsel %vm2534, %v1851, %v2533
  %vm2536 = vcmp.eq.f32.partialorder %v1851, 0.0
  %v2537 = vand.u32 %v1851, 2147483648
  %v2538 = vsel %vm2536, %v2537, %v2535
  %v2539 = vrsqrt.pop %v1854
  %v2540 = vmul.f32 %v2539, %v1854
  %v2541 = vmul.f32 %v2540, %v2539
  %v2542 = vmul.f32 0.5, %v2541
  %v2543 = vsub.f32 1.5, %v2542
  %v2544 = vmul.f32 %v2539, %v2543
  %v2545 = vmul.f32 %v1854, %v2544
  %vm2546 = vcmp.eq.f32.partialorder %v1854, inf
  %v2547 = vsel %vm2546, %v1854, %v2545
  %vm2548 = vcmp.eq.f32.partialorder %v1854, 0.0
  %v2549 = vand.u32 %v1854, 2147483648
  %v2550 = vsel %vm2548, %v2549, %v2547
  %v2551 = vrsqrt.pop %v1857
  %v2552 = vmul.f32 %v2551, %v1857
  %v2553 = vmul.f32 %v2552, %v2551
  %v2554 = vmul.f32 0.5, %v2553
  %v2555 = vsub.f32 1.5, %v2554
  %v2556 = vmul.f32 %v2551, %v2555
  %v2557 = vmul.f32 %v1857, %v2556
  %vm2558 = vcmp.eq.f32.partialorder %v1857, inf
  %v2559 = vsel %vm2558, %v1857, %v2557
  %vm2560 = vcmp.eq.f32.partialorder %v1857, 0.0
  %v2561 = vand.u32 %v1857, 2147483648
  %v2562 = vsel %vm2560, %v2561, %v2559
  %v2563 = vrsqrt.pop %v1860
  %v2564 = vmul.f32 %v2563, %v1860
  %v2565 = vmul.f32 %v2564, %v2563
  %v2566 = vmul.f32 0.5, %v2565
  %v2567 = vsub.f32 1.5, %v2566
  %v2568 = vmul.f32 %v2563, %v2567
  %v2569 = vmul.f32 %v1860, %v2568
  %vm2570 = vcmp.eq.f32.partialorder %v1860, inf
  %v2571 = vsel %vm2570, %v1860, %v2569
  %vm2572 = vcmp.eq.f32.partialorder %v1860, 0.0
  %v2573 = vand.u32 %v1860, 2147483648
  %v2574 = vsel %vm2572, %v2573, %v2571
  %v2575 = vrsqrt.pop %v1863
  %v2576 = vmul.f32 %v2575, %v1863
  %v2577 = vmul.f32 %v2576, %v2575
  %v2578 = vmul.f32 0.5, %v2577
  %v2579 = vsub.f32 1.5, %v2578
  %v2580 = vmul.f32 %v2575, %v2579
  %v2581 = vmul.f32 %v1863, %v2580
  %vm2582 = vcmp.eq.f32.partialorder %v1863, inf
  %v2583 = vsel %vm2582, %v1863, %v2581
  %vm2584 = vcmp.eq.f32.partialorder %v1863, 0.0
  %v2585 = vand.u32 %v1863, 2147483648
  %v2586 = vsel %vm2584, %v2585, %v2583
  %v2587 = vrsqrt.pop %v1866
  %v2588 = vmul.f32 %v2587, %v1866
  %v2589 = vmul.f32 %v2588, %v2587
  %v2590 = vmul.f32 0.5, %v2589
  %v2591 = vsub.f32 1.5, %v2590
  %v2592 = vmul.f32 %v2587, %v2591
  %v2593 = vmul.f32 %v1866, %v2592
  %vm2594 = vcmp.eq.f32.partialorder %v1866, inf
  %v2595 = vsel %vm2594, %v1866, %v2593
  %vm2596 = vcmp.eq.f32.partialorder %v1866, 0.0
  %v2597 = vand.u32 %v1866, 2147483648
  %v2598 = vsel %vm2596, %v2597, %v2595
  %v2599 = vrsqrt.pop %v1869
  %v2600 = vmul.f32 %v2599, %v1869
  %v2601 = vmul.f32 %v2600, %v2599
  %v2602 = vmul.f32 0.5, %v2601
  %v2603 = vsub.f32 1.5, %v2602
  %v2604 = vmul.f32 %v2599, %v2603
  %v2605 = vmul.f32 %v1869, %v2604
  %vm2606 = vcmp.eq.f32.partialorder %v1869, inf
  %v2607 = vsel %vm2606, %v1869, %v2605
  %vm2608 = vcmp.eq.f32.partialorder %v1869, 0.0
  %v2609 = vand.u32 %v1869, 2147483648
  %v2610 = vsel %vm2608, %v2609, %v2607
  %v2611 = vrsqrt.pop %v1872
  %v2612 = vmul.f32 %v2611, %v1872
  %v2613 = vmul.f32 %v2612, %v2611
  %v2614 = vmul.f32 0.5, %v2613
  %v2615 = vsub.f32 1.5, %v2614
  %v2616 = vmul.f32 %v2611, %v2615
  %v2617 = vmul.f32 %v1872, %v2616
  %vm2618 = vcmp.eq.f32.partialorder %v1872, inf
  %v2619 = vsel %vm2618, %v1872, %v2617
  %vm2620 = vcmp.eq.f32.partialorder %v1872, 0.0
  %v2621 = vand.u32 %v1872, 2147483648
  %v2622 = vsel %vm2620, %v2621, %v2619
  %v2623 = vrsqrt.pop %v1875
  %v2624 = vmul.f32 %v2623, %v1875
  %v2625 = vmul.f32 %v2624, %v2623
  %v2626 = vmul.f32 0.5, %v2625
  %v2627 = vsub.f32 1.5, %v2626
  %v2628 = vmul.f32 %v2623, %v2627
  %v2629 = vmul.f32 %v1875, %v2628
  %vm2630 = vcmp.eq.f32.partialorder %v1875, inf
  %v2631 = vsel %vm2630, %v1875, %v2629
  %vm2632 = vcmp.eq.f32.partialorder %v1875, 0.0
  %v2633 = vand.u32 %v1875, 2147483648
  %v2634 = vsel %vm2632, %v2633, %v2631
  %v2635 = vrsqrt.pop %v1878
  %v2636 = vmul.f32 %v2635, %v1878
  %v2637 = vmul.f32 %v2636, %v2635
  %v2638 = vmul.f32 0.5, %v2637
  %v2639 = vsub.f32 1.5, %v2638
  %v2640 = vmul.f32 %v2635, %v2639
  %v2641 = vmul.f32 %v1878, %v2640
  %vm2642 = vcmp.eq.f32.partialorder %v1878, inf
  %v2643 = vsel %vm2642, %v1878, %v2641
  %vm2644 = vcmp.eq.f32.partialorder %v1878, 0.0
  %v2645 = vand.u32 %v1878, 2147483648
  %v2646 = vsel %vm2644, %v2645, %v2643
  %v2647 = vmul.f32 %v434, %v434
  %v2648 = vmul.f32 %v435, %v435
  %v2649 = vmul.f32 %v436, %v436
  %v2650 = vmul.f32 %v437, %v437
  %v2651 = vmul.f32 %v438, %v438
  %v2652 = vmul.f32 %v439, %v439
  %v2653 = vmul.f32 %v440, %v440
  %v2654 = vmul.f32 %v441, %v441
  %v2655 = vmul.f32 %v442, %v442
  %v2656 = vmul.f32 %v443, %v443
  %v2657 = vmul.f32 %v444, %v444
  %v2658 = vmul.f32 %v445, %v445
  %v2659 = vmul.f32 %v446, %v446
  %v2660 = vmul.f32 %v447, %v447
  %v2661 = vmul.f32 %v448, %v448
  %v2662 = vmul.f32 %v449, %v449
  %v2663 = vmul.f32 %v450, %v450
  %v2664 = vmul.f32 %v451, %v451
  %v2665 = vmul.f32 %v452, %v452
  %v2666 = vmul.f32 %v453, %v453
  %v2667 = vmul.f32 %v454, %v454
  %v2668 = vmul.f32 %v455, %v455
  %v2669 = vmul.f32 %v456, %v456
  %v2670 = vmul.f32 %v457, %v457
  %v2671 = vmul.f32 %v458, %v458
  %v2672 = vmul.f32 %v459, %v459
  %v2673 = vmul.f32 %v460, %v460
  %v2674 = vmul.f32 %v461, %v461
  %v2675 = vmul.f32 %v462, %v462
  %v2676 = vmul.f32 %v463, %v463
  %v2677 = vmul.f32 %v464, %v464
  %v2678 = vmul.f32 %v465, %v465
  %v2679 = vmul.f32 %v466, %v466
  %v2680 = vmul.f32 %v467, %v467
  %v2681 = vmul.f32 %v468, %v468
  %v2682 = vmul.f32 %v469, %v469
  %v2683 = vmul.f32 %v470, %v470
  %v2684 = vmul.f32 %v471, %v471
  %v2685 = vmul.f32 %v472, %v472
  %v2686 = vmul.f32 %v473, %v473
  %v2687 = vmul.f32 %v474, %v474
  %v2688 = vmul.f32 %v475, %v475
  %v2689 = vmul.f32 %v476, %v476
  %v2690 = vmul.f32 %v477, %v477
  %v2691 = vmul.f32 %v478, %v478
  %v2692 = vmul.f32 %v479, %v479
  %v2693 = vmul.f32 %v480, %v480
  %v2694 = vmul.f32 %v481, %v481
  %v2695 = vmul.f32 %v482, %v482
  %v2696 = vmul.f32 %v483, %v483
  %v2697 = vmul.f32 %v484, %v484
  %v2698 = vmul.f32 %v485, %v485
  %v2699 = vmul.f32 %v486, %v486
  %v2700 = vmul.f32 %v487, %v487
  %v2701 = vmul.f32 %v488, %v488
  %v2702 = vmul.f32 %v489, %v489
  %v2703 = vmul.f32 %v490, %v490
  %v2704 = vmul.f32 %v491, %v491
  %v2705 = vmul.f32 %v492, %v492
  %v2706 = vmul.f32 %v493, %v493
  %v2707 = vmul.f32 %v494, %v494
  %v2708 = vmul.f32 %v495, %v495
  %v2709 = vmul.f32 %v496, %v496
  %v2710 = vmul.f32 %v497, %v497
  %v2711 = vsel %vm658, %v2647, 0.0
  %2712 = vadd.xlane.f32.xlu0 %v2711
  %v2713 = vpop.xlane.xlu0 %2712
  %v2714 = vsel %vm658, %v2648, 0.0
  %2715 = vadd.xlane.f32.xlu0 %v2714
  %v2716 = vpop.xlane.xlu0 %2715
  %v2717 = vsel %vm658, %v2649, 0.0
  %2718 = vadd.xlane.f32.xlu0 %v2717
  %v2719 = vpop.xlane.xlu0 %2718
  %v2720 = vsel %vm658, %v2650, 0.0
  %2721 = vadd.xlane.f32.xlu0 %v2720
  %v2722 = vpop.xlane.xlu0 %2721
  %v2723 = vsel %vm658, %v2651, 0.0
  %2724 = vadd.xlane.f32.xlu0 %v2723
  %v2725 = vpop.xlane.xlu0 %2724
  %v2726 = vsel %vm658, %v2652, 0.0
  %2727 = vadd.xlane.f32.xlu0 %v2726
  %v2728 = vpop.xlane.xlu0 %2727
  %v2729 = vsel %vm658, %v2653, 0.0
  %2730 = vadd.xlane.f32.xlu0 %v2729
  %v2731 = vpop.xlane.xlu0 %2730
  %v2732 = vsel %vm658, %v2654, 0.0
  %2733 = vadd.xlane.f32.xlu0 %v2732
  %v2734 = vpop.xlane.xlu0 %2733
  %v2735 = vsel %vm658, %v2655, 0.0
  %2736 = vadd.xlane.f32.xlu0 %v2735
  %v2737 = vpop.xlane.xlu0 %2736
  %v2738 = vsel %vm658, %v2656, 0.0
  %2739 = vadd.xlane.f32.xlu0 %v2738
  %v2740 = vpop.xlane.xlu0 %2739
  %v2741 = vsel %vm658, %v2657, 0.0
  %2742 = vadd.xlane.f32.xlu0 %v2741
  %v2743 = vpop.xlane.xlu0 %2742
  %v2744 = vsel %vm658, %v2658, 0.0
  %2745 = vadd.xlane.f32.xlu0 %v2744
  %v2746 = vpop.xlane.xlu0 %2745
  %v2747 = vsel %vm658, %v2659, 0.0
  %2748 = vadd.xlane.f32.xlu0 %v2747
  %v2749 = vpop.xlane.xlu0 %2748
  %v2750 = vsel %vm658, %v2660, 0.0
  %2751 = vadd.xlane.f32.xlu0 %v2750
  %v2752 = vpop.xlane.xlu0 %2751
  %v2753 = vsel %vm658, %v2661, 0.0
  %2754 = vadd.xlane.f32.xlu0 %v2753
  %v2755 = vpop.xlane.xlu0 %2754
  %v2756 = vsel %vm658, %v2662, 0.0
  %2757 = vadd.xlane.f32.xlu0 %v2756
  %v2758 = vpop.xlane.xlu0 %2757
  %v2759 = vsel %vm658, %v2663, 0.0
  %2760 = vadd.xlane.f32.xlu0 %v2759
  %v2761 = vpop.xlane.xlu0 %2760
  %v2762 = vsel %vm658, %v2664, 0.0
  %2763 = vadd.xlane.f32.xlu0 %v2762
  %v2764 = vpop.xlane.xlu0 %2763
  %v2765 = vsel %vm658, %v2665, 0.0
  %2766 = vadd.xlane.f32.xlu0 %v2765
  %v2767 = vpop.xlane.xlu0 %2766
  %v2768 = vsel %vm658, %v2666, 0.0
  %2769 = vadd.xlane.f32.xlu0 %v2768
  %v2770 = vpop.xlane.xlu0 %2769
  %v2771 = vsel %vm658, %v2667, 0.0
  %2772 = vadd.xlane.f32.xlu0 %v2771
  %v2773 = vpop.xlane.xlu0 %2772
  %v2774 = vsel %vm658, %v2668, 0.0
  %2775 = vadd.xlane.f32.xlu0 %v2774
  %v2776 = vpop.xlane.xlu0 %2775
  %v2777 = vsel %vm658, %v2669, 0.0
  %2778 = vadd.xlane.f32.xlu0 %v2777
  %v2779 = vpop.xlane.xlu0 %2778
  %v2780 = vsel %vm658, %v2670, 0.0
  %2781 = vadd.xlane.f32.xlu0 %v2780
  %v2782 = vpop.xlane.xlu0 %2781
  %v2783 = vsel %vm658, %v2671, 0.0
  %2784 = vadd.xlane.f32.xlu0 %v2783
  %v2785 = vpop.xlane.xlu0 %2784
  %v2786 = vsel %vm658, %v2672, 0.0
  %2787 = vadd.xlane.f32.xlu0 %v2786
  %v2788 = vpop.xlane.xlu0 %2787
  %v2789 = vsel %vm658, %v2673, 0.0
  %2790 = vadd.xlane.f32.xlu0 %v2789
  %v2791 = vpop.xlane.xlu0 %2790
  %v2792 = vsel %vm658, %v2674, 0.0
  %2793 = vadd.xlane.f32.xlu0 %v2792
  %v2794 = vpop.xlane.xlu0 %2793
  %v2795 = vsel %vm658, %v2675, 0.0
  %2796 = vadd.xlane.f32.xlu0 %v2795
  %v2797 = vpop.xlane.xlu0 %2796
  %v2798 = vsel %vm658, %v2676, 0.0
  %2799 = vadd.xlane.f32.xlu0 %v2798
  %v2800 = vpop.xlane.xlu0 %2799
  %v2801 = vsel %vm658, %v2677, 0.0
  %2802 = vadd.xlane.f32.xlu0 %v2801
  %v2803 = vpop.xlane.xlu0 %2802
  %v2804 = vsel %vm658, %v2678, 0.0
  %2805 = vadd.xlane.f32.xlu0 %v2804
  %v2806 = vpop.xlane.xlu0 %2805
  %v2807 = vsel %vm658, %v2679, 0.0
  %2808 = vadd.xlane.f32.xlu0 %v2807
  %v2809 = vpop.xlane.xlu0 %2808
  %v2810 = vsel %vm658, %v2680, 0.0
  %2811 = vadd.xlane.f32.xlu0 %v2810
  %v2812 = vpop.xlane.xlu0 %2811
  %v2813 = vsel %vm658, %v2681, 0.0
  %2814 = vadd.xlane.f32.xlu0 %v2813
  %v2815 = vpop.xlane.xlu0 %2814
  %v2816 = vsel %vm658, %v2682, 0.0
  %2817 = vadd.xlane.f32.xlu0 %v2816
  %v2818 = vpop.xlane.xlu0 %2817
  %v2819 = vsel %vm658, %v2683, 0.0
  %2820 = vadd.xlane.f32.xlu0 %v2819
  %v2821 = vpop.xlane.xlu0 %2820
  %v2822 = vsel %vm658, %v2684, 0.0
  %2823 = vadd.xlane.f32.xlu0 %v2822
  %v2824 = vpop.xlane.xlu0 %2823
  %v2825 = vsel %vm658, %v2685, 0.0
  %2826 = vadd.xlane.f32.xlu0 %v2825
  %v2827 = vpop.xlane.xlu0 %2826
  %v2828 = vsel %vm658, %v2686, 0.0
  %2829 = vadd.xlane.f32.xlu0 %v2828
  %v2830 = vpop.xlane.xlu0 %2829
  %v2831 = vsel %vm658, %v2687, 0.0
  %2832 = vadd.xlane.f32.xlu0 %v2831
  %v2833 = vpop.xlane.xlu0 %2832
  %v2834 = vsel %vm658, %v2688, 0.0
  %2835 = vadd.xlane.f32.xlu0 %v2834
  %v2836 = vpop.xlane.xlu0 %2835
  %v2837 = vsel %vm658, %v2689, 0.0
  %2838 = vadd.xlane.f32.xlu0 %v2837
  %v2839 = vpop.xlane.xlu0 %2838
  %v2840 = vsel %vm658, %v2690, 0.0
  %2841 = vadd.xlane.f32.xlu0 %v2840
  %v2842 = vpop.xlane.xlu0 %2841
  %v2843 = vsel %vm658, %v2691, 0.0
  %2844 = vadd.xlane.f32.xlu0 %v2843
  %v2845 = vpop.xlane.xlu0 %2844
  %v2846 = vsel %vm658, %v2692, 0.0
  %2847 = vadd.xlane.f32.xlu0 %v2846
  %v2848 = vpop.xlane.xlu0 %2847
  %v2849 = vsel %vm658, %v2693, 0.0
  %2850 = vadd.xlane.f32.xlu0 %v2849
  %v2851 = vpop.xlane.xlu0 %2850
  %v2852 = vsel %vm658, %v2694, 0.0
  %2853 = vadd.xlane.f32.xlu0 %v2852
  %v2854 = vpop.xlane.xlu0 %2853
  %v2855 = vsel %vm658, %v2695, 0.0
  %2856 = vadd.xlane.f32.xlu0 %v2855
  %v2857 = vpop.xlane.xlu0 %2856
  %v2858 = vsel %vm658, %v2696, 0.0
  %2859 = vadd.xlane.f32.xlu0 %v2858
  %v2860 = vpop.xlane.xlu0 %2859
  %v2861 = vsel %vm658, %v2697, 0.0
  %2862 = vadd.xlane.f32.xlu0 %v2861
  %v2863 = vpop.xlane.xlu0 %2862
  %v2864 = vsel %vm658, %v2698, 0.0
  %2865 = vadd.xlane.f32.xlu0 %v2864
  %v2866 = vpop.xlane.xlu0 %2865
  %v2867 = vsel %vm658, %v2699, 0.0
  %2868 = vadd.xlane.f32.xlu0 %v2867
  %v2869 = vpop.xlane.xlu0 %2868
  %v2870 = vsel %vm658, %v2700, 0.0
  %2871 = vadd.xlane.f32.xlu0 %v2870
  %v2872 = vpop.xlane.xlu0 %2871
  %v2873 = vsel %vm658, %v2701, 0.0
  %2874 = vadd.xlane.f32.xlu0 %v2873
  %v2875 = vpop.xlane.xlu0 %2874
  %v2876 = vsel %vm658, %v2702, 0.0
  %2877 = vadd.xlane.f32.xlu0 %v2876
  %v2878 = vpop.xlane.xlu0 %2877
  %v2879 = vsel %vm658, %v2703, 0.0
  %2880 = vadd.xlane.f32.xlu0 %v2879
  %v2881 = vpop.xlane.xlu0 %2880
  %v2882 = vsel %vm658, %v2704, 0.0
  %2883 = vadd.xlane.f32.xlu0 %v2882
  %v2884 = vpop.xlane.xlu0 %2883
  %v2885 = vsel %vm658, %v2705, 0.0
  %2886 = vadd.xlane.f32.xlu0 %v2885
  %v2887 = vpop.xlane.xlu0 %2886
  %v2888 = vsel %vm658, %v2706, 0.0
  %2889 = vadd.xlane.f32.xlu0 %v2888
  %v2890 = vpop.xlane.xlu0 %2889
  %v2891 = vsel %vm658, %v2707, 0.0
  %2892 = vadd.xlane.f32.xlu0 %v2891
  %v2893 = vpop.xlane.xlu0 %2892
  %v2894 = vsel %vm658, %v2708, 0.0
  %2895 = vadd.xlane.f32.xlu0 %v2894
  %v2896 = vpop.xlane.xlu0 %2895
  %v2897 = vsel %vm658, %v2709, 0.0
  %2898 = vadd.xlane.f32.xlu0 %v2897
  %v2899 = vpop.xlane.xlu0 %2898
  %v2900 = vsel %vm658, %v2710, 0.0
  %2901 = vadd.xlane.f32.xlu0 %v2900
  %v2902 = vpop.xlane.xlu0 %2901
  %v2903 = vrsqrt.pop %v2713
  %v2904 = vmul.f32 %v2903, %v2713
  %v2905 = vmul.f32 %v2904, %v2903
  %v2906 = vmul.f32 0.5, %v2905
  %v2907 = vsub.f32 1.5, %v2906
  %v2908 = vmul.f32 %v2903, %v2907
  %v2909 = vmul.f32 %v2713, %v2908
  %vm2910 = vcmp.eq.f32.partialorder %v2713, inf
  %v2911 = vsel %vm2910, %v2713, %v2909
  %vm2912 = vcmp.eq.f32.partialorder %v2713, 0.0
  %v2913 = vand.u32 %v2713, 2147483648
  %v2914 = vsel %vm2912, %v2913, %v2911
  %v2915 = vrsqrt.pop %v2716
  %v2916 = vmul.f32 %v2915, %v2716
  %v2917 = vmul.f32 %v2916, %v2915
  %v2918 = vmul.f32 0.5, %v2917
  %v2919 = vsub.f32 1.5, %v2918
  %v2920 = vmul.f32 %v2915, %v2919
  %v2921 = vmul.f32 %v2716, %v2920
  %vm2922 = vcmp.eq.f32.partialorder %v2716, inf
  %v2923 = vsel %vm2922, %v2716, %v2921
  %vm2924 = vcmp.eq.f32.partialorder %v2716, 0.0
  %v2925 = vand.u32 %v2716, 2147483648
  %v2926 = vsel %vm2924, %v2925, %v2923
  %v2927 = vrsqrt.pop %v2719
  %v2928 = vmul.f32 %v2927, %v2719
  %v2929 = vmul.f32 %v2928, %v2927
  %v2930 = vmul.f32 0.5, %v2929
  %v2931 = vsub.f32 1.5, %v2930
  %v2932 = vmul.f32 %v2927, %v2931
  %v2933 = vmul.f32 %v2719, %v2932
  %vm2934 = vcmp.eq.f32.partialorder %v2719, inf
  %v2935 = vsel %vm2934, %v2719, %v2933
  %vm2936 = vcmp.eq.f32.partialorder %v2719, 0.0
  %v2937 = vand.u32 %v2719, 2147483648
  %v2938 = vsel %vm2936, %v2937, %v2935
  %v2939 = vrsqrt.pop %v2722
  %v2940 = vmul.f32 %v2939, %v2722
  %v2941 = vmul.f32 %v2940, %v2939
  %v2942 = vmul.f32 0.5, %v2941
  %v2943 = vsub.f32 1.5, %v2942
  %v2944 = vmul.f32 %v2939, %v2943
  %v2945 = vmul.f32 %v2722, %v2944
  %vm2946 = vcmp.eq.f32.partialorder %v2722, inf
  %v2947 = vsel %vm2946, %v2722, %v2945
  %vm2948 = vcmp.eq.f32.partialorder %v2722, 0.0
  %v2949 = vand.u32 %v2722, 2147483648
  %v2950 = vsel %vm2948, %v2949, %v2947
  %v2951 = vrsqrt.pop %v2725
  %v2952 = vmul.f32 %v2951, %v2725
  %v2953 = vmul.f32 %v2952, %v2951
  %v2954 = vmul.f32 0.5, %v2953
  %v2955 = vsub.f32 1.5, %v2954
  %v2956 = vmul.f32 %v2951, %v2955
  %v2957 = vmul.f32 %v2725, %v2956
  %vm2958 = vcmp.eq.f32.partialorder %v2725, inf
  %v2959 = vsel %vm2958, %v2725, %v2957
  %vm2960 = vcmp.eq.f32.partialorder %v2725, 0.0
  %v2961 = vand.u32 %v2725, 2147483648
  %v2962 = vsel %vm2960, %v2961, %v2959
  %v2963 = vrsqrt.pop %v2728
  %v2964 = vmul.f32 %v2963, %v2728
  %v2965 = vmul.f32 %v2964, %v2963
  %v2966 = vmul.f32 0.5, %v2965
  %v2967 = vsub.f32 1.5, %v2966
  %v2968 = vmul.f32 %v2963, %v2967
  %v2969 = vmul.f32 %v2728, %v2968
  %vm2970 = vcmp.eq.f32.partialorder %v2728, inf
  %v2971 = vsel %vm2970, %v2728, %v2969
  %vm2972 = vcmp.eq.f32.partialorder %v2728, 0.0
  %v2973 = vand.u32 %v2728, 2147483648
  %v2974 = vsel %vm2972, %v2973, %v2971
  %v2975 = vrsqrt.pop %v2731
  %v2976 = vmul.f32 %v2975, %v2731
  %v2977 = vmul.f32 %v2976, %v2975
  %v2978 = vmul.f32 0.5, %v2977
  %v2979 = vsub.f32 1.5, %v2978
  %v2980 = vmul.f32 %v2975, %v2979
  %v2981 = vmul.f32 %v2731, %v2980
  %vm2982 = vcmp.eq.f32.partialorder %v2731, inf
  %v2983 = vsel %vm2982, %v2731, %v2981
  %vm2984 = vcmp.eq.f32.partialorder %v2731, 0.0
  %v2985 = vand.u32 %v2731, 2147483648
  %v2986 = vsel %vm2984, %v2985, %v2983
  %v2987 = vrsqrt.pop %v2734
  %v2988 = vmul.f32 %v2987, %v2734
  %v2989 = vmul.f32 %v2988, %v2987
  %v2990 = vmul.f32 0.5, %v2989
  %v2991 = vsub.f32 1.5, %v2990
  %v2992 = vmul.f32 %v2987, %v2991
  %v2993 = vmul.f32 %v2734, %v2992
  %vm2994 = vcmp.eq.f32.partialorder %v2734, inf
  %v2995 = vsel %vm2994, %v2734, %v2993
  %vm2996 = vcmp.eq.f32.partialorder %v2734, 0.0
  %v2997 = vand.u32 %v2734, 2147483648
  %v2998 = vsel %vm2996, %v2997, %v2995
  %v2999 = vrsqrt.pop %v2737
  %v3000 = vmul.f32 %v2999, %v2737
  %v3001 = vmul.f32 %v3000, %v2999
  %v3002 = vmul.f32 0.5, %v3001
  %v3003 = vsub.f32 1.5, %v3002
  %v3004 = vmul.f32 %v2999, %v3003
  %v3005 = vmul.f32 %v2737, %v3004
  %vm3006 = vcmp.eq.f32.partialorder %v2737, inf
  %v3007 = vsel %vm3006, %v2737, %v3005
  %vm3008 = vcmp.eq.f32.partialorder %v2737, 0.0
  %v3009 = vand.u32 %v2737, 2147483648
  %v3010 = vsel %vm3008, %v3009, %v3007
  %v3011 = vrsqrt.pop %v2740
  %v3012 = vmul.f32 %v3011, %v2740
  %v3013 = vmul.f32 %v3012, %v3011
  %v3014 = vmul.f32 0.5, %v3013
  %v3015 = vsub.f32 1.5, %v3014
  %v3016 = vmul.f32 %v3011, %v3015
  %v3017 = vmul.f32 %v2740, %v3016
  %vm3018 = vcmp.eq.f32.partialorder %v2740, inf
  %v3019 = vsel %vm3018, %v2740, %v3017
  %vm3020 = vcmp.eq.f32.partialorder %v2740, 0.0
  %v3021 = vand.u32 %v2740, 2147483648
  %v3022 = vsel %vm3020, %v3021, %v3019
  %v3023 = vrsqrt.pop %v2743
  %v3024 = vmul.f32 %v3023, %v2743
  %v3025 = vmul.f32 %v3024, %v3023
  %v3026 = vmul.f32 0.5, %v3025
  %v3027 = vsub.f32 1.5, %v3026
  %v3028 = vmul.f32 %v3023, %v3027
  %v3029 = vmul.f32 %v2743, %v3028
  %vm3030 = vcmp.eq.f32.partialorder %v2743, inf
  %v3031 = vsel %vm3030, %v2743, %v3029
  %vm3032 = vcmp.eq.f32.partialorder %v2743, 0.0
  %v3033 = vand.u32 %v2743, 2147483648
  %v3034 = vsel %vm3032, %v3033, %v3031
  %v3035 = vrsqrt.pop %v2746
  %v3036 = vmul.f32 %v3035, %v2746
  %v3037 = vmul.f32 %v3036, %v3035
  %v3038 = vmul.f32 0.5, %v3037
  %v3039 = vsub.f32 1.5, %v3038
  %v3040 = vmul.f32 %v3035, %v3039
  %v3041 = vmul.f32 %v2746, %v3040
  %vm3042 = vcmp.eq.f32.partialorder %v2746, inf
  %v3043 = vsel %vm3042, %v2746, %v3041
  %vm3044 = vcmp.eq.f32.partialorder %v2746, 0.0
  %v3045 = vand.u32 %v2746, 2147483648
  %v3046 = vsel %vm3044, %v3045, %v3043
  %v3047 = vrsqrt.pop %v2749
  %v3048 = vmul.f32 %v3047, %v2749
  %v3049 = vmul.f32 %v3048, %v3047
  %v3050 = vmul.f32 0.5, %v3049
  %v3051 = vsub.f32 1.5, %v3050
  %v3052 = vmul.f32 %v3047, %v3051
  %v3053 = vmul.f32 %v2749, %v3052
  %vm3054 = vcmp.eq.f32.partialorder %v2749, inf
  %v3055 = vsel %vm3054, %v2749, %v3053
  %vm3056 = vcmp.eq.f32.partialorder %v2749, 0.0
  %v3057 = vand.u32 %v2749, 2147483648
  %v3058 = vsel %vm3056, %v3057, %v3055
  %v3059 = vrsqrt.pop %v2752
  %v3060 = vmul.f32 %v3059, %v2752
  %v3061 = vmul.f32 %v3060, %v3059
  %v3062 = vmul.f32 0.5, %v3061
  %v3063 = vsub.f32 1.5, %v3062
  %v3064 = vmul.f32 %v3059, %v3063
  %v3065 = vmul.f32 %v2752, %v3064
  %vm3066 = vcmp.eq.f32.partialorder %v2752, inf
  %v3067 = vsel %vm3066, %v2752, %v3065
  %vm3068 = vcmp.eq.f32.partialorder %v2752, 0.0
  %v3069 = vand.u32 %v2752, 2147483648
  %v3070 = vsel %vm3068, %v3069, %v3067
  %v3071 = vrsqrt.pop %v2755
  %v3072 = vmul.f32 %v3071, %v2755
  %v3073 = vmul.f32 %v3072, %v3071
  %v3074 = vmul.f32 0.5, %v3073
  %v3075 = vsub.f32 1.5, %v3074
  %v3076 = vmul.f32 %v3071, %v3075
  %v3077 = vmul.f32 %v2755, %v3076
  %vm3078 = vcmp.eq.f32.partialorder %v2755, inf
  %v3079 = vsel %vm3078, %v2755, %v3077
  %vm3080 = vcmp.eq.f32.partialorder %v2755, 0.0
  %v3081 = vand.u32 %v2755, 2147483648
  %v3082 = vsel %vm3080, %v3081, %v3079
  %v3083 = vrsqrt.pop %v2758
  %v3084 = vmul.f32 %v3083, %v2758
  %v3085 = vmul.f32 %v3084, %v3083
  %v3086 = vmul.f32 0.5, %v3085
  %v3087 = vsub.f32 1.5, %v3086
  %v3088 = vmul.f32 %v3083, %v3087
  %v3089 = vmul.f32 %v2758, %v3088
  %vm3090 = vcmp.eq.f32.partialorder %v2758, inf
  %v3091 = vsel %vm3090, %v2758, %v3089
  %vm3092 = vcmp.eq.f32.partialorder %v2758, 0.0
  %v3093 = vand.u32 %v2758, 2147483648
  %v3094 = vsel %vm3092, %v3093, %v3091
  %v3095 = vrsqrt.pop %v2761
  %v3096 = vmul.f32 %v3095, %v2761
  %v3097 = vmul.f32 %v3096, %v3095
  %v3098 = vmul.f32 0.5, %v3097
  %v3099 = vsub.f32 1.5, %v3098
  %v3100 = vmul.f32 %v3095, %v3099
  %v3101 = vmul.f32 %v2761, %v3100
  %vm3102 = vcmp.eq.f32.partialorder %v2761, inf
  %v3103 = vsel %vm3102, %v2761, %v3101
  %vm3104 = vcmp.eq.f32.partialorder %v2761, 0.0
  %v3105 = vand.u32 %v2761, 2147483648
  %v3106 = vsel %vm3104, %v3105, %v3103
  %v3107 = vrsqrt.pop %v2764
  %v3108 = vmul.f32 %v3107, %v2764
  %v3109 = vmul.f32 %v3108, %v3107
  %v3110 = vmul.f32 0.5, %v3109
  %v3111 = vsub.f32 1.5, %v3110
  %v3112 = vmul.f32 %v3107, %v3111
  %v3113 = vmul.f32 %v2764, %v3112
  %vm3114 = vcmp.eq.f32.partialorder %v2764, inf
  %v3115 = vsel %vm3114, %v2764, %v3113
  %vm3116 = vcmp.eq.f32.partialorder %v2764, 0.0
  %v3117 = vand.u32 %v2764, 2147483648
  %v3118 = vsel %vm3116, %v3117, %v3115
  %v3119 = vrsqrt.pop %v2767
  %v3120 = vmul.f32 %v3119, %v2767
  %v3121 = vmul.f32 %v3120, %v3119
  %v3122 = vmul.f32 0.5, %v3121
  %v3123 = vsub.f32 1.5, %v3122
  %v3124 = vmul.f32 %v3119, %v3123
  %v3125 = vmul.f32 %v2767, %v3124
  %vm3126 = vcmp.eq.f32.partialorder %v2767, inf
  %v3127 = vsel %vm3126, %v2767, %v3125
  %vm3128 = vcmp.eq.f32.partialorder %v2767, 0.0
  %v3129 = vand.u32 %v2767, 2147483648
  %v3130 = vsel %vm3128, %v3129, %v3127
  %v3131 = vrsqrt.pop %v2770
  %v3132 = vmul.f32 %v3131, %v2770
  %v3133 = vmul.f32 %v3132, %v3131
  %v3134 = vmul.f32 0.5, %v3133
  %v3135 = vsub.f32 1.5, %v3134
  %v3136 = vmul.f32 %v3131, %v3135
  %v3137 = vmul.f32 %v2770, %v3136
  %vm3138 = vcmp.eq.f32.partialorder %v2770, inf
  %v3139 = vsel %vm3138, %v2770, %v3137
  %vm3140 = vcmp.eq.f32.partialorder %v2770, 0.0
  %v3141 = vand.u32 %v2770, 2147483648
  %v3142 = vsel %vm3140, %v3141, %v3139
  %v3143 = vrsqrt.pop %v2773
  %v3144 = vmul.f32 %v3143, %v2773
  %v3145 = vmul.f32 %v3144, %v3143
  %v3146 = vmul.f32 0.5, %v3145
  %v3147 = vsub.f32 1.5, %v3146
  %v3148 = vmul.f32 %v3143, %v3147
  %v3149 = vmul.f32 %v2773, %v3148
  %vm3150 = vcmp.eq.f32.partialorder %v2773, inf
  %v3151 = vsel %vm3150, %v2773, %v3149
  %vm3152 = vcmp.eq.f32.partialorder %v2773, 0.0
  %v3153 = vand.u32 %v2773, 2147483648
  %v3154 = vsel %vm3152, %v3153, %v3151
  %v3155 = vrsqrt.pop %v2776
  %v3156 = vmul.f32 %v3155, %v2776
  %v3157 = vmul.f32 %v3156, %v3155
  %v3158 = vmul.f32 0.5, %v3157
  %v3159 = vsub.f32 1.5, %v3158
  %v3160 = vmul.f32 %v3155, %v3159
  %v3161 = vmul.f32 %v2776, %v3160
  %vm3162 = vcmp.eq.f32.partialorder %v2776, inf
  %v3163 = vsel %vm3162, %v2776, %v3161
  %vm3164 = vcmp.eq.f32.partialorder %v2776, 0.0
  %v3165 = vand.u32 %v2776, 2147483648
  %v3166 = vsel %vm3164, %v3165, %v3163
  %v3167 = vrsqrt.pop %v2779
  %v3168 = vmul.f32 %v3167, %v2779
  %v3169 = vmul.f32 %v3168, %v3167
  %v3170 = vmul.f32 0.5, %v3169
  %v3171 = vsub.f32 1.5, %v3170
  %v3172 = vmul.f32 %v3167, %v3171
  %v3173 = vmul.f32 %v2779, %v3172
  %vm3174 = vcmp.eq.f32.partialorder %v2779, inf
  %v3175 = vsel %vm3174, %v2779, %v3173
  %vm3176 = vcmp.eq.f32.partialorder %v2779, 0.0
  %v3177 = vand.u32 %v2779, 2147483648
  %v3178 = vsel %vm3176, %v3177, %v3175
  %v3179 = vrsqrt.pop %v2782
  %v3180 = vmul.f32 %v3179, %v2782
  %v3181 = vmul.f32 %v3180, %v3179
  %v3182 = vmul.f32 0.5, %v3181
  %v3183 = vsub.f32 1.5, %v3182
  %v3184 = vmul.f32 %v3179, %v3183
  %v3185 = vmul.f32 %v2782, %v3184
  %vm3186 = vcmp.eq.f32.partialorder %v2782, inf
  %v3187 = vsel %vm3186, %v2782, %v3185
  %vm3188 = vcmp.eq.f32.partialorder %v2782, 0.0
  %v3189 = vand.u32 %v2782, 2147483648
  %v3190 = vsel %vm3188, %v3189, %v3187
  %v3191 = vrsqrt.pop %v2785
  %v3192 = vmul.f32 %v3191, %v2785
  %v3193 = vmul.f32 %v3192, %v3191
  %v3194 = vmul.f32 0.5, %v3193
  %v3195 = vsub.f32 1.5, %v3194
  %v3196 = vmul.f32 %v3191, %v3195
  %v3197 = vmul.f32 %v2785, %v3196
  %vm3198 = vcmp.eq.f32.partialorder %v2785, inf
  %v3199 = vsel %vm3198, %v2785, %v3197
  %vm3200 = vcmp.eq.f32.partialorder %v2785, 0.0
  %v3201 = vand.u32 %v2785, 2147483648
  %v3202 = vsel %vm3200, %v3201, %v3199
  %v3203 = vrsqrt.pop %v2788
  %v3204 = vmul.f32 %v3203, %v2788
  %v3205 = vmul.f32 %v3204, %v3203
  %v3206 = vmul.f32 0.5, %v3205
  %v3207 = vsub.f32 1.5, %v3206
  %v3208 = vmul.f32 %v3203, %v3207
  %v3209 = vmul.f32 %v2788, %v3208
  %vm3210 = vcmp.eq.f32.partialorder %v2788, inf
  %v3211 = vsel %vm3210, %v2788, %v3209
  %vm3212 = vcmp.eq.f32.partialorder %v2788, 0.0
  %v3213 = vand.u32 %v2788, 2147483648
  %v3214 = vsel %vm3212, %v3213, %v3211
  %v3215 = vrsqrt.pop %v2791
  %v3216 = vmul.f32 %v3215, %v2791
  %v3217 = vmul.f32 %v3216, %v3215
  %v3218 = vmul.f32 0.5, %v3217
  %v3219 = vsub.f32 1.5, %v3218
  %v3220 = vmul.f32 %v3215, %v3219
  %v3221 = vmul.f32 %v2791, %v3220
  %vm3222 = vcmp.eq.f32.partialorder %v2791, inf
  %v3223 = vsel %vm3222, %v2791, %v3221
  %vm3224 = vcmp.eq.f32.partialorder %v2791, 0.0
  %v3225 = vand.u32 %v2791, 2147483648
  %v3226 = vsel %vm3224, %v3225, %v3223
  %v3227 = vrsqrt.pop %v2794
  %v3228 = vmul.f32 %v3227, %v2794
  %v3229 = vmul.f32 %v3228, %v3227
  %v3230 = vmul.f32 0.5, %v3229
  %v3231 = vsub.f32 1.5, %v3230
  %v3232 = vmul.f32 %v3227, %v3231
  %v3233 = vmul.f32 %v2794, %v3232
  %vm3234 = vcmp.eq.f32.partialorder %v2794, inf
  %v3235 = vsel %vm3234, %v2794, %v3233
  %vm3236 = vcmp.eq.f32.partialorder %v2794, 0.0
  %v3237 = vand.u32 %v2794, 2147483648
  %v3238 = vsel %vm3236, %v3237, %v3235
  %v3239 = vrsqrt.pop %v2797
  %v3240 = vmul.f32 %v3239, %v2797
  %v3241 = vmul.f32 %v3240, %v3239
  %v3242 = vmul.f32 0.5, %v3241
  %v3243 = vsub.f32 1.5, %v3242
  %v3244 = vmul.f32 %v3239, %v3243
  %v3245 = vmul.f32 %v2797, %v3244
  %vm3246 = vcmp.eq.f32.partialorder %v2797, inf
  %v3247 = vsel %vm3246, %v2797, %v3245
  %vm3248 = vcmp.eq.f32.partialorder %v2797, 0.0
  %v3249 = vand.u32 %v2797, 2147483648
  %v3250 = vsel %vm3248, %v3249, %v3247
  %v3251 = vrsqrt.pop %v2800
  %v3252 = vmul.f32 %v3251, %v2800
  %v3253 = vmul.f32 %v3252, %v3251
  %v3254 = vmul.f32 0.5, %v3253
  %v3255 = vsub.f32 1.5, %v3254
  %v3256 = vmul.f32 %v3251, %v3255
  %v3257 = vmul.f32 %v2800, %v3256
  %vm3258 = vcmp.eq.f32.partialorder %v2800, inf
  %v3259 = vsel %vm3258, %v2800, %v3257
  %vm3260 = vcmp.eq.f32.partialorder %v2800, 0.0
  %v3261 = vand.u32 %v2800, 2147483648
  %v3262 = vsel %vm3260, %v3261, %v3259
  %v3263 = vrsqrt.pop %v2803
  %v3264 = vmul.f32 %v3263, %v2803
  %v3265 = vmul.f32 %v3264, %v3263
  %v3266 = vmul.f32 0.5, %v3265
  %v3267 = vsub.f32 1.5, %v3266
  %v3268 = vmul.f32 %v3263, %v3267
  %v3269 = vmul.f32 %v2803, %v3268
  %vm3270 = vcmp.eq.f32.partialorder %v2803, inf
  %v3271 = vsel %vm3270, %v2803, %v3269
  %vm3272 = vcmp.eq.f32.partialorder %v2803, 0.0
  %v3273 = vand.u32 %v2803, 2147483648
  %v3274 = vsel %vm3272, %v3273, %v3271
  %v3275 = vrsqrt.pop %v2806
  %v3276 = vmul.f32 %v3275, %v2806
  %v3277 = vmul.f32 %v3276, %v3275
  %v3278 = vmul.f32 0.5, %v3277
  %v3279 = vsub.f32 1.5, %v3278
  %v3280 = vmul.f32 %v3275, %v3279
  %v3281 = vmul.f32 %v2806, %v3280
  %vm3282 = vcmp.eq.f32.partialorder %v2806, inf
  %v3283 = vsel %vm3282, %v2806, %v3281
  %vm3284 = vcmp.eq.f32.partialorder %v2806, 0.0
  %v3285 = vand.u32 %v2806, 2147483648
  %v3286 = vsel %vm3284, %v3285, %v3283
  %v3287 = vrsqrt.pop %v2809
  %v3288 = vmul.f32 %v3287, %v2809
  %v3289 = vmul.f32 %v3288, %v3287
  %v3290 = vmul.f32 0.5, %v3289
  %v3291 = vsub.f32 1.5, %v3290
  %v3292 = vmul.f32 %v3287, %v3291
  %v3293 = vmul.f32 %v2809, %v3292
  %vm3294 = vcmp.eq.f32.partialorder %v2809, inf
  %v3295 = vsel %vm3294, %v2809, %v3293
  %vm3296 = vcmp.eq.f32.partialorder %v2809, 0.0
  %v3297 = vand.u32 %v2809, 2147483648
  %v3298 = vsel %vm3296, %v3297, %v3295
  %v3299 = vrsqrt.pop %v2812
  %v3300 = vmul.f32 %v3299, %v2812
  %v3301 = vmul.f32 %v3300, %v3299
  %v3302 = vmul.f32 0.5, %v3301
  %v3303 = vsub.f32 1.5, %v3302
  %v3304 = vmul.f32 %v3299, %v3303
  %v3305 = vmul.f32 %v2812, %v3304
  %vm3306 = vcmp.eq.f32.partialorder %v2812, inf
  %v3307 = vsel %vm3306, %v2812, %v3305
  %vm3308 = vcmp.eq.f32.partialorder %v2812, 0.0
  %v3309 = vand.u32 %v2812, 2147483648
  %v3310 = vsel %vm3308, %v3309, %v3307
  %v3311 = vrsqrt.pop %v2815
  %v3312 = vmul.f32 %v3311, %v2815
  %v3313 = vmul.f32 %v3312, %v3311
  %v3314 = vmul.f32 0.5, %v3313
  %v3315 = vsub.f32 1.5, %v3314
  %v3316 = vmul.f32 %v3311, %v3315
  %v3317 = vmul.f32 %v2815, %v3316
  %vm3318 = vcmp.eq.f32.partialorder %v2815, inf
  %v3319 = vsel %vm3318, %v2815, %v3317
  %vm3320 = vcmp.eq.f32.partialorder %v2815, 0.0
  %v3321 = vand.u32 %v2815, 2147483648
  %v3322 = vsel %vm3320, %v3321, %v3319
  %v3323 = vrsqrt.pop %v2818
  %v3324 = vmul.f32 %v3323, %v2818
  %v3325 = vmul.f32 %v3324, %v3323
  %v3326 = vmul.f32 0.5, %v3325
  %v3327 = vsub.f32 1.5, %v3326
  %v3328 = vmul.f32 %v3323, %v3327
  %v3329 = vmul.f32 %v2818, %v3328
  %vm3330 = vcmp.eq.f32.partialorder %v2818, inf
  %v3331 = vsel %vm3330, %v2818, %v3329
  %vm3332 = vcmp.eq.f32.partialorder %v2818, 0.0
  %v3333 = vand.u32 %v2818, 2147483648
  %v3334 = vsel %vm3332, %v3333, %v3331
  %v3335 = vrsqrt.pop %v2821
  %v3336 = vmul.f32 %v3335, %v2821
  %v3337 = vmul.f32 %v3336, %v3335
  %v3338 = vmul.f32 0.5, %v3337
  %v3339 = vsub.f32 1.5, %v3338
  %v3340 = vmul.f32 %v3335, %v3339
  %v3341 = vmul.f32 %v2821, %v3340
  %vm3342 = vcmp.eq.f32.partialorder %v2821, inf
  %v3343 = vsel %vm3342, %v2821, %v3341
  %vm3344 = vcmp.eq.f32.partialorder %v2821, 0.0
  %v3345 = vand.u32 %v2821, 2147483648
  %v3346 = vsel %vm3344, %v3345, %v3343
  %v3347 = vrsqrt.pop %v2824
  %v3348 = vmul.f32 %v3347, %v2824
  %v3349 = vmul.f32 %v3348, %v3347
  %v3350 = vmul.f32 0.5, %v3349
  %v3351 = vsub.f32 1.5, %v3350
  %v3352 = vmul.f32 %v3347, %v3351
  %v3353 = vmul.f32 %v2824, %v3352
  %vm3354 = vcmp.eq.f32.partialorder %v2824, inf
  %v3355 = vsel %vm3354, %v2824, %v3353
  %vm3356 = vcmp.eq.f32.partialorder %v2824, 0.0
  %v3357 = vand.u32 %v2824, 2147483648
  %v3358 = vsel %vm3356, %v3357, %v3355
  %v3359 = vrsqrt.pop %v2827
  %v3360 = vmul.f32 %v3359, %v2827
  %v3361 = vmul.f32 %v3360, %v3359
  %v3362 = vmul.f32 0.5, %v3361
  %v3363 = vsub.f32 1.5, %v3362
  %v3364 = vmul.f32 %v3359, %v3363
  %v3365 = vmul.f32 %v2827, %v3364
  %vm3366 = vcmp.eq.f32.partialorder %v2827, inf
  %v3367 = vsel %vm3366, %v2827, %v3365
  %vm3368 = vcmp.eq.f32.partialorder %v2827, 0.0
  %v3369 = vand.u32 %v2827, 2147483648
  %v3370 = vsel %vm3368, %v3369, %v3367
  %v3371 = vrsqrt.pop %v2830
  %v3372 = vmul.f32 %v3371, %v2830
  %v3373 = vmul.f32 %v3372, %v3371
  %v3374 = vmul.f32 0.5, %v3373
  %v3375 = vsub.f32 1.5, %v3374
  %v3376 = vmul.f32 %v3371, %v3375
  %v3377 = vmul.f32 %v2830, %v3376
  %vm3378 = vcmp.eq.f32.partialorder %v2830, inf
  %v3379 = vsel %vm3378, %v2830, %v3377
  %vm3380 = vcmp.eq.f32.partialorder %v2830, 0.0
  %v3381 = vand.u32 %v2830, 2147483648
  %v3382 = vsel %vm3380, %v3381, %v3379
  %v3383 = vrsqrt.pop %v2833
  %v3384 = vmul.f32 %v3383, %v2833
  %v3385 = vmul.f32 %v3384, %v3383
  %v3386 = vmul.f32 0.5, %v3385
  %v3387 = vsub.f32 1.5, %v3386
  %v3388 = vmul.f32 %v3383, %v3387
  %v3389 = vmul.f32 %v2833, %v3388
  %vm3390 = vcmp.eq.f32.partialorder %v2833, inf
  %v3391 = vsel %vm3390, %v2833, %v3389
  %vm3392 = vcmp.eq.f32.partialorder %v2833, 0.0
  %v3393 = vand.u32 %v2833, 2147483648
  %v3394 = vsel %vm3392, %v3393, %v3391
  %v3395 = vrsqrt.pop %v2836
  %v3396 = vmul.f32 %v3395, %v2836
  %v3397 = vmul.f32 %v3396, %v3395
  %v3398 = vmul.f32 0.5, %v3397
  %v3399 = vsub.f32 1.5, %v3398
  %v3400 = vmul.f32 %v3395, %v3399
  %v3401 = vmul.f32 %v2836, %v3400
  %vm3402 = vcmp.eq.f32.partialorder %v2836, inf
  %v3403 = vsel %vm3402, %v2836, %v3401
  %vm3404 = vcmp.eq.f32.partialorder %v2836, 0.0
  %v3405 = vand.u32 %v2836, 2147483648
  %v3406 = vsel %vm3404, %v3405, %v3403
  %v3407 = vrsqrt.pop %v2839
  %v3408 = vmul.f32 %v3407, %v2839
  %v3409 = vmul.f32 %v3408, %v3407
  %v3410 = vmul.f32 0.5, %v3409
  %v3411 = vsub.f32 1.5, %v3410
  %v3412 = vmul.f32 %v3407, %v3411
  %v3413 = vmul.f32 %v2839, %v3412
  %vm3414 = vcmp.eq.f32.partialorder %v2839, inf
  %v3415 = vsel %vm3414, %v2839, %v3413
  %vm3416 = vcmp.eq.f32.partialorder %v2839, 0.0
  %v3417 = vand.u32 %v2839, 2147483648
  %v3418 = vsel %vm3416, %v3417, %v3415
  %v3419 = vrsqrt.pop %v2842
  %v3420 = vmul.f32 %v3419, %v2842
  %v3421 = vmul.f32 %v3420, %v3419
  %v3422 = vmul.f32 0.5, %v3421
  %v3423 = vsub.f32 1.5, %v3422
  %v3424 = vmul.f32 %v3419, %v3423
  %v3425 = vmul.f32 %v2842, %v3424
  %vm3426 = vcmp.eq.f32.partialorder %v2842, inf
  %v3427 = vsel %vm3426, %v2842, %v3425
  %vm3428 = vcmp.eq.f32.partialorder %v2842, 0.0
  %v3429 = vand.u32 %v2842, 2147483648
  %v3430 = vsel %vm3428, %v3429, %v3427
  %v3431 = vrsqrt.pop %v2845
  %v3432 = vmul.f32 %v3431, %v2845
  %v3433 = vmul.f32 %v3432, %v3431
  %v3434 = vmul.f32 0.5, %v3433
  %v3435 = vsub.f32 1.5, %v3434
  %v3436 = vmul.f32 %v3431, %v3435
  %v3437 = vmul.f32 %v2845, %v3436
  %vm3438 = vcmp.eq.f32.partialorder %v2845, inf
  %v3439 = vsel %vm3438, %v2845, %v3437
  %vm3440 = vcmp.eq.f32.partialorder %v2845, 0.0
  %v3441 = vand.u32 %v2845, 2147483648
  %v3442 = vsel %vm3440, %v3441, %v3439
  %v3443 = vrsqrt.pop %v2848
  %v3444 = vmul.f32 %v3443, %v2848
  %v3445 = vmul.f32 %v3444, %v3443
  %v3446 = vmul.f32 0.5, %v3445
  %v3447 = vsub.f32 1.5, %v3446
  %v3448 = vmul.f32 %v3443, %v3447
  %v3449 = vmul.f32 %v2848, %v3448
  %vm3450 = vcmp.eq.f32.partialorder %v2848, inf
  %v3451 = vsel %vm3450, %v2848, %v3449
  %vm3452 = vcmp.eq.f32.partialorder %v2848, 0.0
  %v3453 = vand.u32 %v2848, 2147483648
  %v3454 = vsel %vm3452, %v3453, %v3451
  %v3455 = vrsqrt.pop %v2851
  %v3456 = vmul.f32 %v3455, %v2851
  %v3457 = vmul.f32 %v3456, %v3455
  %v3458 = vmul.f32 0.5, %v3457
  %v3459 = vsub.f32 1.5, %v3458
  %v3460 = vmul.f32 %v3455, %v3459
  %v3461 = vmul.f32 %v2851, %v3460
  %vm3462 = vcmp.eq.f32.partialorder %v2851, inf
  %v3463 = vsel %vm3462, %v2851, %v3461
  %vm3464 = vcmp.eq.f32.partialorder %v2851, 0.0
  %v3465 = vand.u32 %v2851, 2147483648
  %v3466 = vsel %vm3464, %v3465, %v3463
  %v3467 = vrsqrt.pop %v2854
  %v3468 = vmul.f32 %v3467, %v2854
  %v3469 = vmul.f32 %v3468, %v3467
  %v3470 = vmul.f32 0.5, %v3469
  %v3471 = vsub.f32 1.5, %v3470
  %v3472 = vmul.f32 %v3467, %v3471
  %v3473 = vmul.f32 %v2854, %v3472
  %vm3474 = vcmp.eq.f32.partialorder %v2854, inf
  %v3475 = vsel %vm3474, %v2854, %v3473
  %vm3476 = vcmp.eq.f32.partialorder %v2854, 0.0
  %v3477 = vand.u32 %v2854, 2147483648
  %v3478 = vsel %vm3476, %v3477, %v3475
  %v3479 = vrsqrt.pop %v2857
  %v3480 = vmul.f32 %v3479, %v2857
  %v3481 = vmul.f32 %v3480, %v3479
  %v3482 = vmul.f32 0.5, %v3481
  %v3483 = vsub.f32 1.5, %v3482
  %v3484 = vmul.f32 %v3479, %v3483
  %v3485 = vmul.f32 %v2857, %v3484
  %vm3486 = vcmp.eq.f32.partialorder %v2857, inf
  %v3487 = vsel %vm3486, %v2857, %v3485
  %vm3488 = vcmp.eq.f32.partialorder %v2857, 0.0
  %v3489 = vand.u32 %v2857, 2147483648
  %v3490 = vsel %vm3488, %v3489, %v3487
  %v3491 = vrsqrt.pop %v2860
  %v3492 = vmul.f32 %v3491, %v2860
  %v3493 = vmul.f32 %v3492, %v3491
  %v3494 = vmul.f32 0.5, %v3493
  %v3495 = vsub.f32 1.5, %v3494
  %v3496 = vmul.f32 %v3491, %v3495
  %v3497 = vmul.f32 %v2860, %v3496
  %vm3498 = vcmp.eq.f32.partialorder %v2860, inf
  %v3499 = vsel %vm3498, %v2860, %v3497
  %vm3500 = vcmp.eq.f32.partialorder %v2860, 0.0
  %v3501 = vand.u32 %v2860, 2147483648
  %v3502 = vsel %vm3500, %v3501, %v3499
  %v3503 = vrsqrt.pop %v2863
  %v3504 = vmul.f32 %v3503, %v2863
  %v3505 = vmul.f32 %v3504, %v3503
  %v3506 = vmul.f32 0.5, %v3505
  %v3507 = vsub.f32 1.5, %v3506
  %v3508 = vmul.f32 %v3503, %v3507
  %v3509 = vmul.f32 %v2863, %v3508
  %vm3510 = vcmp.eq.f32.partialorder %v2863, inf
  %v3511 = vsel %vm3510, %v2863, %v3509
  %vm3512 = vcmp.eq.f32.partialorder %v2863, 0.0
  %v3513 = vand.u32 %v2863, 2147483648
  %v3514 = vsel %vm3512, %v3513, %v3511
  %v3515 = vrsqrt.pop %v2866
  %v3516 = vmul.f32 %v3515, %v2866
  %v3517 = vmul.f32 %v3516, %v3515
  %v3518 = vmul.f32 0.5, %v3517
  %v3519 = vsub.f32 1.5, %v3518
  %v3520 = vmul.f32 %v3515, %v3519
  %v3521 = vmul.f32 %v2866, %v3520
  %vm3522 = vcmp.eq.f32.partialorder %v2866, inf
  %v3523 = vsel %vm3522, %v2866, %v3521
  %vm3524 = vcmp.eq.f32.partialorder %v2866, 0.0
  %v3525 = vand.u32 %v2866, 2147483648
  %v3526 = vsel %vm3524, %v3525, %v3523
  %v3527 = vrsqrt.pop %v2869
  %v3528 = vmul.f32 %v3527, %v2869
  %v3529 = vmul.f32 %v3528, %v3527
  %v3530 = vmul.f32 0.5, %v3529
  %v3531 = vsub.f32 1.5, %v3530
  %v3532 = vmul.f32 %v3527, %v3531
  %v3533 = vmul.f32 %v2869, %v3532
  %vm3534 = vcmp.eq.f32.partialorder %v2869, inf
  %v3535 = vsel %vm3534, %v2869, %v3533
  %vm3536 = vcmp.eq.f32.partialorder %v2869, 0.0
  %v3537 = vand.u32 %v2869, 2147483648
  %v3538 = vsel %vm3536, %v3537, %v3535
  %v3539 = vrsqrt.pop %v2872
  %v3540 = vmul.f32 %v3539, %v2872
  %v3541 = vmul.f32 %v3540, %v3539
  %v3542 = vmul.f32 0.5, %v3541
  %v3543 = vsub.f32 1.5, %v3542
  %v3544 = vmul.f32 %v3539, %v3543
  %v3545 = vmul.f32 %v2872, %v3544
  %vm3546 = vcmp.eq.f32.partialorder %v2872, inf
  %v3547 = vsel %vm3546, %v2872, %v3545
  %vm3548 = vcmp.eq.f32.partialorder %v2872, 0.0
  %v3549 = vand.u32 %v2872, 2147483648
  %v3550 = vsel %vm3548, %v3549, %v3547
  %v3551 = vrsqrt.pop %v2875
  %v3552 = vmul.f32 %v3551, %v2875
  %v3553 = vmul.f32 %v3552, %v3551
  %v3554 = vmul.f32 0.5, %v3553
  %v3555 = vsub.f32 1.5, %v3554
  %v3556 = vmul.f32 %v3551, %v3555
  %v3557 = vmul.f32 %v2875, %v3556
  %vm3558 = vcmp.eq.f32.partialorder %v2875, inf
  %v3559 = vsel %vm3558, %v2875, %v3557
  %vm3560 = vcmp.eq.f32.partialorder %v2875, 0.0
  %v3561 = vand.u32 %v2875, 2147483648
  %v3562 = vsel %vm3560, %v3561, %v3559
  %v3563 = vrsqrt.pop %v2878
  %v3564 = vmul.f32 %v3563, %v2878
  %v3565 = vmul.f32 %v3564, %v3563
  %v3566 = vmul.f32 0.5, %v3565
  %v3567 = vsub.f32 1.5, %v3566
  %v3568 = vmul.f32 %v3563, %v3567
  %v3569 = vmul.f32 %v2878, %v3568
  %vm3570 = vcmp.eq.f32.partialorder %v2878, inf
  %v3571 = vsel %vm3570, %v2878, %v3569
  %vm3572 = vcmp.eq.f32.partialorder %v2878, 0.0
  %v3573 = vand.u32 %v2878, 2147483648
  %v3574 = vsel %vm3572, %v3573, %v3571
  %v3575 = vrsqrt.pop %v2881
  %v3576 = vmul.f32 %v3575, %v2881
  %v3577 = vmul.f32 %v3576, %v3575
  %v3578 = vmul.f32 0.5, %v3577
  %v3579 = vsub.f32 1.5, %v3578
  %v3580 = vmul.f32 %v3575, %v3579
  %v3581 = vmul.f32 %v2881, %v3580
  %vm3582 = vcmp.eq.f32.partialorder %v2881, inf
  %v3583 = vsel %vm3582, %v2881, %v3581
  %vm3584 = vcmp.eq.f32.partialorder %v2881, 0.0
  %v3585 = vand.u32 %v2881, 2147483648
  %v3586 = vsel %vm3584, %v3585, %v3583
  %v3587 = vrsqrt.pop %v2884
  %v3588 = vmul.f32 %v3587, %v2884
  %v3589 = vmul.f32 %v3588, %v3587
  %v3590 = vmul.f32 0.5, %v3589
  %v3591 = vsub.f32 1.5, %v3590
  %v3592 = vmul.f32 %v3587, %v3591
  %v3593 = vmul.f32 %v2884, %v3592
  %vm3594 = vcmp.eq.f32.partialorder %v2884, inf
  %v3595 = vsel %vm3594, %v2884, %v3593
  %vm3596 = vcmp.eq.f32.partialorder %v2884, 0.0
  %v3597 = vand.u32 %v2884, 2147483648
  %v3598 = vsel %vm3596, %v3597, %v3595
  %v3599 = vrsqrt.pop %v2887
  %v3600 = vmul.f32 %v3599, %v2887
  %v3601 = vmul.f32 %v3600, %v3599
  %v3602 = vmul.f32 0.5, %v3601
  %v3603 = vsub.f32 1.5, %v3602
  %v3604 = vmul.f32 %v3599, %v3603
  %v3605 = vmul.f32 %v2887, %v3604
  %vm3606 = vcmp.eq.f32.partialorder %v2887, inf
  %v3607 = vsel %vm3606, %v2887, %v3605
  %vm3608 = vcmp.eq.f32.partialorder %v2887, 0.0
  %v3609 = vand.u32 %v2887, 2147483648
  %v3610 = vsel %vm3608, %v3609, %v3607
  %v3611 = vrsqrt.pop %v2890
  %v3612 = vmul.f32 %v3611, %v2890
  %v3613 = vmul.f32 %v3612, %v3611
  %v3614 = vmul.f32 0.5, %v3613
  %v3615 = vsub.f32 1.5, %v3614
  %v3616 = vmul.f32 %v3611, %v3615
  %v3617 = vmul.f32 %v2890, %v3616
  %vm3618 = vcmp.eq.f32.partialorder %v2890, inf
  %v3619 = vsel %vm3618, %v2890, %v3617
  %vm3620 = vcmp.eq.f32.partialorder %v2890, 0.0
  %v3621 = vand.u32 %v2890, 2147483648
  %v3622 = vsel %vm3620, %v3621, %v3619
  %v3623 = vrsqrt.pop %v2893
  %v3624 = vmul.f32 %v3623, %v2893
  %v3625 = vmul.f32 %v3624, %v3623
  %v3626 = vmul.f32 0.5, %v3625
  %v3627 = vsub.f32 1.5, %v3626
  %v3628 = vmul.f32 %v3623, %v3627
  %v3629 = vmul.f32 %v2893, %v3628
  %vm3630 = vcmp.eq.f32.partialorder %v2893, inf
  %v3631 = vsel %vm3630, %v2893, %v3629
  %vm3632 = vcmp.eq.f32.partialorder %v2893, 0.0
  %v3633 = vand.u32 %v2893, 2147483648
  %v3634 = vsel %vm3632, %v3633, %v3631
  %v3635 = vrsqrt.pop %v2896
  %v3636 = vmul.f32 %v3635, %v2896
  %v3637 = vmul.f32 %v3636, %v3635
  %v3638 = vmul.f32 0.5, %v3637
  %v3639 = vsub.f32 1.5, %v3638
  %v3640 = vmul.f32 %v3635, %v3639
  %v3641 = vmul.f32 %v2896, %v3640
  %vm3642 = vcmp.eq.f32.partialorder %v2896, inf
  %v3643 = vsel %vm3642, %v2896, %v3641
  %vm3644 = vcmp.eq.f32.partialorder %v2896, 0.0
  %v3645 = vand.u32 %v2896, 2147483648
  %v3646 = vsel %vm3644, %v3645, %v3643
  %v3647 = vrsqrt.pop %v2899
  %v3648 = vmul.f32 %v3647, %v2899
  %v3649 = vmul.f32 %v3648, %v3647
  %v3650 = vmul.f32 0.5, %v3649
  %v3651 = vsub.f32 1.5, %v3650
  %v3652 = vmul.f32 %v3647, %v3651
  %v3653 = vmul.f32 %v2899, %v3652
  %vm3654 = vcmp.eq.f32.partialorder %v2899, inf
  %v3655 = vsel %vm3654, %v2899, %v3653
  %vm3656 = vcmp.eq.f32.partialorder %v2899, 0.0
  %v3657 = vand.u32 %v2899, 2147483648
  %v3658 = vsel %vm3656, %v3657, %v3655
  %v3659 = vrsqrt.pop %v2902
  %v3660 = vmul.f32 %v3659, %v2902
  %v3661 = vmul.f32 %v3660, %v3659
  %v3662 = vmul.f32 0.5, %v3661
  %v3663 = vsub.f32 1.5, %v3662
  %v3664 = vmul.f32 %v3659, %v3663
  %v3665 = vmul.f32 %v2902, %v3664
  %vm3666 = vcmp.eq.f32.partialorder %v2902, inf
  %v3667 = vsel %vm3666, %v2902, %v3665
  %vm3668 = vcmp.eq.f32.partialorder %v2902, 0.0
  %v3669 = vand.u32 %v2902, 2147483648
  %v3670 = vsel %vm3668, %v3669, %v3667
  %v3671 = vsub.f32 0.0, %v1890
  %v3672 = vsub.f32 0.0, %v1902
  %v3673 = vsub.f32 0.0, %v1914
  %v3674 = vsub.f32 0.0, %v1926
  %v3675 = vsub.f32 0.0, %v1938
  %v3676 = vsub.f32 0.0, %v1950
  %v3677 = vsub.f32 0.0, %v1962
  %v3678 = vsub.f32 0.0, %v1974
  %v3679 = vsub.f32 0.0, %v1986
  %v3680 = vsub.f32 0.0, %v1998
  %v3681 = vsub.f32 0.0, %v2010
  %v3682 = vsub.f32 0.0, %v2022
  %v3683 = vsub.f32 0.0, %v2034
  %v3684 = vsub.f32 0.0, %v2046
  %v3685 = vsub.f32 0.0, %v2058
  %v3686 = vsub.f32 0.0, %v2070
  %v3687 = vsub.f32 0.0, %v2082
  %v3688 = vsub.f32 0.0, %v2094
  %v3689 = vsub.f32 0.0, %v2106
  %v3690 = vsub.f32 0.0, %v2118
  %v3691 = vsub.f32 0.0, %v2130
  %v3692 = vsub.f32 0.0, %v2142
  %v3693 = vsub.f32 0.0, %v2154
  %v3694 = vsub.f32 0.0, %v2166
  %v3695 = vsub.f32 0.0, %v2178
  %v3696 = vsub.f32 0.0, %v2190
  %v3697 = vsub.f32 0.0, %v2202
  %v3698 = vsub.f32 0.0, %v2214
  %v3699 = vsub.f32 0.0, %v2226
  %v3700 = vsub.f32 0.0, %v2238
  %v3701 = vsub.f32 0.0, %v2250
  %v3702 = vsub.f32 0.0, %v2262
  %v3703 = vsub.f32 0.0, %v2274
  %v3704 = vsub.f32 0.0, %v2286
  %v3705 = vsub.f32 0.0, %v2298
  %v3706 = vsub.f32 0.0, %v2310
  %v3707 = vsub.f32 0.0, %v2322
  %v3708 = vsub.f32 0.0, %v2334
  %v3709 = vsub.f32 0.0, %v2346
  %v3710 = vsub.f32 0.0, %v2358
  %v3711 = vsub.f32 0.0, %v2370
  %v3712 = vsub.f32 0.0, %v2382
  %v3713 = vsub.f32 0.0, %v2394
  %v3714 = vsub.f32 0.0, %v2406
  %v3715 = vsub.f32 0.0, %v2418
  %v3716 = vsub.f32 0.0, %v2430
  %v3717 = vsub.f32 0.0, %v2442
  %v3718 = vsub.f32 0.0, %v2454
  %v3719 = vsub.f32 0.0, %v2466
  %v3720 = vsub.f32 0.0, %v2478
  %v3721 = vsub.f32 0.0, %v2490
  %v3722 = vsub.f32 0.0, %v2502
  %v3723 = vsub.f32 0.0, %v2514
  %v3724 = vsub.f32 0.0, %v2526
  %v3725 = vsub.f32 0.0, %v2538
  %v3726 = vsub.f32 0.0, %v2550
  %v3727 = vsub.f32 0.0, %v2562
  %v3728 = vsub.f32 0.0, %v2574
  %v3729 = vsub.f32 0.0, %v2586
  %v3730 = vsub.f32 0.0, %v2598
  %v3731 = vsub.f32 0.0, %v2610
  %v3732 = vsub.f32 0.0, %v2622
  %v3733 = vsub.f32 0.0, %v2634
  %v3734 = vsub.f32 0.0, %v2646
  %v3735 = vsub.f32 0.0, %v2914
  %v3736 = vsub.f32 0.0, %v2926
  %v3737 = vsub.f32 0.0, %v2938
  %v3738 = vsub.f32 0.0, %v2950
  %v3739 = vsub.f32 0.0, %v2962
  %v3740 = vsub.f32 0.0, %v2974
  %v3741 = vsub.f32 0.0, %v2986
  %v3742 = vsub.f32 0.0, %v2998
  %v3743 = vsub.f32 0.0, %v3010
  %v3744 = vsub.f32 0.0, %v3022
  %v3745 = vsub.f32 0.0, %v3034
  %v3746 = vsub.f32 0.0, %v3046
  %v3747 = vsub.f32 0.0, %v3058
  %v3748 = vsub.f32 0.0, %v3070
  %v3749 = vsub.f32 0.0, %v3082
  %v3750 = vsub.f32 0.0, %v3094
  %v3751 = vsub.f32 0.0, %v3106
  %v3752 = vsub.f32 0.0, %v3118
  %v3753 = vsub.f32 0.0, %v3130
  %v3754 = vsub.f32 0.0, %v3142
  %v3755 = vsub.f32 0.0, %v3154
  %v3756 = vsub.f32 0.0, %v3166
  %v3757 = vsub.f32 0.0, %v3178
  %v3758 = vsub.f32 0.0, %v3190
  %v3759 = vsub.f32 0.0, %v3202
  %v3760 = vsub.f32 0.0, %v3214
  %v3761 = vsub.f32 0.0, %v3226
  %v3762 = vsub.f32 0.0, %v3238
  %v3763 = vsub.f32 0.0, %v3250
  %v3764 = vsub.f32 0.0, %v3262
  %v3765 = vsub.f32 0.0, %v3274
  %v3766 = vsub.f32 0.0, %v3286
  %v3767 = vsub.f32 0.0, %v3298
  %v3768 = vsub.f32 0.0, %v3310
  %v3769 = vsub.f32 0.0, %v3322
  %v3770 = vsub.f32 0.0, %v3334
  %v3771 = vsub.f32 0.0, %v3346
  %v3772 = vsub.f32 0.0, %v3358
  %v3773 = vsub.f32 0.0, %v3370
  %v3774 = vsub.f32 0.0, %v3382
  %v3775 = vsub.f32 0.0, %v3394
  %v3776 = vsub.f32 0.0, %v3406
  %v3777 = vsub.f32 0.0, %v3418
  %v3778 = vsub.f32 0.0, %v3430
  %v3779 = vsub.f32 0.0, %v3442
  %v3780 = vsub.f32 0.0, %v3454
  %v3781 = vsub.f32 0.0, %v3466
  %v3782 = vsub.f32 0.0, %v3478
  %v3783 = vsub.f32 0.0, %v3490
  %v3784 = vsub.f32 0.0, %v3502
  %v3785 = vsub.f32 0.0, %v3514
  %v3786 = vsub.f32 0.0, %v3526
  %v3787 = vsub.f32 0.0, %v3538
  %v3788 = vsub.f32 0.0, %v3550
  %v3789 = vsub.f32 0.0, %v3562
  %v3790 = vsub.f32 0.0, %v3574
  %v3791 = vsub.f32 0.0, %v3586
  %v3792 = vsub.f32 0.0, %v3598
  %v3793 = vsub.f32 0.0, %v3610
  %v3794 = vsub.f32 0.0, %v3622
  %v3795 = vsub.f32 0.0, %v3634
  %v3796 = vsub.f32 0.0, %v3646
  %v3797 = vsub.f32 0.0, %v3658
  %v3798 = vsub.f32 0.0, %v3670
  %v3863 = vperm.slane %v3671, %v1277
  %v3864 = vperm.slane %v3672, %v1279
  %v3865 = vsel %vm1281, %v3864, %v3863
  %v3866 = vperm.slane %v3673, %v1277
  %v3867 = vperm.slane %v3674, %v1279
  %v3868 = vsel %vm1281, %v3867, %v3866
  %v3869 = vperm.slane %v3675, %v1277
  %v3870 = vperm.slane %v3676, %v1279
  %v3871 = vsel %vm1281, %v3870, %v3869
  %v3872 = vperm.slane %v3677, %v1277
  %v3873 = vperm.slane %v3678, %v1279
  %v3874 = vsel %vm1281, %v3873, %v3872
  %v3875 = vperm.slane %v3679, %v1277
  %v3876 = vperm.slane %v3680, %v1279
  %v3877 = vsel %vm1281, %v3876, %v3875
  %v3878 = vperm.slane %v3681, %v1277
  %v3879 = vperm.slane %v3682, %v1279
  %v3880 = vsel %vm1281, %v3879, %v3878
  %v3881 = vperm.slane %v3683, %v1277
  %v3882 = vperm.slane %v3684, %v1279
  %v3883 = vsel %vm1281, %v3882, %v3881
  %v3884 = vperm.slane %v3685, %v1277
  %v3885 = vperm.slane %v3686, %v1279
  %v3886 = vsel %vm1281, %v3885, %v3884
  %v3887 = vperm.slane %v3687, %v1277
  %v3888 = vperm.slane %v3688, %v1279
  %v3889 = vsel %vm1281, %v3888, %v3887
  %v3890 = vperm.slane %v3689, %v1277
  %v3891 = vperm.slane %v3690, %v1279
  %v3892 = vsel %vm1281, %v3891, %v3890
  %v3893 = vperm.slane %v3691, %v1277
  %v3894 = vperm.slane %v3692, %v1279
  %v3895 = vsel %vm1281, %v3894, %v3893
  %v3896 = vperm.slane %v3693, %v1277
  %v3897 = vperm.slane %v3694, %v1279
  %v3898 = vsel %vm1281, %v3897, %v3896
  %v3899 = vperm.slane %v3695, %v1277
  %v3900 = vperm.slane %v3696, %v1279
  %v3901 = vsel %vm1281, %v3900, %v3899
  %v3902 = vperm.slane %v3697, %v1277
  %v3903 = vperm.slane %v3698, %v1279
  %v3904 = vsel %vm1281, %v3903, %v3902
  %v3905 = vperm.slane %v3699, %v1277
  %v3906 = vperm.slane %v3700, %v1279
  %v3907 = vsel %vm1281, %v3906, %v3905
  %v3908 = vperm.slane %v3701, %v1277
  %v3909 = vperm.slane %v3702, %v1279
  %v3910 = vsel %vm1281, %v3909, %v3908
  %v3911 = vperm.slane %v3703, %v1277
  %v3912 = vperm.slane %v3704, %v1279
  %v3913 = vsel %vm1281, %v3912, %v3911
  %v3914 = vperm.slane %v3705, %v1277
  %v3915 = vperm.slane %v3706, %v1279
  %v3916 = vsel %vm1281, %v3915, %v3914
  %v3917 = vperm.slane %v3707, %v1277
  %v3918 = vperm.slane %v3708, %v1279
  %v3919 = vsel %vm1281, %v3918, %v3917
  %v3920 = vperm.slane %v3709, %v1277
  %v3921 = vperm.slane %v3710, %v1279
  %v3922 = vsel %vm1281, %v3921, %v3920
  %v3923 = vperm.slane %v3711, %v1277
  %v3924 = vperm.slane %v3712, %v1279
  %v3925 = vsel %vm1281, %v3924, %v3923
  %v3926 = vperm.slane %v3713, %v1277
  %v3927 = vperm.slane %v3714, %v1279
  %v3928 = vsel %vm1281, %v3927, %v3926
  %v3929 = vperm.slane %v3715, %v1277
  %v3930 = vperm.slane %v3716, %v1279
  %v3931 = vsel %vm1281, %v3930, %v3929
  %v3932 = vperm.slane %v3717, %v1277
  %v3933 = vperm.slane %v3718, %v1279
  %v3934 = vsel %vm1281, %v3933, %v3932
  %v3935 = vperm.slane %v3719, %v1277
  %v3936 = vperm.slane %v3720, %v1279
  %v3937 = vsel %vm1281, %v3936, %v3935
  %v3938 = vperm.slane %v3721, %v1277
  %v3939 = vperm.slane %v3722, %v1279
  %v3940 = vsel %vm1281, %v3939, %v3938
  %v3941 = vperm.slane %v3723, %v1277
  %v3942 = vperm.slane %v3724, %v1279
  %v3943 = vsel %vm1281, %v3942, %v3941
  %v3944 = vperm.slane %v3725, %v1277
  %v3945 = vperm.slane %v3726, %v1279
  %v3946 = vsel %vm1281, %v3945, %v3944
  %v3947 = vperm.slane %v3727, %v1277
  %v3948 = vperm.slane %v3728, %v1279
  %v3949 = vsel %vm1281, %v3948, %v3947
  %v3950 = vperm.slane %v3729, %v1277
  %v3951 = vperm.slane %v3730, %v1279
  %v3952 = vsel %vm1281, %v3951, %v3950
  %v3953 = vperm.slane %v3731, %v1277
  %v3954 = vperm.slane %v3732, %v1279
  %v3955 = vsel %vm1281, %v3954, %v3953
  %v3956 = vperm.slane %v3733, %v1277
  %v3957 = vperm.slane %v3734, %v1279
  %v3958 = vsel %vm1281, %v3957, %v3956
  %v3959 = vsel %vm1376, %v3868, %v3865
  %v3960 = vsel %vm1378, %v3871, %v3959
  %v3961 = vsel %vm1380, %v3874, %v3960
  %v3962 = vsel %vm1382, %v3877, %v3961
  %v3963 = vsel %vm1384, %v3880, %v3962
  %v3964 = vsel %vm1386, %v3883, %v3963
  %v3965 = vsel %vm1388, %v3886, %v3964
  %v3966 = vsel %vm1376, %v3892, %v3889
  %v3967 = vsel %vm1378, %v3895, %v3966
  %v3968 = vsel %vm1380, %v3898, %v3967
  %v3969 = vsel %vm1382, %v3901, %v3968
  %v3970 = vsel %vm1384, %v3904, %v3969
  %v3971 = vsel %vm1386, %v3907, %v3970
  %v3972 = vsel %vm1388, %v3910, %v3971
  %v3973 = vsel %vm1376, %v3916, %v3913
  %v3974 = vsel %vm1378, %v3919, %v3973
  %v3975 = vsel %vm1380, %v3922, %v3974
  %v3976 = vsel %vm1382, %v3925, %v3975
  %v3977 = vsel %vm1384, %v3928, %v3976
  %v3978 = vsel %vm1386, %v3931, %v3977
  %v3979 = vsel %vm1388, %v3934, %v3978
  %v3980 = vsel %vm1376, %v3940, %v3937
  %v3981 = vsel %vm1378, %v3943, %v3980
  %v3982 = vsel %vm1380, %v3946, %v3981
  %v3983 = vsel %vm1382, %v3949, %v3982
  %v3984 = vsel %vm1384, %v3952, %v3983
  %v3985 = vsel %vm1386, %v3955, %v3984
  %v3986 = vsel %vm1388, %v3958, %v3985
  %vm3991 = vcmask 130048
  %v3992 = vsel %vm3991, %v3965, -inf
  %3993 = vmax.xlane.f32.xlu0 %v3992
  %v3994 = vpop.xlane.xlu0 %3993
  %v3995 = vsel %vm3991, %v3972, -inf
  %3996 = vmax.xlane.f32.xlu0 %v3995
  %v3997 = vpop.xlane.xlu0 %3996
  %v3998 = vsel %vm3991, %v3979, -inf
  %3999 = vmax.xlane.f32.xlu0 %v3998
  %v4000 = vpop.xlane.xlu0 %3999
  %v4001 = vsel %vm3991, %v3986, -inf
  %4002 = vmax.xlane.f32.xlu0 %v4001
  %v4003 = vpop.xlane.xlu0 %4002
  %v4068 = vperm.slane %v3735, %v1277
  %v4069 = vperm.slane %v3736, %v1279
  %v4070 = vsel %vm1281, %v4069, %v4068
  %v4071 = vperm.slane %v3737, %v1277
  %v4072 = vperm.slane %v3738, %v1279
  %v4073 = vsel %vm1281, %v4072, %v4071
  %v4074 = vperm.slane %v3739, %v1277
  %v4075 = vperm.slane %v3740, %v1279
  %v4076 = vsel %vm1281, %v4075, %v4074
  %v4077 = vperm.slane %v3741, %v1277
  %v4078 = vperm.slane %v3742, %v1279
  %v4079 = vsel %vm1281, %v4078, %v4077
  %v4080 = vperm.slane %v3743, %v1277
  %v4081 = vperm.slane %v3744, %v1279
  %v4082 = vsel %vm1281, %v4081, %v4080
  %v4083 = vperm.slane %v3745, %v1277
  %v4084 = vperm.slane %v3746, %v1279
  %v4085 = vsel %vm1281, %v4084, %v4083
  %v4086 = vperm.slane %v3747, %v1277
  %v4087 = vperm.slane %v3748, %v1279
  %v4088 = vsel %vm1281, %v4087, %v4086
  %v4089 = vperm.slane %v3749, %v1277
  %v4090 = vperm.slane %v3750, %v1279
  %v4091 = vsel %vm1281, %v4090, %v4089
  %v4092 = vperm.slane %v3751, %v1277
  %v4093 = vperm.slane %v3752, %v1279
  %v4094 = vsel %vm1281, %v4093, %v4092
  %v4095 = vperm.slane %v3753, %v1277
  %v4096 = vperm.slane %v3754, %v1279
  %v4097 = vsel %vm1281, %v4096, %v4095
  %v4098 = vperm.slane %v3755, %v1277
  %v4099 = vperm.slane %v3756, %v1279
  %v4100 = vsel %vm1281, %v4099, %v4098
  %v4101 = vperm.slane %v3757, %v1277
  %v4102 = vperm.slane %v3758, %v1279
  %v4103 = vsel %vm1281, %v4102, %v4101
  %v4104 = vperm.slane %v3759, %v1277
  %v4105 = vperm.slane %v3760, %v1279
  %v4106 = vsel %vm1281, %v4105, %v4104
  %v4107 = vperm.slane %v3761, %v1277
  %v4108 = vperm.slane %v3762, %v1279
  %v4109 = vsel %vm1281, %v4108, %v4107
  %v4110 = vperm.slane %v3763, %v1277
  %v4111 = vperm.slane %v3764, %v1279
  %v4112 = vsel %vm1281, %v4111, %v4110
  %v4113 = vperm.slane %v3765, %v1277
  %v4114 = vperm.slane %v3766, %v1279
  %v4115 = vsel %vm1281, %v4114, %v4113
  %v4116 = vperm.slane %v3767, %v1277
  %v4117 = vperm.slane %v3768, %v1279
  %v4118 = vsel %vm1281, %v4117, %v4116
  %v4119 = vperm.slane %v3769, %v1277
  %v4120 = vperm.slane %v3770, %v1279
  %v4121 = vsel %vm1281, %v4120, %v4119
  %v4122 = vperm.slane %v3771, %v1277
  %v4123 = vperm.slane %v3772, %v1279
  %v4124 = vsel %vm1281, %v4123, %v4122
  %v4125 = vperm.slane %v3773, %v1277
  %v4126 = vperm.slane %v3774, %v1279
  %v4127 = vsel %vm1281, %v4126, %v4125
  %v4128 = vperm.slane %v3775, %v1277
  %v4129 = vperm.slane %v3776, %v1279
  %v4130 = vsel %vm1281, %v4129, %v4128
  %v4131 = vperm.slane %v3777, %v1277
  %v4132 = vperm.slane %v3778, %v1279
  %v4133 = vsel %vm1281, %v4132, %v4131
  %v4134 = vperm.slane %v3779, %v1277
  %v4135 = vperm.slane %v3780, %v1279
  %v4136 = vsel %vm1281, %v4135, %v4134
  %v4137 = vperm.slane %v3781, %v1277
  %v4138 = vperm.slane %v3782, %v1279
  %v4139 = vsel %vm1281, %v4138, %v4137
  %v4140 = vperm.slane %v3783, %v1277
  %v4141 = vperm.slane %v3784, %v1279
  %v4142 = vsel %vm1281, %v4141, %v4140
  %v4143 = vperm.slane %v3785, %v1277
  %v4144 = vperm.slane %v3786, %v1279
  %v4145 = vsel %vm1281, %v4144, %v4143
  %v4146 = vperm.slane %v3787, %v1277
  %v4147 = vperm.slane %v3788, %v1279
  %v4148 = vsel %vm1281, %v4147, %v4146
  %v4149 = vperm.slane %v3789, %v1277
  %v4150 = vperm.slane %v3790, %v1279
  %v4151 = vsel %vm1281, %v4150, %v4149
  %v4152 = vperm.slane %v3791, %v1277
  %v4153 = vperm.slane %v3792, %v1279
  %v4154 = vsel %vm1281, %v4153, %v4152
  %v4155 = vperm.slane %v3793, %v1277
  %v4156 = vperm.slane %v3794, %v1279
  %v4157 = vsel %vm1281, %v4156, %v4155
  %v4158 = vperm.slane %v3795, %v1277
  %v4159 = vperm.slane %v3796, %v1279
  %v4160 = vsel %vm1281, %v4159, %v4158
  %v4161 = vperm.slane %v3797, %v1277
  %v4162 = vperm.slane %v3798, %v1279
  %v4163 = vsel %vm1281, %v4162, %v4161
  %v4164 = vsel %vm1376, %v4073, %v4070
  %v4165 = vsel %vm1378, %v4076, %v4164
  %v4166 = vsel %vm1380, %v4079, %v4165
  %v4167 = vsel %vm1382, %v4082, %v4166
  %v4168 = vsel %vm1384, %v4085, %v4167
  %v4169 = vsel %vm1386, %v4088, %v4168
  %v4170 = vsel %vm1388, %v4091, %v4169
  %v4171 = vsel %vm1376, %v4097, %v4094
  %v4172 = vsel %vm1378, %v4100, %v4171
  %v4173 = vsel %vm1380, %v4103, %v4172
  %v4174 = vsel %vm1382, %v4106, %v4173
  %v4175 = vsel %vm1384, %v4109, %v4174
  %v4176 = vsel %vm1386, %v4112, %v4175
  %v4177 = vsel %vm1388, %v4115, %v4176
  %v4178 = vsel %vm1376, %v4121, %v4118
  %v4179 = vsel %vm1378, %v4124, %v4178
  %v4180 = vsel %vm1380, %v4127, %v4179
  %v4181 = vsel %vm1382, %v4130, %v4180
  %v4182 = vsel %vm1384, %v4133, %v4181
  %v4183 = vsel %vm1386, %v4136, %v4182
  %v4184 = vsel %vm1388, %v4139, %v4183
  %v4185 = vsel %vm1376, %v4145, %v4142
  %v4186 = vsel %vm1378, %v4148, %v4185
  %v4187 = vsel %vm1380, %v4151, %v4186
  %v4188 = vsel %vm1382, %v4154, %v4187
  %v4189 = vsel %vm1384, %v4157, %v4188
  %v4190 = vsel %vm1386, %v4160, %v4189
  %v4191 = vsel %vm1388, %v4163, %v4190
  %v4196 = vsel %vm3991, %v4170, -inf
  %4197 = vmax.xlane.f32.xlu0 %v4196
  %v4198 = vpop.xlane.xlu0 %4197
  %v4199 = vsel %vm3991, %v4177, -inf
  %4200 = vmax.xlane.f32.xlu0 %v4199
  %v4201 = vpop.xlane.xlu0 %4200
  %v4202 = vsel %vm3991, %v4184, -inf
  %4203 = vmax.xlane.f32.xlu0 %v4202
  %v4204 = vpop.xlane.xlu0 %4203
  %v4205 = vsel %vm3991, %v4191, -inf
  %4206 = vmax.xlane.f32.xlu0 %v4205
  %v4207 = vpop.xlane.xlu0 %4206
  %v4208 = vmax.f32 %v3994, %v4198
  %v4209 = vmax.f32 %v3997, %v4201
  %v4210 = vmax.f32 %v4000, %v4204
  %v4211 = vmax.f32 %v4003, %v4207
  %v4212 = vmax.f32 %v4208, -1.0
  %v4213 = vmax.f32 %v4209, -1.0
  %v4214 = vmax.f32 %v4210, -1.0
  %v4215 = vmax.f32 %v4211, -1.0
  %v4220 = vperm.slane %v4212, 0
  %v4221 = vperm.slane %v4212, 1
  %v4222 = vperm.slane %v4212, 2
  %v4223 = vperm.slane %v4212, 3
  %v4224 = vperm.slane %v4212, 4
  %v4225 = vperm.slane %v4212, 5
  %v4226 = vperm.slane %v4212, 6
  %v4227 = vperm.slane %v4212, 7
  %v4228 = vperm.slane %v4213, 0
  %v4229 = vperm.slane %v4213, 1
  %v4230 = vperm.slane %v4213, 2
  %v4231 = vperm.slane %v4213, 3
  %v4232 = vperm.slane %v4213, 4
  %v4233 = vperm.slane %v4213, 5
  %v4234 = vperm.slane %v4213, 6
  %v4235 = vperm.slane %v4213, 7
  %v4236 = vperm.slane %v4214, 0
  %v4237 = vperm.slane %v4214, 1
  %v4238 = vperm.slane %v4214, 2
  %v4239 = vperm.slane %v4214, 3
  %v4240 = vperm.slane %v4214, 4
  %v4241 = vperm.slane %v4214, 5
  %v4242 = vperm.slane %v4214, 6
  %v4243 = vperm.slane %v4214, 7
  %v4244 = vperm.slane %v4215, 0
  %v4245 = vperm.slane %v4215, 1
  %v4246 = vperm.slane %v4215, 2
  %v4247 = vperm.slane %v4215, 3
  %v4248 = vperm.slane %v4215, 4
  %v4249 = vperm.slane %v4215, 5
  %v4250 = vperm.slane %v4215, 6
  %v4251 = vperm.slane %v4215, 7
  %v4284 = vsub.f32 %v3671, %v4220
  %v4285 = vsub.f32 %v3672, %v4220
  %v4286 = vsub.f32 %v3673, %v4221
  %v4287 = vsub.f32 %v3674, %v4221
  %v4288 = vsub.f32 %v3675, %v4222
  %v4289 = vsub.f32 %v3676, %v4222
  %v4290 = vsub.f32 %v3677, %v4223
  %v4291 = vsub.f32 %v3678, %v4223
  %v4292 = vsub.f32 %v3679, %v4224
  %v4293 = vsub.f32 %v3680, %v4224
  %v4294 = vsub.f32 %v3681, %v4225
  %v4295 = vsub.f32 %v3682, %v4225
  %v4296 = vsub.f32 %v3683, %v4226
  %v4297 = vsub.f32 %v3684, %v4226
  %v4298 = vsub.f32 %v3685, %v4227
  %v4299 = vsub.f32 %v3686, %v4227
  %v4300 = vsub.f32 %v3687, %v4228
  %v4301 = vsub.f32 %v3688, %v4228
  %v4302 = vsub.f32 %v3689, %v4229
  %v4303 = vsub.f32 %v3690, %v4229
  %v4304 = vsub.f32 %v3691, %v4230
  %v4305 = vsub.f32 %v3692, %v4230
  %v4306 = vsub.f32 %v3693, %v4231
  %v4307 = vsub.f32 %v3694, %v4231
  %v4308 = vsub.f32 %v3695, %v4232
  %v4309 = vsub.f32 %v3696, %v4232
  %v4310 = vsub.f32 %v3697, %v4233
  %v4311 = vsub.f32 %v3698, %v4233
  %v4312 = vsub.f32 %v3699, %v4234
  %v4313 = vsub.f32 %v3700, %v4234
  %v4314 = vsub.f32 %v3701, %v4235
  %v4315 = vsub.f32 %v3702, %v4235
  %v4316 = vsub.f32 %v3703, %v4236
  %v4317 = vsub.f32 %v3704, %v4236
  %v4318 = vsub.f32 %v3705, %v4237
  %v4319 = vsub.f32 %v3706, %v4237
  %v4320 = vsub.f32 %v3707, %v4238
  %v4321 = vsub.f32 %v3708, %v4238
  %v4322 = vsub.f32 %v3709, %v4239
  %v4323 = vsub.f32 %v3710, %v4239
  %v4324 = vsub.f32 %v3711, %v4240
  %v4325 = vsub.f32 %v3712, %v4240
  %v4326 = vsub.f32 %v3713, %v4241
  %v4327 = vsub.f32 %v3714, %v4241
  %v4328 = vsub.f32 %v3715, %v4242
  %v4329 = vsub.f32 %v3716, %v4242
  %v4330 = vsub.f32 %v3717, %v4243
  %v4331 = vsub.f32 %v3718, %v4243
  %v4332 = vsub.f32 %v3719, %v4244
  %v4333 = vsub.f32 %v3720, %v4244
  %v4334 = vsub.f32 %v3721, %v4245
  %v4335 = vsub.f32 %v3722, %v4245
  %v4336 = vsub.f32 %v3723, %v4246
  %v4337 = vsub.f32 %v3724, %v4246
  %v4338 = vsub.f32 %v3725, %v4247
  %v4339 = vsub.f32 %v3726, %v4247
  %v4340 = vsub.f32 %v3727, %v4248
  %v4341 = vsub.f32 %v3728, %v4248
  %v4342 = vsub.f32 %v3729, %v4249
  %v4343 = vsub.f32 %v3730, %v4249
  %v4344 = vsub.f32 %v3731, %v4250
  %v4345 = vsub.f32 %v3732, %v4250
  %v4346 = vsub.f32 %v3733, %v4251
  %v4347 = vsub.f32 %v3734, %v4251
  %v4348 = vmul.f32 %v4284, 1.442695
  %v4349 = vpow.pop %v4348
  %v4350 = vmul.f32 %v4285, 1.442695
  %v4351 = vpow.pop %v4350
  %v4352 = vmul.f32 %v4286, 1.442695
  %v4353 = vpow.pop %v4352
  %v4354 = vmul.f32 %v4287, 1.442695
  %v4355 = vpow.pop %v4354
  %v4356 = vmul.f32 %v4288, 1.442695
  %v4357 = vpow.pop %v4356
  %v4358 = vmul.f32 %v4289, 1.442695
  %v4359 = vpow.pop %v4358
  %v4360 = vmul.f32 %v4290, 1.442695
  %v4361 = vpow.pop %v4360
  %v4362 = vmul.f32 %v4291, 1.442695
  %v4363 = vpow.pop %v4362
  %v4364 = vmul.f32 %v4292, 1.442695
  %v4365 = vpow.pop %v4364
  %v4366 = vmul.f32 %v4293, 1.442695
  %v4367 = vpow.pop %v4366
  %v4368 = vmul.f32 %v4294, 1.442695
  %v4369 = vpow.pop %v4368
  %v4370 = vmul.f32 %v4295, 1.442695
  %v4371 = vpow.pop %v4370
  %v4372 = vmul.f32 %v4296, 1.442695
  %v4373 = vpow.pop %v4372
  %v4374 = vmul.f32 %v4297, 1.442695
  %v4375 = vpow.pop %v4374
  %v4376 = vmul.f32 %v4298, 1.442695
  %v4377 = vpow.pop %v4376
  %v4378 = vmul.f32 %v4299, 1.442695
  %v4379 = vpow.pop %v4378
  %v4380 = vmul.f32 %v4300, 1.442695
  %v4381 = vpow.pop %v4380
  %v4382 = vmul.f32 %v4301, 1.442695
  %v4383 = vpow.pop %v4382
  %v4384 = vmul.f32 %v4302, 1.442695
  %v4385 = vpow.pop %v4384
  %v4386 = vmul.f32 %v4303, 1.442695
  %v4387 = vpow.pop %v4386
  %v4388 = vmul.f32 %v4304, 1.442695
  %v4389 = vpow.pop %v4388
  %v4390 = vmul.f32 %v4305, 1.442695
  %v4391 = vpow.pop %v4390
  %v4392 = vmul.f32 %v4306, 1.442695
  %v4393 = vpow.pop %v4392
  %v4394 = vmul.f32 %v4307, 1.442695
  %v4395 = vpow.pop %v4394
  %v4396 = vmul.f32 %v4308, 1.442695
  %v4397 = vpow.pop %v4396
  %v4398 = vmul.f32 %v4309, 1.442695
  %v4399 = vpow.pop %v4398
  %v4400 = vmul.f32 %v4310, 1.442695
  %v4401 = vpow.pop %v4400
  %v4402 = vmul.f32 %v4311, 1.442695
  %v4403 = vpow.pop %v4402
  %v4404 = vmul.f32 %v4312, 1.442695
  %v4405 = vpow.pop %v4404
  %v4406 = vmul.f32 %v4313, 1.442695
  %v4407 = vpow.pop %v4406
  %v4408 = vmul.f32 %v4314, 1.442695
  %v4409 = vpow.pop %v4408
  %v4410 = vmul.f32 %v4315, 1.442695
  %v4411 = vpow.pop %v4410
  %v4412 = vmul.f32 %v4316, 1.442695
  %v4413 = vpow.pop %v4412
  %v4414 = vmul.f32 %v4317, 1.442695
  %v4415 = vpow.pop %v4414
  %v4416 = vmul.f32 %v4318, 1.442695
  %v4417 = vpow.pop %v4416
  %v4418 = vmul.f32 %v4319, 1.442695
  %v4419 = vpow.pop %v4418
  %v4420 = vmul.f32 %v4320, 1.442695
  %v4421 = vpow.pop %v4420
  %v4422 = vmul.f32 %v4321, 1.442695
  %v4423 = vpow.pop %v4422
  %v4424 = vmul.f32 %v4322, 1.442695
  %v4425 = vpow.pop %v4424
  %v4426 = vmul.f32 %v4323, 1.442695
  %v4427 = vpow.pop %v4426
  %v4428 = vmul.f32 %v4324, 1.442695
  %v4429 = vpow.pop %v4428
  %v4430 = vmul.f32 %v4325, 1.442695
  %v4431 = vpow.pop %v4430
  %v4432 = vmul.f32 %v4326, 1.442695
  %v4433 = vpow.pop %v4432
  %v4434 = vmul.f32 %v4327, 1.442695
  %v4435 = vpow.pop %v4434
  %v4436 = vmul.f32 %v4328, 1.442695
  %v4437 = vpow.pop %v4436
  %v4438 = vmul.f32 %v4329, 1.442695
  %v4439 = vpow.pop %v4438
  %v4440 = vmul.f32 %v4330, 1.442695
  %v4441 = vpow.pop %v4440
  %v4442 = vmul.f32 %v4331, 1.442695
  %v4443 = vpow.pop %v4442
  %v4444 = vmul.f32 %v4332, 1.442695
  %v4445 = vpow.pop %v4444
  %v4446 = vmul.f32 %v4333, 1.442695
  %v4447 = vpow.pop %v4446
  %v4448 = vmul.f32 %v4334, 1.442695
  %v4449 = vpow.pop %v4448
  %v4450 = vmul.f32 %v4335, 1.442695
  %v4451 = vpow.pop %v4450
  %v4452 = vmul.f32 %v4336, 1.442695
  %v4453 = vpow.pop %v4452
  %v4454 = vmul.f32 %v4337, 1.442695
  %v4455 = vpow.pop %v4454
  %v4456 = vmul.f32 %v4338, 1.442695
  %v4457 = vpow.pop %v4456
  %v4458 = vmul.f32 %v4339, 1.442695
  %v4459 = vpow.pop %v4458
  %v4460 = vmul.f32 %v4340, 1.442695
  %v4461 = vpow.pop %v4460
  %v4462 = vmul.f32 %v4341, 1.442695
  %v4463 = vpow.pop %v4462
  %v4464 = vmul.f32 %v4342, 1.442695
  %v4465 = vpow.pop %v4464
  %v4466 = vmul.f32 %v4343, 1.442695
  %v4467 = vpow.pop %v4466
  %v4468 = vmul.f32 %v4344, 1.442695
  %v4469 = vpow.pop %v4468
  %v4470 = vmul.f32 %v4345, 1.442695
  %v4471 = vpow.pop %v4470
  %v4472 = vmul.f32 %v4346, 1.442695
  %v4473 = vpow.pop %v4472
  %v4474 = vmul.f32 %v4347, 1.442695
  %v4475 = vpow.pop %v4474
  %v4476 = vsub.f32 %v3735, %v4220
  %v4477 = vsub.f32 %v3736, %v4220
  %v4478 = vsub.f32 %v3737, %v4221
  %v4479 = vsub.f32 %v3738, %v4221
  %v4480 = vsub.f32 %v3739, %v4222
  %v4481 = vsub.f32 %v3740, %v4222
  %v4482 = vsub.f32 %v3741, %v4223
  %v4483 = vsub.f32 %v3742, %v4223
  %v4484 = vsub.f32 %v3743, %v4224
  %v4485 = vsub.f32 %v3744, %v4224
  %v4486 = vsub.f32 %v3745, %v4225
  %v4487 = vsub.f32 %v3746, %v4225
  %v4488 = vsub.f32 %v3747, %v4226
  %v4489 = vsub.f32 %v3748, %v4226
  %v4490 = vsub.f32 %v3749, %v4227
  %v4491 = vsub.f32 %v3750, %v4227
  %v4492 = vsub.f32 %v3751, %v4228
  %v4493 = vsub.f32 %v3752, %v4228
  %v4494 = vsub.f32 %v3753, %v4229
  %v4495 = vsub.f32 %v3754, %v4229
  %v4496 = vsub.f32 %v3755, %v4230
  %v4497 = vsub.f32 %v3756, %v4230
  %v4498 = vsub.f32 %v3757, %v4231
  %v4499 = vsub.f32 %v3758, %v4231
  %v4500 = vsub.f32 %v3759, %v4232
  %v4501 = vsub.f32 %v3760, %v4232
  %v4502 = vsub.f32 %v3761, %v4233
  %v4503 = vsub.f32 %v3762, %v4233
  %v4504 = vsub.f32 %v3763, %v4234
  %v4505 = vsub.f32 %v3764, %v4234
  %v4506 = vsub.f32 %v3765, %v4235
  %v4507 = vsub.f32 %v3766, %v4235
  %v4508 = vsub.f32 %v3767, %v4236
  %v4509 = vsub.f32 %v3768, %v4236
  %v4510 = vsub.f32 %v3769, %v4237
  %v4511 = vsub.f32 %v3770, %v4237
  %v4512 = vsub.f32 %v3771, %v4238
  %v4513 = vsub.f32 %v3772, %v4238
  %v4514 = vsub.f32 %v3773, %v4239
  %v4515 = vsub.f32 %v3774, %v4239
  %v4516 = vsub.f32 %v3775, %v4240
  %v4517 = vsub.f32 %v3776, %v4240
  %v4518 = vsub.f32 %v3777, %v4241
  %v4519 = vsub.f32 %v3778, %v4241
  %v4520 = vsub.f32 %v3779, %v4242
  %v4521 = vsub.f32 %v3780, %v4242
  %v4522 = vsub.f32 %v3781, %v4243
  %v4523 = vsub.f32 %v3782, %v4243
  %v4524 = vsub.f32 %v3783, %v4244
  %v4525 = vsub.f32 %v3784, %v4244
  %v4526 = vsub.f32 %v3785, %v4245
  %v4527 = vsub.f32 %v3786, %v4245
  %v4528 = vsub.f32 %v3787, %v4246
  %v4529 = vsub.f32 %v3788, %v4246
  %v4530 = vsub.f32 %v3789, %v4247
  %v4531 = vsub.f32 %v3790, %v4247
  %v4532 = vsub.f32 %v3791, %v4248
  %v4533 = vsub.f32 %v3792, %v4248
  %v4534 = vsub.f32 %v3793, %v4249
  %v4535 = vsub.f32 %v3794, %v4249
  %v4536 = vsub.f32 %v3795, %v4250
  %v4537 = vsub.f32 %v3796, %v4250
  %v4538 = vsub.f32 %v3797, %v4251
  %v4539 = vsub.f32 %v3798, %v4251
  %v4540 = vmul.f32 %v4476, 1.442695
  %v4541 = vpow.pop %v4540
  %v4542 = vmul.f32 %v4477, 1.442695
  %v4543 = vpow.pop %v4542
  %v4544 = vmul.f32 %v4478, 1.442695
  %v4545 = vpow.pop %v4544
  %v4546 = vmul.f32 %v4479, 1.442695
  %v4547 = vpow.pop %v4546
  %v4548 = vmul.f32 %v4480, 1.442695
  %v4549 = vpow.pop %v4548
  %v4550 = vmul.f32 %v4481, 1.442695
  %v4551 = vpow.pop %v4550
  %v4552 = vmul.f32 %v4482, 1.442695
  %v4553 = vpow.pop %v4552
  %v4554 = vmul.f32 %v4483, 1.442695
  %v4555 = vpow.pop %v4554
  %v4556 = vmul.f32 %v4484, 1.442695
  %v4557 = vpow.pop %v4556
  %v4558 = vmul.f32 %v4485, 1.442695
  %v4559 = vpow.pop %v4558
  %v4560 = vmul.f32 %v4486, 1.442695
  %v4561 = vpow.pop %v4560
  %v4562 = vmul.f32 %v4487, 1.442695
  %v4563 = vpow.pop %v4562
  %v4564 = vmul.f32 %v4488, 1.442695
  %v4565 = vpow.pop %v4564
  %v4566 = vmul.f32 %v4489, 1.442695
  %v4567 = vpow.pop %v4566
  %v4568 = vmul.f32 %v4490, 1.442695
  %v4569 = vpow.pop %v4568
  %v4570 = vmul.f32 %v4491, 1.442695
  %v4571 = vpow.pop %v4570
  %v4572 = vmul.f32 %v4492, 1.442695
  %v4573 = vpow.pop %v4572
  %v4574 = vmul.f32 %v4493, 1.442695
  %v4575 = vpow.pop %v4574
  %v4576 = vmul.f32 %v4494, 1.442695
  %v4577 = vpow.pop %v4576
  %v4578 = vmul.f32 %v4495, 1.442695
  %v4579 = vpow.pop %v4578
  %v4580 = vmul.f32 %v4496, 1.442695
  %v4581 = vpow.pop %v4580
  %v4582 = vmul.f32 %v4497, 1.442695
  %v4583 = vpow.pop %v4582
  %v4584 = vmul.f32 %v4498, 1.442695
  %v4585 = vpow.pop %v4584
  %v4586 = vmul.f32 %v4499, 1.442695
  %v4587 = vpow.pop %v4586
  %v4588 = vmul.f32 %v4500, 1.442695
  %v4589 = vpow.pop %v4588
  %v4590 = vmul.f32 %v4501, 1.442695
  %v4591 = vpow.pop %v4590
  %v4592 = vmul.f32 %v4502, 1.442695
  %v4593 = vpow.pop %v4592
  %v4594 = vmul.f32 %v4503, 1.442695
  %v4595 = vpow.pop %v4594
  %v4596 = vmul.f32 %v4504, 1.442695
  %v4597 = vpow.pop %v4596
  %v4598 = vmul.f32 %v4505, 1.442695
  %v4599 = vpow.pop %v4598
  %v4600 = vmul.f32 %v4506, 1.442695
  %v4601 = vpow.pop %v4600
  %v4602 = vmul.f32 %v4507, 1.442695
  %v4603 = vpow.pop %v4602
  %v4604 = vmul.f32 %v4508, 1.442695
  %v4605 = vpow.pop %v4604
  %v4606 = vmul.f32 %v4509, 1.442695
  %v4607 = vpow.pop %v4606
  %v4608 = vmul.f32 %v4510, 1.442695
  %v4609 = vpow.pop %v4608
  %v4610 = vmul.f32 %v4511, 1.442695
  %v4611 = vpow.pop %v4610
  %v4612 = vmul.f32 %v4512, 1.442695
  %v4613 = vpow.pop %v4612
  %v4614 = vmul.f32 %v4513, 1.442695
  %v4615 = vpow.pop %v4614
  %v4616 = vmul.f32 %v4514, 1.442695
  %v4617 = vpow.pop %v4616
  %v4618 = vmul.f32 %v4515, 1.442695
  %v4619 = vpow.pop %v4618
  %v4620 = vmul.f32 %v4516, 1.442695
  %v4621 = vpow.pop %v4620
  %v4622 = vmul.f32 %v4517, 1.442695
  %v4623 = vpow.pop %v4622
  %v4624 = vmul.f32 %v4518, 1.442695
  %v4625 = vpow.pop %v4624
  %v4626 = vmul.f32 %v4519, 1.442695
  %v4627 = vpow.pop %v4626
  %v4628 = vmul.f32 %v4520, 1.442695
  %v4629 = vpow.pop %v4628
  %v4630 = vmul.f32 %v4521, 1.442695
  %v4631 = vpow.pop %v4630
  %v4632 = vmul.f32 %v4522, 1.442695
  %v4633 = vpow.pop %v4632
  %v4634 = vmul.f32 %v4523, 1.442695
  %v4635 = vpow.pop %v4634
  %v4636 = vmul.f32 %v4524, 1.442695
  %v4637 = vpow.pop %v4636
  %v4638 = vmul.f32 %v4525, 1.442695
  %v4639 = vpow.pop %v4638
  %v4640 = vmul.f32 %v4526, 1.442695
  %v4641 = vpow.pop %v4640
  %v4642 = vmul.f32 %v4527, 1.442695
  %v4643 = vpow.pop %v4642
  %v4644 = vmul.f32 %v4528, 1.442695
  %v4645 = vpow.pop %v4644
  %v4646 = vmul.f32 %v4529, 1.442695
  %v4647 = vpow.pop %v4646
  %v4648 = vmul.f32 %v4530, 1.442695
  %v4649 = vpow.pop %v4648
  %v4650 = vmul.f32 %v4531, 1.442695
  %v4651 = vpow.pop %v4650
  %v4652 = vmul.f32 %v4532, 1.442695
  %v4653 = vpow.pop %v4652
  %v4654 = vmul.f32 %v4533, 1.442695
  %v4655 = vpow.pop %v4654
  %v4656 = vmul.f32 %v4534, 1.442695
  %v4657 = vpow.pop %v4656
  %v4658 = vmul.f32 %v4535, 1.442695
  %v4659 = vpow.pop %v4658
  %v4660 = vmul.f32 %v4536, 1.442695
  %v4661 = vpow.pop %v4660
  %v4662 = vmul.f32 %v4537, 1.442695
  %v4663 = vpow.pop %v4662
  %v4664 = vmul.f32 %v4538, 1.442695
  %v4665 = vpow.pop %v4664
  %v4666 = vmul.f32 %v4539, 1.442695
  %v4667 = vpow.pop %v4666
  %4732 = vset.pattern.permute.xlu0 0
  %4733 = vperm.xlu0 %4732, %v4349
  %v4734 = vpop.permute.xlu0 %4733
  %4735 = vset.pattern.permute.xlu0 0
  %4736 = vperm.xlu0 %4735, %v4351
  %v4737 = vpop.permute.xlu0 %4736
  %4738 = vset.pattern.permute.xlu0 0
  %4739 = vperm.xlu0 %4738, %v4353
  %v4740 = vpop.permute.xlu0 %4739
  %4741 = vset.pattern.permute.xlu0 0
  %4742 = vperm.xlu0 %4741, %v4355
  %v4743 = vpop.permute.xlu0 %4742
  %4744 = vset.pattern.permute.xlu0 0
  %4745 = vperm.xlu0 %4744, %v4357
  %v4746 = vpop.permute.xlu0 %4745
  %4747 = vset.pattern.permute.xlu0 0
  %4748 = vperm.xlu0 %4747, %v4359
  %v4749 = vpop.permute.xlu0 %4748
  %4750 = vset.pattern.permute.xlu0 0
  %4751 = vperm.xlu0 %4750, %v4361
  %v4752 = vpop.permute.xlu0 %4751
  %4753 = vset.pattern.permute.xlu0 0
  %4754 = vperm.xlu0 %4753, %v4363
  %v4755 = vpop.permute.xlu0 %4754
  %4756 = vset.pattern.permute.xlu0 0
  %4757 = vperm.xlu0 %4756, %v4365
  %v4758 = vpop.permute.xlu0 %4757
  %4759 = vset.pattern.permute.xlu0 0
  %4760 = vperm.xlu0 %4759, %v4367
  %v4761 = vpop.permute.xlu0 %4760
  %4762 = vset.pattern.permute.xlu0 0
  %4763 = vperm.xlu0 %4762, %v4369
  %v4764 = vpop.permute.xlu0 %4763
  %4765 = vset.pattern.permute.xlu0 0
  %4766 = vperm.xlu0 %4765, %v4371
  %v4767 = vpop.permute.xlu0 %4766
  %4768 = vset.pattern.permute.xlu0 0
  %4769 = vperm.xlu0 %4768, %v4373
  %v4770 = vpop.permute.xlu0 %4769
  %4771 = vset.pattern.permute.xlu0 0
  %4772 = vperm.xlu0 %4771, %v4375
  %v4773 = vpop.permute.xlu0 %4772
  %4774 = vset.pattern.permute.xlu0 0
  %4775 = vperm.xlu0 %4774, %v4377
  %v4776 = vpop.permute.xlu0 %4775
  %4777 = vset.pattern.permute.xlu0 0
  %4778 = vperm.xlu0 %4777, %v4379
  %v4779 = vpop.permute.xlu0 %4778
  %4780 = vset.pattern.permute.xlu0 0
  %4781 = vperm.xlu0 %4780, %v4381
  %v4782 = vpop.permute.xlu0 %4781
  %4783 = vset.pattern.permute.xlu0 0
  %4784 = vperm.xlu0 %4783, %v4383
  %v4785 = vpop.permute.xlu0 %4784
  %4786 = vset.pattern.permute.xlu0 0
  %4787 = vperm.xlu0 %4786, %v4385
  %v4788 = vpop.permute.xlu0 %4787
  %4789 = vset.pattern.permute.xlu0 0
  %4790 = vperm.xlu0 %4789, %v4387
  %v4791 = vpop.permute.xlu0 %4790
  %4792 = vset.pattern.permute.xlu0 0
  %4793 = vperm.xlu0 %4792, %v4389
  %v4794 = vpop.permute.xlu0 %4793
  %4795 = vset.pattern.permute.xlu0 0
  %4796 = vperm.xlu0 %4795, %v4391
  %v4797 = vpop.permute.xlu0 %4796
  %4798 = vset.pattern.permute.xlu0 0
  %4799 = vperm.xlu0 %4798, %v4393
  %v4800 = vpop.permute.xlu0 %4799
  %4801 = vset.pattern.permute.xlu0 0
  %4802 = vperm.xlu0 %4801, %v4395
  %v4803 = vpop.permute.xlu0 %4802
  %4804 = vset.pattern.permute.xlu0 0
  %4805 = vperm.xlu0 %4804, %v4397
  %v4806 = vpop.permute.xlu0 %4805
  %4807 = vset.pattern.permute.xlu0 0
  %4808 = vperm.xlu0 %4807, %v4399
  %v4809 = vpop.permute.xlu0 %4808
  %4810 = vset.pattern.permute.xlu0 0
  %4811 = vperm.xlu0 %4810, %v4401
  %v4812 = vpop.permute.xlu0 %4811
  %4813 = vset.pattern.permute.xlu0 0
  %4814 = vperm.xlu0 %4813, %v4403
  %v4815 = vpop.permute.xlu0 %4814
  %4816 = vset.pattern.permute.xlu0 0
  %4817 = vperm.xlu0 %4816, %v4405
  %v4818 = vpop.permute.xlu0 %4817
  %4819 = vset.pattern.permute.xlu0 0
  %4820 = vperm.xlu0 %4819, %v4407
  %v4821 = vpop.permute.xlu0 %4820
  %4822 = vset.pattern.permute.xlu0 0
  %4823 = vperm.xlu0 %4822, %v4409
  %v4824 = vpop.permute.xlu0 %4823
  %4825 = vset.pattern.permute.xlu0 0
  %4826 = vperm.xlu0 %4825, %v4411
  %v4827 = vpop.permute.xlu0 %4826
  %4828 = vset.pattern.permute.xlu0 0
  %4829 = vperm.xlu0 %4828, %v4413
  %v4830 = vpop.permute.xlu0 %4829
  %4831 = vset.pattern.permute.xlu0 0
  %4832 = vperm.xlu0 %4831, %v4415
  %v4833 = vpop.permute.xlu0 %4832
  %4834 = vset.pattern.permute.xlu0 0
  %4835 = vperm.xlu0 %4834, %v4417
  %v4836 = vpop.permute.xlu0 %4835
  %4837 = vset.pattern.permute.xlu0 0
  %4838 = vperm.xlu0 %4837, %v4419
  %v4839 = vpop.permute.xlu0 %4838
  %4840 = vset.pattern.permute.xlu0 0
  %4841 = vperm.xlu0 %4840, %v4421
  %v4842 = vpop.permute.xlu0 %4841
  %4843 = vset.pattern.permute.xlu0 0
  %4844 = vperm.xlu0 %4843, %v4423
  %v4845 = vpop.permute.xlu0 %4844
  %4846 = vset.pattern.permute.xlu0 0
  %4847 = vperm.xlu0 %4846, %v4425
  %v4848 = vpop.permute.xlu0 %4847
  %4849 = vset.pattern.permute.xlu0 0
  %4850 = vperm.xlu0 %4849, %v4427
  %v4851 = vpop.permute.xlu0 %4850
  %4852 = vset.pattern.permute.xlu0 0
  %4853 = vperm.xlu0 %4852, %v4429
  %v4854 = vpop.permute.xlu0 %4853
  %4855 = vset.pattern.permute.xlu0 0
  %4856 = vperm.xlu0 %4855, %v4431
  %v4857 = vpop.permute.xlu0 %4856
  %4858 = vset.pattern.permute.xlu0 0
  %4859 = vperm.xlu0 %4858, %v4433
  %v4860 = vpop.permute.xlu0 %4859
  %4861 = vset.pattern.permute.xlu0 0
  %4862 = vperm.xlu0 %4861, %v4435
  %v4863 = vpop.permute.xlu0 %4862
  %4864 = vset.pattern.permute.xlu0 0
  %4865 = vperm.xlu0 %4864, %v4437
  %v4866 = vpop.permute.xlu0 %4865
  %4867 = vset.pattern.permute.xlu0 0
  %4868 = vperm.xlu0 %4867, %v4439
  %v4869 = vpop.permute.xlu0 %4868
  %4870 = vset.pattern.permute.xlu0 0
  %4871 = vperm.xlu0 %4870, %v4441
  %v4872 = vpop.permute.xlu0 %4871
  %4873 = vset.pattern.permute.xlu0 0
  %4874 = vperm.xlu0 %4873, %v4443
  %v4875 = vpop.permute.xlu0 %4874
  %4876 = vset.pattern.permute.xlu0 0
  %4877 = vperm.xlu0 %4876, %v4445
  %v4878 = vpop.permute.xlu0 %4877
  %4879 = vset.pattern.permute.xlu0 0
  %4880 = vperm.xlu0 %4879, %v4447
  %v4881 = vpop.permute.xlu0 %4880
  %4882 = vset.pattern.permute.xlu0 0
  %4883 = vperm.xlu0 %4882, %v4449
  %v4884 = vpop.permute.xlu0 %4883
  %4885 = vset.pattern.permute.xlu0 0
  %4886 = vperm.xlu0 %4885, %v4451
  %v4887 = vpop.permute.xlu0 %4886
  %4888 = vset.pattern.permute.xlu0 0
  %4889 = vperm.xlu0 %4888, %v4453
  %v4890 = vpop.permute.xlu0 %4889
  %4891 = vset.pattern.permute.xlu0 0
  %4892 = vperm.xlu0 %4891, %v4455
  %v4893 = vpop.permute.xlu0 %4892
  %4894 = vset.pattern.permute.xlu0 0
  %4895 = vperm.xlu0 %4894, %v4457
  %v4896 = vpop.permute.xlu0 %4895
  %4897 = vset.pattern.permute.xlu0 0
  %4898 = vperm.xlu0 %4897, %v4459
  %v4899 = vpop.permute.xlu0 %4898
  %4900 = vset.pattern.permute.xlu0 0
  %4901 = vperm.xlu0 %4900, %v4461
  %v4902 = vpop.permute.xlu0 %4901
  %4903 = vset.pattern.permute.xlu0 0
  %4904 = vperm.xlu0 %4903, %v4463
  %v4905 = vpop.permute.xlu0 %4904
  %4906 = vset.pattern.permute.xlu0 0
  %4907 = vperm.xlu0 %4906, %v4465
  %v4908 = vpop.permute.xlu0 %4907
  %4909 = vset.pattern.permute.xlu0 0
  %4910 = vperm.xlu0 %4909, %v4467
  %v4911 = vpop.permute.xlu0 %4910
  %4912 = vset.pattern.permute.xlu0 0
  %4913 = vperm.xlu0 %4912, %v4469
  %v4914 = vpop.permute.xlu0 %4913
  %4915 = vset.pattern.permute.xlu0 0
  %4916 = vperm.xlu0 %4915, %v4471
  %v4917 = vpop.permute.xlu0 %4916
  %4918 = vset.pattern.permute.xlu0 0
  %4919 = vperm.xlu0 %4918, %v4473
  %v4920 = vpop.permute.xlu0 %4919
  %4921 = vset.pattern.permute.xlu0 0
  %4922 = vperm.xlu0 %4921, %v4475
  %v4923 = vpop.permute.xlu0 %4922
  %v4924 = vperm.slane %v4734, %v1277
  %v4925 = vperm.slane %v4737, %v1279
  %v4926 = vsel %vm1281, %v4925, %v4924
  %v4927 = vperm.slane %v4740, %v1277
  %v4928 = vperm.slane %v4743, %v1279
  %v4929 = vsel %vm1281, %v4928, %v4927
  %v4930 = vperm.slane %v4746, %v1277
  %v4931 = vperm.slane %v4749, %v1279
  %v4932 = vsel %vm1281, %v4931, %v4930
  %v4933 = vperm.slane %v4752, %v1277
  %v4934 = vperm.slane %v4755, %v1279
  %v4935 = vsel %vm1281, %v4934, %v4933
  %v4936 = vperm.slane %v4758, %v1277
  %v4937 = vperm.slane %v4761, %v1279
  %v4938 = vsel %vm1281, %v4937, %v4936
  %v4939 = vperm.slane %v4764, %v1277
  %v4940 = vperm.slane %v4767, %v1279
  %v4941 = vsel %vm1281, %v4940, %v4939
  %v4942 = vperm.slane %v4770, %v1277
  %v4943 = vperm.slane %v4773, %v1279
  %v4944 = vsel %vm1281, %v4943, %v4942
  %v4945 = vperm.slane %v4776, %v1277
  %v4946 = vperm.slane %v4779, %v1279
  %v4947 = vsel %vm1281, %v4946, %v4945
  %v4948 = vperm.slane %v4782, %v1277
  %v4949 = vperm.slane %v4785, %v1279
  %v4950 = vsel %vm1281, %v4949, %v4948
  %v4951 = vperm.slane %v4788, %v1277
  %v4952 = vperm.slane %v4791, %v1279
  %v4953 = vsel %vm1281, %v4952, %v4951
  %v4954 = vperm.slane %v4794, %v1277
  %v4955 = vperm.slane %v4797, %v1279
  %v4956 = vsel %vm1281, %v4955, %v4954
  %v4957 = vperm.slane %v4800, %v1277
  %v4958 = vperm.slane %v4803, %v1279
  %v4959 = vsel %vm1281, %v4958, %v4957
  %v4960 = vperm.slane %v4806, %v1277
  %v4961 = vperm.slane %v4809, %v1279
  %v4962 = vsel %vm1281, %v4961, %v4960
  %v4963 = vperm.slane %v4812, %v1277
  %v4964 = vperm.slane %v4815, %v1279
  %v4965 = vsel %vm1281, %v4964, %v4963
  %v4966 = vperm.slane %v4818, %v1277
  %v4967 = vperm.slane %v4821, %v1279
  %v4968 = vsel %vm1281, %v4967, %v4966
  %v4969 = vperm.slane %v4824, %v1277
  %v4970 = vperm.slane %v4827, %v1279
  %v4971 = vsel %vm1281, %v4970, %v4969
  %v4972 = vperm.slane %v4830, %v1277
  %v4973 = vperm.slane %v4833, %v1279
  %v4974 = vsel %vm1281, %v4973, %v4972
  %v4975 = vperm.slane %v4836, %v1277
  %v4976 = vperm.slane %v4839, %v1279
  %v4977 = vsel %vm1281, %v4976, %v4975
  %v4978 = vperm.slane %v4842, %v1277
  %v4979 = vperm.slane %v4845, %v1279
  %v4980 = vsel %vm1281, %v4979, %v4978
  %v4981 = vperm.slane %v4848, %v1277
  %v4982 = vperm.slane %v4851, %v1279
  %v4983 = vsel %vm1281, %v4982, %v4981
  %v4984 = vperm.slane %v4854, %v1277
  %v4985 = vperm.slane %v4857, %v1279
  %v4986 = vsel %vm1281, %v4985, %v4984
  %v4987 = vperm.slane %v4860, %v1277
  %v4988 = vperm.slane %v4863, %v1279
  %v4989 = vsel %vm1281, %v4988, %v4987
  %v4990 = vperm.slane %v4866, %v1277
  %v4991 = vperm.slane %v4869, %v1279
  %v4992 = vsel %vm1281, %v4991, %v4990
  %v4993 = vperm.slane %v4872, %v1277
  %v4994 = vperm.slane %v4875, %v1279
  %v4995 = vsel %vm1281, %v4994, %v4993
  %v4996 = vperm.slane %v4878, %v1277
  %v4997 = vperm.slane %v4881, %v1279
  %v4998 = vsel %vm1281, %v4997, %v4996
  %v4999 = vperm.slane %v4884, %v1277
  %v5000 = vperm.slane %v4887, %v1279
  %v5001 = vsel %vm1281, %v5000, %v4999
  %v5002 = vperm.slane %v4890, %v1277
  %v5003 = vperm.slane %v4893, %v1279
  %v5004 = vsel %vm1281, %v5003, %v5002
  %v5005 = vperm.slane %v4896, %v1277
  %v5006 = vperm.slane %v4899, %v1279
  %v5007 = vsel %vm1281, %v5006, %v5005
  %v5008 = vperm.slane %v4902, %v1277
  %v5009 = vperm.slane %v4905, %v1279
  %v5010 = vsel %vm1281, %v5009, %v5008
  %v5011 = vperm.slane %v4908, %v1277
  %v5012 = vperm.slane %v4911, %v1279
  %v5013 = vsel %vm1281, %v5012, %v5011
  %v5014 = vperm.slane %v4914, %v1277
  %v5015 = vperm.slane %v4917, %v1279
  %v5016 = vsel %vm1281, %v5015, %v5014
  %v5017 = vperm.slane %v4920, %v1277
  %v5018 = vperm.slane %v4923, %v1279
  %v5019 = vsel %vm1281, %v5018, %v5017
  %v5020 = vsel %vm1376, %v4929, %v4926
  %v5021 = vsel %vm1378, %v4932, %v5020
  %v5022 = vsel %vm1380, %v4935, %v5021
  %v5023 = vsel %vm1382, %v4938, %v5022
  %v5024 = vsel %vm1384, %v4941, %v5023
  %v5025 = vsel %vm1386, %v4944, %v5024
  %v5026 = vsel %vm1388, %v4947, %v5025
  %v5027 = vsel %vm1376, %v4953, %v4950
  %v5028 = vsel %vm1378, %v4956, %v5027
  %v5029 = vsel %vm1380, %v4959, %v5028
  %v5030 = vsel %vm1382, %v4962, %v5029
  %v5031 = vsel %vm1384, %v4965, %v5030
  %v5032 = vsel %vm1386, %v4968, %v5031
  %v5033 = vsel %vm1388, %v4971, %v5032
  %v5034 = vsel %vm1376, %v4977, %v4974
  %v5035 = vsel %vm1378, %v4980, %v5034
  %v5036 = vsel %vm1380, %v4983, %v5035
  %v5037 = vsel %vm1382, %v4986, %v5036
  %v5038 = vsel %vm1384, %v4989, %v5037
  %v5039 = vsel %vm1386, %v4992, %v5038
  %v5040 = vsel %vm1388, %v4995, %v5039
  %v5041 = vsel %vm1376, %v5001, %v4998
  %v5042 = vsel %vm1378, %v5004, %v5041
  %v5043 = vsel %vm1380, %v5007, %v5042
  %v5044 = vsel %vm1382, %v5010, %v5043
  %v5045 = vsel %vm1384, %v5013, %v5044
  %v5046 = vsel %vm1386, %v5016, %v5045
  %v5047 = vsel %vm1388, %v5019, %v5046
  %v5052 = vsel %vm3991, %v5026, 0.0
  %5053 = vadd.xlane.f32.xlu0 %v5052
  %v5054 = vpop.xlane.xlu0 %5053
  %v5055 = vsel %vm3991, %v5033, 0.0
  %5056 = vadd.xlane.f32.xlu0 %v5055
  %v5057 = vpop.xlane.xlu0 %5056
  %v5058 = vsel %vm3991, %v5040, 0.0
  %5059 = vadd.xlane.f32.xlu0 %v5058
  %v5060 = vpop.xlane.xlu0 %5059
  %v5061 = vsel %vm3991, %v5047, 0.0
  %5062 = vadd.xlane.f32.xlu0 %v5061
  %v5063 = vpop.xlane.xlu0 %5062
  %5128 = vset.pattern.permute.xlu0 0
  %5129 = vperm.xlu0 %5128, %v4541
  %v5130 = vpop.permute.xlu0 %5129
  %5131 = vset.pattern.permute.xlu0 0
  %5132 = vperm.xlu0 %5131, %v4543
  %v5133 = vpop.permute.xlu0 %5132
  %5134 = vset.pattern.permute.xlu0 0
  %5135 = vperm.xlu0 %5134, %v4545
  %v5136 = vpop.permute.xlu0 %5135
  %5137 = vset.pattern.permute.xlu0 0
  %5138 = vperm.xlu0 %5137, %v4547
  %v5139 = vpop.permute.xlu0 %5138
  %5140 = vset.pattern.permute.xlu0 0
  %5141 = vperm.xlu0 %5140, %v4549
  %v5142 = vpop.permute.xlu0 %5141
  %5143 = vset.pattern.permute.xlu0 0
  %5144 = vperm.xlu0 %5143, %v4551
  %v5145 = vpop.permute.xlu0 %5144
  %5146 = vset.pattern.permute.xlu0 0
  %5147 = vperm.xlu0 %5146, %v4553
  %v5148 = vpop.permute.xlu0 %5147
  %5149 = vset.pattern.permute.xlu0 0
  %5150 = vperm.xlu0 %5149, %v4555
  %v5151 = vpop.permute.xlu0 %5150
  %5152 = vset.pattern.permute.xlu0 0
  %5153 = vperm.xlu0 %5152, %v4557
  %v5154 = vpop.permute.xlu0 %5153
  %5155 = vset.pattern.permute.xlu0 0
  %5156 = vperm.xlu0 %5155, %v4559
  %v5157 = vpop.permute.xlu0 %5156
  %5158 = vset.pattern.permute.xlu0 0
  %5159 = vperm.xlu0 %5158, %v4561
  %v5160 = vpop.permute.xlu0 %5159
  %5161 = vset.pattern.permute.xlu0 0
  %5162 = vperm.xlu0 %5161, %v4563
  %v5163 = vpop.permute.xlu0 %5162
  %5164 = vset.pattern.permute.xlu0 0
  %5165 = vperm.xlu0 %5164, %v4565
  %v5166 = vpop.permute.xlu0 %5165
  %5167 = vset.pattern.permute.xlu0 0
  %5168 = vperm.xlu0 %5167, %v4567
  %v5169 = vpop.permute.xlu0 %5168
  %5170 = vset.pattern.permute.xlu0 0
  %5171 = vperm.xlu0 %5170, %v4569
  %v5172 = vpop.permute.xlu0 %5171
  %5173 = vset.pattern.permute.xlu0 0
  %5174 = vperm.xlu0 %5173, %v4571
  %v5175 = vpop.permute.xlu0 %5174
  %5176 = vset.pattern.permute.xlu0 0
  %5177 = vperm.xlu0 %5176, %v4573
  %v5178 = vpop.permute.xlu0 %5177
  %5179 = vset.pattern.permute.xlu0 0
  %5180 = vperm.xlu0 %5179, %v4575
  %v5181 = vpop.permute.xlu0 %5180
  %5182 = vset.pattern.permute.xlu0 0
  %5183 = vperm.xlu0 %5182, %v4577
  %v5184 = vpop.permute.xlu0 %5183
  %5185 = vset.pattern.permute.xlu0 0
  %5186 = vperm.xlu0 %5185, %v4579
  %v5187 = vpop.permute.xlu0 %5186
  %5188 = vset.pattern.permute.xlu0 0
  %5189 = vperm.xlu0 %5188, %v4581
  %v5190 = vpop.permute.xlu0 %5189
  %5191 = vset.pattern.permute.xlu0 0
  %5192 = vperm.xlu0 %5191, %v4583
  %v5193 = vpop.permute.xlu0 %5192
  %5194 = vset.pattern.permute.xlu0 0
  %5195 = vperm.xlu0 %5194, %v4585
  %v5196 = vpop.permute.xlu0 %5195
  %5197 = vset.pattern.permute.xlu0 0
  %5198 = vperm.xlu0 %5197, %v4587
  %v5199 = vpop.permute.xlu0 %5198
  %5200 = vset.pattern.permute.xlu0 0
  %5201 = vperm.xlu0 %5200, %v4589
  %v5202 = vpop.permute.xlu0 %5201
  %5203 = vset.pattern.permute.xlu0 0
  %5204 = vperm.xlu0 %5203, %v4591
  %v5205 = vpop.permute.xlu0 %5204
  %5206 = vset.pattern.permute.xlu0 0
  %5207 = vperm.xlu0 %5206, %v4593
  %v5208 = vpop.permute.xlu0 %5207
  %5209 = vset.pattern.permute.xlu0 0
  %5210 = vperm.xlu0 %5209, %v4595
  %v5211 = vpop.permute.xlu0 %5210
  %5212 = vset.pattern.permute.xlu0 0
  %5213 = vperm.xlu0 %5212, %v4597
  %v5214 = vpop.permute.xlu0 %5213
  %5215 = vset.pattern.permute.xlu0 0
  %5216 = vperm.xlu0 %5215, %v4599
  %v5217 = vpop.permute.xlu0 %5216
  %5218 = vset.pattern.permute.xlu0 0
  %5219 = vperm.xlu0 %5218, %v4601
  %v5220 = vpop.permute.xlu0 %5219
  %5221 = vset.pattern.permute.xlu0 0
  %5222 = vperm.xlu0 %5221, %v4603
  %v5223 = vpop.permute.xlu0 %5222
  %5224 = vset.pattern.permute.xlu0 0
  %5225 = vperm.xlu0 %5224, %v4605
  %v5226 = vpop.permute.xlu0 %5225
  %5227 = vset.pattern.permute.xlu0 0
  %5228 = vperm.xlu0 %5227, %v4607
  %v5229 = vpop.permute.xlu0 %5228
  %5230 = vset.pattern.permute.xlu0 0
  %5231 = vperm.xlu0 %5230, %v4609
  %v5232 = vpop.permute.xlu0 %5231
  %5233 = vset.pattern.permute.xlu0 0
  %5234 = vperm.xlu0 %5233, %v4611
  %v5235 = vpop.permute.xlu0 %5234
  %5236 = vset.pattern.permute.xlu0 0
  %5237 = vperm.xlu0 %5236, %v4613
  %v5238 = vpop.permute.xlu0 %5237
  %5239 = vset.pattern.permute.xlu0 0
  %5240 = vperm.xlu0 %5239, %v4615
  %v5241 = vpop.permute.xlu0 %5240
  %5242 = vset.pattern.permute.xlu0 0
  %5243 = vperm.xlu0 %5242, %v4617
  %v5244 = vpop.permute.xlu0 %5243
  %5245 = vset.pattern.permute.xlu0 0
  %5246 = vperm.xlu0 %5245, %v4619
  %v5247 = vpop.permute.xlu0 %5246
  %5248 = vset.pattern.permute.xlu0 0
  %5249 = vperm.xlu0 %5248, %v4621
  %v5250 = vpop.permute.xlu0 %5249
  %5251 = vset.pattern.permute.xlu0 0
  %5252 = vperm.xlu0 %5251, %v4623
  %v5253 = vpop.permute.xlu0 %5252
  %5254 = vset.pattern.permute.xlu0 0
  %5255 = vperm.xlu0 %5254, %v4625
  %v5256 = vpop.permute.xlu0 %5255
  %5257 = vset.pattern.permute.xlu0 0
  %5258 = vperm.xlu0 %5257, %v4627
  %v5259 = vpop.permute.xlu0 %5258
  %5260 = vset.pattern.permute.xlu0 0
  %5261 = vperm.xlu0 %5260, %v4629
  %v5262 = vpop.permute.xlu0 %5261
  %5263 = vset.pattern.permute.xlu0 0
  %5264 = vperm.xlu0 %5263, %v4631
  %v5265 = vpop.permute.xlu0 %5264
  %5266 = vset.pattern.permute.xlu0 0
  %5267 = vperm.xlu0 %5266, %v4633
  %v5268 = vpop.permute.xlu0 %5267
  %5269 = vset.pattern.permute.xlu0 0
  %5270 = vperm.xlu0 %5269, %v4635
  %v5271 = vpop.permute.xlu0 %5270
  %5272 = vset.pattern.permute.xlu0 0
  %5273 = vperm.xlu0 %5272, %v4637
  %v5274 = vpop.permute.xlu0 %5273
  %5275 = vset.pattern.permute.xlu0 0
  %5276 = vperm.xlu0 %5275, %v4639
  %v5277 = vpop.permute.xlu0 %5276
  %5278 = vset.pattern.permute.xlu0 0
  %5279 = vperm.xlu0 %5278, %v4641
  %v5280 = vpop.permute.xlu0 %5279
  %5281 = vset.pattern.permute.xlu0 0
  %5282 = vperm.xlu0 %5281, %v4643
  %v5283 = vpop.permute.xlu0 %5282
  %5284 = vset.pattern.permute.xlu0 0
  %5285 = vperm.xlu0 %5284, %v4645
  %v5286 = vpop.permute.xlu0 %5285
  %5287 = vset.pattern.permute.xlu0 0
  %5288 = vperm.xlu0 %5287, %v4647
  %v5289 = vpop.permute.xlu0 %5288
  %5290 = vset.pattern.permute.xlu0 0
  %5291 = vperm.xlu0 %5290, %v4649
  %v5292 = vpop.permute.xlu0 %5291
  %5293 = vset.pattern.permute.xlu0 0
  %5294 = vperm.xlu0 %5293, %v4651
  %v5295 = vpop.permute.xlu0 %5294
  %5296 = vset.pattern.permute.xlu0 0
  %5297 = vperm.xlu0 %5296, %v4653
  %v5298 = vpop.permute.xlu0 %5297
  %5299 = vset.pattern.permute.xlu0 0
  %5300 = vperm.xlu0 %5299, %v4655
  %v5301 = vpop.permute.xlu0 %5300
  %5302 = vset.pattern.permute.xlu0 0
  %5303 = vperm.xlu0 %5302, %v4657
  %v5304 = vpop.permute.xlu0 %5303
  %5305 = vset.pattern.permute.xlu0 0
  %5306 = vperm.xlu0 %5305, %v4659
  %v5307 = vpop.permute.xlu0 %5306
  %5308 = vset.pattern.permute.xlu0 0
  %5309 = vperm.xlu0 %5308, %v4661
  %v5310 = vpop.permute.xlu0 %5309
  %5311 = vset.pattern.permute.xlu0 0
  %5312 = vperm.xlu0 %5311, %v4663
  %v5313 = vpop.permute.xlu0 %5312
  %5314 = vset.pattern.permute.xlu0 0
  %5315 = vperm.xlu0 %5314, %v4665
  %v5316 = vpop.permute.xlu0 %5315
  %5317 = vset.pattern.permute.xlu0 0
  %5318 = vperm.xlu0 %5317, %v4667
  %v5319 = vpop.permute.xlu0 %5318
  %v5320 = vperm.slane %v5130, %v1277
  %v5321 = vperm.slane %v5133, %v1279
  %v5322 = vsel %vm1281, %v5321, %v5320
  %v5323 = vperm.slane %v5136, %v1277
  %v5324 = vperm.slane %v5139, %v1279
  %v5325 = vsel %vm1281, %v5324, %v5323
  %v5326 = vperm.slane %v5142, %v1277
  %v5327 = vperm.slane %v5145, %v1279
  %v5328 = vsel %vm1281, %v5327, %v5326
  %v5329 = vperm.slane %v5148, %v1277
  %v5330 = vperm.slane %v5151, %v1279
  %v5331 = vsel %vm1281, %v5330, %v5329
  %v5332 = vperm.slane %v5154, %v1277
  %v5333 = vperm.slane %v5157, %v1279
  %v5334 = vsel %vm1281, %v5333, %v5332
  %v5335 = vperm.slane %v5160, %v1277
  %v5336 = vperm.slane %v5163, %v1279
  %v5337 = vsel %vm1281, %v5336, %v5335
  %v5338 = vperm.slane %v5166, %v1277
  %v5339 = vperm.slane %v5169, %v1279
  %v5340 = vsel %vm1281, %v5339, %v5338
  %v5341 = vperm.slane %v5172, %v1277
  %v5342 = vperm.slane %v5175, %v1279
  %v5343 = vsel %vm1281, %v5342, %v5341
  %v5344 = vperm.slane %v5178, %v1277
  %v5345 = vperm.slane %v5181, %v1279
  %v5346 = vsel %vm1281, %v5345, %v5344
  %v5347 = vperm.slane %v5184, %v1277
  %v5348 = vperm.slane %v5187, %v1279
  %v5349 = vsel %vm1281, %v5348, %v5347
  %v5350 = vperm.slane %v5190, %v1277
  %v5351 = vperm.slane %v5193, %v1279
  %v5352 = vsel %vm1281, %v5351, %v5350
  %v5353 = vperm.slane %v5196, %v1277
  %v5354 = vperm.slane %v5199, %v1279
  %v5355 = vsel %vm1281, %v5354, %v5353
  %v5356 = vperm.slane %v5202, %v1277
  %v5357 = vperm.slane %v5205, %v1279
  %v5358 = vsel %vm1281, %v5357, %v5356
  %v5359 = vperm.slane %v5208, %v1277
  %v5360 = vperm.slane %v5211, %v1279
  %v5361 = vsel %vm1281, %v5360, %v5359
  %v5362 = vperm.slane %v5214, %v1277
  %v5363 = vperm.slane %v5217, %v1279
  %v5364 = vsel %vm1281, %v5363, %v5362
  %v5365 = vperm.slane %v5220, %v1277
  %v5366 = vperm.slane %v5223, %v1279
  %v5367 = vsel %vm1281, %v5366, %v5365
  %v5368 = vperm.slane %v5226, %v1277
  %v5369 = vperm.slane %v5229, %v1279
  %v5370 = vsel %vm1281, %v5369, %v5368
  %v5371 = vperm.slane %v5232, %v1277
  %v5372 = vperm.slane %v5235, %v1279
  %v5373 = vsel %vm1281, %v5372, %v5371
  %v5374 = vperm.slane %v5238, %v1277
  %v5375 = vperm.slane %v5241, %v1279
  %v5376 = vsel %vm1281, %v5375, %v5374
  %v5377 = vperm.slane %v5244, %v1277
  %v5378 = vperm.slane %v5247, %v1279
  %v5379 = vsel %vm1281, %v5378, %v5377
  %v5380 = vperm.slane %v5250, %v1277
  %v5381 = vperm.slane %v5253, %v1279
  %v5382 = vsel %vm1281, %v5381, %v5380
  %v5383 = vperm.slane %v5256, %v1277
  %v5384 = vperm.slane %v5259, %v1279
  %v5385 = vsel %vm1281, %v5384, %v5383
  %v5386 = vperm.slane %v5262, %v1277
  %v5387 = vperm.slane %v5265, %v1279
  %v5388 = vsel %vm1281, %v5387, %v5386
  %v5389 = vperm.slane %v5268, %v1277
  %v5390 = vperm.slane %v5271, %v1279
  %v5391 = vsel %vm1281, %v5390, %v5389
  %v5392 = vperm.slane %v5274, %v1277
  %v5393 = vperm.slane %v5277, %v1279
  %v5394 = vsel %vm1281, %v5393, %v5392
  %v5395 = vperm.slane %v5280, %v1277
  %v5396 = vperm.slane %v5283, %v1279
  %v5397 = vsel %vm1281, %v5396, %v5395
  %v5398 = vperm.slane %v5286, %v1277
  %v5399 = vperm.slane %v5289, %v1279
  %v5400 = vsel %vm1281, %v5399, %v5398
  %v5401 = vperm.slane %v5292, %v1277
  %v5402 = vperm.slane %v5295, %v1279
  %v5403 = vsel %vm1281, %v5402, %v5401
  %v5404 = vperm.slane %v5298, %v1277
  %v5405 = vperm.slane %v5301, %v1279
  %v5406 = vsel %vm1281, %v5405, %v5404
  %v5407 = vperm.slane %v5304, %v1277
  %v5408 = vperm.slane %v5307, %v1279
  %v5409 = vsel %vm1281, %v5408, %v5407
  %v5410 = vperm.slane %v5310, %v1277
  %v5411 = vperm.slane %v5313, %v1279
  %v5412 = vsel %vm1281, %v5411, %v5410
  %v5413 = vperm.slane %v5316, %v1277
  %v5414 = vperm.slane %v5319, %v1279
  %v5415 = vsel %vm1281, %v5414, %v5413
  %v5416 = vsel %vm1376, %v5325, %v5322
  %v5417 = vsel %vm1378, %v5328, %v5416
  %v5418 = vsel %vm1380, %v5331, %v5417
  %v5419 = vsel %vm1382, %v5334, %v5418
  %v5420 = vsel %vm1384, %v5337, %v5419
  %v5421 = vsel %vm1386, %v5340, %v5420
  %v5422 = vsel %vm1388, %v5343, %v5421
  %v5423 = vsel %vm1376, %v5349, %v5346
  %v5424 = vsel %vm1378, %v5352, %v5423
  %v5425 = vsel %vm1380, %v5355, %v5424
  %v5426 = vsel %vm1382, %v5358, %v5425
  %v5427 = vsel %vm1384, %v5361, %v5426
  %v5428 = vsel %vm1386, %v5364, %v5427
  %v5429 = vsel %vm1388, %v5367, %v5428
  %v5430 = vsel %vm1376, %v5373, %v5370
  %v5431 = vsel %vm1378, %v5376, %v5430
  %v5432 = vsel %vm1380, %v5379, %v5431
  %v5433 = vsel %vm1382, %v5382, %v5432
  %v5434 = vsel %vm1384, %v5385, %v5433
  %v5435 = vsel %vm1386, %v5388, %v5434
  %v5436 = vsel %vm1388, %v5391, %v5435
  %v5437 = vsel %vm1376, %v5397, %v5394
  %v5438 = vsel %vm1378, %v5400, %v5437
  %v5439 = vsel %vm1380, %v5403, %v5438
  %v5440 = vsel %vm1382, %v5406, %v5439
  %v5441 = vsel %vm1384, %v5409, %v5440
  %v5442 = vsel %vm1386, %v5412, %v5441
  %v5443 = vsel %vm1388, %v5415, %v5442
  %v5448 = vsel %vm3991, %v5422, 0.0
  %5449 = vadd.xlane.f32.xlu0 %v5448
  %v5450 = vpop.xlane.xlu0 %5449
  %v5451 = vsel %vm3991, %v5429, 0.0
  %5452 = vadd.xlane.f32.xlu0 %v5451
  %v5453 = vpop.xlane.xlu0 %5452
  %v5454 = vsel %vm3991, %v5436, 0.0
  %5455 = vadd.xlane.f32.xlu0 %v5454
  %v5456 = vpop.xlane.xlu0 %5455
  %v5457 = vsel %vm3991, %v5443, 0.0
  %5458 = vadd.xlane.f32.xlu0 %v5457
  %v5459 = vpop.xlane.xlu0 %5458
  %v5460 = vadd.f32 %v5054, %v5450
  %v5461 = vadd.f32 %v5057, %v5453
  %v5462 = vadd.f32 %v5060, %v5456
  %v5463 = vadd.f32 %v5063, %v5459
  %v5464 = vsub.f32 -1.0, %v4212
  %v5465 = vsub.f32 -1.0, %v4213
  %v5466 = vsub.f32 -1.0, %v4214
  %v5467 = vsub.f32 -1.0, %v4215
  %v5468 = vmul.f32 %v5464, 1.442695
  %v5469 = vpow.pop %v5468
  %v5470 = vmul.f32 %v5465, 1.442695
  %v5471 = vpow.pop %v5470
  %v5472 = vmul.f32 %v5466, 1.442695
  %v5473 = vpow.pop %v5472
  %v5474 = vmul.f32 %v5467, 1.442695
  %v5475 = vpow.pop %v5474
  %v5476 = vmul.f32 %v5469, 16.0
  %v5477 = vmul.f32 %v5471, 16.0
  %v5478 = vmul.f32 %v5473, 16.0
  %v5479 = vmul.f32 %v5475, 16.0
  %v5480 = vadd.f32 %v5460, %v5476
  %v5481 = vadd.f32 %v5461, %v5477
  %v5482 = vadd.f32 %v5462, %v5478
  %v5483 = vadd.f32 %v5463, %v5479
  %v5484 = vrcp.pop %v5480
  %v5485 = vrcp.pop %v5481
  %v5486 = vrcp.pop %v5482
  %v5487 = vrcp.pop %v5483
  %v5492 = vperm.slane %v1415, 0
  %v5493 = vlaneseq
  %v5494 = vshrl.u32 %v5493, 7
  %5496 = vset.pattern.permute.xlu0 %v5494
  %5497 = vperm.xlu0 %5496, %v5492
  %v5498 = vpop.permute.xlu0 %5497
  %v5499 = vlaneseq
  %v5500 = vshrl.u32 %v5499, 7
  %v5501 = vadd.s32 %v5500, 8
  %5502 = vset.pattern.permute.xlu0 %v5501
  %5503 = vperm.xlu0 %5502, %v5492
  %v5504 = vpop.permute.xlu0 %5503
  %v5505 = vperm.slane %v1415, 1
  %v5506 = vlaneseq
  %v5507 = vshrl.u32 %v5506, 7
  %5509 = vset.pattern.permute.xlu0 %v5507
  %5510 = vperm.xlu0 %5509, %v5505
  %v5511 = vpop.permute.xlu0 %5510
  %v5512 = vlaneseq
  %v5513 = vshrl.u32 %v5512, 7
  %v5514 = vadd.s32 %v5513, 8
  %5515 = vset.pattern.permute.xlu0 %v5514
  %5516 = vperm.xlu0 %5515, %v5505
  %v5517 = vpop.permute.xlu0 %5516
  %v5518 = vperm.slane %v1415, 2
  %v5519 = vlaneseq
  %v5520 = vshrl.u32 %v5519, 7
  %5522 = vset.pattern.permute.xlu0 %v5520
  %5523 = vperm.xlu0 %5522, %v5518
  %v5524 = vpop.permute.xlu0 %5523
  %v5525 = vlaneseq
  %v5526 = vshrl.u32 %v5525, 7
  %v5527 = vadd.s32 %v5526, 8
  %5528 = vset.pattern.permute.xlu0 %v5527
  %5529 = vperm.xlu0 %5528, %v5518
  %v5530 = vpop.permute.xlu0 %5529
  %v5531 = vperm.slane %v1415, 3
  %v5532 = vlaneseq
  %v5533 = vshrl.u32 %v5532, 7
  %5535 = vset.pattern.permute.xlu0 %v5533
  %5536 = vperm.xlu0 %5535, %v5531
  %v5537 = vpop.permute.xlu0 %5536
  %v5538 = vlaneseq
  %v5539 = vshrl.u32 %v5538, 7
  %v5540 = vadd.s32 %v5539, 8
  %5541 = vset.pattern.permute.xlu0 %v5540
  %5542 = vperm.xlu0 %5541, %v5531
  %v5543 = vpop.permute.xlu0 %5542
  %v5544 = vperm.slane %v1415, 4
  %v5545 = vlaneseq
  %v5546 = vshrl.u32 %v5545, 7
  %5548 = vset.pattern.permute.xlu0 %v5546
  %5549 = vperm.xlu0 %5548, %v5544
  %v5550 = vpop.permute.xlu0 %5549
  %v5551 = vlaneseq
  %v5552 = vshrl.u32 %v5551, 7
  %v5553 = vadd.s32 %v5552, 8
  %5554 = vset.pattern.permute.xlu0 %v5553
  %5555 = vperm.xlu0 %5554, %v5544
  %v5556 = vpop.permute.xlu0 %5555
  %v5557 = vperm.slane %v1415, 5
  %v5558 = vlaneseq
  %v5559 = vshrl.u32 %v5558, 7
  %5561 = vset.pattern.permute.xlu0 %v5559
  %5562 = vperm.xlu0 %5561, %v5557
  %v5563 = vpop.permute.xlu0 %5562
  %v5564 = vlaneseq
  %v5565 = vshrl.u32 %v5564, 7
  %v5566 = vadd.s32 %v5565, 8
  %5567 = vset.pattern.permute.xlu0 %v5566
  %5568 = vperm.xlu0 %5567, %v5557
  %v5569 = vpop.permute.xlu0 %5568
  %v5570 = vperm.slane %v1415, 6
  %v5571 = vlaneseq
  %v5572 = vshrl.u32 %v5571, 7
  %5574 = vset.pattern.permute.xlu0 %v5572
  %5575 = vperm.xlu0 %5574, %v5570
  %v5576 = vpop.permute.xlu0 %5575
  %v5577 = vlaneseq
  %v5578 = vshrl.u32 %v5577, 7
  %v5579 = vadd.s32 %v5578, 8
  %5580 = vset.pattern.permute.xlu0 %v5579
  %5581 = vperm.xlu0 %5580, %v5570
  %v5582 = vpop.permute.xlu0 %5581
  %v5583 = vperm.slane %v1415, 7
  %v5584 = vlaneseq
  %v5585 = vshrl.u32 %v5584, 7
  %5587 = vset.pattern.permute.xlu0 %v5585
  %5588 = vperm.xlu0 %5587, %v5583
  %v5589 = vpop.permute.xlu0 %5588
  %v5590 = vlaneseq
  %v5591 = vshrl.u32 %v5590, 7
  %v5592 = vadd.s32 %v5591, 8
  %5593 = vset.pattern.permute.xlu0 %v5592
  %5594 = vperm.xlu0 %5593, %v5583
  %v5595 = vpop.permute.xlu0 %5594
  %v5596 = vperm.slane %v1416, 0
  %v5597 = vlaneseq
  %v5598 = vshrl.u32 %v5597, 7
  %5600 = vset.pattern.permute.xlu0 %v5598
  %5601 = vperm.xlu0 %5600, %v5596
  %v5602 = vpop.permute.xlu0 %5601
  %v5603 = vlaneseq
  %v5604 = vshrl.u32 %v5603, 7
  %v5605 = vadd.s32 %v5604, 8
  %5606 = vset.pattern.permute.xlu0 %v5605
  %5607 = vperm.xlu0 %5606, %v5596
  %v5608 = vpop.permute.xlu0 %5607
  %v5609 = vperm.slane %v1416, 1
  %v5610 = vlaneseq
  %v5611 = vshrl.u32 %v5610, 7
  %5613 = vset.pattern.permute.xlu0 %v5611
  %5614 = vperm.xlu0 %5613, %v5609
  %v5615 = vpop.permute.xlu0 %5614
  %v5616 = vlaneseq
  %v5617 = vshrl.u32 %v5616, 7
  %v5618 = vadd.s32 %v5617, 8
  %5619 = vset.pattern.permute.xlu0 %v5618
  %5620 = vperm.xlu0 %5619, %v5609
  %v5621 = vpop.permute.xlu0 %5620
  %v5622 = vperm.slane %v1416, 2
  %v5623 = vlaneseq
  %v5624 = vshrl.u32 %v5623, 7
  %5626 = vset.pattern.permute.xlu0 %v5624
  %5627 = vperm.xlu0 %5626, %v5622
  %v5628 = vpop.permute.xlu0 %5627
  %v5629 = vlaneseq
  %v5630 = vshrl.u32 %v5629, 7
  %v5631 = vadd.s32 %v5630, 8
  %5632 = vset.pattern.permute.xlu0 %v5631
  %5633 = vperm.xlu0 %5632, %v5622
  %v5634 = vpop.permute.xlu0 %5633
  %v5635 = vperm.slane %v1416, 3
  %v5636 = vlaneseq
  %v5637 = vshrl.u32 %v5636, 7
  %5639 = vset.pattern.permute.xlu0 %v5637
  %5640 = vperm.xlu0 %5639, %v5635
  %v5641 = vpop.permute.xlu0 %5640
  %v5642 = vlaneseq
  %v5643 = vshrl.u32 %v5642, 7
  %v5644 = vadd.s32 %v5643, 8
  %5645 = vset.pattern.permute.xlu0 %v5644
  %5646 = vperm.xlu0 %5645, %v5635
  %v5647 = vpop.permute.xlu0 %5646
  %v5648 = vperm.slane %v1416, 4
  %v5649 = vlaneseq
  %v5650 = vshrl.u32 %v5649, 7
  %5652 = vset.pattern.permute.xlu0 %v5650
  %5653 = vperm.xlu0 %5652, %v5648
  %v5654 = vpop.permute.xlu0 %5653
  %v5655 = vlaneseq
  %v5656 = vshrl.u32 %v5655, 7
  %v5657 = vadd.s32 %v5656, 8
  %5658 = vset.pattern.permute.xlu0 %v5657
  %5659 = vperm.xlu0 %5658, %v5648
  %v5660 = vpop.permute.xlu0 %5659
  %v5661 = vperm.slane %v1416, 5
  %v5662 = vlaneseq
  %v5663 = vshrl.u32 %v5662, 7
  %5665 = vset.pattern.permute.xlu0 %v5663
  %5666 = vperm.xlu0 %5665, %v5661
  %v5667 = vpop.permute.xlu0 %5666
  %v5668 = vlaneseq
  %v5669 = vshrl.u32 %v5668, 7
  %v5670 = vadd.s32 %v5669, 8
  %5671 = vset.pattern.permute.xlu0 %v5670
  %5672 = vperm.xlu0 %5671, %v5661
  %v5673 = vpop.permute.xlu0 %5672
  %v5674 = vperm.slane %v1416, 6
  %v5675 = vlaneseq
  %v5676 = vshrl.u32 %v5675, 7
  %5678 = vset.pattern.permute.xlu0 %v5676
  %5679 = vperm.xlu0 %5678, %v5674
  %v5680 = vpop.permute.xlu0 %5679
  %v5681 = vlaneseq
  %v5682 = vshrl.u32 %v5681, 7
  %v5683 = vadd.s32 %v5682, 8
  %5684 = vset.pattern.permute.xlu0 %v5683
  %5685 = vperm.xlu0 %5684, %v5674
  %v5686 = vpop.permute.xlu0 %5685
  %v5687 = vperm.slane %v1416, 7
  %v5688 = vlaneseq
  %v5689 = vshrl.u32 %v5688, 7
  %5691 = vset.pattern.permute.xlu0 %v5689
  %5692 = vperm.xlu0 %5691, %v5687
  %v5693 = vpop.permute.xlu0 %5692
  %v5694 = vlaneseq
  %v5695 = vshrl.u32 %v5694, 7
  %v5696 = vadd.s32 %v5695, 8
  %5697 = vset.pattern.permute.xlu0 %v5696
  %5698 = vperm.xlu0 %5697, %v5687
  %v5699 = vpop.permute.xlu0 %5698
  %v5700 = vperm.slane %v1417, 0
  %v5701 = vlaneseq
  %v5702 = vshrl.u32 %v5701, 7
  %5704 = vset.pattern.permute.xlu0 %v5702
  %5705 = vperm.xlu0 %5704, %v5700
  %v5706 = vpop.permute.xlu0 %5705
  %v5707 = vlaneseq
  %v5708 = vshrl.u32 %v5707, 7
  %v5709 = vadd.s32 %v5708, 8
  %5710 = vset.pattern.permute.xlu0 %v5709
  %5711 = vperm.xlu0 %5710, %v5700
  %v5712 = vpop.permute.xlu0 %5711
  %v5713 = vperm.slane %v1417, 1
  %v5714 = vlaneseq
  %v5715 = vshrl.u32 %v5714, 7
  %5717 = vset.pattern.permute.xlu0 %v5715
  %5718 = vperm.xlu0 %5717, %v5713
  %v5719 = vpop.permute.xlu0 %5718
  %v5720 = vlaneseq
  %v5721 = vshrl.u32 %v5720, 7
  %v5722 = vadd.s32 %v5721, 8
  %5723 = vset.pattern.permute.xlu0 %v5722
  %5724 = vperm.xlu0 %5723, %v5713
  %v5725 = vpop.permute.xlu0 %5724
  %v5726 = vperm.slane %v1417, 2
  %v5727 = vlaneseq
  %v5728 = vshrl.u32 %v5727, 7
  %5730 = vset.pattern.permute.xlu0 %v5728
  %5731 = vperm.xlu0 %5730, %v5726
  %v5732 = vpop.permute.xlu0 %5731
  %v5733 = vlaneseq
  %v5734 = vshrl.u32 %v5733, 7
  %v5735 = vadd.s32 %v5734, 8
  %5736 = vset.pattern.permute.xlu0 %v5735
  %5737 = vperm.xlu0 %5736, %v5726
  %v5738 = vpop.permute.xlu0 %5737
  %v5739 = vperm.slane %v1417, 3
  %v5740 = vlaneseq
  %v5741 = vshrl.u32 %v5740, 7
  %5743 = vset.pattern.permute.xlu0 %v5741
  %5744 = vperm.xlu0 %5743, %v5739
  %v5745 = vpop.permute.xlu0 %5744
  %v5746 = vlaneseq
  %v5747 = vshrl.u32 %v5746, 7
  %v5748 = vadd.s32 %v5747, 8
  %5749 = vset.pattern.permute.xlu0 %v5748
  %5750 = vperm.xlu0 %5749, %v5739
  %v5751 = vpop.permute.xlu0 %5750
  %v5752 = vperm.slane %v1417, 4
  %v5753 = vlaneseq
  %v5754 = vshrl.u32 %v5753, 7
  %5756 = vset.pattern.permute.xlu0 %v5754
  %5757 = vperm.xlu0 %5756, %v5752
  %v5758 = vpop.permute.xlu0 %5757
  %v5759 = vlaneseq
  %v5760 = vshrl.u32 %v5759, 7
  %v5761 = vadd.s32 %v5760, 8
  %5762 = vset.pattern.permute.xlu0 %v5761
  %5763 = vperm.xlu0 %5762, %v5752
  %v5764 = vpop.permute.xlu0 %5763
  %v5765 = vperm.slane %v1417, 5
  %v5766 = vlaneseq
  %v5767 = vshrl.u32 %v5766, 7
  %5769 = vset.pattern.permute.xlu0 %v5767
  %5770 = vperm.xlu0 %5769, %v5765
  %v5771 = vpop.permute.xlu0 %5770
  %v5772 = vlaneseq
  %v5773 = vshrl.u32 %v5772, 7
  %v5774 = vadd.s32 %v5773, 8
  %5775 = vset.pattern.permute.xlu0 %v5774
  %5776 = vperm.xlu0 %5775, %v5765
  %v5777 = vpop.permute.xlu0 %5776
  %v5778 = vperm.slane %v1417, 6
  %v5779 = vlaneseq
  %v5780 = vshrl.u32 %v5779, 7
  %5782 = vset.pattern.permute.xlu0 %v5780
  %5783 = vperm.xlu0 %5782, %v5778
  %v5784 = vpop.permute.xlu0 %5783
  %v5785 = vlaneseq
  %v5786 = vshrl.u32 %v5785, 7
  %v5787 = vadd.s32 %v5786, 8
  %5788 = vset.pattern.permute.xlu0 %v5787
  %5789 = vperm.xlu0 %5788, %v5778
  %v5790 = vpop.permute.xlu0 %5789
  %v5791 = vperm.slane %v1417, 7
  %v5792 = vlaneseq
  %v5793 = vshrl.u32 %v5792, 7
  %5795 = vset.pattern.permute.xlu0 %v5793
  %5796 = vperm.xlu0 %5795, %v5791
  %v5797 = vpop.permute.xlu0 %5796
  %v5798 = vlaneseq
  %v5799 = vshrl.u32 %v5798, 7
  %v5800 = vadd.s32 %v5799, 8
  %5801 = vset.pattern.permute.xlu0 %v5800
  %5802 = vperm.xlu0 %5801, %v5791
  %v5803 = vpop.permute.xlu0 %5802
  %v5804 = vperm.slane %v1418, 0
  %v5805 = vlaneseq
  %v5806 = vshrl.u32 %v5805, 7
  %5808 = vset.pattern.permute.xlu0 %v5806
  %5809 = vperm.xlu0 %5808, %v5804
  %v5810 = vpop.permute.xlu0 %5809
  %v5811 = vlaneseq
  %v5812 = vshrl.u32 %v5811, 7
  %v5813 = vadd.s32 %v5812, 8
  %5814 = vset.pattern.permute.xlu0 %v5813
  %5815 = vperm.xlu0 %5814, %v5804
  %v5816 = vpop.permute.xlu0 %5815
  %v5817 = vperm.slane %v1418, 1
  %v5818 = vlaneseq
  %v5819 = vshrl.u32 %v5818, 7
  %5821 = vset.pattern.permute.xlu0 %v5819
  %5822 = vperm.xlu0 %5821, %v5817
  %v5823 = vpop.permute.xlu0 %5822
  %v5824 = vlaneseq
  %v5825 = vshrl.u32 %v5824, 7
  %v5826 = vadd.s32 %v5825, 8
  %5827 = vset.pattern.permute.xlu0 %v5826
  %5828 = vperm.xlu0 %5827, %v5817
  %v5829 = vpop.permute.xlu0 %5828
  %v5830 = vperm.slane %v1418, 2
  %v5831 = vlaneseq
  %v5832 = vshrl.u32 %v5831, 7
  %5834 = vset.pattern.permute.xlu0 %v5832
  %5835 = vperm.xlu0 %5834, %v5830
  %v5836 = vpop.permute.xlu0 %5835
  %v5837 = vlaneseq
  %v5838 = vshrl.u32 %v5837, 7
  %v5839 = vadd.s32 %v5838, 8
  %5840 = vset.pattern.permute.xlu0 %v5839
  %5841 = vperm.xlu0 %5840, %v5830
  %v5842 = vpop.permute.xlu0 %5841
  %v5843 = vperm.slane %v1418, 3
  %v5844 = vlaneseq
  %v5845 = vshrl.u32 %v5844, 7
  %5847 = vset.pattern.permute.xlu0 %v5845
  %5848 = vperm.xlu0 %5847, %v5843
  %v5849 = vpop.permute.xlu0 %5848
  %v5850 = vlaneseq
  %v5851 = vshrl.u32 %v5850, 7
  %v5852 = vadd.s32 %v5851, 8
  %5853 = vset.pattern.permute.xlu0 %v5852
  %5854 = vperm.xlu0 %5853, %v5843
  %v5855 = vpop.permute.xlu0 %5854
  %v5856 = vperm.slane %v1418, 4
  %v5857 = vlaneseq
  %v5858 = vshrl.u32 %v5857, 7
  %5860 = vset.pattern.permute.xlu0 %v5858
  %5861 = vperm.xlu0 %5860, %v5856
  %v5862 = vpop.permute.xlu0 %5861
  %v5863 = vlaneseq
  %v5864 = vshrl.u32 %v5863, 7
  %v5865 = vadd.s32 %v5864, 8
  %5866 = vset.pattern.permute.xlu0 %v5865
  %5867 = vperm.xlu0 %5866, %v5856
  %v5868 = vpop.permute.xlu0 %5867
  %v5869 = vperm.slane %v1418, 5
  %v5870 = vlaneseq
  %v5871 = vshrl.u32 %v5870, 7
  %5873 = vset.pattern.permute.xlu0 %v5871
  %5874 = vperm.xlu0 %5873, %v5869
  %v5875 = vpop.permute.xlu0 %5874
  %v5876 = vlaneseq
  %v5877 = vshrl.u32 %v5876, 7
  %v5878 = vadd.s32 %v5877, 8
  %5879 = vset.pattern.permute.xlu0 %v5878
  %5880 = vperm.xlu0 %5879, %v5869
  %v5881 = vpop.permute.xlu0 %5880
  %v5882 = vperm.slane %v1418, 6
  %v5883 = vlaneseq
  %v5884 = vshrl.u32 %v5883, 7
  %5886 = vset.pattern.permute.xlu0 %v5884
  %5887 = vperm.xlu0 %5886, %v5882
  %v5888 = vpop.permute.xlu0 %5887
  %v5889 = vlaneseq
  %v5890 = vshrl.u32 %v5889, 7
  %v5891 = vadd.s32 %v5890, 8
  %5892 = vset.pattern.permute.xlu0 %v5891
  %5893 = vperm.xlu0 %5892, %v5882
  %v5894 = vpop.permute.xlu0 %5893
  %v5895 = vperm.slane %v1418, 7
  %v5896 = vlaneseq
  %v5897 = vshrl.u32 %v5896, 7
  %5899 = vset.pattern.permute.xlu0 %v5897
  %5900 = vperm.xlu0 %5899, %v5895
  %v5901 = vpop.permute.xlu0 %5900
  %v5902 = vlaneseq
  %v5903 = vshrl.u32 %v5902, 7
  %v5904 = vadd.s32 %v5903, 8
  %5905 = vset.pattern.permute.xlu0 %v5904
  %5906 = vperm.xlu0 %5905, %v5895
  %v5907 = vpop.permute.xlu0 %5906
  %v5972 = vmul.f32 %v4349, %v5498
  %v5973 = vmul.f32 %v4351, %v5504
  %v5974 = vmul.f32 %v4353, %v5511
  %v5975 = vmul.f32 %v4355, %v5517
  %v5976 = vmul.f32 %v4357, %v5524
  %v5977 = vmul.f32 %v4359, %v5530
  %v5978 = vmul.f32 %v4361, %v5537
  %v5979 = vmul.f32 %v4363, %v5543
  %v5980 = vmul.f32 %v4365, %v5550
  %v5981 = vmul.f32 %v4367, %v5556
  %v5982 = vmul.f32 %v4369, %v5563
  %v5983 = vmul.f32 %v4371, %v5569
  %v5984 = vmul.f32 %v4373, %v5576
  %v5985 = vmul.f32 %v4375, %v5582
  %v5986 = vmul.f32 %v4377, %v5589
  %v5987 = vmul.f32 %v4379, %v5595
  %v5988 = vmul.f32 %v4381, %v5602
  %v5989 = vmul.f32 %v4383, %v5608
  %v5990 = vmul.f32 %v4385, %v5615
  %v5991 = vmul.f32 %v4387, %v5621
  %v5992 = vmul.f32 %v4389, %v5628
  %v5993 = vmul.f32 %v4391, %v5634
  %v5994 = vmul.f32 %v4393, %v5641
  %v5995 = vmul.f32 %v4395, %v5647
  %v5996 = vmul.f32 %v4397, %v5654
  %v5997 = vmul.f32 %v4399, %v5660
  %v5998 = vmul.f32 %v4401, %v5667
  %v5999 = vmul.f32 %v4403, %v5673
  %v6000 = vmul.f32 %v4405, %v5680
  %v6001 = vmul.f32 %v4407, %v5686
  %v6002 = vmul.f32 %v4409, %v5693
  %v6003 = vmul.f32 %v4411, %v5699
  %v6004 = vmul.f32 %v4413, %v5706
  %v6005 = vmul.f32 %v4415, %v5712
  %v6006 = vmul.f32 %v4417, %v5719
  %v6007 = vmul.f32 %v4419, %v5725
  %v6008 = vmul.f32 %v4421, %v5732
  %v6009 = vmul.f32 %v4423, %v5738
  %v6010 = vmul.f32 %v4425, %v5745
  %v6011 = vmul.f32 %v4427, %v5751
  %v6012 = vmul.f32 %v4429, %v5758
  %v6013 = vmul.f32 %v4431, %v5764
  %v6014 = vmul.f32 %v4433, %v5771
  %v6015 = vmul.f32 %v4435, %v5777
  %v6016 = vmul.f32 %v4437, %v5784
  %v6017 = vmul.f32 %v4439, %v5790
  %v6018 = vmul.f32 %v4441, %v5797
  %v6019 = vmul.f32 %v4443, %v5803
  %v6020 = vmul.f32 %v4445, %v5810
  %v6021 = vmul.f32 %v4447, %v5816
  %v6022 = vmul.f32 %v4449, %v5823
  %v6023 = vmul.f32 %v4451, %v5829
  %v6024 = vmul.f32 %v4453, %v5836
  %v6025 = vmul.f32 %v4455, %v5842
  %v6026 = vmul.f32 %v4457, %v5849
  %v6027 = vmul.f32 %v4459, %v5855
  %v6028 = vmul.f32 %v4461, %v5862
  %v6029 = vmul.f32 %v4463, %v5868
  %v6030 = vmul.f32 %v4465, %v5875
  %v6031 = vmul.f32 %v4467, %v5881
  %v6032 = vmul.f32 %v4469, %v5888
  %v6033 = vmul.f32 %v4471, %v5894
  %v6034 = vmul.f32 %v4473, %v5901
  %v6035 = vmul.f32 %v4475, %v5907
  %6100 = vset.pattern.permute.xlu0 0
  %6101 = vperm.xlu0 %6100, %v5972
  %v6102 = vpop.permute.xlu0 %6101
  %6103 = vset.pattern.permute.xlu0 0
  %6104 = vperm.xlu0 %6103, %v5973
  %v6105 = vpop.permute.xlu0 %6104
  %6106 = vset.pattern.permute.xlu0 0
  %6107 = vperm.xlu0 %6106, %v5974
  %v6108 = vpop.permute.xlu0 %6107
  %6109 = vset.pattern.permute.xlu0 0
  %6110 = vperm.xlu0 %6109, %v5975
  %v6111 = vpop.permute.xlu0 %6110
  %6112 = vset.pattern.permute.xlu0 0
  %6113 = vperm.xlu0 %6112, %v5976
  %v6114 = vpop.permute.xlu0 %6113
  %6115 = vset.pattern.permute.xlu0 0
  %6116 = vperm.xlu0 %6115, %v5977
  %v6117 = vpop.permute.xlu0 %6116
  %6118 = vset.pattern.permute.xlu0 0
  %6119 = vperm.xlu0 %6118, %v5978
  %v6120 = vpop.permute.xlu0 %6119
  %6121 = vset.pattern.permute.xlu0 0
  %6122 = vperm.xlu0 %6121, %v5979
  %v6123 = vpop.permute.xlu0 %6122
  %6124 = vset.pattern.permute.xlu0 0
  %6125 = vperm.xlu0 %6124, %v5980
  %v6126 = vpop.permute.xlu0 %6125
  %6127 = vset.pattern.permute.xlu0 0
  %6128 = vperm.xlu0 %6127, %v5981
  %v6129 = vpop.permute.xlu0 %6128
  %6130 = vset.pattern.permute.xlu0 0
  %6131 = vperm.xlu0 %6130, %v5982
  %v6132 = vpop.permute.xlu0 %6131
  %6133 = vset.pattern.permute.xlu0 0
  %6134 = vperm.xlu0 %6133, %v5983
  %v6135 = vpop.permute.xlu0 %6134
  %6136 = vset.pattern.permute.xlu0 0
  %6137 = vperm.xlu0 %6136, %v5984
  %v6138 = vpop.permute.xlu0 %6137
  %6139 = vset.pattern.permute.xlu0 0
  %6140 = vperm.xlu0 %6139, %v5985
  %v6141 = vpop.permute.xlu0 %6140
  %6142 = vset.pattern.permute.xlu0 0
  %6143 = vperm.xlu0 %6142, %v5986
  %v6144 = vpop.permute.xlu0 %6143
  %6145 = vset.pattern.permute.xlu0 0
  %6146 = vperm.xlu0 %6145, %v5987
  %v6147 = vpop.permute.xlu0 %6146
  %6148 = vset.pattern.permute.xlu0 0
  %6149 = vperm.xlu0 %6148, %v5988
  %v6150 = vpop.permute.xlu0 %6149
  %6151 = vset.pattern.permute.xlu0 0
  %6152 = vperm.xlu0 %6151, %v5989
  %v6153 = vpop.permute.xlu0 %6152
  %6154 = vset.pattern.permute.xlu0 0
  %6155 = vperm.xlu0 %6154, %v5990
  %v6156 = vpop.permute.xlu0 %6155
  %6157 = vset.pattern.permute.xlu0 0
  %6158 = vperm.xlu0 %6157, %v5991
  %v6159 = vpop.permute.xlu0 %6158
  %6160 = vset.pattern.permute.xlu0 0
  %6161 = vperm.xlu0 %6160, %v5992
  %v6162 = vpop.permute.xlu0 %6161
  %6163 = vset.pattern.permute.xlu0 0
  %6164 = vperm.xlu0 %6163, %v5993
  %v6165 = vpop.permute.xlu0 %6164
  %6166 = vset.pattern.permute.xlu0 0
  %6167 = vperm.xlu0 %6166, %v5994
  %v6168 = vpop.permute.xlu0 %6167
  %6169 = vset.pattern.permute.xlu0 0
  %6170 = vperm.xlu0 %6169, %v5995
  %v6171 = vpop.permute.xlu0 %6170
  %6172 = vset.pattern.permute.xlu0 0
  %6173 = vperm.xlu0 %6172, %v5996
  %v6174 = vpop.permute.xlu0 %6173
  %6175 = vset.pattern.permute.xlu0 0
  %6176 = vperm.xlu0 %6175, %v5997
  %v6177 = vpop.permute.xlu0 %6176
  %6178 = vset.pattern.permute.xlu0 0
  %6179 = vperm.xlu0 %6178, %v5998
  %v6180 = vpop.permute.xlu0 %6179
  %6181 = vset.pattern.permute.xlu0 0
  %6182 = vperm.xlu0 %6181, %v5999
  %v6183 = vpop.permute.xlu0 %6182
  %6184 = vset.pattern.permute.xlu0 0
  %6185 = vperm.xlu0 %6184, %v6000
  %v6186 = vpop.permute.xlu0 %6185
  %6187 = vset.pattern.permute.xlu0 0
  %6188 = vperm.xlu0 %6187, %v6001
  %v6189 = vpop.permute.xlu0 %6188
  %6190 = vset.pattern.permute.xlu0 0
  %6191 = vperm.xlu0 %6190, %v6002
  %v6192 = vpop.permute.xlu0 %6191
  %6193 = vset.pattern.permute.xlu0 0
  %6194 = vperm.xlu0 %6193, %v6003
  %v6195 = vpop.permute.xlu0 %6194
  %6196 = vset.pattern.permute.xlu0 0
  %6197 = vperm.xlu0 %6196, %v6004
  %v6198 = vpop.permute.xlu0 %6197
  %6199 = vset.pattern.permute.xlu0 0
  %6200 = vperm.xlu0 %6199, %v6005
  %v6201 = vpop.permute.xlu0 %6200
  %6202 = vset.pattern.permute.xlu0 0
  %6203 = vperm.xlu0 %6202, %v6006
  %v6204 = vpop.permute.xlu0 %6203
  %6205 = vset.pattern.permute.xlu0 0
  %6206 = vperm.xlu0 %6205, %v6007
  %v6207 = vpop.permute.xlu0 %6206
  %6208 = vset.pattern.permute.xlu0 0
  %6209 = vperm.xlu0 %6208, %v6008
  %v6210 = vpop.permute.xlu0 %6209
  %6211 = vset.pattern.permute.xlu0 0
  %6212 = vperm.xlu0 %6211, %v6009
  %v6213 = vpop.permute.xlu0 %6212
  %6214 = vset.pattern.permute.xlu0 0
  %6215 = vperm.xlu0 %6214, %v6010
  %v6216 = vpop.permute.xlu0 %6215
  %6217 = vset.pattern.permute.xlu0 0
  %6218 = vperm.xlu0 %6217, %v6011
  %v6219 = vpop.permute.xlu0 %6218
  %6220 = vset.pattern.permute.xlu0 0
  %6221 = vperm.xlu0 %6220, %v6012
  %v6222 = vpop.permute.xlu0 %6221
  %6223 = vset.pattern.permute.xlu0 0
  %6224 = vperm.xlu0 %6223, %v6013
  %v6225 = vpop.permute.xlu0 %6224
  %6226 = vset.pattern.permute.xlu0 0
  %6227 = vperm.xlu0 %6226, %v6014
  %v6228 = vpop.permute.xlu0 %6227
  %6229 = vset.pattern.permute.xlu0 0
  %6230 = vperm.xlu0 %6229, %v6015
  %v6231 = vpop.permute.xlu0 %6230
  %6232 = vset.pattern.permute.xlu0 0
  %6233 = vperm.xlu0 %6232, %v6016
  %v6234 = vpop.permute.xlu0 %6233
  %6235 = vset.pattern.permute.xlu0 0
  %6236 = vperm.xlu0 %6235, %v6017
  %v6237 = vpop.permute.xlu0 %6236
  %6238 = vset.pattern.permute.xlu0 0
  %6239 = vperm.xlu0 %6238, %v6018
  %v6240 = vpop.permute.xlu0 %6239
  %6241 = vset.pattern.permute.xlu0 0
  %6242 = vperm.xlu0 %6241, %v6019
  %v6243 = vpop.permute.xlu0 %6242
  %6244 = vset.pattern.permute.xlu0 0
  %6245 = vperm.xlu0 %6244, %v6020
  %v6246 = vpop.permute.xlu0 %6245
  %6247 = vset.pattern.permute.xlu0 0
  %6248 = vperm.xlu0 %6247, %v6021
  %v6249 = vpop.permute.xlu0 %6248
  %6250 = vset.pattern.permute.xlu0 0
  %6251 = vperm.xlu0 %6250, %v6022
  %v6252 = vpop.permute.xlu0 %6251
  %6253 = vset.pattern.permute.xlu0 0
  %6254 = vperm.xlu0 %6253, %v6023
  %v6255 = vpop.permute.xlu0 %6254
  %6256 = vset.pattern.permute.xlu0 0
  %6257 = vperm.xlu0 %6256, %v6024
  %v6258 = vpop.permute.xlu0 %6257
  %6259 = vset.pattern.permute.xlu0 0
  %6260 = vperm.xlu0 %6259, %v6025
  %v6261 = vpop.permute.xlu0 %6260
  %6262 = vset.pattern.permute.xlu0 0
  %6263 = vperm.xlu0 %6262, %v6026
  %v6264 = vpop.permute.xlu0 %6263
  %6265 = vset.pattern.permute.xlu0 0
  %6266 = vperm.xlu0 %6265, %v6027
  %v6267 = vpop.permute.xlu0 %6266
  %6268 = vset.pattern.permute.xlu0 0
  %6269 = vperm.xlu0 %6268, %v6028
  %v6270 = vpop.permute.xlu0 %6269
  %6271 = vset.pattern.permute.xlu0 0
  %6272 = vperm.xlu0 %6271, %v6029
  %v6273 = vpop.permute.xlu0 %6272
  %6274 = vset.pattern.permute.xlu0 0
  %6275 = vperm.xlu0 %6274, %v6030
  %v6276 = vpop.permute.xlu0 %6275
  %6277 = vset.pattern.permute.xlu0 0
  %6278 = vperm.xlu0 %6277, %v6031
  %v6279 = vpop.permute.xlu0 %6278
  %6280 = vset.pattern.permute.xlu0 0
  %6281 = vperm.xlu0 %6280, %v6032
  %v6282 = vpop.permute.xlu0 %6281
  %6283 = vset.pattern.permute.xlu0 0
  %6284 = vperm.xlu0 %6283, %v6033
  %v6285 = vpop.permute.xlu0 %6284
  %6286 = vset.pattern.permute.xlu0 0
  %6287 = vperm.xlu0 %6286, %v6034
  %v6288 = vpop.permute.xlu0 %6287
  %6289 = vset.pattern.permute.xlu0 0
  %6290 = vperm.xlu0 %6289, %v6035
  %v6291 = vpop.permute.xlu0 %6290
  %v6292 = vperm.slane %v6102, %v1277
  %v6293 = vperm.slane %v6105, %v1279
  %v6294 = vsel %vm1281, %v6293, %v6292
  %v6295 = vperm.slane %v6108, %v1277
  %v6296 = vperm.slane %v6111, %v1279
  %v6297 = vsel %vm1281, %v6296, %v6295
  %v6298 = vperm.slane %v6114, %v1277
  %v6299 = vperm.slane %v6117, %v1279
  %v6300 = vsel %vm1281, %v6299, %v6298
  %v6301 = vperm.slane %v6120, %v1277
  %v6302 = vperm.slane %v6123, %v1279
  %v6303 = vsel %vm1281, %v6302, %v6301
  %v6304 = vperm.slane %v6126, %v1277
  %v6305 = vperm.slane %v6129, %v1279
  %v6306 = vsel %vm1281, %v6305, %v6304
  %v6307 = vperm.slane %v6132, %v1277
  %v6308 = vperm.slane %v6135, %v1279
  %v6309 = vsel %vm1281, %v6308, %v6307
  %v6310 = vperm.slane %v6138, %v1277
  %v6311 = vperm.slane %v6141, %v1279
  %v6312 = vsel %vm1281, %v6311, %v6310
  %v6313 = vperm.slane %v6144, %v1277
  %v6314 = vperm.slane %v6147, %v1279
  %v6315 = vsel %vm1281, %v6314, %v6313
  %v6316 = vperm.slane %v6150, %v1277
  %v6317 = vperm.slane %v6153, %v1279
  %v6318 = vsel %vm1281, %v6317, %v6316
  %v6319 = vperm.slane %v6156, %v1277
  %v6320 = vperm.slane %v6159, %v1279
  %v6321 = vsel %vm1281, %v6320, %v6319
  %v6322 = vperm.slane %v6162, %v1277
  %v6323 = vperm.slane %v6165, %v1279
  %v6324 = vsel %vm1281, %v6323, %v6322
  %v6325 = vperm.slane %v6168, %v1277
  %v6326 = vperm.slane %v6171, %v1279
  %v6327 = vsel %vm1281, %v6326, %v6325
  %v6328 = vperm.slane %v6174, %v1277
  %v6329 = vperm.slane %v6177, %v1279
  %v6330 = vsel %vm1281, %v6329, %v6328
  %v6331 = vperm.slane %v6180, %v1277
  %v6332 = vperm.slane %v6183, %v1279
  %v6333 = vsel %vm1281, %v6332, %v6331
  %v6334 = vperm.slane %v6186, %v1277
  %v6335 = vperm.slane %v6189, %v1279
  %v6336 = vsel %vm1281, %v6335, %v6334
  %v6337 = vperm.slane %v6192, %v1277
  %v6338 = vperm.slane %v6195, %v1279
  %v6339 = vsel %vm1281, %v6338, %v6337
  %v6340 = vperm.slane %v6198, %v1277
  %v6341 = vperm.slane %v6201, %v1279
  %v6342 = vsel %vm1281, %v6341, %v6340
  %v6343 = vperm.slane %v6204, %v1277
  %v6344 = vperm.slane %v6207, %v1279
  %v6345 = vsel %vm1281, %v6344, %v6343
  %v6346 = vperm.slane %v6210, %v1277
  %v6347 = vperm.slane %v6213, %v1279
  %v6348 = vsel %vm1281, %v6347, %v6346
  %v6349 = vperm.slane %v6216, %v1277
  %v6350 = vperm.slane %v6219, %v1279
  %v6351 = vsel %vm1281, %v6350, %v6349
  %v6352 = vperm.slane %v6222, %v1277
  %v6353 = vperm.slane %v6225, %v1279
  %v6354 = vsel %vm1281, %v6353, %v6352
  %v6355 = vperm.slane %v6228, %v1277
  %v6356 = vperm.slane %v6231, %v1279
  %v6357 = vsel %vm1281, %v6356, %v6355
  %v6358 = vperm.slane %v6234, %v1277
  %v6359 = vperm.slane %v6237, %v1279
  %v6360 = vsel %vm1281, %v6359, %v6358
  %v6361 = vperm.slane %v6240, %v1277
  %v6362 = vperm.slane %v6243, %v1279
  %v6363 = vsel %vm1281, %v6362, %v6361
  %v6364 = vperm.slane %v6246, %v1277
  %v6365 = vperm.slane %v6249, %v1279
  %v6366 = vsel %vm1281, %v6365, %v6364
  %v6367 = vperm.slane %v6252, %v1277
  %v6368 = vperm.slane %v6255, %v1279
  %v6369 = vsel %vm1281, %v6368, %v6367
  %v6370 = vperm.slane %v6258, %v1277
  %v6371 = vperm.slane %v6261, %v1279
  %v6372 = vsel %vm1281, %v6371, %v6370
  %v6373 = vperm.slane %v6264, %v1277
  %v6374 = vperm.slane %v6267, %v1279
  %v6375 = vsel %vm1281, %v6374, %v6373
  %v6376 = vperm.slane %v6270, %v1277
  %v6377 = vperm.slane %v6273, %v1279
  %v6378 = vsel %vm1281, %v6377, %v6376
  %v6379 = vperm.slane %v6276, %v1277
  %v6380 = vperm.slane %v6279, %v1279
  %v6381 = vsel %vm1281, %v6380, %v6379
  %v6382 = vperm.slane %v6282, %v1277
  %v6383 = vperm.slane %v6285, %v1279
  %v6384 = vsel %vm1281, %v6383, %v6382
  %v6385 = vperm.slane %v6288, %v1277
  %v6386 = vperm.slane %v6291, %v1279
  %v6387 = vsel %vm1281, %v6386, %v6385
  %v6388 = vsel %vm1376, %v6297, %v6294
  %v6389 = vsel %vm1378, %v6300, %v6388
  %v6390 = vsel %vm1380, %v6303, %v6389
  %v6391 = vsel %vm1382, %v6306, %v6390
  %v6392 = vsel %vm1384, %v6309, %v6391
  %v6393 = vsel %vm1386, %v6312, %v6392
  %v6394 = vsel %vm1388, %v6315, %v6393
  %v6395 = vsel %vm1376, %v6321, %v6318
  %v6396 = vsel %vm1378, %v6324, %v6395
  %v6397 = vsel %vm1380, %v6327, %v6396
  %v6398 = vsel %vm1382, %v6330, %v6397
  %v6399 = vsel %vm1384, %v6333, %v6398
  %v6400 = vsel %vm1386, %v6336, %v6399
  %v6401 = vsel %vm1388, %v6339, %v6400
  %v6402 = vsel %vm1376, %v6345, %v6342
  %v6403 = vsel %vm1378, %v6348, %v6402
  %v6404 = vsel %vm1380, %v6351, %v6403
  %v6405 = vsel %vm1382, %v6354, %v6404
  %v6406 = vsel %vm1384, %v6357, %v6405
  %v6407 = vsel %vm1386, %v6360, %v6406
  %v6408 = vsel %vm1388, %v6363, %v6407
  %v6409 = vsel %vm1376, %v6369, %v6366
  %v6410 = vsel %vm1378, %v6372, %v6409
  %v6411 = vsel %vm1380, %v6375, %v6410
  %v6412 = vsel %vm1382, %v6378, %v6411
  %v6413 = vsel %vm1384, %v6381, %v6412
  %v6414 = vsel %vm1386, %v6384, %v6413
  %v6415 = vsel %vm1388, %v6387, %v6414
  %v6420 = vsel %vm3991, %v6394, 0.0
  %6421 = vadd.xlane.f32.xlu0 %v6420
  %v6422 = vpop.xlane.xlu0 %6421
  %v6423 = vsel %vm3991, %v6401, 0.0
  %6424 = vadd.xlane.f32.xlu0 %v6423
  %v6425 = vpop.xlane.xlu0 %6424
  %v6426 = vsel %vm3991, %v6408, 0.0
  %6427 = vadd.xlane.f32.xlu0 %v6426
  %v6428 = vpop.xlane.xlu0 %6427
  %v6429 = vsel %vm3991, %v6415, 0.0
  %6430 = vadd.xlane.f32.xlu0 %v6429
  %v6431 = vpop.xlane.xlu0 %6430
  %v6436 = vperm.slane %v1619, 0
  %v6437 = vlaneseq
  %v6438 = vshrl.u32 %v6437, 7
  %6440 = vset.pattern.permute.xlu0 %v6438
  %6441 = vperm.xlu0 %6440, %v6436
  %v6442 = vpop.permute.xlu0 %6441
  %v6443 = vlaneseq
  %v6444 = vshrl.u32 %v6443, 7
  %v6445 = vadd.s32 %v6444, 8
  %6446 = vset.pattern.permute.xlu0 %v6445
  %6447 = vperm.xlu0 %6446, %v6436
  %v6448 = vpop.permute.xlu0 %6447
  %v6449 = vperm.slane %v1619, 1
  %v6450 = vlaneseq
  %v6451 = vshrl.u32 %v6450, 7
  %6453 = vset.pattern.permute.xlu0 %v6451
  %6454 = vperm.xlu0 %6453, %v6449
  %v6455 = vpop.permute.xlu0 %6454
  %v6456 = vlaneseq
  %v6457 = vshrl.u32 %v6456, 7
  %v6458 = vadd.s32 %v6457, 8
  %6459 = vset.pattern.permute.xlu0 %v6458
  %6460 = vperm.xlu0 %6459, %v6449
  %v6461 = vpop.permute.xlu0 %6460
  %v6462 = vperm.slane %v1619, 2
  %v6463 = vlaneseq
  %v6464 = vshrl.u32 %v6463, 7
  %6466 = vset.pattern.permute.xlu0 %v6464
  %6467 = vperm.xlu0 %6466, %v6462
  %v6468 = vpop.permute.xlu0 %6467
  %v6469 = vlaneseq
  %v6470 = vshrl.u32 %v6469, 7
  %v6471 = vadd.s32 %v6470, 8
  %6472 = vset.pattern.permute.xlu0 %v6471
  %6473 = vperm.xlu0 %6472, %v6462
  %v6474 = vpop.permute.xlu0 %6473
  %v6475 = vperm.slane %v1619, 3
  %v6476 = vlaneseq
  %v6477 = vshrl.u32 %v6476, 7
  %6479 = vset.pattern.permute.xlu0 %v6477
  %6480 = vperm.xlu0 %6479, %v6475
  %v6481 = vpop.permute.xlu0 %6480
  %v6482 = vlaneseq
  %v6483 = vshrl.u32 %v6482, 7
  %v6484 = vadd.s32 %v6483, 8
  %6485 = vset.pattern.permute.xlu0 %v6484
  %6486 = vperm.xlu0 %6485, %v6475
  %v6487 = vpop.permute.xlu0 %6486
  %v6488 = vperm.slane %v1619, 4
  %v6489 = vlaneseq
  %v6490 = vshrl.u32 %v6489, 7
  %6492 = vset.pattern.permute.xlu0 %v6490
  %6493 = vperm.xlu0 %6492, %v6488
  %v6494 = vpop.permute.xlu0 %6493
  %v6495 = vlaneseq
  %v6496 = vshrl.u32 %v6495, 7
  %v6497 = vadd.s32 %v6496, 8
  %6498 = vset.pattern.permute.xlu0 %v6497
  %6499 = vperm.xlu0 %6498, %v6488
  %v6500 = vpop.permute.xlu0 %6499
  %v6501 = vperm.slane %v1619, 5
  %v6502 = vlaneseq
  %v6503 = vshrl.u32 %v6502, 7
  %6505 = vset.pattern.permute.xlu0 %v6503
  %6506 = vperm.xlu0 %6505, %v6501
  %v6507 = vpop.permute.xlu0 %6506
  %v6508 = vlaneseq
  %v6509 = vshrl.u32 %v6508, 7
  %v6510 = vadd.s32 %v6509, 8
  %6511 = vset.pattern.permute.xlu0 %v6510
  %6512 = vperm.xlu0 %6511, %v6501
  %v6513 = vpop.permute.xlu0 %6512
  %v6514 = vperm.slane %v1619, 6
  %v6515 = vlaneseq
  %v6516 = vshrl.u32 %v6515, 7
  %6518 = vset.pattern.permute.xlu0 %v6516
  %6519 = vperm.xlu0 %6518, %v6514
  %v6520 = vpop.permute.xlu0 %6519
  %v6521 = vlaneseq
  %v6522 = vshrl.u32 %v6521, 7
  %v6523 = vadd.s32 %v6522, 8
  %6524 = vset.pattern.permute.xlu0 %v6523
  %6525 = vperm.xlu0 %6524, %v6514
  %v6526 = vpop.permute.xlu0 %6525
  %v6527 = vperm.slane %v1619, 7
  %v6528 = vlaneseq
  %v6529 = vshrl.u32 %v6528, 7
  %6531 = vset.pattern.permute.xlu0 %v6529
  %6532 = vperm.xlu0 %6531, %v6527
  %v6533 = vpop.permute.xlu0 %6532
  %v6534 = vlaneseq
  %v6535 = vshrl.u32 %v6534, 7
  %v6536 = vadd.s32 %v6535, 8
  %6537 = vset.pattern.permute.xlu0 %v6536
  %6538 = vperm.xlu0 %6537, %v6527
  %v6539 = vpop.permute.xlu0 %6538
  %v6540 = vperm.slane %v1620, 0
  %v6541 = vlaneseq
  %v6542 = vshrl.u32 %v6541, 7
  %6544 = vset.pattern.permute.xlu0 %v6542
  %6545 = vperm.xlu0 %6544, %v6540
  %v6546 = vpop.permute.xlu0 %6545
  %v6547 = vlaneseq
  %v6548 = vshrl.u32 %v6547, 7
  %v6549 = vadd.s32 %v6548, 8
  %6550 = vset.pattern.permute.xlu0 %v6549
  %6551 = vperm.xlu0 %6550, %v6540
  %v6552 = vpop.permute.xlu0 %6551
  %v6553 = vperm.slane %v1620, 1
  %v6554 = vlaneseq
  %v6555 = vshrl.u32 %v6554, 7
  %6557 = vset.pattern.permute.xlu0 %v6555
  %6558 = vperm.xlu0 %6557, %v6553
  %v6559 = vpop.permute.xlu0 %6558
  %v6560 = vlaneseq
  %v6561 = vshrl.u32 %v6560, 7
  %v6562 = vadd.s32 %v6561, 8
  %6563 = vset.pattern.permute.xlu0 %v6562
  %6564 = vperm.xlu0 %6563, %v6553
  %v6565 = vpop.permute.xlu0 %6564
  %v6566 = vperm.slane %v1620, 2
  %v6567 = vlaneseq
  %v6568 = vshrl.u32 %v6567, 7
  %6570 = vset.pattern.permute.xlu0 %v6568
  %6571 = vperm.xlu0 %6570, %v6566
  %v6572 = vpop.permute.xlu0 %6571
  %v6573 = vlaneseq
  %v6574 = vshrl.u32 %v6573, 7
  %v6575 = vadd.s32 %v6574, 8
  %6576 = vset.pattern.permute.xlu0 %v6575
  %6577 = vperm.xlu0 %6576, %v6566
  %v6578 = vpop.permute.xlu0 %6577
  %v6579 = vperm.slane %v1620, 3
  %v6580 = vlaneseq
  %v6581 = vshrl.u32 %v6580, 7
  %6583 = vset.pattern.permute.xlu0 %v6581
  %6584 = vperm.xlu0 %6583, %v6579
  %v6585 = vpop.permute.xlu0 %6584
  %v6586 = vlaneseq
  %v6587 = vshrl.u32 %v6586, 7
  %v6588 = vadd.s32 %v6587, 8
  %6589 = vset.pattern.permute.xlu0 %v6588
  %6590 = vperm.xlu0 %6589, %v6579
  %v6591 = vpop.permute.xlu0 %6590
  %v6592 = vperm.slane %v1620, 4
  %v6593 = vlaneseq
  %v6594 = vshrl.u32 %v6593, 7
  %6596 = vset.pattern.permute.xlu0 %v6594
  %6597 = vperm.xlu0 %6596, %v6592
  %v6598 = vpop.permute.xlu0 %6597
  %v6599 = vlaneseq
  %v6600 = vshrl.u32 %v6599, 7
  %v6601 = vadd.s32 %v6600, 8
  %6602 = vset.pattern.permute.xlu0 %v6601
  %6603 = vperm.xlu0 %6602, %v6592
  %v6604 = vpop.permute.xlu0 %6603
  %v6605 = vperm.slane %v1620, 5
  %v6606 = vlaneseq
  %v6607 = vshrl.u32 %v6606, 7
  %6609 = vset.pattern.permute.xlu0 %v6607
  %6610 = vperm.xlu0 %6609, %v6605
  %v6611 = vpop.permute.xlu0 %6610
  %v6612 = vlaneseq
  %v6613 = vshrl.u32 %v6612, 7
  %v6614 = vadd.s32 %v6613, 8
  %6615 = vset.pattern.permute.xlu0 %v6614
  %6616 = vperm.xlu0 %6615, %v6605
  %v6617 = vpop.permute.xlu0 %6616
  %v6618 = vperm.slane %v1620, 6
  %v6619 = vlaneseq
  %v6620 = vshrl.u32 %v6619, 7
  %6622 = vset.pattern.permute.xlu0 %v6620
  %6623 = vperm.xlu0 %6622, %v6618
  %v6624 = vpop.permute.xlu0 %6623
  %v6625 = vlaneseq
  %v6626 = vshrl.u32 %v6625, 7
  %v6627 = vadd.s32 %v6626, 8
  %6628 = vset.pattern.permute.xlu0 %v6627
  %6629 = vperm.xlu0 %6628, %v6618
  %v6630 = vpop.permute.xlu0 %6629
  %v6631 = vperm.slane %v1620, 7
  %v6632 = vlaneseq
  %v6633 = vshrl.u32 %v6632, 7
  %6635 = vset.pattern.permute.xlu0 %v6633
  %6636 = vperm.xlu0 %6635, %v6631
  %v6637 = vpop.permute.xlu0 %6636
  %v6638 = vlaneseq
  %v6639 = vshrl.u32 %v6638, 7
  %v6640 = vadd.s32 %v6639, 8
  %6641 = vset.pattern.permute.xlu0 %v6640
  %6642 = vperm.xlu0 %6641, %v6631
  %v6643 = vpop.permute.xlu0 %6642
  %v6644 = vperm.slane %v1621, 0
  %v6645 = vlaneseq
  %v6646 = vshrl.u32 %v6645, 7
  %6648 = vset.pattern.permute.xlu0 %v6646
  %6649 = vperm.xlu0 %6648, %v6644
  %v6650 = vpop.permute.xlu0 %6649
  %v6651 = vlaneseq
  %v6652 = vshrl.u32 %v6651, 7
  %v6653 = vadd.s32 %v6652, 8
  %6654 = vset.pattern.permute.xlu0 %v6653
  %6655 = vperm.xlu0 %6654, %v6644
  %v6656 = vpop.permute.xlu0 %6655
  %v6657 = vperm.slane %v1621, 1
  %v6658 = vlaneseq
  %v6659 = vshrl.u32 %v6658, 7
  %6661 = vset.pattern.permute.xlu0 %v6659
  %6662 = vperm.xlu0 %6661, %v6657
  %v6663 = vpop.permute.xlu0 %6662
  %v6664 = vlaneseq
  %v6665 = vshrl.u32 %v6664, 7
  %v6666 = vadd.s32 %v6665, 8
  %6667 = vset.pattern.permute.xlu0 %v6666
  %6668 = vperm.xlu0 %6667, %v6657
  %v6669 = vpop.permute.xlu0 %6668
  %v6670 = vperm.slane %v1621, 2
  %v6671 = vlaneseq
  %v6672 = vshrl.u32 %v6671, 7
  %6674 = vset.pattern.permute.xlu0 %v6672
  %6675 = vperm.xlu0 %6674, %v6670
  %v6676 = vpop.permute.xlu0 %6675
  %v6677 = vlaneseq
  %v6678 = vshrl.u32 %v6677, 7
  %v6679 = vadd.s32 %v6678, 8
  %6680 = vset.pattern.permute.xlu0 %v6679
  %6681 = vperm.xlu0 %6680, %v6670
  %v6682 = vpop.permute.xlu0 %6681
  %v6683 = vperm.slane %v1621, 3
  %v6684 = vlaneseq
  %v6685 = vshrl.u32 %v6684, 7
  %6687 = vset.pattern.permute.xlu0 %v6685
  %6688 = vperm.xlu0 %6687, %v6683
  %v6689 = vpop.permute.xlu0 %6688
  %v6690 = vlaneseq
  %v6691 = vshrl.u32 %v6690, 7
  %v6692 = vadd.s32 %v6691, 8
  %6693 = vset.pattern.permute.xlu0 %v6692
  %6694 = vperm.xlu0 %6693, %v6683
  %v6695 = vpop.permute.xlu0 %6694
  %v6696 = vperm.slane %v1621, 4
  %v6697 = vlaneseq
  %v6698 = vshrl.u32 %v6697, 7
  %6700 = vset.pattern.permute.xlu0 %v6698
  %6701 = vperm.xlu0 %6700, %v6696
  %v6702 = vpop.permute.xlu0 %6701
  %v6703 = vlaneseq
  %v6704 = vshrl.u32 %v6703, 7
  %v6705 = vadd.s32 %v6704, 8
  %6706 = vset.pattern.permute.xlu0 %v6705
  %6707 = vperm.xlu0 %6706, %v6696
  %v6708 = vpop.permute.xlu0 %6707
  %v6709 = vperm.slane %v1621, 5
  %v6710 = vlaneseq
  %v6711 = vshrl.u32 %v6710, 7
  %6713 = vset.pattern.permute.xlu0 %v6711
  %6714 = vperm.xlu0 %6713, %v6709
  %v6715 = vpop.permute.xlu0 %6714
  %v6716 = vlaneseq
  %v6717 = vshrl.u32 %v6716, 7
  %v6718 = vadd.s32 %v6717, 8
  %6719 = vset.pattern.permute.xlu0 %v6718
  %6720 = vperm.xlu0 %6719, %v6709
  %v6721 = vpop.permute.xlu0 %6720
  %v6722 = vperm.slane %v1621, 6
  %v6723 = vlaneseq
  %v6724 = vshrl.u32 %v6723, 7
  %6726 = vset.pattern.permute.xlu0 %v6724
  %6727 = vperm.xlu0 %6726, %v6722
  %v6728 = vpop.permute.xlu0 %6727
  %v6729 = vlaneseq
  %v6730 = vshrl.u32 %v6729, 7
  %v6731 = vadd.s32 %v6730, 8
  %6732 = vset.pattern.permute.xlu0 %v6731
  %6733 = vperm.xlu0 %6732, %v6722
  %v6734 = vpop.permute.xlu0 %6733
  %v6735 = vperm.slane %v1621, 7
  %v6736 = vlaneseq
  %v6737 = vshrl.u32 %v6736, 7
  %6739 = vset.pattern.permute.xlu0 %v6737
  %6740 = vperm.xlu0 %6739, %v6735
  %v6741 = vpop.permute.xlu0 %6740
  %v6742 = vlaneseq
  %v6743 = vshrl.u32 %v6742, 7
  %v6744 = vadd.s32 %v6743, 8
  %6745 = vset.pattern.permute.xlu0 %v6744
  %6746 = vperm.xlu0 %6745, %v6735
  %v6747 = vpop.permute.xlu0 %6746
  %v6748 = vperm.slane %v1622, 0
  %v6749 = vlaneseq
  %v6750 = vshrl.u32 %v6749, 7
  %6752 = vset.pattern.permute.xlu0 %v6750
  %6753 = vperm.xlu0 %6752, %v6748
  %v6754 = vpop.permute.xlu0 %6753
  %v6755 = vlaneseq
  %v6756 = vshrl.u32 %v6755, 7
  %v6757 = vadd.s32 %v6756, 8
  %6758 = vset.pattern.permute.xlu0 %v6757
  %6759 = vperm.xlu0 %6758, %v6748
  %v6760 = vpop.permute.xlu0 %6759
  %v6761 = vperm.slane %v1622, 1
  %v6762 = vlaneseq
  %v6763 = vshrl.u32 %v6762, 7
  %6765 = vset.pattern.permute.xlu0 %v6763
  %6766 = vperm.xlu0 %6765, %v6761
  %v6767 = vpop.permute.xlu0 %6766
  %v6768 = vlaneseq
  %v6769 = vshrl.u32 %v6768, 7
  %v6770 = vadd.s32 %v6769, 8
  %6771 = vset.pattern.permute.xlu0 %v6770
  %6772 = vperm.xlu0 %6771, %v6761
  %v6773 = vpop.permute.xlu0 %6772
  %v6774 = vperm.slane %v1622, 2
  %v6775 = vlaneseq
  %v6776 = vshrl.u32 %v6775, 7
  %6778 = vset.pattern.permute.xlu0 %v6776
  %6779 = vperm.xlu0 %6778, %v6774
  %v6780 = vpop.permute.xlu0 %6779
  %v6781 = vlaneseq
  %v6782 = vshrl.u32 %v6781, 7
  %v6783 = vadd.s32 %v6782, 8
  %6784 = vset.pattern.permute.xlu0 %v6783
  %6785 = vperm.xlu0 %6784, %v6774
  %v6786 = vpop.permute.xlu0 %6785
  %v6787 = vperm.slane %v1622, 3
  %v6788 = vlaneseq
  %v6789 = vshrl.u32 %v6788, 7
  %6791 = vset.pattern.permute.xlu0 %v6789
  %6792 = vperm.xlu0 %6791, %v6787
  %v6793 = vpop.permute.xlu0 %6792
  %v6794 = vlaneseq
  %v6795 = vshrl.u32 %v6794, 7
  %v6796 = vadd.s32 %v6795, 8
  %6797 = vset.pattern.permute.xlu0 %v6796
  %6798 = vperm.xlu0 %6797, %v6787
  %v6799 = vpop.permute.xlu0 %6798
  %v6800 = vperm.slane %v1622, 4
  %v6801 = vlaneseq
  %v6802 = vshrl.u32 %v6801, 7
  %6804 = vset.pattern.permute.xlu0 %v6802
  %6805 = vperm.xlu0 %6804, %v6800
  %v6806 = vpop.permute.xlu0 %6805
  %v6807 = vlaneseq
  %v6808 = vshrl.u32 %v6807, 7
  %v6809 = vadd.s32 %v6808, 8
  %6810 = vset.pattern.permute.xlu0 %v6809
  %6811 = vperm.xlu0 %6810, %v6800
  %v6812 = vpop.permute.xlu0 %6811
  %v6813 = vperm.slane %v1622, 5
  %v6814 = vlaneseq
  %v6815 = vshrl.u32 %v6814, 7
  %6817 = vset.pattern.permute.xlu0 %v6815
  %6818 = vperm.xlu0 %6817, %v6813
  %v6819 = vpop.permute.xlu0 %6818
  %v6820 = vlaneseq
  %v6821 = vshrl.u32 %v6820, 7
  %v6822 = vadd.s32 %v6821, 8
  %6823 = vset.pattern.permute.xlu0 %v6822
  %6824 = vperm.xlu0 %6823, %v6813
  %v6825 = vpop.permute.xlu0 %6824
  %v6826 = vperm.slane %v1622, 6
  %v6827 = vlaneseq
  %v6828 = vshrl.u32 %v6827, 7
  %6830 = vset.pattern.permute.xlu0 %v6828
  %6831 = vperm.xlu0 %6830, %v6826
  %v6832 = vpop.permute.xlu0 %6831
  %v6833 = vlaneseq
  %v6834 = vshrl.u32 %v6833, 7
  %v6835 = vadd.s32 %v6834, 8
  %6836 = vset.pattern.permute.xlu0 %v6835
  %6837 = vperm.xlu0 %6836, %v6826
  %v6838 = vpop.permute.xlu0 %6837
  %v6839 = vperm.slane %v1622, 7
  %v6840 = vlaneseq
  %v6841 = vshrl.u32 %v6840, 7
  %6843 = vset.pattern.permute.xlu0 %v6841
  %6844 = vperm.xlu0 %6843, %v6839
  %v6845 = vpop.permute.xlu0 %6844
  %v6846 = vlaneseq
  %v6847 = vshrl.u32 %v6846, 7
  %v6848 = vadd.s32 %v6847, 8
  %6849 = vset.pattern.permute.xlu0 %v6848
  %6850 = vperm.xlu0 %6849, %v6839
  %v6851 = vpop.permute.xlu0 %6850
  %v6916 = vmul.f32 %v4541, %v6442
  %v6917 = vmul.f32 %v4543, %v6448
  %v6918 = vmul.f32 %v4545, %v6455
  %v6919 = vmul.f32 %v4547, %v6461
  %v6920 = vmul.f32 %v4549, %v6468
  %v6921 = vmul.f32 %v4551, %v6474
  %v6922 = vmul.f32 %v4553, %v6481
  %v6923 = vmul.f32 %v4555, %v6487
  %v6924 = vmul.f32 %v4557, %v6494
  %v6925 = vmul.f32 %v4559, %v6500
  %v6926 = vmul.f32 %v4561, %v6507
  %v6927 = vmul.f32 %v4563, %v6513
  %v6928 = vmul.f32 %v4565, %v6520
  %v6929 = vmul.f32 %v4567, %v6526
  %v6930 = vmul.f32 %v4569, %v6533
  %v6931 = vmul.f32 %v4571, %v6539
  %v6932 = vmul.f32 %v4573, %v6546
  %v6933 = vmul.f32 %v4575, %v6552
  %v6934 = vmul.f32 %v4577, %v6559
  %v6935 = vmul.f32 %v4579, %v6565
  %v6936 = vmul.f32 %v4581, %v6572
  %v6937 = vmul.f32 %v4583, %v6578
  %v6938 = vmul.f32 %v4585, %v6585
  %v6939 = vmul.f32 %v4587, %v6591
  %v6940 = vmul.f32 %v4589, %v6598
  %v6941 = vmul.f32 %v4591, %v6604
  %v6942 = vmul.f32 %v4593, %v6611
  %v6943 = vmul.f32 %v4595, %v6617
  %v6944 = vmul.f32 %v4597, %v6624
  %v6945 = vmul.f32 %v4599, %v6630
  %v6946 = vmul.f32 %v4601, %v6637
  %v6947 = vmul.f32 %v4603, %v6643
  %v6948 = vmul.f32 %v4605, %v6650
  %v6949 = vmul.f32 %v4607, %v6656
  %v6950 = vmul.f32 %v4609, %v6663
  %v6951 = vmul.f32 %v4611, %v6669
  %v6952 = vmul.f32 %v4613, %v6676
  %v6953 = vmul.f32 %v4615, %v6682
  %v6954 = vmul.f32 %v4617, %v6689
  %v6955 = vmul.f32 %v4619, %v6695
  %v6956 = vmul.f32 %v4621, %v6702
  %v6957 = vmul.f32 %v4623, %v6708
  %v6958 = vmul.f32 %v4625, %v6715
  %v6959 = vmul.f32 %v4627, %v6721
  %v6960 = vmul.f32 %v4629, %v6728
  %v6961 = vmul.f32 %v4631, %v6734
  %v6962 = vmul.f32 %v4633, %v6741
  %v6963 = vmul.f32 %v4635, %v6747
  %v6964 = vmul.f32 %v4637, %v6754
  %v6965 = vmul.f32 %v4639, %v6760
  %v6966 = vmul.f32 %v4641, %v6767
  %v6967 = vmul.f32 %v4643, %v6773
  %v6968 = vmul.f32 %v4645, %v6780
  %v6969 = vmul.f32 %v4647, %v6786
  %v6970 = vmul.f32 %v4649, %v6793
  %v6971 = vmul.f32 %v4651, %v6799
  %v6972 = vmul.f32 %v4653, %v6806
  %v6973 = vmul.f32 %v4655, %v6812
  %v6974 = vmul.f32 %v4657, %v6819
  %v6975 = vmul.f32 %v4659, %v6825
  %v6976 = vmul.f32 %v4661, %v6832
  %v6977 = vmul.f32 %v4663, %v6838
  %v6978 = vmul.f32 %v4665, %v6845
  %v6979 = vmul.f32 %v4667, %v6851
  %7044 = vset.pattern.permute.xlu0 0
  %7045 = vperm.xlu0 %7044, %v6916
  %v7046 = vpop.permute.xlu0 %7045
  %7047 = vset.pattern.permute.xlu0 0
  %7048 = vperm.xlu0 %7047, %v6917
  %v7049 = vpop.permute.xlu0 %7048
  %7050 = vset.pattern.permute.xlu0 0
  %7051 = vperm.xlu0 %7050, %v6918
  %v7052 = vpop.permute.xlu0 %7051
  %7053 = vset.pattern.permute.xlu0 0
  %7054 = vperm.xlu0 %7053, %v6919
  %v7055 = vpop.permute.xlu0 %7054
  %7056 = vset.pattern.permute.xlu0 0
  %7057 = vperm.xlu0 %7056, %v6920
  %v7058 = vpop.permute.xlu0 %7057
  %7059 = vset.pattern.permute.xlu0 0
  %7060 = vperm.xlu0 %7059, %v6921
  %v7061 = vpop.permute.xlu0 %7060
  %7062 = vset.pattern.permute.xlu0 0
  %7063 = vperm.xlu0 %7062, %v6922
  %v7064 = vpop.permute.xlu0 %7063
  %7065 = vset.pattern.permute.xlu0 0
  %7066 = vperm.xlu0 %7065, %v6923
  %v7067 = vpop.permute.xlu0 %7066
  %7068 = vset.pattern.permute.xlu0 0
  %7069 = vperm.xlu0 %7068, %v6924
  %v7070 = vpop.permute.xlu0 %7069
  %7071 = vset.pattern.permute.xlu0 0
  %7072 = vperm.xlu0 %7071, %v6925
  %v7073 = vpop.permute.xlu0 %7072
  %7074 = vset.pattern.permute.xlu0 0
  %7075 = vperm.xlu0 %7074, %v6926
  %v7076 = vpop.permute.xlu0 %7075
  %7077 = vset.pattern.permute.xlu0 0
  %7078 = vperm.xlu0 %7077, %v6927
  %v7079 = vpop.permute.xlu0 %7078
  %7080 = vset.pattern.permute.xlu0 0
  %7081 = vperm.xlu0 %7080, %v6928
  %v7082 = vpop.permute.xlu0 %7081
  %7083 = vset.pattern.permute.xlu0 0
  %7084 = vperm.xlu0 %7083, %v6929
  %v7085 = vpop.permute.xlu0 %7084
  %7086 = vset.pattern.permute.xlu0 0
  %7087 = vperm.xlu0 %7086, %v6930
  %v7088 = vpop.permute.xlu0 %7087
  %7089 = vset.pattern.permute.xlu0 0
  %7090 = vperm.xlu0 %7089, %v6931
  %v7091 = vpop.permute.xlu0 %7090
  %7092 = vset.pattern.permute.xlu0 0
  %7093 = vperm.xlu0 %7092, %v6932
  %v7094 = vpop.permute.xlu0 %7093
  %7095 = vset.pattern.permute.xlu0 0
  %7096 = vperm.xlu0 %7095, %v6933
  %v7097 = vpop.permute.xlu0 %7096
  %7098 = vset.pattern.permute.xlu0 0
  %7099 = vperm.xlu0 %7098, %v6934
  %v7100 = vpop.permute.xlu0 %7099
  %7101 = vset.pattern.permute.xlu0 0
  %7102 = vperm.xlu0 %7101, %v6935
  %v7103 = vpop.permute.xlu0 %7102
  %7104 = vset.pattern.permute.xlu0 0
  %7105 = vperm.xlu0 %7104, %v6936
  %v7106 = vpop.permute.xlu0 %7105
  %7107 = vset.pattern.permute.xlu0 0
  %7108 = vperm.xlu0 %7107, %v6937
  %v7109 = vpop.permute.xlu0 %7108
  %7110 = vset.pattern.permute.xlu0 0
  %7111 = vperm.xlu0 %7110, %v6938
  %v7112 = vpop.permute.xlu0 %7111
  %7113 = vset.pattern.permute.xlu0 0
  %7114 = vperm.xlu0 %7113, %v6939
  %v7115 = vpop.permute.xlu0 %7114
  %7116 = vset.pattern.permute.xlu0 0
  %7117 = vperm.xlu0 %7116, %v6940
  %v7118 = vpop.permute.xlu0 %7117
  %7119 = vset.pattern.permute.xlu0 0
  %7120 = vperm.xlu0 %7119, %v6941
  %v7121 = vpop.permute.xlu0 %7120
  %7122 = vset.pattern.permute.xlu0 0
  %7123 = vperm.xlu0 %7122, %v6942
  %v7124 = vpop.permute.xlu0 %7123
  %7125 = vset.pattern.permute.xlu0 0
  %7126 = vperm.xlu0 %7125, %v6943
  %v7127 = vpop.permute.xlu0 %7126
  %7128 = vset.pattern.permute.xlu0 0
  %7129 = vperm.xlu0 %7128, %v6944
  %v7130 = vpop.permute.xlu0 %7129
  %7131 = vset.pattern.permute.xlu0 0
  %7132 = vperm.xlu0 %7131, %v6945
  %v7133 = vpop.permute.xlu0 %7132
  %7134 = vset.pattern.permute.xlu0 0
  %7135 = vperm.xlu0 %7134, %v6946
  %v7136 = vpop.permute.xlu0 %7135
  %7137 = vset.pattern.permute.xlu0 0
  %7138 = vperm.xlu0 %7137, %v6947
  %v7139 = vpop.permute.xlu0 %7138
  %7140 = vset.pattern.permute.xlu0 0
  %7141 = vperm.xlu0 %7140, %v6948
  %v7142 = vpop.permute.xlu0 %7141
  %7143 = vset.pattern.permute.xlu0 0
  %7144 = vperm.xlu0 %7143, %v6949
  %v7145 = vpop.permute.xlu0 %7144
  %7146 = vset.pattern.permute.xlu0 0
  %7147 = vperm.xlu0 %7146, %v6950
  %v7148 = vpop.permute.xlu0 %7147
  %7149 = vset.pattern.permute.xlu0 0
  %7150 = vperm.xlu0 %7149, %v6951
  %v7151 = vpop.permute.xlu0 %7150
  %7152 = vset.pattern.permute.xlu0 0
  %7153 = vperm.xlu0 %7152, %v6952
  %v7154 = vpop.permute.xlu0 %7153
  %7155 = vset.pattern.permute.xlu0 0
  %7156 = vperm.xlu0 %7155, %v6953
  %v7157 = vpop.permute.xlu0 %7156
  %7158 = vset.pattern.permute.xlu0 0
  %7159 = vperm.xlu0 %7158, %v6954
  %v7160 = vpop.permute.xlu0 %7159
  %7161 = vset.pattern.permute.xlu0 0
  %7162 = vperm.xlu0 %7161, %v6955
  %v7163 = vpop.permute.xlu0 %7162
  %7164 = vset.pattern.permute.xlu0 0
  %7165 = vperm.xlu0 %7164, %v6956
  %v7166 = vpop.permute.xlu0 %7165
  %7167 = vset.pattern.permute.xlu0 0
  %7168 = vperm.xlu0 %7167, %v6957
  %v7169 = vpop.permute.xlu0 %7168
  %7170 = vset.pattern.permute.xlu0 0
  %7171 = vperm.xlu0 %7170, %v6958
  %v7172 = vpop.permute.xlu0 %7171
  %7173 = vset.pattern.permute.xlu0 0
  %7174 = vperm.xlu0 %7173, %v6959
  %v7175 = vpop.permute.xlu0 %7174
  %7176 = vset.pattern.permute.xlu0 0
  %7177 = vperm.xlu0 %7176, %v6960
  %v7178 = vpop.permute.xlu0 %7177
  %7179 = vset.pattern.permute.xlu0 0
  %7180 = vperm.xlu0 %7179, %v6961
  %v7181 = vpop.permute.xlu0 %7180
  %7182 = vset.pattern.permute.xlu0 0
  %7183 = vperm.xlu0 %7182, %v6962
  %v7184 = vpop.permute.xlu0 %7183
  %7185 = vset.pattern.permute.xlu0 0
  %7186 = vperm.xlu0 %7185, %v6963
  %v7187 = vpop.permute.xlu0 %7186
  %7188 = vset.pattern.permute.xlu0 0
  %7189 = vperm.xlu0 %7188, %v6964
  %v7190 = vpop.permute.xlu0 %7189
  %7191 = vset.pattern.permute.xlu0 0
  %7192 = vperm.xlu0 %7191, %v6965
  %v7193 = vpop.permute.xlu0 %7192
  %7194 = vset.pattern.permute.xlu0 0
  %7195 = vperm.xlu0 %7194, %v6966
  %v7196 = vpop.permute.xlu0 %7195
  %7197 = vset.pattern.permute.xlu0 0
  %7198 = vperm.xlu0 %7197, %v6967
  %v7199 = vpop.permute.xlu0 %7198
  %7200 = vset.pattern.permute.xlu0 0
  %7201 = vperm.xlu0 %7200, %v6968
  %v7202 = vpop.permute.xlu0 %7201
  %7203 = vset.pattern.permute.xlu0 0
  %7204 = vperm.xlu0 %7203, %v6969
  %v7205 = vpop.permute.xlu0 %7204
  %7206 = vset.pattern.permute.xlu0 0
  %7207 = vperm.xlu0 %7206, %v6970
  %v7208 = vpop.permute.xlu0 %7207
  %7209 = vset.pattern.permute.xlu0 0
  %7210 = vperm.xlu0 %7209, %v6971
  %v7211 = vpop.permute.xlu0 %7210
  %7212 = vset.pattern.permute.xlu0 0
  %7213 = vperm.xlu0 %7212, %v6972
  %v7214 = vpop.permute.xlu0 %7213
  %7215 = vset.pattern.permute.xlu0 0
  %7216 = vperm.xlu0 %7215, %v6973
  %v7217 = vpop.permute.xlu0 %7216
  %7218 = vset.pattern.permute.xlu0 0
  %7219 = vperm.xlu0 %7218, %v6974
  %v7220 = vpop.permute.xlu0 %7219
  %7221 = vset.pattern.permute.xlu0 0
  %7222 = vperm.xlu0 %7221, %v6975
  %v7223 = vpop.permute.xlu0 %7222
  %7224 = vset.pattern.permute.xlu0 0
  %7225 = vperm.xlu0 %7224, %v6976
  %v7226 = vpop.permute.xlu0 %7225
  %7227 = vset.pattern.permute.xlu0 0
  %7228 = vperm.xlu0 %7227, %v6977
  %v7229 = vpop.permute.xlu0 %7228
  %7230 = vset.pattern.permute.xlu0 0
  %7231 = vperm.xlu0 %7230, %v6978
  %v7232 = vpop.permute.xlu0 %7231
  %7233 = vset.pattern.permute.xlu0 0
  %7234 = vperm.xlu0 %7233, %v6979
  %v7235 = vpop.permute.xlu0 %7234
  %v7236 = vperm.slane %v7046, %v1277
  %v7237 = vperm.slane %v7049, %v1279
  %v7238 = vsel %vm1281, %v7237, %v7236
  %v7239 = vperm.slane %v7052, %v1277
  %v7240 = vperm.slane %v7055, %v1279
  %v7241 = vsel %vm1281, %v7240, %v7239
  %v7242 = vperm.slane %v7058, %v1277
  %v7243 = vperm.slane %v7061, %v1279
  %v7244 = vsel %vm1281, %v7243, %v7242
  %v7245 = vperm.slane %v7064, %v1277
  %v7246 = vperm.slane %v7067, %v1279
  %v7247 = vsel %vm1281, %v7246, %v7245
  %v7248 = vperm.slane %v7070, %v1277
  %v7249 = vperm.slane %v7073, %v1279
  %v7250 = vsel %vm1281, %v7249, %v7248
  %v7251 = vperm.slane %v7076, %v1277
  %v7252 = vperm.slane %v7079, %v1279
  %v7253 = vsel %vm1281, %v7252, %v7251
  %v7254 = vperm.slane %v7082, %v1277
  %v7255 = vperm.slane %v7085, %v1279
  %v7256 = vsel %vm1281, %v7255, %v7254
  %v7257 = vperm.slane %v7088, %v1277
  %v7258 = vperm.slane %v7091, %v1279
  %v7259 = vsel %vm1281, %v7258, %v7257
  %v7260 = vperm.slane %v7094, %v1277
  %v7261 = vperm.slane %v7097, %v1279
  %v7262 = vsel %vm1281, %v7261, %v7260
  %v7263 = vperm.slane %v7100, %v1277
  %v7264 = vperm.slane %v7103, %v1279
  %v7265 = vsel %vm1281, %v7264, %v7263
  %v7266 = vperm.slane %v7106, %v1277
  %v7267 = vperm.slane %v7109, %v1279
  %v7268 = vsel %vm1281, %v7267, %v7266
  %v7269 = vperm.slane %v7112, %v1277
  %v7270 = vperm.slane %v7115, %v1279
  %v7271 = vsel %vm1281, %v7270, %v7269
  %v7272 = vperm.slane %v7118, %v1277
  %v7273 = vperm.slane %v7121, %v1279
  %v7274 = vsel %vm1281, %v7273, %v7272
  %v7275 = vperm.slane %v7124, %v1277
  %v7276 = vperm.slane %v7127, %v1279
  %v7277 = vsel %vm1281, %v7276, %v7275
  %v7278 = vperm.slane %v7130, %v1277
  %v7279 = vperm.slane %v7133, %v1279
  %v7280 = vsel %vm1281, %v7279, %v7278
  %v7281 = vperm.slane %v7136, %v1277
  %v7282 = vperm.slane %v7139, %v1279
  %v7283 = vsel %vm1281, %v7282, %v7281
  %v7284 = vperm.slane %v7142, %v1277
  %v7285 = vperm.slane %v7145, %v1279
  %v7286 = vsel %vm1281, %v7285, %v7284
  %v7287 = vperm.slane %v7148, %v1277
  %v7288 = vperm.slane %v7151, %v1279
  %v7289 = vsel %vm1281, %v7288, %v7287
  %v7290 = vperm.slane %v7154, %v1277
  %v7291 = vperm.slane %v7157, %v1279
  %v7292 = vsel %vm1281, %v7291, %v7290
  %v7293 = vperm.slane %v7160, %v1277
  %v7294 = vperm.slane %v7163, %v1279
  %v7295 = vsel %vm1281, %v7294, %v7293
  %v7296 = vperm.slane %v7166, %v1277
  %v7297 = vperm.slane %v7169, %v1279
  %v7298 = vsel %vm1281, %v7297, %v7296
  %v7299 = vperm.slane %v7172, %v1277
  %v7300 = vperm.slane %v7175, %v1279
  %v7301 = vsel %vm1281, %v7300, %v7299
  %v7302 = vperm.slane %v7178, %v1277
  %v7303 = vperm.slane %v7181, %v1279
  %v7304 = vsel %vm1281, %v7303, %v7302
  %v7305 = vperm.slane %v7184, %v1277
  %v7306 = vperm.slane %v7187, %v1279
  %v7307 = vsel %vm1281, %v7306, %v7305
  %v7308 = vperm.slane %v7190, %v1277
  %v7309 = vperm.slane %v7193, %v1279
  %v7310 = vsel %vm1281, %v7309, %v7308
  %v7311 = vperm.slane %v7196, %v1277
  %v7312 = vperm.slane %v7199, %v1279
  %v7313 = vsel %vm1281, %v7312, %v7311
  %v7314 = vperm.slane %v7202, %v1277
  %v7315 = vperm.slane %v7205, %v1279
  %v7316 = vsel %vm1281, %v7315, %v7314
  %v7317 = vperm.slane %v7208, %v1277
  %v7318 = vperm.slane %v7211, %v1279
  %v7319 = vsel %vm1281, %v7318, %v7317
  %v7320 = vperm.slane %v7214, %v1277
  %v7321 = vperm.slane %v7217, %v1279
  %v7322 = vsel %vm1281, %v7321, %v7320
  %v7323 = vperm.slane %v7220, %v1277
  %v7324 = vperm.slane %v7223, %v1279
  %v7325 = vsel %vm1281, %v7324, %v7323
  %v7326 = vperm.slane %v7226, %v1277
  %v7327 = vperm.slane %v7229, %v1279
  %v7328 = vsel %vm1281, %v7327, %v7326
  %v7329 = vperm.slane %v7232, %v1277
  %v7330 = vperm.slane %v7235, %v1279
  %v7331 = vsel %vm1281, %v7330, %v7329
  %v7332 = vsel %vm1376, %v7241, %v7238
  %v7333 = vsel %vm1378, %v7244, %v7332
  %v7334 = vsel %vm1380, %v7247, %v7333
  %v7335 = vsel %vm1382, %v7250, %v7334
  %v7336 = vsel %vm1384, %v7253, %v7335
  %v7337 = vsel %vm1386, %v7256, %v7336
  %v7338 = vsel %vm1388, %v7259, %v7337
  %v7339 = vsel %vm1376, %v7265, %v7262
  %v7340 = vsel %vm1378, %v7268, %v7339
  %v7341 = vsel %vm1380, %v7271, %v7340
  %v7342 = vsel %vm1382, %v7274, %v7341
  %v7343 = vsel %vm1384, %v7277, %v7342
  %v7344 = vsel %vm1386, %v7280, %v7343
  %v7345 = vsel %vm1388, %v7283, %v7344
  %v7346 = vsel %vm1376, %v7289, %v7286
  %v7347 = vsel %vm1378, %v7292, %v7346
  %v7348 = vsel %vm1380, %v7295, %v7347
  %v7349 = vsel %vm1382, %v7298, %v7348
  %v7350 = vsel %vm1384, %v7301, %v7349
  %v7351 = vsel %vm1386, %v7304, %v7350
  %v7352 = vsel %vm1388, %v7307, %v7351
  %v7353 = vsel %vm1376, %v7313, %v7310
  %v7354 = vsel %vm1378, %v7316, %v7353
  %v7355 = vsel %vm1380, %v7319, %v7354
  %v7356 = vsel %vm1382, %v7322, %v7355
  %v7357 = vsel %vm1384, %v7325, %v7356
  %v7358 = vsel %vm1386, %v7328, %v7357
  %v7359 = vsel %vm1388, %v7331, %v7358
  %v7364 = vsel %vm3991, %v7338, 0.0
  %7365 = vadd.xlane.f32.xlu0 %v7364
  %v7366 = vpop.xlane.xlu0 %7365
  %v7367 = vsel %vm3991, %v7345, 0.0
  %7368 = vadd.xlane.f32.xlu0 %v7367
  %v7369 = vpop.xlane.xlu0 %7368
  %v7370 = vsel %vm3991, %v7352, 0.0
  %7371 = vadd.xlane.f32.xlu0 %v7370
  %v7372 = vpop.xlane.xlu0 %7371
  %v7373 = vsel %vm3991, %v7359, 0.0
  %7374 = vadd.xlane.f32.xlu0 %v7373
  %v7375 = vpop.xlane.xlu0 %7374
  %v7376 = vadd.f32 %v6422, %v7366
  %v7377 = vadd.f32 %v6425, %v7369
  %v7378 = vadd.f32 %v6428, %v7372
  %v7379 = vadd.f32 %v6431, %v7375
  %v7380 = vmul.f32 %v7376, %v5484
  %v7381 = vmul.f32 %v7377, %v5485
  %v7382 = vmul.f32 %v7378, %v5486
  %v7383 = vmul.f32 %v7379, %v5487
  %vm7384 = vcmask 7168
  %7385 = vst.msk [vmem:[%s9] sm:$0xff] %vm7384, %v7380
  %7386 = vst.msk [vmem:[%s9 + $0x8] sm:$0xff] %vm7384, %v7381
  %7387 = vst.msk [vmem:[%s9 + $0x10] sm:$0xff] %vm7384, %v7382
  %7388 = vst.msk [vmem:[%s9 + $0x18] sm:$0xff] %vm7384, %v7383
  // Predicated region
  $region38: #{mad_sage2_forward.7} parent=0 // pred_check
    _
  $region39: #{mad_sage2_forward.7} parent=0 // pred_check_branch
    %7390 = sbr.rel (0) target = $region41
  $region40: #{mad_sage2_forward.7} parent=0 // pred_region
    _
  $region41: #{mad_sage2_forward.7} parent=0 // pred_fallthru
    _
  // Predicated region
  $region42: #{mad_sage2_forward.7} parent=0 // pred_check
    _
  $region43: #{mad_sage2_forward.7} parent=0 // pred_check_branch
    %7392 = sbr.rel (0) target = $region45
  $region44: #{mad_sage2_forward.7} parent=0 // pred_region
    _
  $region45: #{mad_sage2_forward.7} parent=0 // pred_fallthru
    _

</llo_original>
